<compile_context>
chip_gen: v6e
topology: v6e:2x2x1
jax: 0.10.0
libtpu: 0.0.40
codegen_flags: <defaults>
</compile_context>

<pallas_src>
import jax
import jax.numpy as jnp
from jax.experimental import pallas as pl
from jax.experimental.pallas import tpu as pltpu


def _attention_kernel(x_ref, wq_ref, wk_ref, wv_ref, bq_ref, bk_ref, bv_ref,
                      wpt_ref, bp_ref, o_ref):
    Bb, N, C = x_ref.shape                       # batch chunk, seq, channels
    H, _, hd = wq_ref.shape                      # heads, C, head_dim
    out_dim = wpt_ref.shape[1]
    G = Bb * H                                   # merged (batch, head) axis

    x = x_ref[...]                               # (Bb, N, C)

    # Broadcast the activations over heads so every (batch, head) pair is one
    # entry of a single merged batch axis g = b*H + h (outer-dim replication
    # only; no lane/sublane relayout).
    xg = jnp.broadcast_to(x[:, None, :, :], (Bb, H, N, C)).reshape(G, N, C)

    def bcast_over_batch(ref):
        w = ref[...]                             # (H, ...)
        return jnp.broadcast_to(w[None], (Bb,) + w.shape).reshape((G,) + w.shape[1:])

    wq = bcast_over_batch(wq_ref)                # (G, C, hd)  (scale pre-folded)
    wk = bcast_over_batch(wk_ref)
    wv = bcast_over_batch(wv_ref)
    bq = bcast_over_batch(bq_ref)                # (G, 1, hd)  (scale pre-folded)
    bk = bcast_over_batch(bk_ref)
    bv = bcast_over_batch(bv_ref)
    wpt = bcast_over_batch(wpt_ref)              # (G, out_dim, hd)

    # Per-(batch, head) projections: (G, N, C) @ (G, C, hd) -> (G, N, hd).
    q = jnp.einsum('gnc,gcd->gnd', xg, wq, preferred_element_type=jnp.float32) + bq
    k = jnp.einsum('gnc,gcd->gnd', xg, wk, preferred_element_type=jnp.float32) + bk
    v = jnp.einsum('gnc,gcd->gnd', xg, wv, preferred_element_type=jnp.float32) + bv

    # Scaled-dot-product attention (scale already folded into wq/bq).
    s = jnp.einsum('gnd,gmd->gnm', q, k, preferred_element_type=jnp.float32)   # (G, N, N)
    m = jnp.max(s, axis=-1, keepdims=True)
    e = jnp.exp(s - m)
    denom = jnp.sum(e, axis=-1, keepdims=True)
    p = e * pl.reciprocal(denom, approx=True)

    ctx = jnp.einsum('gnm,gmd->gnd', p, v, preferred_element_type=jnp.float32)  # (G, N, hd)

    # Per-head output projection, transposed so N lands on the lane axis,
    # then reduce over heads (cheap VPU adds along an outer dim).
    yg = jnp.einsum('god,gnd->gon', wpt, ctx, preferred_element_type=jnp.float32)  # (G, out_dim, N)
    y = jnp.sum(yg.reshape(Bb, H, out_dim, N), axis=1) + bp_ref[...]               # (Bb, out_dim, N)

    o_ref[...] = y.astype(o_ref.dtype)


def attention_pallas(x, w_qkv, b_qkv, w_proj, b_proj, *, num_heads, batch_block=None):
    """x: (B, N, C); w_qkv: (C, 3C); b_qkv: (3C,); w_proj: (C, out_dim); b_proj: (out_dim,)."""
    B, N, C = x.shape
    assert C % num_heads == 0
    H = num_heads
    hd = C // H
    out_dim = w_proj.shape[1]
    scale = float(hd) ** -0.5

    Bb = B if batch_block is None else batch_block   # whole batch per grid step by default
    assert B % Bb == 0

    # ---- one-time host-side weight re-layout (constant transform) ----
    # w_qkv[c, t*C + h*hd + d] -> per-head (H, C, hd); fold softmax scale into q.
    w3 = w_qkv.reshape(C, 3, H, hd)
    wq = jnp.transpose(w3[:, 0], (1, 0, 2)) * scale   # (H, C, hd)
    wk = jnp.transpose(w3[:, 1], (1, 0, 2))
    wv = jnp.transpose(w3[:, 2], (1, 0, 2))
    b3 = b_qkv.reshape(3, H, 1, hd)
    bq = b3[0] * scale                                # (H, 1, hd)
    bk = b3[1]
    bv = b3[2]
    # Output projection per head, transposed: (H, out_dim, hd).
    wpt = jnp.transpose(w_proj.reshape(H, hd, out_dim), (0, 2, 1))
    bp = b_proj.reshape(1, out_dim, 1)

    out_t = pl.pallas_call(
        _attention_kernel,
        out_shape=jax.ShapeDtypeStruct((B, out_dim, N), x.dtype),
        grid_spec=pltpu.PrefetchScalarGridSpec(
            num_scalar_prefetch=0,
            grid=(B // Bb,),
            in_specs=[
                pl.BlockSpec((Bb, N, C), lambda i: (i, 0, 0)),          # x
                pl.BlockSpec((H, C, hd), lambda i: (0, 0, 0)),          # wq (scaled)
                pl.BlockSpec((H, C, hd), lambda i: (0, 0, 0)),          # wk
                pl.BlockSpec((H, C, hd), lambda i: (0, 0, 0)),          # wv
                pl.BlockSpec((H, 1, hd), lambda i: (0, 0, 0)),          # bq (scaled)
                pl.BlockSpec((H, 1, hd), lambda i: (0, 0, 0)),          # bk
                pl.BlockSpec((H, 1, hd), lambda i: (0, 0, 0)),          # bv
                pl.BlockSpec((H, out_dim, hd), lambda i: (0, 0, 0)),    # w_proj^T per head
                pl.BlockSpec((1, out_dim, 1), lambda i: (0, 0, 0)),     # b_proj
            ],
            out_specs=pl.BlockSpec((Bb, out_dim, N), lambda i: (i, 0, 0)),
        ),
        compiler_params=pltpu.CompilerParams(
            dimension_semantics=("parallel",)),
    )(x, wq, wk, wv, bq, bk, bv, wpt, bp)

    # (B, out_dim, N) -> (B, N, out_dim): restore the module's output layout.
    return jnp.transpose(out_t, (0, 2, 1))


def attention_ref(x, w_qkv, b_qkv, w_proj, b_proj, *, num_heads):
    """Pure-JAX reference mirroring the PyTorch forward exactly."""
    B, N, C = x.shape
    head_dim = C // num_heads
    scale = float(head_dim) ** -0.5

    qkv = x @ w_qkv + b_qkv                        # (B, N, 3C)
    qkv = qkv.reshape(B, N, 3, num_heads, head_dim)
    qkv = jnp.transpose(qkv, (2, 0, 3, 1, 4))      # (3, B, H, N, hd)
    q, k, v = qkv[0], qkv[1], qkv[2]
    q = q * scale
    attn = jnp.einsum('bhqd,bhkd->bhqk', q, k)
    attn = jax.nn.softmax(attn, axis=-1)
    ctx = jnp.einsum('bhqk,bhkd->bhqd', attn, v)   # (B, H, N, hd)
    ctx = jnp.transpose(ctx, (0, 2, 1, 3)).reshape(B, N, C)
    return ctx @ w_proj + b_proj


if __name__ == "__main__":
    # Small shapes consistent with the module: dim=32, num_heads=8, out_dim=1.
    B, N, C = 2, 8, 32
    num_heads = 8
    out_dim = 1

    key = jax.random.PRNGKey(0)
    kx, kw1, kb1, kw2, kb2 = jax.random.split(key, 5)

    x = jax.random.normal(kx, (B, N, C), dtype=jnp.float32)

    # Parameters stored pre-transposed as (in, out) for row-major matmuls
    # (nn.Linear(dim, 3*dim) / nn.Linear(dim, out_dim)).
    w_qkv = jax.random.normal(kw1, (C, 3 * C), dtype=jnp.float32) * (C ** -0.5)
    b_qkv = jax.random.normal(kb1, (3 * C,), dtype=jnp.float32) * 0.02
    w_proj = jax.random.normal(kw2, (C, out_dim), dtype=jnp.float32) * (C ** -0.5)
    b_proj = jax.random.normal(kb2, (out_dim,), dtype=jnp.float32) * 0.02

    out = attention_pallas(x, w_qkv, b_qkv, w_proj, b_proj, num_heads=num_heads)
    out = jax.block_until_ready(out)

    ref = attention_ref(x, w_qkv, b_qkv, w_proj, b_proj, num_heads=num_heads)
    assert out.shape == (B, N, out_dim)
    # Slightly loosened tolerance: the softmax uses the EUP *approximate*
    # reciprocal (per the perf review); genuine bugs produce O(0.1+) errors.
    assert jnp.allclose(out, ref, atol=5e-3, rtol=5e-3), "Pallas output mismatch vs reference"

    print("KERNEL_OK")
</pallas_src>

<mosaic_0001>
module attributes {stable_mosaic.version = 11 : i64} {
  func.func @_attention_kernel(%arg0: i32, %arg1: memref<2x8x32xf32, #tpu.memory_space<vmem>>, %arg2: memref<8x32x4xf32, #tpu.memory_space<vmem>>, %arg3: memref<8x32x4xf32, #tpu.memory_space<vmem>>, %arg4: memref<8x32x4xf32, #tpu.memory_space<vmem>>, %arg5: memref<8x1x4xf32, #tpu.memory_space<vmem>>, %arg6: memref<8x1x4xf32, #tpu.memory_space<vmem>>, %arg7: memref<8x1x4xf32, #tpu.memory_space<vmem>>, %arg8: memref<8x1x4xf32, #tpu.memory_space<vmem>>, %arg9: memref<1x1x1xf32, #tpu.memory_space<vmem>>, %arg10: memref<2x1x8xf32, #tpu.memory_space<vmem>>) attributes {dimension_semantics = [#tpu.dimension_semantics<parallel>], iteration_bounds = array<i64: 1>, scalar_prefetch = 0 : i64, scratch_operands = 0 : i64, tpu.core_type = #tpu.core_type<tc>, window_params = [{transform_indices = @transform_0, window_bounds = array<i64: 2, 8, 32>}, {pipeline_mode = #tpu.pipeline_mode<synchronous>, transform_indices = @transform_1, window_bounds = array<i64: 8, 32, 4>}, {pipeline_mode = #tpu.pipeline_mode<synchronous>, transform_indices = @transform_2, window_bounds = array<i64: 8, 32, 4>}, {pipeline_mode = #tpu.pipeline_mode<synchronous>, transform_indices = @transform_3, window_bounds = array<i64: 8, 32, 4>}, {pipeline_mode = #tpu.pipeline_mode<synchronous>, transform_indices = @transform_4, window_bounds = array<i64: 8, 1, 4>}, {pipeline_mode = #tpu.pipeline_mode<synchronous>, transform_indices = @transform_5, window_bounds = array<i64: 8, 1, 4>}, {pipeline_mode = #tpu.pipeline_mode<synchronous>, transform_indices = @transform_6, window_bounds = array<i64: 8, 1, 4>}, {pipeline_mode = #tpu.pipeline_mode<synchronous>, transform_indices = @transform_7, window_bounds = array<i64: 8, 1, 4>}, {pipeline_mode = #tpu.pipeline_mode<synchronous>, transform_indices = @transform_8, window_bounds = array<i64: 1, 1, 1>}, {transform_indices = @transform_9, window_bounds = array<i64: 2, 1, 8>}]} {
    %c0 = arith.constant 0 : index
    %c0_0 = arith.constant 0 : index
    %c0_1 = arith.constant 0 : index
    %0 = vector.load %arg1[%c0, %c0_0, %c0_1] : memref<2x8x32xf32, #tpu.memory_space<vmem>>, vector<2x8x32xf32>
    %1 = vector.shape_cast %0 : vector<2x8x32xf32> to vector<2x1x8x32xf32>
    %2 = vector.shape_cast %1 : vector<2x1x8x32xf32> to vector<2x1x8x32xf32>
    %3 = vector.broadcast %2 : vector<2x1x8x32xf32> to vector<2x8x8x32xf32>
    %4 = vector.shape_cast %3 : vector<2x8x8x32xf32> to vector<16x8x32xf32>
    %c0_2 = arith.constant 0 : index
    %c0_3 = arith.constant 0 : index
    %c0_4 = arith.constant 0 : index
    %5 = vector.load %arg2[%c0_2, %c0_3, %c0_4] : memref<8x32x4xf32, #tpu.memory_space<vmem>>, vector<8x32x4xf32>
    %6 = vector.shape_cast %5 : vector<8x32x4xf32> to vector<1x8x32x4xf32>
    %7 = vector.shape_cast %6 : vector<1x8x32x4xf32> to vector<1x8x32x4xf32>
    %8 = vector.broadcast %7 : vector<1x8x32x4xf32> to vector<2x8x32x4xf32>
    %9 = vector.shape_cast %8 : vector<2x8x32x4xf32> to vector<16x32x4xf32>
    %c0_5 = arith.constant 0 : index
    %c0_6 = arith.constant 0 : index
    %c0_7 = arith.constant 0 : index
    %10 = vector.load %arg3[%c0_5, %c0_6, %c0_7] : memref<8x32x4xf32, #tpu.memory_space<vmem>>, vector<8x32x4xf32>
    %11 = vector.shape_cast %10 : vector<8x32x4xf32> to vector<1x8x32x4xf32>
    %12 = vector.shape_cast %11 : vector<1x8x32x4xf32> to vector<1x8x32x4xf32>
    %13 = vector.broadcast %12 : vector<1x8x32x4xf32> to vector<2x8x32x4xf32>
    %14 = vector.shape_cast %13 : vector<2x8x32x4xf32> to vector<16x32x4xf32>
    %c0_8 = arith.constant 0 : index
    %c0_9 = arith.constant 0 : index
    %c0_10 = arith.constant 0 : index
    %15 = vector.load %arg4[%c0_8, %c0_9, %c0_10] : memref<8x32x4xf32, #tpu.memory_space<vmem>>, vector<8x32x4xf32>
    %16 = vector.shape_cast %15 : vector<8x32x4xf32> to vector<1x8x32x4xf32>
    %17 = vector.shape_cast %16 : vector<1x8x32x4xf32> to vector<1x8x32x4xf32>
    %18 = vector.broadcast %17 : vector<1x8x32x4xf32> to vector<2x8x32x4xf32>
    %19 = vector.shape_cast %18 : vector<2x8x32x4xf32> to vector<16x32x4xf32>
    %c0_11 = arith.constant 0 : index
    %c0_12 = arith.constant 0 : index
    %c0_13 = arith.constant 0 : index
    %20 = vector.load %arg5[%c0_11, %c0_12, %c0_13] : memref<8x1x4xf32, #tpu.memory_space<vmem>>, vector<8x1x4xf32>
    %21 = vector.shape_cast %20 : vector<8x1x4xf32> to vector<1x8x1x4xf32>
    %22 = vector.shape_cast %21 : vector<1x8x1x4xf32> to vector<1x8x1x4xf32>
    %23 = vector.broadcast %22 : vector<1x8x1x4xf32> to vector<2x8x1x4xf32>
    %24 = vector.shape_cast %23 : vector<2x8x1x4xf32> to vector<16x1x4xf32>
    %c0_14 = arith.constant 0 : index
    %c0_15 = arith.constant 0 : index
    %c0_16 = arith.constant 0 : index
    %25 = vector.load %arg6[%c0_14, %c0_15, %c0_16] : memref<8x1x4xf32, #tpu.memory_space<vmem>>, vector<8x1x4xf32>
    %26 = vector.shape_cast %25 : vector<8x1x4xf32> to vector<1x8x1x4xf32>
    %27 = vector.shape_cast %26 : vector<1x8x1x4xf32> to vector<1x8x1x4xf32>
    %28 = vector.broadcast %27 : vector<1x8x1x4xf32> to vector<2x8x1x4xf32>
    %29 = vector.shape_cast %28 : vector<2x8x1x4xf32> to vector<16x1x4xf32>
    %c0_17 = arith.constant 0 : index
    %c0_18 = arith.constant 0 : index
    %c0_19 = arith.constant 0 : index
    %30 = vector.load %arg7[%c0_17, %c0_18, %c0_19] : memref<8x1x4xf32, #tpu.memory_space<vmem>>, vector<8x1x4xf32>
    %31 = vector.shape_cast %30 : vector<8x1x4xf32> to vector<1x8x1x4xf32>
    %32 = vector.shape_cast %31 : vector<1x8x1x4xf32> to vector<1x8x1x4xf32>
    %33 = vector.broadcast %32 : vector<1x8x1x4xf32> to vector<2x8x1x4xf32>
    %34 = vector.shape_cast %33 : vector<2x8x1x4xf32> to vector<16x1x4xf32>
    %c0_20 = arith.constant 0 : index
    %c0_21 = arith.constant 0 : index
    %c0_22 = arith.constant 0 : index
    %35 = vector.load %arg8[%c0_20, %c0_21, %c0_22] : memref<8x1x4xf32, #tpu.memory_space<vmem>>, vector<8x1x4xf32>
    %36 = vector.shape_cast %35 : vector<8x1x4xf32> to vector<1x8x1x4xf32>
    %37 = vector.shape_cast %36 : vector<1x8x1x4xf32> to vector<1x8x1x4xf32>
    %38 = vector.broadcast %37 : vector<1x8x1x4xf32> to vector<2x8x1x4xf32>
    %39 = vector.shape_cast %38 : vector<2x8x1x4xf32> to vector<16x1x4xf32>
    "tpu.trace_start"() <{level = 10 : i32, message = "gnc,gcd->gnd"}> : () -> ()
    %cst = arith.constant dense<0.000000e+00> : vector<16x8x4xf32>
    %40 = tpu.matmul %4, %9, %cst {dimension_numbers = #tpu.dot_dimension_numbers<[2], [1], [1], [2], [0, 0, 0, 1, 1, 2], [0], [0]>} : vector<16x8x32xf32>, vector<16x32x4xf32>, vector<16x8x4xf32> -> vector<16x8x4xf32>
    "tpu.trace_stop"() : () -> ()
    %41 = vector.broadcast %24 : vector<16x1x4xf32> to vector<16x8x4xf32>
    %42 = arith.addf %40, %41 : vector<16x8x4xf32>
    "tpu.trace_start"() <{level = 10 : i32, message = "gnc,gcd->gnd"}> : () -> ()
    %cst_23 = arith.constant dense<0.000000e+00> : vector<16x8x4xf32>
    %43 = tpu.matmul %4, %14, %cst_23 {dimension_numbers = #tpu.dot_dimension_numbers<[2], [1], [1], [2], [0, 0, 0, 1, 1, 2], [0], [0]>} : vector<16x8x32xf32>, vector<16x32x4xf32>, vector<16x8x4xf32> -> vector<16x8x4xf32>
    "tpu.trace_stop"() : () -> ()
    %44 = vector.broadcast %29 : vector<16x1x4xf32> to vector<16x8x4xf32>
    %45 = arith.addf %43, %44 : vector<16x8x4xf32>
    "tpu.trace_start"() <{level = 10 : i32, message = "gnc,gcd->gnd"}> : () -> ()
    %cst_24 = arith.constant dense<0.000000e+00> : vector<16x8x4xf32>
    %46 = tpu.matmul %4, %19, %cst_24 {dimension_numbers = #tpu.dot_dimension_numbers<[2], [1], [1], [2], [0, 0, 0, 1, 1, 2], [0], [0]>} : vector<16x8x32xf32>, vector<16x32x4xf32>, vector<16x8x4xf32> -> vector<16x8x4xf32>
    "tpu.trace_stop"() : () -> ()
    %47 = vector.broadcast %34 : vector<16x1x4xf32> to vector<16x8x4xf32>
    %48 = arith.addf %46, %47 : vector<16x8x4xf32>
    "tpu.trace_start"() <{level = 10 : i32, message = "gnd,gmd->gnm"}> : () -> ()
    %cst_25 = arith.constant dense<0.000000e+00> : vector<16x8x8xf32>
    %49 = tpu.matmul %42, %45, %cst_25 {dimension_numbers = #tpu.dot_dimension_numbers<[2], [2], [1], [1], [0, 0, 0, 1, 1, 1], [0], [0]>} : vector<16x8x4xf32>, vector<16x8x4xf32>, vector<16x8x8xf32> -> vector<16x8x8xf32>
    "tpu.trace_stop"() : () -> ()
    %cst_26 = arith.constant dense<0xFF800000> : vector<16x8xf32>
    %50 = vector.multi_reduction <maximumf>, %49, %cst_26 [2] : vector<16x8x8xf32> to vector<16x8xf32>
    %51 = vector.shape_cast %50 : vector<16x8xf32> to vector<16x8x1xf32>
    %52 = vector.broadcast %51 : vector<16x8x1xf32> to vector<16x8x8xf32>
    %53 = arith.subf %49, %52 : vector<16x8x8xf32>
    %54 = math.exp %53 : vector<16x8x8xf32>
    %cst_27 = arith.constant dense<0.000000e+00> : vector<16x8xf32>
    %55 = vector.multi_reduction <add>, %54, %cst_27 [2] : vector<16x8x8xf32> to vector<16x8xf32>
    %56 = vector.shape_cast %55 : vector<16x8xf32> to vector<16x8x1xf32>
    %57 = tpu.reciprocal %56 {approx = true} : vector<16x8x1xf32> -> vector<16x8x1xf32>
    %58 = vector.broadcast %57 : vector<16x8x1xf32> to vector<16x8x8xf32>
    %59 = arith.mulf %54, %58 : vector<16x8x8xf32>
    "tpu.trace_start"() <{level = 10 : i32, message = "gnm,gmd->gnd"}> : () -> ()
    %cst_28 = arith.constant dense<0.000000e+00> : vector<16x8x4xf32>
    %60 = tpu.matmul %59, %48, %cst_28 {dimension_numbers = #tpu.dot_dimension_numbers<[2], [1], [1], [2], [0, 0, 0, 1, 1, 2], [0], [0]>} : vector<16x8x8xf32>, vector<16x8x4xf32>, vector<16x8x4xf32> -> vector<16x8x4xf32>
    "tpu.trace_stop"() : () -> ()
    "tpu.trace_start"() <{level = 10 : i32, message = "god,gnd->gon"}> : () -> ()
    %cst_29 = arith.constant dense<0.000000e+00> : vector<16x1x8xf32>
    %61 = tpu.matmul %39, %60, %cst_29 {dimension_numbers = #tpu.dot_dimension_numbers<[2], [2], [1], [1], [0, 0, 0, 1, 1, 1], [0], [0]>} : vector<16x1x4xf32>, vector<16x8x4xf32>, vector<16x1x8xf32> -> vector<16x1x8xf32>
    "tpu.trace_stop"() : () -> ()
    %62 = vector.shape_cast %61 : vector<16x1x8xf32> to vector<2x8x1x8xf32>
    %cst_30 = arith.constant dense<0.000000e+00> : vector<2x1x8xf32>
    %63 = vector.multi_reduction <add>, %62, %cst_30 [1] : vector<2x8x1x8xf32> to vector<2x1x8xf32>
    %c0_31 = arith.constant 0 : index
    %c0_32 = arith.constant 0 : index
    %c0_33 = arith.constant 0 : index
    %64 = vector.load %arg9[%c0_31, %c0_32, %c0_33] : memref<1x1x1xf32, #tpu.memory_space<vmem>>, vector<1x1x1xf32>
    %65 = vector.broadcast %64 : vector<1x1x1xf32> to vector<2x1x8xf32>
    %66 = arith.addf %63, %65 : vector<2x1x8xf32>
    %c0_34 = arith.constant 0 : index
    %c0_35 = arith.constant 0 : index
    %c0_36 = arith.constant 0 : index
    %67 = vector.load %arg10[%c0_34, %c0_35, %c0_36] : memref<2x1x8xf32, #tpu.memory_space<vmem>>, vector<2x1x8xf32>
    tpu.vector_store %arg10[%c0_34, %c0_35, %c0_36], %66 {strides = array<i32>} : memref<2x1x8xf32, #tpu.memory_space<vmem>>, vector<2x1x8xf32>,
    return
  }
  func.func @transform_0(%arg0: i32) -> (i32, i32, i32) {
    %c0_i32 = arith.constant 0 : i32
    %c0_i32_0 = arith.constant 0 : i32
    %c0_i32_1 = arith.constant 0 : i32
    return %arg0, %c0_i32, %c0_i32_0 : i32, i32, i32
  }
  func.func @transform_1(%arg0: i32) -> (i32, i32, i32) {
    %c0_i32 = arith.constant 0 : i32
    %c0_i32_0 = arith.constant 0 : i32
    %c0_i32_1 = arith.constant 0 : i32
    %c0_i32_2 = arith.constant 0 : i32
    return %c0_i32, %c0_i32_0, %c0_i32_1 : i32, i32, i32
  }
  func.func @transform_2(%arg0: i32) -> (i32, i32, i32) {
    %c0_i32 = arith.constant 0 : i32
    %c0_i32_0 = arith.constant 0 : i32
    %c0_i32_1 = arith.constant 0 : i32
    %c0_i32_2 = arith.constant 0 : i32
    return %c0_i32, %c0_i32_0, %c0_i32_1 : i32, i32, i32
  }
  func.func @transform_3(%arg0: i32) -> (i32, i32, i32) {
    %c0_i32 = arith.constant 0 : i32
    %c0_i32_0 = arith.constant 0 : i32
    %c0_i32_1 = arith.constant 0 : i32
    %c0_i32_2 = arith.constant 0 : i32
    return %c0_i32, %c0_i32_0, %c0_i32_1 : i32, i32, i32
  }
  func.func @transform_4(%arg0: i32) -> (i32, i32, i32) {
    %c0_i32 = arith.constant 0 : i32
    %c0_i32_0 = arith.constant 0 : i32
    %c0_i32_1 = arith.constant 0 : i32
    %c0_i32_2 = arith.constant 0 : i32
    return %c0_i32, %c0_i32_0, %c0_i32_1 : i32, i32, i32
  }
  func.func @transform_5(%arg0: i32) -> (i32, i32, i32) {
    %c0_i32 = arith.constant 0 : i32
    %c0_i32_0 = arith.constant 0 : i32
    %c0_i32_1 = arith.constant 0 : i32
    %c0_i32_2 = arith.constant 0 : i32
    return %c0_i32, %c0_i32_0, %c0_i32_1 : i32, i32, i32
  }
  func.func @transform_6(%arg0: i32) -> (i32, i32, i32) {
    %c0_i32 = arith.constant 0 : i32
    %c0_i32_0 = arith.constant 0 : i32
    %c0_i32_1 = arith.constant 0 : i32
    %c0_i32_2 = arith.constant 0 : i32
    return %c0_i32, %c0_i32_0, %c0_i32_1 : i32, i32, i32
  }
  func.func @transform_7(%arg0: i32) -> (i32, i32, i32) {
    %c0_i32 = arith.constant 0 : i32
    %c0_i32_0 = arith.constant 0 : i32
    %c0_i32_1 = arith.constant 0 : i32
    %c0_i32_2 = arith.constant 0 : i32
    return %c0_i32, %c0_i32_0, %c0_i32_1 : i32, i32, i32
  }
  func.func @transform_8(%arg0: i32) -> (i32, i32, i32) {
    %c0_i32 = arith.constant 0 : i32
    %c0_i32_0 = arith.constant 0 : i32
    %c0_i32_1 = arith.constant 0 : i32
    %c0_i32_2 = arith.constant 0 : i32
    return %c0_i32, %c0_i32_0, %c0_i32_1 : i32, i32, i32
  }
  func.func @transform_9(%arg0: i32) -> (i32, i32, i32) {
    %c0_i32 = arith.constant 0 : i32
    %c0_i32_0 = arith.constant 0 : i32
    %c0_i32_1 = arith.constant 0 : i32
    return %arg0, %c0_i32, %c0_i32_0 : i32, i32, i32
  }
}

</mosaic_0001>

<llo_original>
// kernel: tpu_custom_call.1
$region0: #{tpu_custom_call.1}
  #allocation0 [shape = 'u32[]', space=smem, size = 0x4, offset = 0x4, fixed_abs, tag = 'smem constant byte address 0x4 - core index']
  #allocation1 [shape = 'u32[144,128]{1,0:T(1,128)}', space=vmem, size = 0x12000, scoped, tag = 'internal scratch']
  #allocation2 [shape = 'f32[1,1,1]{2,1,0:T(1,128)S(1)}', space=vmem, size = 0x200, scoped, tag = 'scoped memory for tpu_custom_call.1']
  %s0 = inlined_call_operand.vmem [shape: f32[2,8,32], index: 0, kind: input, shape index: {}]
  %s1 = inlined_call_operand.vmem [shape: f32[8,32,4], index: 1, kind: input, shape index: {}]
  %s2 = inlined_call_operand.vmem [shape: f32[8,32,4], index: 2, kind: input, shape index: {}]
  %s3 = inlined_call_operand.vmem [shape: f32[8,32,4], index: 3, kind: input, shape index: {}]
  %s4 = inlined_call_operand.vmem [shape: f32[8,1,4], index: 4, kind: input, shape index: {}]
  %s5 = inlined_call_operand.vmem [shape: f32[8,1,4], index: 5, kind: input, shape index: {}]
  %s6 = inlined_call_operand.vmem [shape: f32[8,1,4], index: 6, kind: input, shape index: {}]
  %s7 = inlined_call_operand.vmem [shape: f32[8,1,4], index: 7, kind: input, shape index: {}]
  %s8 = inlined_call_operand.<no memory space> [shape: f32[1,1,1], index: 8, kind: input, shape index: {}]
  %s9 = inlined_call_operand.hbm [shape: f32[2,1,8], index: 9, kind: output, shape index: {}]
  %s10 = sld [smem:[#allocation0]]
  $region46: #{tpu_custom_call.1} parent=0
    _
  %s12 = ssub.s32 1, %s10
  %s13 = scalar_select 0, %s12, %s10
  %v14 = vstv %s8
  %15 = vst [vmem:[#allocation2] sm:$0x1] %v14
  $region1: #{tpu_custom_call.1} parent=0
    #allocation3 [shape = 'u8[1024]{0}', space=vmem, size = 0x400, scoped, tag = 'output window, operand 0, single buffered']
    #allocation4 [shape = 's32[1]{0}', space=sflag, size = 0x4, scoped, tag = 'scoped memory for tpu_custom_call.1']
    %16 = vsyncpa [#allocation4], 0
    // Predicated region
    $region2: #{tpu_custom_call.1} parent=1 // pred_check
      _
    $region3: #{tpu_custom_call.1} parent=1 // pred_check_branch
      %18 = sbr.rel (0) target = $region5
    $region4: #{tpu_custom_call.1} parent=1 // pred_region
      _
    $region5: #{tpu_custom_call.1} parent=1 // pred_fallthru
      _
    // Predicated region
    $region6: #{tpu_custom_call.1} parent=1 // pred_check
      _
    $region7: #{tpu_custom_call.1} parent=1 // pred_check_branch
      %20 = sbr.rel (0) target = $region9
    $region8: #{tpu_custom_call.1} parent=1 // pred_region
      _
    $region9: #{tpu_custom_call.1} parent=1 // pred_fallthru
      _
    // Predicated region
    $region10: #{tpu_custom_call.1} parent=1 // pred_check
      _
    $region11: #{tpu_custom_call.1} parent=1 // pred_check_branch
      %22 = sbr.rel (0) target = $region13
    $region12: #{tpu_custom_call.1} parent=1 // pred_region
      _
    $region13: #{tpu_custom_call.1} parent=1 // pred_fallthru
      _
    // Predicated region
    $region14: #{tpu_custom_call.1} parent=1 // pred_check
      _
    $region15: #{tpu_custom_call.1} parent=1 // pred_check_branch
      %24 = sbr.rel (0) target = $region17
    $region16: #{tpu_custom_call.1} parent=1 // pred_region
      _
    $region17: #{tpu_custom_call.1} parent=1 // pred_fallthru
      _
    // Predicated region
    $region18: #{tpu_custom_call.1} parent=1 // pred_check
      _
    $region19: #{tpu_custom_call.1} parent=1 // pred_check_branch
      %26 = sbr.rel (0) target = $region21
    $region20: #{tpu_custom_call.1} parent=1 // pred_region
      _
    $region21: #{tpu_custom_call.1} parent=1 // pred_fallthru
      _
    // Predicated region
    $region22: #{tpu_custom_call.1} parent=1 // pred_check
      _
    $region23: #{tpu_custom_call.1} parent=1 // pred_check_branch
      %28 = sbr.rel (0) target = $region25
    $region24: #{tpu_custom_call.1} parent=1 // pred_region
      _
    $region25: #{tpu_custom_call.1} parent=1 // pred_fallthru
      _
    // Predicated region
    $region26: #{tpu_custom_call.1} parent=1 // pred_check
      _
    $region27: #{tpu_custom_call.1} parent=1 // pred_check_branch
      %30 = sbr.rel (0) target = $region29
    $region28: #{tpu_custom_call.1} parent=1 // pred_region
      _
    $region29: #{tpu_custom_call.1} parent=1 // pred_fallthru
      _
    // Predicated region
    $region30: #{tpu_custom_call.1} parent=1 // pred_check
      _
    $region31: #{tpu_custom_call.1} parent=1 // pred_check_branch
      %32 = sbr.rel (0) target = $region33
    $region32: #{tpu_custom_call.1} parent=1 // pred_region
      _
    $region33: #{tpu_custom_call.1} parent=1 // pred_fallthru
      _
    // Predicated region
    $region34: #{tpu_custom_call.1} parent=1 // pred_check
      _
    $region35: #{tpu_custom_call.1} parent=1 // pred_check_branch
      %34 = sbr.rel (0) target = $region37
    $region36: #{tpu_custom_call.1} parent=1 // pred_region
      _
    $region37: #{tpu_custom_call.1} parent=1 // pred_fallthru
      _
    %v35 = vld [vmem:[%s0] sm:$0xff]
    %v36 = vld [vmem:[%s0 + $0x8] sm:$0xff]
    %v37 = vld [vmem:[%s1] sm:$0xff]
    %v38 = vld [vmem:[%s1 + $0x8] sm:$0xff]
    %v39 = vld [vmem:[%s1 + $0x10] sm:$0xff]
    %v40 = vld [vmem:[%s1 + $0x18] sm:$0xff]
    %v41 = vld [vmem:[%s1 + $0x20] sm:$0xff]
    %v42 = vld [vmem:[%s1 + $0x28] sm:$0xff]
    %v43 = vld [vmem:[%s1 + $0x30] sm:$0xff]
    %v44 = vld [vmem:[%s1 + $0x38] sm:$0xff]
    %v45 = vld [vmem:[%s1 + $0x40] sm:$0xff]
    %v46 = vld [vmem:[%s1 + $0x48] sm:$0xff]
    %v47 = vld [vmem:[%s1 + $0x50] sm:$0xff]
    %v48 = vld [vmem:[%s1 + $0x58] sm:$0xff]
    %v49 = vld [vmem:[%s1 + $0x60] sm:$0xff]
    %v50 = vld [vmem:[%s1 + $0x68] sm:$0xff]
    %v51 = vld [vmem:[%s1 + $0x70] sm:$0xff]
    %v52 = vld [vmem:[%s1 + $0x78] sm:$0xff]
    %v53 = vld [vmem:[%s1 + $0x80] sm:$0xff]
    %v54 = vld [vmem:[%s1 + $0x88] sm:$0xff]
    %v55 = vld [vmem:[%s1 + $0x90] sm:$0xff]
    %v56 = vld [vmem:[%s1 + $0x98] sm:$0xff]
    %v57 = vld [vmem:[%s1 + $0xa0] sm:$0xff]
    %v58 = vld [vmem:[%s1 + $0xa8] sm:$0xff]
    %v59 = vld [vmem:[%s1 + $0xb0] sm:$0xff]
    %v60 = vld [vmem:[%s1 + $0xb8] sm:$0xff]
    %v61 = vld [vmem:[%s1 + $0xc0] sm:$0xff]
    %v62 = vld [vmem:[%s1 + $0xc8] sm:$0xff]
    %v63 = vld [vmem:[%s1 + $0xd0] sm:$0xff]
    %v64 = vld [vmem:[%s1 + $0xd8] sm:$0xff]
    %v65 = vld [vmem:[%s1 + $0xe0] sm:$0xff]
    %v66 = vld [vmem:[%s1 + $0xe8] sm:$0xff]
    %v67 = vld [vmem:[%s1 + $0xf0] sm:$0xff]
    %v68 = vld [vmem:[%s1 + $0xf8] sm:$0xff]
    %v69 = vld [vmem:[%s2] sm:$0xff]
    %v70 = vld [vmem:[%s2 + $0x8] sm:$0xff]
    %v71 = vld [vmem:[%s2 + $0x10] sm:$0xff]
    %v72 = vld [vmem:[%s2 + $0x18] sm:$0xff]
    %v73 = vld [vmem:[%s2 + $0x20] sm:$0xff]
    %v74 = vld [vmem:[%s2 + $0x28] sm:$0xff]
    %v75 = vld [vmem:[%s2 + $0x30] sm:$0xff]
    %v76 = vld [vmem:[%s2 + $0x38] sm:$0xff]
    %v77 = vld [vmem:[%s2 + $0x40] sm:$0xff]
    %v78 = vld [vmem:[%s2 + $0x48] sm:$0xff]
    %v79 = vld [vmem:[%s2 + $0x50] sm:$0xff]
    %v80 = vld [vmem:[%s2 + $0x58] sm:$0xff]
    %v81 = vld [vmem:[%s2 + $0x60] sm:$0xff]
    %v82 = vld [vmem:[%s2 + $0x68] sm:$0xff]
    %v83 = vld [vmem:[%s2 + $0x70] sm:$0xff]
    %v84 = vld [vmem:[%s2 + $0x78] sm:$0xff]
    %v85 = vld [vmem:[%s2 + $0x80] sm:$0xff]
    %v86 = vld [vmem:[%s2 + $0x88] sm:$0xff]
    %v87 = vld [vmem:[%s2 + $0x90] sm:$0xff]
    %v88 = vld [vmem:[%s2 + $0x98] sm:$0xff]
    %v89 = vld [vmem:[%s2 + $0xa0] sm:$0xff]
    %v90 = vld [vmem:[%s2 + $0xa8] sm:$0xff]
    %v91 = vld [vmem:[%s2 + $0xb0] sm:$0xff]
    %v92 = vld [vmem:[%s2 + $0xb8] sm:$0xff]
    %v93 = vld [vmem:[%s2 + $0xc0] sm:$0xff]
    %v94 = vld [vmem:[%s2 + $0xc8] sm:$0xff]
    %v95 = vld [vmem:[%s2 + $0xd0] sm:$0xff]
    %v96 = vld [vmem:[%s2 + $0xd8] sm:$0xff]
    %v97 = vld [vmem:[%s2 + $0xe0] sm:$0xff]
    %v98 = vld [vmem:[%s2 + $0xe8] sm:$0xff]
    %v99 = vld [vmem:[%s2 + $0xf0] sm:$0xff]
    %v100 = vld [vmem:[%s2 + $0xf8] sm:$0xff]
    %v101 = vld [vmem:[%s3] sm:$0xff]
    %v102 = vld [vmem:[%s3 + $0x8] sm:$0xff]
    %v103 = vld [vmem:[%s3 + $0x10] sm:$0xff]
    %v104 = vld [vmem:[%s3 + $0x18] sm:$0xff]
    %v105 = vld [vmem:[%s3 + $0x20] sm:$0xff]
    %v106 = vld [vmem:[%s3 + $0x28] sm:$0xff]
    %v107 = vld [vmem:[%s3 + $0x30] sm:$0xff]
    %v108 = vld [vmem:[%s3 + $0x38] sm:$0xff]
    %v109 = vld [vmem:[%s3 + $0x40] sm:$0xff]
    %v110 = vld [vmem:[%s3 + $0x48] sm:$0xff]
    %v111 = vld [vmem:[%s3 + $0x50] sm:$0xff]
    %v112 = vld [vmem:[%s3 + $0x58] sm:$0xff]
    %v113 = vld [vmem:[%s3 + $0x60] sm:$0xff]
    %v114 = vld [vmem:[%s3 + $0x68] sm:$0xff]
    %v115 = vld [vmem:[%s3 + $0x70] sm:$0xff]
    %v116 = vld [vmem:[%s3 + $0x78] sm:$0xff]
    %v117 = vld [vmem:[%s3 + $0x80] sm:$0xff]
    %v118 = vld [vmem:[%s3 + $0x88] sm:$0xff]
    %v119 = vld [vmem:[%s3 + $0x90] sm:$0xff]
    %v120 = vld [vmem:[%s3 + $0x98] sm:$0xff]
    %v121 = vld [vmem:[%s3 + $0xa0] sm:$0xff]
    %v122 = vld [vmem:[%s3 + $0xa8] sm:$0xff]
    %v123 = vld [vmem:[%s3 + $0xb0] sm:$0xff]
    %v124 = vld [vmem:[%s3 + $0xb8] sm:$0xff]
    %v125 = vld [vmem:[%s3 + $0xc0] sm:$0xff]
    %v126 = vld [vmem:[%s3 + $0xc8] sm:$0xff]
    %v127 = vld [vmem:[%s3 + $0xd0] sm:$0xff]
    %v128 = vld [vmem:[%s3 + $0xd8] sm:$0xff]
    %v129 = vld [vmem:[%s3 + $0xe0] sm:$0xff]
    %v130 = vld [vmem:[%s3 + $0xe8] sm:$0xff]
    %v131 = vld [vmem:[%s3 + $0xf0] sm:$0xff]
    %v132 = vld [vmem:[%s3 + $0xf8] sm:$0xff]
    %v133 = vld [vmem:[%s4] sm:$0x1]
    %v134 = vld [vmem:[%s4 + $0x1] sm:$0x1]
    %v135 = vld [vmem:[%s4 + $0x2] sm:$0x1]
    %v136 = vld [vmem:[%s4 + $0x3] sm:$0x1]
    %v137 = vld [vmem:[%s4 + $0x4] sm:$0x1]
    %v138 = vld [vmem:[%s4 + $0x5] sm:$0x1]
    %v139 = vld [vmem:[%s4 + $0x6] sm:$0x1]
    %v140 = vld [vmem:[%s4 + $0x7] sm:$0x1]
    %v141 = vld [vmem:[%s5] sm:$0x1]
    %v142 = vld [vmem:[%s5 + $0x1] sm:$0x1]
    %v143 = vld [vmem:[%s5 + $0x2] sm:$0x1]
    %v144 = vld [vmem:[%s5 + $0x3] sm:$0x1]
    %v145 = vld [vmem:[%s5 + $0x4] sm:$0x1]
    %v146 = vld [vmem:[%s5 + $0x5] sm:$0x1]
    %v147 = vld [vmem:[%s5 + $0x6] sm:$0x1]
    %v148 = vld [vmem:[%s5 + $0x7] sm:$0x1]
    %v149 = vld [vmem:[%s6] sm:$0x1]
    %v150 = vld [vmem:[%s6 + $0x1] sm:$0x1]
    %v151 = vld [vmem:[%s6 + $0x2] sm:$0x1]
    %v152 = vld [vmem:[%s6 + $0x3] sm:$0x1]
    %v153 = vld [vmem:[%s6 + $0x4] sm:$0x1]
    %v154 = vld [vmem:[%s6 + $0x5] sm:$0x1]
    %v155 = vld [vmem:[%s6 + $0x6] sm:$0x1]
    %v156 = vld [vmem:[%s6 + $0x7] sm:$0x1]
    %v157 = vld [vmem:[%s7] sm:$0x1]
    %v158 = vld [vmem:[%s7 + $0x1] sm:$0x1]
    %v159 = vld [vmem:[%s7 + $0x2] sm:$0x1]
    %v160 = vld [vmem:[%s7 + $0x3] sm:$0x1]
    %v161 = vld [vmem:[%s7 + $0x4] sm:$0x1]
    %v162 = vld [vmem:[%s7 + $0x5] sm:$0x1]
    %v163 = vld [vmem:[%s7 + $0x6] sm:$0x1]
    %v164 = vld [vmem:[%s7 + $0x7] sm:$0x1]
    %v173 = vlaneseq
    %v174 = vshrl.u32 %v173, 7
    %v175 = vsub.s32 0, %v174
    %v176 = vrot.slane %v133, %v175
    %v177 = vlaneseq
    %v178 = vshrl.u32 %v177, 7
    %v179 = vsub.s32 0, %v178
    %v180 = vrot.slane %v134, %v179
    %v181 = vlaneseq
    %v182 = vshrl.u32 %v181, 7
    %v183 = vsub.s32 0, %v182
    %v184 = vrot.slane %v135, %v183
    %v185 = vlaneseq
    %v186 = vshrl.u32 %v185, 7
    %v187 = vsub.s32 0, %v186
    %v188 = vrot.slane %v136, %v187
    %v189 = vlaneseq
    %v190 = vshrl.u32 %v189, 7
    %v191 = vsub.s32 0, %v190
    %v192 = vrot.slane %v137, %v191
    %v193 = vlaneseq
    %v194 = vshrl.u32 %v193, 7
    %v195 = vsub.s32 0, %v194
    %v196 = vrot.slane %v138, %v195
    %v197 = vlaneseq
    %v198 = vshrl.u32 %v197, 7
    %v199 = vsub.s32 0, %v198
    %v200 = vrot.slane %v139, %v199
    %v201 = vlaneseq
    %v202 = vshrl.u32 %v201, 7
    %v203 = vsub.s32 0, %v202
    %v204 = vrot.slane %v140, %v203
    %vm213 = vcmask 261120
    %v215 = vsel %vm213, %v35, 0
    %217 = vmatprep.subr.mxu0 0.0
    %218 = vmatpush1.msra.mxu0 0.0
    %219 = vmatprep.subr.mxu0 0.0
    %220 = vmatpush1.msra.mxu0 0.0
    %221 = vmatprep.subr.mxu0 0.0
    %222 = vmatpush1.msra.mxu0 0.0
    %223 = vmatprep.subr.mxu0 0.0
    %224 = vmatpush1.msra.mxu0 0.0
    %225 = vmatprep.subr.mxu0 0.0
    %226 = vmatpush1.msra.mxu0 0.0
    %227 = vmatprep.subr.mxu0 0.0
    %228 = vmatpush1.msra.mxu0 0.0
    %229 = vmatprep.subr.mxu0 0.0
    %230 = vmatpush1.msra.mxu0 0.0
    %231 = vmatprep.subr.mxu0 0.0
    %232 = vmatpush1.msra.mxu0 0.0
    %233 = vmatprep.subr.mxu0 0.0
    %234 = vmatpush1.msra.mxu0 0.0
    %235 = vmatprep.subr.mxu0 0.0
    %236 = vmatpush1.msra.mxu0 0.0
    %237 = vmatprep.subr.mxu0 0.0
    %238 = vmatpush1.msra.mxu0 0.0
    %239 = vmatprep.subr.mxu0 0.0
    %240 = vmatpush1.msra.mxu0 0.0
    %241 = vmatprep.subr.mxu0 0.0
    %242 = vmatpush1.msra.mxu0 %v40
    %243 = vmatprep.subr.mxu0 0.0
    %244 = vmatpush1.msra.mxu0 %v39
    %245 = vmatprep.subr.mxu0 0.0
    %246 = vmatpush1.msra.mxu0 %v38
    %247 = vmatprep.subr.mxu0 0.0
    %248 = vmatpush1.msra.mxu0 %v37
    %249 = vmatprep.subr.mxu0 0.0
    %250 = vmatpush2.msra.mxu0 0.0
    %251 = vmatprep.subr.mxu0 0.0
    %252 = vmatpush2.msra.mxu0 0.0
    %253 = vmatprep.subr.mxu0 0.0
    %254 = vmatpush2.msra.mxu0 0.0
    %255 = vmatprep.subr.mxu0 0.0
    %256 = vmatpush2.msra.mxu0 0.0
    %257 = vmatprep.subr.mxu0 0.0
    %258 = vmatpush2.msra.mxu0 0.0
    %259 = vmatprep.subr.mxu0 0.0
    %260 = vmatpush2.msra.mxu0 0.0
    %261 = vmatprep.subr.mxu0 0.0
    %262 = vmatpush2.msra.mxu0 0.0
    %263 = vmatprep.subr.mxu0 0.0
    %264 = vmatpush2.msra.mxu0 0.0
    %265 = vmatprep.subr.mxu0 0.0
    %266 = vmatpush2.msra.mxu0 0.0
    %267 = vmatprep.subr.mxu0 0.0
    %268 = vmatpush2.msra.mxu0 0.0
    %269 = vmatprep.subr.mxu0 0.0
    %270 = vmatpush2.msra.mxu0 0.0
    %271 = vmatprep.subr.mxu0 0.0
    %272 = vmatpush2.msra.mxu0 0.0
    %273 = vmatprep.subr.mxu0 0.0
    %274 = vmatpush2.msra.mxu0 0.0
    %275 = vmatprep.subr.mxu0 0.0
    %276 = vmatpush2.msra.mxu0 0.0
    %277 = vmatprep.subr.mxu0 0.0
    %278 = vmatpush2.msra.mxu0 0.0
    %279 = vmatprep.subr.mxu0 0.0
    %280 = vmatpush2.msra.mxu0 0.0
    %281 = vmatprep.mubr.f32.mxu0 0.0
    %282 = vmatmul.mubr.f32.gmra.mxu0 %v215
    %v283 = vpop.f32.mrf.mxu0
    %v284 = vadd.f32 %v176, %v283
    %v285 = vpop.f32.mrf.mxu0
    %286 = vdwg.mxu0
    %287 = vmatprep.subr.mxu0 0.0
    %288 = vmatpush1.msra.mxu0 0.0
    %289 = vmatprep.subr.mxu0 0.0
    %290 = vmatpush1.msra.mxu0 0.0
    %291 = vmatprep.subr.mxu0 0.0
    %292 = vmatpush1.msra.mxu0 0.0
    %293 = vmatprep.subr.mxu0 0.0
    %294 = vmatpush1.msra.mxu0 0.0
    %295 = vmatprep.subr.mxu0 0.0
    %296 = vmatpush1.msra.mxu0 0.0
    %297 = vmatprep.subr.mxu0 0.0
    %298 = vmatpush1.msra.mxu0 0.0
    %299 = vmatprep.subr.mxu0 0.0
    %300 = vmatpush1.msra.mxu0 0.0
    %301 = vmatprep.subr.mxu0 0.0
    %302 = vmatpush1.msra.mxu0 0.0
    %303 = vmatprep.subr.mxu0 0.0
    %304 = vmatpush1.msra.mxu0 0.0
    %305 = vmatprep.subr.mxu0 0.0
    %306 = vmatpush1.msra.mxu0 0.0
    %307 = vmatprep.subr.mxu0 0.0
    %308 = vmatpush1.msra.mxu0 0.0
    %309 = vmatprep.subr.mxu0 0.0
    %310 = vmatpush1.msra.mxu0 0.0
    %311 = vmatprep.subr.mxu0 0.0
    %312 = vmatpush1.msra.mxu0 %v44
    %313 = vmatprep.subr.mxu0 0.0
    %314 = vmatpush1.msra.mxu0 %v43
    %315 = vmatprep.subr.mxu0 0.0
    %316 = vmatpush1.msra.mxu0 %v42
    %317 = vmatprep.subr.mxu0 0.0
    %318 = vmatpush1.msra.mxu0 %v41
    %319 = vmatprep.subr.mxu0 0.0
    %320 = vmatpush2.msra.mxu0 0.0
    %321 = vmatprep.subr.mxu0 0.0
    %322 = vmatpush2.msra.mxu0 0.0
    %323 = vmatprep.subr.mxu0 0.0
    %324 = vmatpush2.msra.mxu0 0.0
    %325 = vmatprep.subr.mxu0 0.0
    %326 = vmatpush2.msra.mxu0 0.0
    %327 = vmatprep.subr.mxu0 0.0
    %328 = vmatpush2.msra.mxu0 0.0
    %329 = vmatprep.subr.mxu0 0.0
    %330 = vmatpush2.msra.mxu0 0.0
    %331 = vmatprep.subr.mxu0 0.0
    %332 = vmatpush2.msra.mxu0 0.0
    %333 = vmatprep.subr.mxu0 0.0
    %334 = vmatpush2.msra.mxu0 0.0
    %335 = vmatprep.subr.mxu0 0.0
    %336 = vmatpush2.msra.mxu0 0.0
    %337 = vmatprep.subr.mxu0 0.0
    %338 = vmatpush2.msra.mxu0 0.0
    %339 = vmatprep.subr.mxu0 0.0
    %340 = vmatpush2.msra.mxu0 0.0
    %341 = vmatprep.subr.mxu0 0.0
    %342 = vmatpush2.msra.mxu0 0.0
    %343 = vmatprep.subr.mxu0 0.0
    %344 = vmatpush2.msra.mxu0 0.0
    %345 = vmatprep.subr.mxu0 0.0
    %346 = vmatpush2.msra.mxu0 0.0
    %347 = vmatprep.subr.mxu0 0.0
    %348 = vmatpush2.msra.mxu0 0.0
    %349 = vmatprep.subr.mxu0 0.0
    %350 = vmatpush2.msra.mxu0 0.0
    %351 = vmatprep.mubr.f32.mxu0 0.0
    %352 = vmatmul.mubr.f32.gmra.mxu0 %v215
    %v353 = vpop.f32.mrf.mxu0
    %v354 = vadd.f32 %v180, %v353
    %v355 = vpop.f32.mrf.mxu0
    %356 = vdwg.mxu0
    %357 = vmatprep.subr.mxu0 0.0
    %358 = vmatpush1.msra.mxu0 0.0
    %359 = vmatprep.subr.mxu0 0.0
    %360 = vmatpush1.msra.mxu0 0.0
    %361 = vmatprep.subr.mxu0 0.0
    %362 = vmatpush1.msra.mxu0 0.0
    %363 = vmatprep.subr.mxu0 0.0
    %364 = vmatpush1.msra.mxu0 0.0
    %365 = vmatprep.subr.mxu0 0.0
    %366 = vmatpush1.msra.mxu0 0.0
    %367 = vmatprep.subr.mxu0 0.0
    %368 = vmatpush1.msra.mxu0 0.0
    %369 = vmatprep.subr.mxu0 0.0
    %370 = vmatpush1.msra.mxu0 0.0
    %371 = vmatprep.subr.mxu0 0.0
    %372 = vmatpush1.msra.mxu0 0.0
    %373 = vmatprep.subr.mxu0 0.0
    %374 = vmatpush1.msra.mxu0 0.0
    %375 = vmatprep.subr.mxu0 0.0
    %376 = vmatpush1.msra.mxu0 0.0
    %377 = vmatprep.subr.mxu0 0.0
    %378 = vmatpush1.msra.mxu0 0.0
    %379 = vmatprep.subr.mxu0 0.0
    %380 = vmatpush1.msra.mxu0 0.0
    %381 = vmatprep.subr.mxu0 0.0
    %382 = vmatpush1.msra.mxu0 %v48
    %383 = vmatprep.subr.mxu0 0.0
    %384 = vmatpush1.msra.mxu0 %v47
    %385 = vmatprep.subr.mxu0 0.0
    %386 = vmatpush1.msra.mxu0 %v46
    %387 = vmatprep.subr.mxu0 0.0
    %388 = vmatpush1.msra.mxu0 %v45
    %389 = vmatprep.subr.mxu0 0.0
    %390 = vmatpush2.msra.mxu0 0.0
    %391 = vmatprep.subr.mxu0 0.0
    %392 = vmatpush2.msra.mxu0 0.0
    %393 = vmatprep.subr.mxu0 0.0
    %394 = vmatpush2.msra.mxu0 0.0
    %395 = vmatprep.subr.mxu0 0.0
    %396 = vmatpush2.msra.mxu0 0.0
    %397 = vmatprep.subr.mxu0 0.0
    %398 = vmatpush2.msra.mxu0 0.0
    %399 = vmatprep.subr.mxu0 0.0
    %400 = vmatpush2.msra.mxu0 0.0
    %401 = vmatprep.subr.mxu0 0.0
    %402 = vmatpush2.msra.mxu0 0.0
    %403 = vmatprep.subr.mxu0 0.0
    %404 = vmatpush2.msra.mxu0 0.0
    %405 = vmatprep.subr.mxu0 0.0
    %406 = vmatpush2.msra.mxu0 0.0
    %407 = vmatprep.subr.mxu0 0.0
    %408 = vmatpush2.msra.mxu0 0.0
    %409 = vmatprep.subr.mxu0 0.0
    %410 = vmatpush2.msra.mxu0 0.0
    %411 = vmatprep.subr.mxu0 0.0
    %412 = vmatpush2.msra.mxu0 0.0
    %413 = vmatprep.subr.mxu0 0.0
    %414 = vmatpush2.msra.mxu0 0.0
    %415 = vmatprep.subr.mxu0 0.0
    %416 = vmatpush2.msra.mxu0 0.0
    %417 = vmatprep.subr.mxu0 0.0
    %418 = vmatpush2.msra.mxu0 0.0
    %419 = vmatprep.subr.mxu0 0.0
    %420 = vmatpush2.msra.mxu0 0.0
    %421 = vmatprep.mubr.f32.mxu0 0.0
    %422 = vmatmul.mubr.f32.gmra.mxu0 %v215
    %v423 = vpop.f32.mrf.mxu0
    %v424 = vadd.f32 %v184, %v423
    %v425 = vpop.f32.mrf.mxu0
    %426 = vdwg.mxu0
    %427 = vmatprep.subr.mxu0 0.0
    %428 = vmatpush1.msra.mxu0 0.0
    %429 = vmatprep.subr.mxu0 0.0
    %430 = vmatpush1.msra.mxu0 0.0
    %431 = vmatprep.subr.mxu0 0.0
    %432 = vmatpush1.msra.mxu0 0.0
    %433 = vmatprep.subr.mxu0 0.0
    %434 = vmatpush1.msra.mxu0 0.0
    %435 = vmatprep.subr.mxu0 0.0
    %436 = vmatpush1.msra.mxu0 0.0
    %437 = vmatprep.subr.mxu0 0.0
    %438 = vmatpush1.msra.mxu0 0.0
    %439 = vmatprep.subr.mxu0 0.0
    %440 = vmatpush1.msra.mxu0 0.0
    %441 = vmatprep.subr.mxu0 0.0
    %442 = vmatpush1.msra.mxu0 0.0
    %443 = vmatprep.subr.mxu0 0.0
    %444 = vmatpush1.msra.mxu0 0.0
    %445 = vmatprep.subr.mxu0 0.0
    %446 = vmatpush1.msra.mxu0 0.0
    %447 = vmatprep.subr.mxu0 0.0
    %448 = vmatpush1.msra.mxu0 0.0
    %449 = vmatprep.subr.mxu0 0.0
    %450 = vmatpush1.msra.mxu0 0.0
    %451 = vmatprep.subr.mxu0 0.0
    %452 = vmatpush1.msra.mxu0 %v52
    %453 = vmatprep.subr.mxu0 0.0
    %454 = vmatpush1.msra.mxu0 %v51
    %455 = vmatprep.subr.mxu0 0.0
    %456 = vmatpush1.msra.mxu0 %v50
    %457 = vmatprep.subr.mxu0 0.0
    %458 = vmatpush1.msra.mxu0 %v49
    %459 = vmatprep.subr.mxu0 0.0
    %460 = vmatpush2.msra.mxu0 0.0
    %461 = vmatprep.subr.mxu0 0.0
    %462 = vmatpush2.msra.mxu0 0.0
    %463 = vmatprep.subr.mxu0 0.0
    %464 = vmatpush2.msra.mxu0 0.0
    %465 = vmatprep.subr.mxu0 0.0
    %466 = vmatpush2.msra.mxu0 0.0
    %467 = vmatprep.subr.mxu0 0.0
    %468 = vmatpush2.msra.mxu0 0.0
    %469 = vmatprep.subr.mxu0 0.0
    %470 = vmatpush2.msra.mxu0 0.0
    %471 = vmatprep.subr.mxu0 0.0
    %472 = vmatpush2.msra.mxu0 0.0
    %473 = vmatprep.subr.mxu0 0.0
    %474 = vmatpush2.msra.mxu0 0.0
    %475 = vmatprep.subr.mxu0 0.0
    %476 = vmatpush2.msra.mxu0 0.0
    %477 = vmatprep.subr.mxu0 0.0
    %478 = vmatpush2.msra.mxu0 0.0
    %479 = vmatprep.subr.mxu0 0.0
    %480 = vmatpush2.msra.mxu0 0.0
    %481 = vmatprep.subr.mxu0 0.0
    %482 = vmatpush2.msra.mxu0 0.0
    %483 = vmatprep.subr.mxu0 0.0
    %484 = vmatpush2.msra.mxu0 0.0
    %485 = vmatprep.subr.mxu0 0.0
    %486 = vmatpush2.msra.mxu0 0.0
    %487 = vmatprep.subr.mxu0 0.0
    %488 = vmatpush2.msra.mxu0 0.0
    %489 = vmatprep.subr.mxu0 0.0
    %490 = vmatpush2.msra.mxu0 0.0
    %491 = vmatprep.mubr.f32.mxu0 0.0
    %492 = vmatmul.mubr.f32.gmra.mxu0 %v215
    %v493 = vpop.f32.mrf.mxu0
    %v494 = vadd.f32 %v188, %v493
    %v495 = vpop.f32.mrf.mxu0
    %496 = vdwg.mxu0
    %497 = vmatprep.subr.mxu0 0.0
    %498 = vmatpush1.msra.mxu0 0.0
    %499 = vmatprep.subr.mxu0 0.0
    %500 = vmatpush1.msra.mxu0 0.0
    %501 = vmatprep.subr.mxu0 0.0
    %502 = vmatpush1.msra.mxu0 0.0
    %503 = vmatprep.subr.mxu0 0.0
    %504 = vmatpush1.msra.mxu0 0.0
    %505 = vmatprep.subr.mxu0 0.0
    %506 = vmatpush1.msra.mxu0 0.0
    %507 = vmatprep.subr.mxu0 0.0
    %508 = vmatpush1.msra.mxu0 0.0
    %509 = vmatprep.subr.mxu0 0.0
    %510 = vmatpush1.msra.mxu0 0.0
    %511 = vmatprep.subr.mxu0 0.0
    %512 = vmatpush1.msra.mxu0 0.0
    %513 = vmatprep.subr.mxu0 0.0
    %514 = vmatpush1.msra.mxu0 0.0
    %515 = vmatprep.subr.mxu0 0.0
    %516 = vmatpush1.msra.mxu0 0.0
    %517 = vmatprep.subr.mxu0 0.0
    %518 = vmatpush1.msra.mxu0 0.0
    %519 = vmatprep.subr.mxu0 0.0
    %520 = vmatpush1.msra.mxu0 0.0
    %521 = vmatprep.subr.mxu0 0.0
    %522 = vmatpush1.msra.mxu0 %v56
    %523 = vmatprep.subr.mxu0 0.0
    %524 = vmatpush1.msra.mxu0 %v55
    %525 = vmatprep.subr.mxu0 0.0
    %526 = vmatpush1.msra.mxu0 %v54
    %527 = vmatprep.subr.mxu0 0.0
    %528 = vmatpush1.msra.mxu0 %v53
    %529 = vmatprep.subr.mxu0 0.0
    %530 = vmatpush2.msra.mxu0 0.0
    %531 = vmatprep.subr.mxu0 0.0
    %532 = vmatpush2.msra.mxu0 0.0
    %533 = vmatprep.subr.mxu0 0.0
    %534 = vmatpush2.msra.mxu0 0.0
    %535 = vmatprep.subr.mxu0 0.0
    %536 = vmatpush2.msra.mxu0 0.0
    %537 = vmatprep.subr.mxu0 0.0
    %538 = vmatpush2.msra.mxu0 0.0
    %539 = vmatprep.subr.mxu0 0.0
    %540 = vmatpush2.msra.mxu0 0.0
    %541 = vmatprep.subr.mxu0 0.0
    %542 = vmatpush2.msra.mxu0 0.0
    %543 = vmatprep.subr.mxu0 0.0
    %544 = vmatpush2.msra.mxu0 0.0
    %545 = vmatprep.subr.mxu0 0.0
    %546 = vmatpush2.msra.mxu0 0.0
    %547 = vmatprep.subr.mxu0 0.0
    %548 = vmatpush2.msra.mxu0 0.0
    %549 = vmatprep.subr.mxu0 0.0
    %550 = vmatpush2.msra.mxu0 0.0
    %551 = vmatprep.subr.mxu0 0.0
    %552 = vmatpush2.msra.mxu0 0.0
    %553 = vmatprep.subr.mxu0 0.0
    %554 = vmatpush2.msra.mxu0 0.0
    %555 = vmatprep.subr.mxu0 0.0
    %556 = vmatpush2.msra.mxu0 0.0
    %557 = vmatprep.subr.mxu0 0.0
    %558 = vmatpush2.msra.mxu0 0.0
    %559 = vmatprep.subr.mxu0 0.0
    %560 = vmatpush2.msra.mxu0 0.0
    %561 = vmatprep.mubr.f32.mxu0 0.0
    %562 = vmatmul.mubr.f32.gmra.mxu0 %v215
    %v563 = vpop.f32.mrf.mxu0
    %v564 = vadd.f32 %v192, %v563
    %v565 = vpop.f32.mrf.mxu0
    %566 = vdwg.mxu0
    %567 = vmatprep.subr.mxu0 0.0
    %568 = vmatpush1.msra.mxu0 0.0
    %569 = vmatprep.subr.mxu0 0.0
    %570 = vmatpush1.msra.mxu0 0.0
    %571 = vmatprep.subr.mxu0 0.0
    %572 = vmatpush1.msra.mxu0 0.0
    %573 = vmatprep.subr.mxu0 0.0
    %574 = vmatpush1.msra.mxu0 0.0
    %575 = vmatprep.subr.mxu0 0.0
    %576 = vmatpush1.msra.mxu0 0.0
    %577 = vmatprep.subr.mxu0 0.0
    %578 = vmatpush1.msra.mxu0 0.0
    %579 = vmatprep.subr.mxu0 0.0
    %580 = vmatpush1.msra.mxu0 0.0
    %581 = vmatprep.subr.mxu0 0.0
    %582 = vmatpush1.msra.mxu0 0.0
    %583 = vmatprep.subr.mxu0 0.0
    %584 = vmatpush1.msra.mxu0 0.0
    %585 = vmatprep.subr.mxu0 0.0
    %586 = vmatpush1.msra.mxu0 0.0
    %587 = vmatprep.subr.mxu0 0.0
    %588 = vmatpush1.msra.mxu0 0.0
    %589 = vmatprep.subr.mxu0 0.0
    %590 = vmatpush1.msra.mxu0 0.0
    %591 = vmatprep.subr.mxu0 0.0
    %592 = vmatpush1.msra.mxu0 %v60
    %593 = vmatprep.subr.mxu0 0.0
    %594 = vmatpush1.msra.mxu0 %v59
    %595 = vmatprep.subr.mxu0 0.0
    %596 = vmatpush1.msra.mxu0 %v58
    %597 = vmatprep.subr.mxu0 0.0
    %598 = vmatpush1.msra.mxu0 %v57
    %599 = vmatprep.subr.mxu0 0.0
    %600 = vmatpush2.msra.mxu0 0.0
    %601 = vmatprep.subr.mxu0 0.0
    %602 = vmatpush2.msra.mxu0 0.0
    %603 = vmatprep.subr.mxu0 0.0
    %604 = vmatpush2.msra.mxu0 0.0
    %605 = vmatprep.subr.mxu0 0.0
    %606 = vmatpush2.msra.mxu0 0.0
    %607 = vmatprep.subr.mxu0 0.0
    %608 = vmatpush2.msra.mxu0 0.0
    %609 = vmatprep.subr.mxu0 0.0
    %610 = vmatpush2.msra.mxu0 0.0
    %611 = vmatprep.subr.mxu0 0.0
    %612 = vmatpush2.msra.mxu0 0.0
    %613 = vmatprep.subr.mxu0 0.0
    %614 = vmatpush2.msra.mxu0 0.0
    %615 = vmatprep.subr.mxu0 0.0
    %616 = vmatpush2.msra.mxu0 0.0
    %617 = vmatprep.subr.mxu0 0.0
    %618 = vmatpush2.msra.mxu0 0.0
    %619 = vmatprep.subr.mxu0 0.0
    %620 = vmatpush2.msra.mxu0 0.0
    %621 = vmatprep.subr.mxu0 0.0
    %622 = vmatpush2.msra.mxu0 0.0
    %623 = vmatprep.subr.mxu0 0.0
    %624 = vmatpush2.msra.mxu0 0.0
    %625 = vmatprep.subr.mxu0 0.0
    %626 = vmatpush2.msra.mxu0 0.0
    %627 = vmatprep.subr.mxu0 0.0
    %628 = vmatpush2.msra.mxu0 0.0
    %629 = vmatprep.subr.mxu0 0.0
    %630 = vmatpush2.msra.mxu0 0.0
    %631 = vmatprep.mubr.f32.mxu0 0.0
    %632 = vmatmul.mubr.f32.gmra.mxu0 %v215
    %v633 = vpop.f32.mrf.mxu0
    %v634 = vadd.f32 %v196, %v633
    %v635 = vpop.f32.mrf.mxu0
    %636 = vdwg.mxu0
    %637 = vmatprep.subr.mxu0 0.0
    %638 = vmatpush1.msra.mxu0 0.0
    %639 = vmatprep.subr.mxu0 0.0
    %640 = vmatpush1.msra.mxu0 0.0
    %641 = vmatprep.subr.mxu0 0.0
    %642 = vmatpush1.msra.mxu0 0.0
    %643 = vmatprep.subr.mxu0 0.0
    %644 = vmatpush1.msra.mxu0 0.0
    %645 = vmatprep.subr.mxu0 0.0
    %646 = vmatpush1.msra.mxu0 0.0
    %647 = vmatprep.subr.mxu0 0.0
    %648 = vmatpush1.msra.mxu0 0.0
    %649 = vmatprep.subr.mxu0 0.0
    %650 = vmatpush1.msra.mxu0 0.0
    %651 = vmatprep.subr.mxu0 0.0
    %652 = vmatpush1.msra.mxu0 0.0
    %653 = vmatprep.subr.mxu0 0.0
    %654 = vmatpush1.msra.mxu0 0.0
    %655 = vmatprep.subr.mxu0 0.0
    %656 = vmatpush1.msra.mxu0 0.0
    %657 = vmatprep.subr.mxu0 0.0
    %658 = vmatpush1.msra.mxu0 0.0
    %659 = vmatprep.subr.mxu0 0.0
    %660 = vmatpush1.msra.mxu0 0.0
    %661 = vmatprep.subr.mxu0 0.0
    %662 = vmatpush1.msra.mxu0 %v64
    %663 = vmatprep.subr.mxu0 0.0
    %664 = vmatpush1.msra.mxu0 %v63
    %665 = vmatprep.subr.mxu0 0.0
    %666 = vmatpush1.msra.mxu0 %v62
    %667 = vmatprep.subr.mxu0 0.0
    %668 = vmatpush1.msra.mxu0 %v61
    %669 = vmatprep.subr.mxu0 0.0
    %670 = vmatpush2.msra.mxu0 0.0
    %671 = vmatprep.subr.mxu0 0.0
    %672 = vmatpush2.msra.mxu0 0.0
    %673 = vmatprep.subr.mxu0 0.0
    %674 = vmatpush2.msra.mxu0 0.0
    %675 = vmatprep.subr.mxu0 0.0
    %676 = vmatpush2.msra.mxu0 0.0
    %677 = vmatprep.subr.mxu0 0.0
    %678 = vmatpush2.msra.mxu0 0.0
    %679 = vmatprep.subr.mxu0 0.0
    %680 = vmatpush2.msra.mxu0 0.0
    %681 = vmatprep.subr.mxu0 0.0
    %682 = vmatpush2.msra.mxu0 0.0
    %683 = vmatprep.subr.mxu0 0.0
    %684 = vmatpush2.msra.mxu0 0.0
    %685 = vmatprep.subr.mxu0 0.0
    %686 = vmatpush2.msra.mxu0 0.0
    %687 = vmatprep.subr.mxu0 0.0
    %688 = vmatpush2.msra.mxu0 0.0
    %689 = vmatprep.subr.mxu0 0.0
    %690 = vmatpush2.msra.mxu0 0.0
    %691 = vmatprep.subr.mxu0 0.0
    %692 = vmatpush2.msra.mxu0 0.0
    %693 = vmatprep.subr.mxu0 0.0
    %694 = vmatpush2.msra.mxu0 0.0
    %695 = vmatprep.subr.mxu0 0.0
    %696 = vmatpush2.msra.mxu0 0.0
    %697 = vmatprep.subr.mxu0 0.0
    %698 = vmatpush2.msra.mxu0 0.0
    %699 = vmatprep.subr.mxu0 0.0
    %700 = vmatpush2.msra.mxu0 0.0
    %701 = vmatprep.mubr.f32.mxu0 0.0
    %702 = vmatmul.mubr.f32.gmra.mxu0 %v215
    %v703 = vpop.f32.mrf.mxu0
    %v704 = vadd.f32 %v200, %v703
    %v705 = vpop.f32.mrf.mxu0
    %706 = vdwg.mxu0
    %707 = vmatprep.subr.mxu0 0.0
    %708 = vmatpush1.msra.mxu0 0.0
    %709 = vmatprep.subr.mxu0 0.0
    %710 = vmatpush1.msra.mxu0 0.0
    %711 = vmatprep.subr.mxu0 0.0
    %712 = vmatpush1.msra.mxu0 0.0
    %713 = vmatprep.subr.mxu0 0.0
    %714 = vmatpush1.msra.mxu0 0.0
    %715 = vmatprep.subr.mxu0 0.0
    %716 = vmatpush1.msra.mxu0 0.0
    %717 = vmatprep.subr.mxu0 0.0
    %718 = vmatpush1.msra.mxu0 0.0
    %719 = vmatprep.subr.mxu0 0.0
    %720 = vmatpush1.msra.mxu0 0.0
    %721 = vmatprep.subr.mxu0 0.0
    %722 = vmatpush1.msra.mxu0 0.0
    %723 = vmatprep.subr.mxu0 0.0
    %724 = vmatpush1.msra.mxu0 0.0
    %725 = vmatprep.subr.mxu0 0.0
    %726 = vmatpush1.msra.mxu0 0.0
    %727 = vmatprep.subr.mxu0 0.0
    %728 = vmatpush1.msra.mxu0 0.0
    %729 = vmatprep.subr.mxu0 0.0
    %730 = vmatpush1.msra.mxu0 0.0
    %731 = vmatprep.subr.mxu0 0.0
    %732 = vmatpush1.msra.mxu0 %v68
    %733 = vmatprep.subr.mxu0 0.0
    %734 = vmatpush1.msra.mxu0 %v67
    %735 = vmatprep.subr.mxu0 0.0
    %736 = vmatpush1.msra.mxu0 %v66
    %737 = vmatprep.subr.mxu0 0.0
    %738 = vmatpush1.msra.mxu0 %v65
    %739 = vmatprep.subr.mxu0 0.0
    %740 = vmatpush2.msra.mxu0 0.0
    %741 = vmatprep.subr.mxu0 0.0
    %742 = vmatpush2.msra.mxu0 0.0
    %743 = vmatprep.subr.mxu0 0.0
    %744 = vmatpush2.msra.mxu0 0.0
    %745 = vmatprep.subr.mxu0 0.0
    %746 = vmatpush2.msra.mxu0 0.0
    %747 = vmatprep.subr.mxu0 0.0
    %748 = vmatpush2.msra.mxu0 0.0
    %749 = vmatprep.subr.mxu0 0.0
    %750 = vmatpush2.msra.mxu0 0.0
    %751 = vmatprep.subr.mxu0 0.0
    %752 = vmatpush2.msra.mxu0 0.0
    %753 = vmatprep.subr.mxu0 0.0
    %754 = vmatpush2.msra.mxu0 0.0
    %755 = vmatprep.subr.mxu0 0.0
    %756 = vmatpush2.msra.mxu0 0.0
    %757 = vmatprep.subr.mxu0 0.0
    %758 = vmatpush2.msra.mxu0 0.0
    %759 = vmatprep.subr.mxu0 0.0
    %760 = vmatpush2.msra.mxu0 0.0
    %761 = vmatprep.subr.mxu0 0.0
    %762 = vmatpush2.msra.mxu0 0.0
    %763 = vmatprep.subr.mxu0 0.0
    %764 = vmatpush2.msra.mxu0 0.0
    %765 = vmatprep.subr.mxu0 0.0
    %766 = vmatpush2.msra.mxu0 0.0
    %767 = vmatprep.subr.mxu0 0.0
    %768 = vmatpush2.msra.mxu0 0.0
    %769 = vmatprep.subr.mxu0 0.0
    %770 = vmatpush2.msra.mxu0 0.0
    %771 = vmatprep.mubr.f32.mxu0 0.0
    %772 = vmatmul.mubr.f32.gmra.mxu0 %v215
    %v773 = vpop.f32.mrf.mxu0
    %v774 = vadd.f32 %v204, %v773
    %v775 = vpop.f32.mrf.mxu0
    %776 = vdwg.mxu0
    %v778 = vsel %vm213, %v36, 0
    %780 = vmatprep.subr.mxu0 0.0
    %781 = vmatpush1.msra.mxu0 0.0
    %782 = vmatprep.subr.mxu0 0.0
    %783 = vmatpush1.msra.mxu0 0.0
    %784 = vmatprep.subr.mxu0 0.0
    %785 = vmatpush1.msra.mxu0 0.0
    %786 = vmatprep.subr.mxu0 0.0
    %787 = vmatpush1.msra.mxu0 0.0
    %788 = vmatprep.subr.mxu0 0.0
    %789 = vmatpush1.msra.mxu0 0.0
    %790 = vmatprep.subr.mxu0 0.0
    %791 = vmatpush1.msra.mxu0 0.0
    %792 = vmatprep.subr.mxu0 0.0
    %793 = vmatpush1.msra.mxu0 0.0
    %794 = vmatprep.subr.mxu0 0.0
    %795 = vmatpush1.msra.mxu0 0.0
    %796 = vmatprep.subr.mxu0 0.0
    %797 = vmatpush1.msra.mxu0 0.0
    %798 = vmatprep.subr.mxu0 0.0
    %799 = vmatpush1.msra.mxu0 0.0
    %800 = vmatprep.subr.mxu0 0.0
    %801 = vmatpush1.msra.mxu0 0.0
    %802 = vmatprep.subr.mxu0 0.0
    %803 = vmatpush1.msra.mxu0 0.0
    %804 = vmatprep.subr.mxu0 0.0
    %805 = vmatpush1.msra.mxu0 %v40
    %806 = vmatprep.subr.mxu0 0.0
    %807 = vmatpush1.msra.mxu0 %v39
    %808 = vmatprep.subr.mxu0 0.0
    %809 = vmatpush1.msra.mxu0 %v38
    %810 = vmatprep.subr.mxu0 0.0
    %811 = vmatpush1.msra.mxu0 %v37
    %812 = vmatprep.subr.mxu0 0.0
    %813 = vmatpush2.msra.mxu0 0.0
    %814 = vmatprep.subr.mxu0 0.0
    %815 = vmatpush2.msra.mxu0 0.0
    %816 = vmatprep.subr.mxu0 0.0
    %817 = vmatpush2.msra.mxu0 0.0
    %818 = vmatprep.subr.mxu0 0.0
    %819 = vmatpush2.msra.mxu0 0.0
    %820 = vmatprep.subr.mxu0 0.0
    %821 = vmatpush2.msra.mxu0 0.0
    %822 = vmatprep.subr.mxu0 0.0
    %823 = vmatpush2.msra.mxu0 0.0
    %824 = vmatprep.subr.mxu0 0.0
    %825 = vmatpush2.msra.mxu0 0.0
    %826 = vmatprep.subr.mxu0 0.0
    %827 = vmatpush2.msra.mxu0 0.0
    %828 = vmatprep.subr.mxu0 0.0
    %829 = vmatpush2.msra.mxu0 0.0
    %830 = vmatprep.subr.mxu0 0.0
    %831 = vmatpush2.msra.mxu0 0.0
    %832 = vmatprep.subr.mxu0 0.0
    %833 = vmatpush2.msra.mxu0 0.0
    %834 = vmatprep.subr.mxu0 0.0
    %835 = vmatpush2.msra.mxu0 0.0
    %836 = vmatprep.subr.mxu0 0.0
    %837 = vmatpush2.msra.mxu0 0.0
    %838 = vmatprep.subr.mxu0 0.0
    %839 = vmatpush2.msra.mxu0 0.0
    %840 = vmatprep.subr.mxu0 0.0
    %841 = vmatpush2.msra.mxu0 0.0
    %842 = vmatprep.subr.mxu0 0.0
    %843 = vmatpush2.msra.mxu0 0.0
    %844 = vmatprep.mubr.f32.mxu0 0.0
    %845 = vmatmul.mubr.f32.gmra.mxu0 %v778
    %v846 = vpop.f32.mrf.mxu0
    %v847 = vadd.f32 %v176, %v846
    %v848 = vpop.f32.mrf.mxu0
    %849 = vdwg.mxu0
    %850 = vmatprep.subr.mxu0 0.0
    %851 = vmatpush1.msra.mxu0 0.0
    %852 = vmatprep.subr.mxu0 0.0
    %853 = vmatpush1.msra.mxu0 0.0
    %854 = vmatprep.subr.mxu0 0.0
    %855 = vmatpush1.msra.mxu0 0.0
    %856 = vmatprep.subr.mxu0 0.0
    %857 = vmatpush1.msra.mxu0 0.0
    %858 = vmatprep.subr.mxu0 0.0
    %859 = vmatpush1.msra.mxu0 0.0
    %860 = vmatprep.subr.mxu0 0.0
    %861 = vmatpush1.msra.mxu0 0.0
    %862 = vmatprep.subr.mxu0 0.0
    %863 = vmatpush1.msra.mxu0 0.0
    %864 = vmatprep.subr.mxu0 0.0
    %865 = vmatpush1.msra.mxu0 0.0
    %866 = vmatprep.subr.mxu0 0.0
    %867 = vmatpush1.msra.mxu0 0.0
    %868 = vmatprep.subr.mxu0 0.0
    %869 = vmatpush1.msra.mxu0 0.0
    %870 = vmatprep.subr.mxu0 0.0
    %871 = vmatpush1.msra.mxu0 0.0
    %872 = vmatprep.subr.mxu0 0.0
    %873 = vmatpush1.msra.mxu0 0.0
    %874 = vmatprep.subr.mxu0 0.0
    %875 = vmatpush1.msra.mxu0 %v44
    %876 = vmatprep.subr.mxu0 0.0
    %877 = vmatpush1.msra.mxu0 %v43
    %878 = vmatprep.subr.mxu0 0.0
    %879 = vmatpush1.msra.mxu0 %v42
    %880 = vmatprep.subr.mxu0 0.0
    %881 = vmatpush1.msra.mxu0 %v41
    %882 = vmatprep.subr.mxu0 0.0
    %883 = vmatpush2.msra.mxu0 0.0
    %884 = vmatprep.subr.mxu0 0.0
    %885 = vmatpush2.msra.mxu0 0.0
    %886 = vmatprep.subr.mxu0 0.0
    %887 = vmatpush2.msra.mxu0 0.0
    %888 = vmatprep.subr.mxu0 0.0
    %889 = vmatpush2.msra.mxu0 0.0
    %890 = vmatprep.subr.mxu0 0.0
    %891 = vmatpush2.msra.mxu0 0.0
    %892 = vmatprep.subr.mxu0 0.0
    %893 = vmatpush2.msra.mxu0 0.0
    %894 = vmatprep.subr.mxu0 0.0
    %895 = vmatpush2.msra.mxu0 0.0
    %896 = vmatprep.subr.mxu0 0.0
    %897 = vmatpush2.msra.mxu0 0.0
    %898 = vmatprep.subr.mxu0 0.0
    %899 = vmatpush2.msra.mxu0 0.0
    %900 = vmatprep.subr.mxu0 0.0
    %901 = vmatpush2.msra.mxu0 0.0
    %902 = vmatprep.subr.mxu0 0.0
    %903 = vmatpush2.msra.mxu0 0.0
    %904 = vmatprep.subr.mxu0 0.0
    %905 = vmatpush2.msra.mxu0 0.0
    %906 = vmatprep.subr.mxu0 0.0
    %907 = vmatpush2.msra.mxu0 0.0
    %908 = vmatprep.subr.mxu0 0.0
    %909 = vmatpush2.msra.mxu0 0.0
    %910 = vmatprep.subr.mxu0 0.0
    %911 = vmatpush2.msra.mxu0 0.0
    %912 = vmatprep.subr.mxu0 0.0
    %913 = vmatpush2.msra.mxu0 0.0
    %914 = vmatprep.mubr.f32.mxu0 0.0
    %915 = vmatmul.mubr.f32.gmra.mxu0 %v778
    %v916 = vpop.f32.mrf.mxu0
    %v917 = vadd.f32 %v180, %v916
    %v918 = vpop.f32.mrf.mxu0
    %919 = vdwg.mxu0
    %920 = vmatprep.subr.mxu0 0.0
    %921 = vmatpush1.msra.mxu0 0.0
    %922 = vmatprep.subr.mxu0 0.0
    %923 = vmatpush1.msra.mxu0 0.0
    %924 = vmatprep.subr.mxu0 0.0
    %925 = vmatpush1.msra.mxu0 0.0
    %926 = vmatprep.subr.mxu0 0.0
    %927 = vmatpush1.msra.mxu0 0.0
    %928 = vmatprep.subr.mxu0 0.0
    %929 = vmatpush1.msra.mxu0 0.0
    %930 = vmatprep.subr.mxu0 0.0
    %931 = vmatpush1.msra.mxu0 0.0
    %932 = vmatprep.subr.mxu0 0.0
    %933 = vmatpush1.msra.mxu0 0.0
    %934 = vmatprep.subr.mxu0 0.0
    %935 = vmatpush1.msra.mxu0 0.0
    %936 = vmatprep.subr.mxu0 0.0
    %937 = vmatpush1.msra.mxu0 0.0
    %938 = vmatprep.subr.mxu0 0.0
    %939 = vmatpush1.msra.mxu0 0.0
    %940 = vmatprep.subr.mxu0 0.0
    %941 = vmatpush1.msra.mxu0 0.0
    %942 = vmatprep.subr.mxu0 0.0
    %943 = vmatpush1.msra.mxu0 0.0
    %944 = vmatprep.subr.mxu0 0.0
    %945 = vmatpush1.msra.mxu0 %v48
    %946 = vmatprep.subr.mxu0 0.0
    %947 = vmatpush1.msra.mxu0 %v47
    %948 = vmatprep.subr.mxu0 0.0
    %949 = vmatpush1.msra.mxu0 %v46
    %950 = vmatprep.subr.mxu0 0.0
    %951 = vmatpush1.msra.mxu0 %v45
    %952 = vmatprep.subr.mxu0 0.0
    %953 = vmatpush2.msra.mxu0 0.0
    %954 = vmatprep.subr.mxu0 0.0
    %955 = vmatpush2.msra.mxu0 0.0
    %956 = vmatprep.subr.mxu0 0.0
    %957 = vmatpush2.msra.mxu0 0.0
    %958 = vmatprep.subr.mxu0 0.0
    %959 = vmatpush2.msra.mxu0 0.0
    %960 = vmatprep.subr.mxu0 0.0
    %961 = vmatpush2.msra.mxu0 0.0
    %962 = vmatprep.subr.mxu0 0.0
    %963 = vmatpush2.msra.mxu0 0.0
    %964 = vmatprep.subr.mxu0 0.0
    %965 = vmatpush2.msra.mxu0 0.0
    %966 = vmatprep.subr.mxu0 0.0
    %967 = vmatpush2.msra.mxu0 0.0
    %968 = vmatprep.subr.mxu0 0.0
    %969 = vmatpush2.msra.mxu0 0.0
    %970 = vmatprep.subr.mxu0 0.0
    %971 = vmatpush2.msra.mxu0 0.0
    %972 = vmatprep.subr.mxu0 0.0
    %973 = vmatpush2.msra.mxu0 0.0
    %974 = vmatprep.subr.mxu0 0.0
    %975 = vmatpush2.msra.mxu0 0.0
    %976 = vmatprep.subr.mxu0 0.0
    %977 = vmatpush2.msra.mxu0 0.0
    %978 = vmatprep.subr.mxu0 0.0
    %979 = vmatpush2.msra.mxu0 0.0
    %980 = vmatprep.subr.mxu0 0.0
    %981 = vmatpush2.msra.mxu0 0.0
    %982 = vmatprep.subr.mxu0 0.0
    %983 = vmatpush2.msra.mxu0 0.0
    %984 = vmatprep.mubr.f32.mxu0 0.0
    %985 = vmatmul.mubr.f32.gmra.mxu0 %v778
    %v986 = vpop.f32.mrf.mxu0
    %v987 = vadd.f32 %v184, %v986
    %v988 = vpop.f32.mrf.mxu0
    %989 = vdwg.mxu0
    %990 = vmatprep.subr.mxu0 0.0
    %991 = vmatpush1.msra.mxu0 0.0
    %992 = vmatprep.subr.mxu0 0.0
    %993 = vmatpush1.msra.mxu0 0.0
    %994 = vmatprep.subr.mxu0 0.0
    %995 = vmatpush1.msra.mxu0 0.0
    %996 = vmatprep.subr.mxu0 0.0
    %997 = vmatpush1.msra.mxu0 0.0
    %998 = vmatprep.subr.mxu0 0.0
    %999 = vmatpush1.msra.mxu0 0.0
    %1000 = vmatprep.subr.mxu0 0.0
    %1001 = vmatpush1.msra.mxu0 0.0
    %1002 = vmatprep.subr.mxu0 0.0
    %1003 = vmatpush1.msra.mxu0 0.0
    %1004 = vmatprep.subr.mxu0 0.0
    %1005 = vmatpush1.msra.mxu0 0.0
    %1006 = vmatprep.subr.mxu0 0.0
    %1007 = vmatpush1.msra.mxu0 0.0
    %1008 = vmatprep.subr.mxu0 0.0
    %1009 = vmatpush1.msra.mxu0 0.0
    %1010 = vmatprep.subr.mxu0 0.0
    %1011 = vmatpush1.msra.mxu0 0.0
    %1012 = vmatprep.subr.mxu0 0.0
    %1013 = vmatpush1.msra.mxu0 0.0
    %1014 = vmatprep.subr.mxu0 0.0
    %1015 = vmatpush1.msra.mxu0 %v52
    %1016 = vmatprep.subr.mxu0 0.0
    %1017 = vmatpush1.msra.mxu0 %v51
    %1018 = vmatprep.subr.mxu0 0.0
    %1019 = vmatpush1.msra.mxu0 %v50
    %1020 = vmatprep.subr.mxu0 0.0
    %1021 = vmatpush1.msra.mxu0 %v49
    %1022 = vmatprep.subr.mxu0 0.0
    %1023 = vmatpush2.msra.mxu0 0.0
    %1024 = vmatprep.subr.mxu0 0.0
    %1025 = vmatpush2.msra.mxu0 0.0
    %1026 = vmatprep.subr.mxu0 0.0
    %1027 = vmatpush2.msra.mxu0 0.0
    %1028 = vmatprep.subr.mxu0 0.0
    %1029 = vmatpush2.msra.mxu0 0.0
    %1030 = vmatprep.subr.mxu0 0.0
    %1031 = vmatpush2.msra.mxu0 0.0
    %1032 = vmatprep.subr.mxu0 0.0
    %1033 = vmatpush2.msra.mxu0 0.0
    %1034 = vmatprep.subr.mxu0 0.0
    %1035 = vmatpush2.msra.mxu0 0.0
    %1036 = vmatprep.subr.mxu0 0.0
    %1037 = vmatpush2.msra.mxu0 0.0
    %1038 = vmatprep.subr.mxu0 0.0
    %1039 = vmatpush2.msra.mxu0 0.0
    %1040 = vmatprep.subr.mxu0 0.0
    %1041 = vmatpush2.msra.mxu0 0.0
    %1042 = vmatprep.subr.mxu0 0.0
    %1043 = vmatpush2.msra.mxu0 0.0
    %1044 = vmatprep.subr.mxu0 0.0
    %1045 = vmatpush2.msra.mxu0 0.0
    %1046 = vmatprep.subr.mxu0 0.0
    %1047 = vmatpush2.msra.mxu0 0.0
    %1048 = vmatprep.subr.mxu0 0.0
    %1049 = vmatpush2.msra.mxu0 0.0
    %1050 = vmatprep.subr.mxu0 0.0
    %1051 = vmatpush2.msra.mxu0 0.0
    %1052 = vmatprep.subr.mxu0 0.0
    %1053 = vmatpush2.msra.mxu0 0.0
    %1054 = vmatprep.mubr.f32.mxu0 0.0
    %1055 = vmatmul.mubr.f32.gmra.mxu0 %v778
    %v1056 = vpop.f32.mrf.mxu0
    %v1057 = vadd.f32 %v188, %v1056
    %v1058 = vpop.f32.mrf.mxu0
    %1059 = vdwg.mxu0
    %1060 = vmatprep.subr.mxu0 0.0
    %1061 = vmatpush1.msra.mxu0 0.0
    %1062 = vmatprep.subr.mxu0 0.0
    %1063 = vmatpush1.msra.mxu0 0.0
    %1064 = vmatprep.subr.mxu0 0.0
    %1065 = vmatpush1.msra.mxu0 0.0
    %1066 = vmatprep.subr.mxu0 0.0
    %1067 = vmatpush1.msra.mxu0 0.0
    %1068 = vmatprep.subr.mxu0 0.0
    %1069 = vmatpush1.msra.mxu0 0.0
    %1070 = vmatprep.subr.mxu0 0.0
    %1071 = vmatpush1.msra.mxu0 0.0
    %1072 = vmatprep.subr.mxu0 0.0
    %1073 = vmatpush1.msra.mxu0 0.0
    %1074 = vmatprep.subr.mxu0 0.0
    %1075 = vmatpush1.msra.mxu0 0.0
    %1076 = vmatprep.subr.mxu0 0.0
    %1077 = vmatpush1.msra.mxu0 0.0
    %1078 = vmatprep.subr.mxu0 0.0
    %1079 = vmatpush1.msra.mxu0 0.0
    %1080 = vmatprep.subr.mxu0 0.0
    %1081 = vmatpush1.msra.mxu0 0.0
    %1082 = vmatprep.subr.mxu0 0.0
    %1083 = vmatpush1.msra.mxu0 0.0
    %1084 = vmatprep.subr.mxu0 0.0
    %1085 = vmatpush1.msra.mxu0 %v56
    %1086 = vmatprep.subr.mxu0 0.0
    %1087 = vmatpush1.msra.mxu0 %v55
    %1088 = vmatprep.subr.mxu0 0.0
    %1089 = vmatpush1.msra.mxu0 %v54
    %1090 = vmatprep.subr.mxu0 0.0
    %1091 = vmatpush1.msra.mxu0 %v53
    %1092 = vmatprep.subr.mxu0 0.0
    %1093 = vmatpush2.msra.mxu0 0.0
    %1094 = vmatprep.subr.mxu0 0.0
    %1095 = vmatpush2.msra.mxu0 0.0
    %1096 = vmatprep.subr.mxu0 0.0
    %1097 = vmatpush2.msra.mxu0 0.0
    %1098 = vmatprep.subr.mxu0 0.0
    %1099 = vmatpush2.msra.mxu0 0.0
    %1100 = vmatprep.subr.mxu0 0.0
    %1101 = vmatpush2.msra.mxu0 0.0
    %1102 = vmatprep.subr.mxu0 0.0
    %1103 = vmatpush2.msra.mxu0 0.0
    %1104 = vmatprep.subr.mxu0 0.0
    %1105 = vmatpush2.msra.mxu0 0.0
    %1106 = vmatprep.subr.mxu0 0.0
    %1107 = vmatpush2.msra.mxu0 0.0
    %1108 = vmatprep.subr.mxu0 0.0
    %1109 = vmatpush2.msra.mxu0 0.0
    %1110 = vmatprep.subr.mxu0 0.0
    %1111 = vmatpush2.msra.mxu0 0.0
    %1112 = vmatprep.subr.mxu0 0.0
    %1113 = vmatpush2.msra.mxu0 0.0
    %1114 = vmatprep.subr.mxu0 0.0
    %1115 = vmatpush2.msra.mxu0 0.0
    %1116 = vmatprep.subr.mxu0 0.0
    %1117 = vmatpush2.msra.mxu0 0.0
    %1118 = vmatprep.subr.mxu0 0.0
    %1119 = vmatpush2.msra.mxu0 0.0
    %1120 = vmatprep.subr.mxu0 0.0
    %1121 = vmatpush2.msra.mxu0 0.0
    %1122 = vmatprep.subr.mxu0 0.0
    %1123 = vmatpush2.msra.mxu0 0.0
    %1124 = vmatprep.mubr.f32.mxu0 0.0
    %1125 = vmatmul.mubr.f32.gmra.mxu0 %v778
    %v1126 = vpop.f32.mrf.mxu0
    %v1127 = vadd.f32 %v192, %v1126
    %v1128 = vpop.f32.mrf.mxu0
    %1129 = vdwg.mxu0
    %1130 = vmatprep.subr.mxu0 0.0
    %1131 = vmatpush1.msra.mxu0 0.0
    %1132 = vmatprep.subr.mxu0 0.0
    %1133 = vmatpush1.msra.mxu0 0.0
    %1134 = vmatprep.subr.mxu0 0.0
    %1135 = vmatpush1.msra.mxu0 0.0
    %1136 = vmatprep.subr.mxu0 0.0
    %1137 = vmatpush1.msra.mxu0 0.0
    %1138 = vmatprep.subr.mxu0 0.0
    %1139 = vmatpush1.msra.mxu0 0.0
    %1140 = vmatprep.subr.mxu0 0.0
    %1141 = vmatpush1.msra.mxu0 0.0
    %1142 = vmatprep.subr.mxu0 0.0
    %1143 = vmatpush1.msra.mxu0 0.0
    %1144 = vmatprep.subr.mxu0 0.0
    %1145 = vmatpush1.msra.mxu0 0.0
    %1146 = vmatprep.subr.mxu0 0.0
    %1147 = vmatpush1.msra.mxu0 0.0
    %1148 = vmatprep.subr.mxu0 0.0
    %1149 = vmatpush1.msra.mxu0 0.0
    %1150 = vmatprep.subr.mxu0 0.0
    %1151 = vmatpush1.msra.mxu0 0.0
    %1152 = vmatprep.subr.mxu0 0.0
    %1153 = vmatpush1.msra.mxu0 0.0
    %1154 = vmatprep.subr.mxu0 0.0
    %1155 = vmatpush1.msra.mxu0 %v60
    %1156 = vmatprep.subr.mxu0 0.0
    %1157 = vmatpush1.msra.mxu0 %v59
    %1158 = vmatprep.subr.mxu0 0.0
    %1159 = vmatpush1.msra.mxu0 %v58
    %1160 = vmatprep.subr.mxu0 0.0
    %1161 = vmatpush1.msra.mxu0 %v57
    %1162 = vmatprep.subr.mxu0 0.0
    %1163 = vmatpush2.msra.mxu0 0.0
    %1164 = vmatprep.subr.mxu0 0.0
    %1165 = vmatpush2.msra.mxu0 0.0
    %1166 = vmatprep.subr.mxu0 0.0
    %1167 = vmatpush2.msra.mxu0 0.0
    %1168 = vmatprep.subr.mxu0 0.0
    %1169 = vmatpush2.msra.mxu0 0.0
    %1170 = vmatprep.subr.mxu0 0.0
    %1171 = vmatpush2.msra.mxu0 0.0
    %1172 = vmatprep.subr.mxu0 0.0
    %1173 = vmatpush2.msra.mxu0 0.0
    %1174 = vmatprep.subr.mxu0 0.0
    %1175 = vmatpush2.msra.mxu0 0.0
    %1176 = vmatprep.subr.mxu0 0.0
    %1177 = vmatpush2.msra.mxu0 0.0
    %1178 = vmatprep.subr.mxu0 0.0
    %1179 = vmatpush2.msra.mxu0 0.0
    %1180 = vmatprep.subr.mxu0 0.0
    %1181 = vmatpush2.msra.mxu0 0.0
    %1182 = vmatprep.subr.mxu0 0.0
    %1183 = vmatpush2.msra.mxu0 0.0
    %1184 = vmatprep.subr.mxu0 0.0
    %1185 = vmatpush2.msra.mxu0 0.0
    %1186 = vmatprep.subr.mxu0 0.0
    %1187 = vmatpush2.msra.mxu0 0.0
    %1188 = vmatprep.subr.mxu0 0.0
    %1189 = vmatpush2.msra.mxu0 0.0
    %1190 = vmatprep.subr.mxu0 0.0
    %1191 = vmatpush2.msra.mxu0 0.0
    %1192 = vmatprep.subr.mxu0 0.0
    %1193 = vmatpush2.msra.mxu0 0.0
    %1194 = vmatprep.mubr.f32.mxu0 0.0
    %1195 = vmatmul.mubr.f32.gmra.mxu0 %v778
    %v1196 = vpop.f32.mrf.mxu0
    %v1197 = vadd.f32 %v196, %v1196
    %v1198 = vpop.f32.mrf.mxu0
    %1199 = vdwg.mxu0
    %1200 = vmatprep.subr.mxu0 0.0
    %1201 = vmatpush1.msra.mxu0 0.0
    %1202 = vmatprep.subr.mxu0 0.0
    %1203 = vmatpush1.msra.mxu0 0.0
    %1204 = vmatprep.subr.mxu0 0.0
    %1205 = vmatpush1.msra.mxu0 0.0
    %1206 = vmatprep.subr.mxu0 0.0
    %1207 = vmatpush1.msra.mxu0 0.0
    %1208 = vmatprep.subr.mxu0 0.0
    %1209 = vmatpush1.msra.mxu0 0.0
    %1210 = vmatprep.subr.mxu0 0.0
    %1211 = vmatpush1.msra.mxu0 0.0
    %1212 = vmatprep.subr.mxu0 0.0
    %1213 = vmatpush1.msra.mxu0 0.0
    %1214 = vmatprep.subr.mxu0 0.0
    %1215 = vmatpush1.msra.mxu0 0.0
    %1216 = vmatprep.subr.mxu0 0.0
    %1217 = vmatpush1.msra.mxu0 0.0
    %1218 = vmatprep.subr.mxu0 0.0
    %1219 = vmatpush1.msra.mxu0 0.0
    %1220 = vmatprep.subr.mxu0 0.0
    %1221 = vmatpush1.msra.mxu0 0.0
    %1222 = vmatprep.subr.mxu0 0.0
    %1223 = vmatpush1.msra.mxu0 0.0
    %1224 = vmatprep.subr.mxu0 0.0
    %1225 = vmatpush1.msra.mxu0 %v64
    %1226 = vmatprep.subr.mxu0 0.0
    %1227 = vmatpush1.msra.mxu0 %v63
    %1228 = vmatprep.subr.mxu0 0.0
    %1229 = vmatpush1.msra.mxu0 %v62
    %1230 = vmatprep.subr.mxu0 0.0
    %1231 = vmatpush1.msra.mxu0 %v61
    %1232 = vmatprep.subr.mxu0 0.0
    %1233 = vmatpush2.msra.mxu0 0.0
    %1234 = vmatprep.subr.mxu0 0.0
    %1235 = vmatpush2.msra.mxu0 0.0
    %1236 = vmatprep.subr.mxu0 0.0
    %1237 = vmatpush2.msra.mxu0 0.0
    %1238 = vmatprep.subr.mxu0 0.0
    %1239 = vmatpush2.msra.mxu0 0.0
    %1240 = vmatprep.subr.mxu0 0.0
    %1241 = vmatpush2.msra.mxu0 0.0
    %1242 = vmatprep.subr.mxu0 0.0
    %1243 = vmatpush2.msra.mxu0 0.0
    %1244 = vmatprep.subr.mxu0 0.0
    %1245 = vmatpush2.msra.mxu0 0.0
    %1246 = vmatprep.subr.mxu0 0.0
    %1247 = vmatpush2.msra.mxu0 0.0
    %1248 = vmatprep.subr.mxu0 0.0
    %1249 = vmatpush2.msra.mxu0 0.0
    %1250 = vmatprep.subr.mxu0 0.0
    %1251 = vmatpush2.msra.mxu0 0.0
    %1252 = vmatprep.subr.mxu0 0.0
    %1253 = vmatpush2.msra.mxu0 0.0
    %1254 = vmatprep.subr.mxu0 0.0
    %1255 = vmatpush2.msra.mxu0 0.0
    %1256 = vmatprep.subr.mxu0 0.0
    %1257 = vmatpush2.msra.mxu0 0.0
    %1258 = vmatprep.subr.mxu0 0.0
    %1259 = vmatpush2.msra.mxu0 0.0
    %1260 = vmatprep.subr.mxu0 0.0
    %1261 = vmatpush2.msra.mxu0 0.0
    %1262 = vmatprep.subr.mxu0 0.0
    %1263 = vmatpush2.msra.mxu0 0.0
    %1264 = vmatprep.mubr.f32.mxu0 0.0
    %1265 = vmatmul.mubr.f32.gmra.mxu0 %v778
    %v1266 = vpop.f32.mrf.mxu0
    %v1267 = vadd.f32 %v200, %v1266
    %v1268 = vpop.f32.mrf.mxu0
    %1269 = vdwg.mxu0
    %1270 = vmatprep.subr.mxu0 0.0
    %1271 = vmatpush1.msra.mxu0 0.0
    %1272 = vmatprep.subr.mxu0 0.0
    %1273 = vmatpush1.msra.mxu0 0.0
    %1274 = vmatprep.subr.mxu0 0.0
    %1275 = vmatpush1.msra.mxu0 0.0
    %1276 = vmatprep.subr.mxu0 0.0
    %1277 = vmatpush1.msra.mxu0 0.0
    %1278 = vmatprep.subr.mxu0 0.0
    %1279 = vmatpush1.msra.mxu0 0.0
    %1280 = vmatprep.subr.mxu0 0.0
    %1281 = vmatpush1.msra.mxu0 0.0
    %1282 = vmatprep.subr.mxu0 0.0
    %1283 = vmatpush1.msra.mxu0 0.0
    %1284 = vmatprep.subr.mxu0 0.0
    %1285 = vmatpush1.msra.mxu0 0.0
    %1286 = vmatprep.subr.mxu0 0.0
    %1287 = vmatpush1.msra.mxu0 0.0
    %1288 = vmatprep.subr.mxu0 0.0
    %1289 = vmatpush1.msra.mxu0 0.0
    %1290 = vmatprep.subr.mxu0 0.0
    %1291 = vmatpush1.msra.mxu0 0.0
    %1292 = vmatprep.subr.mxu0 0.0
    %1293 = vmatpush1.msra.mxu0 0.0
    %1294 = vmatprep.subr.mxu0 0.0
    %1295 = vmatpush1.msra.mxu0 %v68
    %1296 = vmatprep.subr.mxu0 0.0
    %1297 = vmatpush1.msra.mxu0 %v67
    %1298 = vmatprep.subr.mxu0 0.0
    %1299 = vmatpush1.msra.mxu0 %v66
    %1300 = vmatprep.subr.mxu0 0.0
    %1301 = vmatpush1.msra.mxu0 %v65
    %1302 = vmatprep.subr.mxu0 0.0
    %1303 = vmatpush2.msra.mxu0 0.0
    %1304 = vmatprep.subr.mxu0 0.0
    %1305 = vmatpush2.msra.mxu0 0.0
    %1306 = vmatprep.subr.mxu0 0.0
    %1307 = vmatpush2.msra.mxu0 0.0
    %1308 = vmatprep.subr.mxu0 0.0
    %1309 = vmatpush2.msra.mxu0 0.0
    %1310 = vmatprep.subr.mxu0 0.0
    %1311 = vmatpush2.msra.mxu0 0.0
    %1312 = vmatprep.subr.mxu0 0.0
    %1313 = vmatpush2.msra.mxu0 0.0
    %1314 = vmatprep.subr.mxu0 0.0
    %1315 = vmatpush2.msra.mxu0 0.0
    %1316 = vmatprep.subr.mxu0 0.0
    %1317 = vmatpush2.msra.mxu0 0.0
    %1318 = vmatprep.subr.mxu0 0.0
    %1319 = vmatpush2.msra.mxu0 0.0
    %1320 = vmatprep.subr.mxu0 0.0
    %1321 = vmatpush2.msra.mxu0 0.0
    %1322 = vmatprep.subr.mxu0 0.0
    %1323 = vmatpush2.msra.mxu0 0.0
    %1324 = vmatprep.subr.mxu0 0.0
    %1325 = vmatpush2.msra.mxu0 0.0
    %1326 = vmatprep.subr.mxu0 0.0
    %1327 = vmatpush2.msra.mxu0 0.0
    %1328 = vmatprep.subr.mxu0 0.0
    %1329 = vmatpush2.msra.mxu0 0.0
    %1330 = vmatprep.subr.mxu0 0.0
    %1331 = vmatpush2.msra.mxu0 0.0
    %1332 = vmatprep.subr.mxu0 0.0
    %1333 = vmatpush2.msra.mxu0 0.0
    %1334 = vmatprep.mubr.f32.mxu0 0.0
    %1335 = vmatmul.mubr.f32.gmra.mxu0 %v778
    %v1336 = vpop.f32.mrf.mxu0
    %v1337 = vadd.f32 %v204, %v1336
    %v1338 = vpop.f32.mrf.mxu0
    %1339 = vdwg.mxu0
    %v1348 = vlaneseq
    %v1349 = vshrl.u32 %v1348, 7
    %v1350 = vsub.s32 0, %v1349
    %v1351 = vrot.slane %v141, %v1350
    %v1352 = vlaneseq
    %v1353 = vshrl.u32 %v1352, 7
    %v1354 = vsub.s32 0, %v1353
    %v1355 = vrot.slane %v142, %v1354
    %v1356 = vlaneseq
    %v1357 = vshrl.u32 %v1356, 7
    %v1358 = vsub.s32 0, %v1357
    %v1359 = vrot.slane %v143, %v1358
    %v1360 = vlaneseq
    %v1361 = vshrl.u32 %v1360, 7
    %v1362 = vsub.s32 0, %v1361
    %v1363 = vrot.slane %v144, %v1362
    %v1364 = vlaneseq
    %v1365 = vshrl.u32 %v1364, 7
    %v1366 = vsub.s32 0, %v1365
    %v1367 = vrot.slane %v145, %v1366
    %v1368 = vlaneseq
    %v1369 = vshrl.u32 %v1368, 7
    %v1370 = vsub.s32 0, %v1369
    %v1371 = vrot.slane %v146, %v1370
    %v1372 = vlaneseq
    %v1373 = vshrl.u32 %v1372, 7
    %v1374 = vsub.s32 0, %v1373
    %v1375 = vrot.slane %v147, %v1374
    %v1376 = vlaneseq
    %v1377 = vshrl.u32 %v1376, 7
    %v1378 = vsub.s32 0, %v1377
    %v1379 = vrot.slane %v148, %v1378
    %1388 = vmatprep.subr.mxu0 0.0
    %1389 = vmatpush1.msra.mxu0 0.0
    %1390 = vmatprep.subr.mxu0 0.0
    %1391 = vmatpush1.msra.mxu0 0.0
    %1392 = vmatprep.subr.mxu0 0.0
    %1393 = vmatpush1.msra.mxu0 0.0
    %1394 = vmatprep.subr.mxu0 0.0
    %1395 = vmatpush1.msra.mxu0 0.0
    %1396 = vmatprep.subr.mxu0 0.0
    %1397 = vmatpush1.msra.mxu0 0.0
    %1398 = vmatprep.subr.mxu0 0.0
    %1399 = vmatpush1.msra.mxu0 0.0
    %1400 = vmatprep.subr.mxu0 0.0
    %1401 = vmatpush1.msra.mxu0 0.0
    %1402 = vmatprep.subr.mxu0 0.0
    %1403 = vmatpush1.msra.mxu0 0.0
    %1404 = vmatprep.subr.mxu0 0.0
    %1405 = vmatpush1.msra.mxu0 0.0
    %1406 = vmatprep.subr.mxu0 0.0
    %1407 = vmatpush1.msra.mxu0 0.0
    %1408 = vmatprep.subr.mxu0 0.0
    %1409 = vmatpush1.msra.mxu0 0.0
    %1410 = vmatprep.subr.mxu0 0.0
    %1411 = vmatpush1.msra.mxu0 0.0
    %1412 = vmatprep.subr.mxu0 0.0
    %1413 = vmatpush1.msra.mxu0 %v72
    %1414 = vmatprep.subr.mxu0 0.0
    %1415 = vmatpush1.msra.mxu0 %v71
    %1416 = vmatprep.subr.mxu0 0.0
    %1417 = vmatpush1.msra.mxu0 %v70
    %1418 = vmatprep.subr.mxu0 0.0
    %1419 = vmatpush1.msra.mxu0 %v69
    %1420 = vmatprep.subr.mxu0 0.0
    %1421 = vmatpush2.msra.mxu0 0.0
    %1422 = vmatprep.subr.mxu0 0.0
    %1423 = vmatpush2.msra.mxu0 0.0
    %1424 = vmatprep.subr.mxu0 0.0
    %1425 = vmatpush2.msra.mxu0 0.0
    %1426 = vmatprep.subr.mxu0 0.0
    %1427 = vmatpush2.msra.mxu0 0.0
    %1428 = vmatprep.subr.mxu0 0.0
    %1429 = vmatpush2.msra.mxu0 0.0
    %1430 = vmatprep.subr.mxu0 0.0
    %1431 = vmatpush2.msra.mxu0 0.0
    %1432 = vmatprep.subr.mxu0 0.0
    %1433 = vmatpush2.msra.mxu0 0.0
    %1434 = vmatprep.subr.mxu0 0.0
    %1435 = vmatpush2.msra.mxu0 0.0
    %1436 = vmatprep.subr.mxu0 0.0
    %1437 = vmatpush2.msra.mxu0 0.0
    %1438 = vmatprep.subr.mxu0 0.0
    %1439 = vmatpush2.msra.mxu0 0.0
    %1440 = vmatprep.subr.mxu0 0.0
    %1441 = vmatpush2.msra.mxu0 0.0
    %1442 = vmatprep.subr.mxu0 0.0
    %1443 = vmatpush2.msra.mxu0 0.0
    %1444 = vmatprep.subr.mxu0 0.0
    %1445 = vmatpush2.msra.mxu0 0.0
    %1446 = vmatprep.subr.mxu0 0.0
    %1447 = vmatpush2.msra.mxu0 0.0
    %1448 = vmatprep.subr.mxu0 0.0
    %1449 = vmatpush2.msra.mxu0 0.0
    %1450 = vmatprep.subr.mxu0 0.0
    %1451 = vmatpush2.msra.mxu0 0.0
    %1452 = vmatprep.mubr.f32.mxu0 0.0
    %1453 = vmatmul.mubr.f32.gmra.mxu0 %v215
    %v1454 = vpop.f32.mrf.mxu0
    %v1455 = vadd.f32 %v1351, %v1454
    %v1456 = vpop.f32.mrf.mxu0
    %1457 = vdwg.mxu0
    %1458 = vmatprep.subr.mxu0 0.0
    %1459 = vmatpush1.msra.mxu0 0.0
    %1460 = vmatprep.subr.mxu0 0.0
    %1461 = vmatpush1.msra.mxu0 0.0
    %1462 = vmatprep.subr.mxu0 0.0
    %1463 = vmatpush1.msra.mxu0 0.0
    %1464 = vmatprep.subr.mxu0 0.0
    %1465 = vmatpush1.msra.mxu0 0.0
    %1466 = vmatprep.subr.mxu0 0.0
    %1467 = vmatpush1.msra.mxu0 0.0
    %1468 = vmatprep.subr.mxu0 0.0
    %1469 = vmatpush1.msra.mxu0 0.0
    %1470 = vmatprep.subr.mxu0 0.0
    %1471 = vmatpush1.msra.mxu0 0.0
    %1472 = vmatprep.subr.mxu0 0.0
    %1473 = vmatpush1.msra.mxu0 0.0
    %1474 = vmatprep.subr.mxu0 0.0
    %1475 = vmatpush1.msra.mxu0 0.0
    %1476 = vmatprep.subr.mxu0 0.0
    %1477 = vmatpush1.msra.mxu0 0.0
    %1478 = vmatprep.subr.mxu0 0.0
    %1479 = vmatpush1.msra.mxu0 0.0
    %1480 = vmatprep.subr.mxu0 0.0
    %1481 = vmatpush1.msra.mxu0 0.0
    %1482 = vmatprep.subr.mxu0 0.0
    %1483 = vmatpush1.msra.mxu0 %v76
    %1484 = vmatprep.subr.mxu0 0.0
    %1485 = vmatpush1.msra.mxu0 %v75
    %1486 = vmatprep.subr.mxu0 0.0
    %1487 = vmatpush1.msra.mxu0 %v74
    %1488 = vmatprep.subr.mxu0 0.0
    %1489 = vmatpush1.msra.mxu0 %v73
    %1490 = vmatprep.subr.mxu0 0.0
    %1491 = vmatpush2.msra.mxu0 0.0
    %1492 = vmatprep.subr.mxu0 0.0
    %1493 = vmatpush2.msra.mxu0 0.0
    %1494 = vmatprep.subr.mxu0 0.0
    %1495 = vmatpush2.msra.mxu0 0.0
    %1496 = vmatprep.subr.mxu0 0.0
    %1497 = vmatpush2.msra.mxu0 0.0
    %1498 = vmatprep.subr.mxu0 0.0
    %1499 = vmatpush2.msra.mxu0 0.0
    %1500 = vmatprep.subr.mxu0 0.0
    %1501 = vmatpush2.msra.mxu0 0.0
    %1502 = vmatprep.subr.mxu0 0.0
    %1503 = vmatpush2.msra.mxu0 0.0
    %1504 = vmatprep.subr.mxu0 0.0
    %1505 = vmatpush2.msra.mxu0 0.0
    %1506 = vmatprep.subr.mxu0 0.0
    %1507 = vmatpush2.msra.mxu0 0.0
    %1508 = vmatprep.subr.mxu0 0.0
    %1509 = vmatpush2.msra.mxu0 0.0
    %1510 = vmatprep.subr.mxu0 0.0
    %1511 = vmatpush2.msra.mxu0 0.0
    %1512 = vmatprep.subr.mxu0 0.0
    %1513 = vmatpush2.msra.mxu0 0.0
    %1514 = vmatprep.subr.mxu0 0.0
    %1515 = vmatpush2.msra.mxu0 0.0
    %1516 = vmatprep.subr.mxu0 0.0
    %1517 = vmatpush2.msra.mxu0 0.0
    %1518 = vmatprep.subr.mxu0 0.0
    %1519 = vmatpush2.msra.mxu0 0.0
    %1520 = vmatprep.subr.mxu0 0.0
    %1521 = vmatpush2.msra.mxu0 0.0
    %1522 = vmatprep.mubr.f32.mxu0 0.0
    %1523 = vmatmul.mubr.f32.gmra.mxu0 %v215
    %v1524 = vpop.f32.mrf.mxu0
    %v1525 = vadd.f32 %v1355, %v1524
    %v1526 = vpop.f32.mrf.mxu0
    %1527 = vdwg.mxu0
    %1528 = vmatprep.subr.mxu0 0.0
    %1529 = vmatpush1.msra.mxu0 0.0
    %1530 = vmatprep.subr.mxu0 0.0
    %1531 = vmatpush1.msra.mxu0 0.0
    %1532 = vmatprep.subr.mxu0 0.0
    %1533 = vmatpush1.msra.mxu0 0.0
    %1534 = vmatprep.subr.mxu0 0.0
    %1535 = vmatpush1.msra.mxu0 0.0
    %1536 = vmatprep.subr.mxu0 0.0
    %1537 = vmatpush1.msra.mxu0 0.0
    %1538 = vmatprep.subr.mxu0 0.0
    %1539 = vmatpush1.msra.mxu0 0.0
    %1540 = vmatprep.subr.mxu0 0.0
    %1541 = vmatpush1.msra.mxu0 0.0
    %1542 = vmatprep.subr.mxu0 0.0
    %1543 = vmatpush1.msra.mxu0 0.0
    %1544 = vmatprep.subr.mxu0 0.0
    %1545 = vmatpush1.msra.mxu0 0.0
    %1546 = vmatprep.subr.mxu0 0.0
    %1547 = vmatpush1.msra.mxu0 0.0
    %1548 = vmatprep.subr.mxu0 0.0
    %1549 = vmatpush1.msra.mxu0 0.0
    %1550 = vmatprep.subr.mxu0 0.0
    %1551 = vmatpush1.msra.mxu0 0.0
    %1552 = vmatprep.subr.mxu0 0.0
    %1553 = vmatpush1.msra.mxu0 %v80
    %1554 = vmatprep.subr.mxu0 0.0
    %1555 = vmatpush1.msra.mxu0 %v79
    %1556 = vmatprep.subr.mxu0 0.0
    %1557 = vmatpush1.msra.mxu0 %v78
    %1558 = vmatprep.subr.mxu0 0.0
    %1559 = vmatpush1.msra.mxu0 %v77
    %1560 = vmatprep.subr.mxu0 0.0
    %1561 = vmatpush2.msra.mxu0 0.0
    %1562 = vmatprep.subr.mxu0 0.0
    %1563 = vmatpush2.msra.mxu0 0.0
    %1564 = vmatprep.subr.mxu0 0.0
    %1565 = vmatpush2.msra.mxu0 0.0
    %1566 = vmatprep.subr.mxu0 0.0
    %1567 = vmatpush2.msra.mxu0 0.0
    %1568 = vmatprep.subr.mxu0 0.0
    %1569 = vmatpush2.msra.mxu0 0.0
    %1570 = vmatprep.subr.mxu0 0.0
    %1571 = vmatpush2.msra.mxu0 0.0
    %1572 = vmatprep.subr.mxu0 0.0
    %1573 = vmatpush2.msra.mxu0 0.0
    %1574 = vmatprep.subr.mxu0 0.0
    %1575 = vmatpush2.msra.mxu0 0.0
    %1576 = vmatprep.subr.mxu0 0.0
    %1577 = vmatpush2.msra.mxu0 0.0
    %1578 = vmatprep.subr.mxu0 0.0
    %1579 = vmatpush2.msra.mxu0 0.0
    %1580 = vmatprep.subr.mxu0 0.0
    %1581 = vmatpush2.msra.mxu0 0.0
    %1582 = vmatprep.subr.mxu0 0.0
    %1583 = vmatpush2.msra.mxu0 0.0
    %1584 = vmatprep.subr.mxu0 0.0
    %1585 = vmatpush2.msra.mxu0 0.0
    %1586 = vmatprep.subr.mxu0 0.0
    %1587 = vmatpush2.msra.mxu0 0.0
    %1588 = vmatprep.subr.mxu0 0.0
    %1589 = vmatpush2.msra.mxu0 0.0
    %1590 = vmatprep.subr.mxu0 0.0
    %1591 = vmatpush2.msra.mxu0 0.0
    %1592 = vmatprep.mubr.f32.mxu0 0.0
    %1593 = vmatmul.mubr.f32.gmra.mxu0 %v215
    %v1594 = vpop.f32.mrf.mxu0
    %v1595 = vadd.f32 %v1359, %v1594
    %v1596 = vpop.f32.mrf.mxu0
    %1597 = vdwg.mxu0
    %1598 = vmatprep.subr.mxu0 0.0
    %1599 = vmatpush1.msra.mxu0 0.0
    %1600 = vmatprep.subr.mxu0 0.0
    %1601 = vmatpush1.msra.mxu0 0.0
    %1602 = vmatprep.subr.mxu0 0.0
    %1603 = vmatpush1.msra.mxu0 0.0
    %1604 = vmatprep.subr.mxu0 0.0
    %1605 = vmatpush1.msra.mxu0 0.0
    %1606 = vmatprep.subr.mxu0 0.0
    %1607 = vmatpush1.msra.mxu0 0.0
    %1608 = vmatprep.subr.mxu0 0.0
    %1609 = vmatpush1.msra.mxu0 0.0
    %1610 = vmatprep.subr.mxu0 0.0
    %1611 = vmatpush1.msra.mxu0 0.0
    %1612 = vmatprep.subr.mxu0 0.0
    %1613 = vmatpush1.msra.mxu0 0.0
    %1614 = vmatprep.subr.mxu0 0.0
    %1615 = vmatpush1.msra.mxu0 0.0
    %1616 = vmatprep.subr.mxu0 0.0
    %1617 = vmatpush1.msra.mxu0 0.0
    %1618 = vmatprep.subr.mxu0 0.0
    %1619 = vmatpush1.msra.mxu0 0.0
    %1620 = vmatprep.subr.mxu0 0.0
    %1621 = vmatpush1.msra.mxu0 0.0
    %1622 = vmatprep.subr.mxu0 0.0
    %1623 = vmatpush1.msra.mxu0 %v84
    %1624 = vmatprep.subr.mxu0 0.0
    %1625 = vmatpush1.msra.mxu0 %v83
    %1626 = vmatprep.subr.mxu0 0.0
    %1627 = vmatpush1.msra.mxu0 %v82
    %1628 = vmatprep.subr.mxu0 0.0
    %1629 = vmatpush1.msra.mxu0 %v81
    %1630 = vmatprep.subr.mxu0 0.0
    %1631 = vmatpush2.msra.mxu0 0.0
    %1632 = vmatprep.subr.mxu0 0.0
    %1633 = vmatpush2.msra.mxu0 0.0
    %1634 = vmatprep.subr.mxu0 0.0
    %1635 = vmatpush2.msra.mxu0 0.0
    %1636 = vmatprep.subr.mxu0 0.0
    %1637 = vmatpush2.msra.mxu0 0.0
    %1638 = vmatprep.subr.mxu0 0.0
    %1639 = vmatpush2.msra.mxu0 0.0
    %1640 = vmatprep.subr.mxu0 0.0
    %1641 = vmatpush2.msra.mxu0 0.0
    %1642 = vmatprep.subr.mxu0 0.0
    %1643 = vmatpush2.msra.mxu0 0.0
    %1644 = vmatprep.subr.mxu0 0.0
    %1645 = vmatpush2.msra.mxu0 0.0
    %1646 = vmatprep.subr.mxu0 0.0
    %1647 = vmatpush2.msra.mxu0 0.0
    %1648 = vmatprep.subr.mxu0 0.0
    %1649 = vmatpush2.msra.mxu0 0.0
    %1650 = vmatprep.subr.mxu0 0.0
    %1651 = vmatpush2.msra.mxu0 0.0
    %1652 = vmatprep.subr.mxu0 0.0
    %1653 = vmatpush2.msra.mxu0 0.0
    %1654 = vmatprep.subr.mxu0 0.0
    %1655 = vmatpush2.msra.mxu0 0.0
    %1656 = vmatprep.subr.mxu0 0.0
    %1657 = vmatpush2.msra.mxu0 0.0
    %1658 = vmatprep.subr.mxu0 0.0
    %1659 = vmatpush2.msra.mxu0 0.0
    %1660 = vmatprep.subr.mxu0 0.0
    %1661 = vmatpush2.msra.mxu0 0.0
    %1662 = vmatprep.mubr.f32.mxu0 0.0
    %1663 = vmatmul.mubr.f32.gmra.mxu0 %v215
    %v1664 = vpop.f32.mrf.mxu0
    %v1665 = vadd.f32 %v1363, %v1664
    %v1666 = vpop.f32.mrf.mxu0
    %1667 = vdwg.mxu0
    %1668 = vmatprep.subr.mxu0 0.0
    %1669 = vmatpush1.msra.mxu0 0.0
    %1670 = vmatprep.subr.mxu0 0.0
    %1671 = vmatpush1.msra.mxu0 0.0
    %1672 = vmatprep.subr.mxu0 0.0
    %1673 = vmatpush1.msra.mxu0 0.0
    %1674 = vmatprep.subr.mxu0 0.0
    %1675 = vmatpush1.msra.mxu0 0.0
    %1676 = vmatprep.subr.mxu0 0.0
    %1677 = vmatpush1.msra.mxu0 0.0
    %1678 = vmatprep.subr.mxu0 0.0
    %1679 = vmatpush1.msra.mxu0 0.0
    %1680 = vmatprep.subr.mxu0 0.0
    %1681 = vmatpush1.msra.mxu0 0.0
    %1682 = vmatprep.subr.mxu0 0.0
    %1683 = vmatpush1.msra.mxu0 0.0
    %1684 = vmatprep.subr.mxu0 0.0
    %1685 = vmatpush1.msra.mxu0 0.0
    %1686 = vmatprep.subr.mxu0 0.0
    %1687 = vmatpush1.msra.mxu0 0.0
    %1688 = vmatprep.subr.mxu0 0.0
    %1689 = vmatpush1.msra.mxu0 0.0
    %1690 = vmatprep.subr.mxu0 0.0
    %1691 = vmatpush1.msra.mxu0 0.0
    %1692 = vmatprep.subr.mxu0 0.0
    %1693 = vmatpush1.msra.mxu0 %v88
    %1694 = vmatprep.subr.mxu0 0.0
    %1695 = vmatpush1.msra.mxu0 %v87
    %1696 = vmatprep.subr.mxu0 0.0
    %1697 = vmatpush1.msra.mxu0 %v86
    %1698 = vmatprep.subr.mxu0 0.0
    %1699 = vmatpush1.msra.mxu0 %v85
    %1700 = vmatprep.subr.mxu0 0.0
    %1701 = vmatpush2.msra.mxu0 0.0
    %1702 = vmatprep.subr.mxu0 0.0
    %1703 = vmatpush2.msra.mxu0 0.0
    %1704 = vmatprep.subr.mxu0 0.0
    %1705 = vmatpush2.msra.mxu0 0.0
    %1706 = vmatprep.subr.mxu0 0.0
    %1707 = vmatpush2.msra.mxu0 0.0
    %1708 = vmatprep.subr.mxu0 0.0
    %1709 = vmatpush2.msra.mxu0 0.0
    %1710 = vmatprep.subr.mxu0 0.0
    %1711 = vmatpush2.msra.mxu0 0.0
    %1712 = vmatprep.subr.mxu0 0.0
    %1713 = vmatpush2.msra.mxu0 0.0
    %1714 = vmatprep.subr.mxu0 0.0
    %1715 = vmatpush2.msra.mxu0 0.0
    %1716 = vmatprep.subr.mxu0 0.0
    %1717 = vmatpush2.msra.mxu0 0.0
    %1718 = vmatprep.subr.mxu0 0.0
    %1719 = vmatpush2.msra.mxu0 0.0
    %1720 = vmatprep.subr.mxu0 0.0
    %1721 = vmatpush2.msra.mxu0 0.0
    %1722 = vmatprep.subr.mxu0 0.0
    %1723 = vmatpush2.msra.mxu0 0.0
    %1724 = vmatprep.subr.mxu0 0.0
    %1725 = vmatpush2.msra.mxu0 0.0
    %1726 = vmatprep.subr.mxu0 0.0
    %1727 = vmatpush2.msra.mxu0 0.0
    %1728 = vmatprep.subr.mxu0 0.0
    %1729 = vmatpush2.msra.mxu0 0.0
    %1730 = vmatprep.subr.mxu0 0.0
    %1731 = vmatpush2.msra.mxu0 0.0
    %1732 = vmatprep.mubr.f32.mxu0 0.0
    %1733 = vmatmul.mubr.f32.gmra.mxu0 %v215
    %v1734 = vpop.f32.mrf.mxu0
    %v1735 = vadd.f32 %v1367, %v1734
    %v1736 = vpop.f32.mrf.mxu0
    %1737 = vdwg.mxu0
    %1738 = vmatprep.subr.mxu0 0.0
    %1739 = vmatpush1.msra.mxu0 0.0
    %1740 = vmatprep.subr.mxu0 0.0
    %1741 = vmatpush1.msra.mxu0 0.0
    %1742 = vmatprep.subr.mxu0 0.0
    %1743 = vmatpush1.msra.mxu0 0.0
    %1744 = vmatprep.subr.mxu0 0.0
    %1745 = vmatpush1.msra.mxu0 0.0
    %1746 = vmatprep.subr.mxu0 0.0
    %1747 = vmatpush1.msra.mxu0 0.0
    %1748 = vmatprep.subr.mxu0 0.0
    %1749 = vmatpush1.msra.mxu0 0.0
    %1750 = vmatprep.subr.mxu0 0.0
    %1751 = vmatpush1.msra.mxu0 0.0
    %1752 = vmatprep.subr.mxu0 0.0
    %1753 = vmatpush1.msra.mxu0 0.0
    %1754 = vmatprep.subr.mxu0 0.0
    %1755 = vmatpush1.msra.mxu0 0.0
    %1756 = vmatprep.subr.mxu0 0.0
    %1757 = vmatpush1.msra.mxu0 0.0
    %1758 = vmatprep.subr.mxu0 0.0
    %1759 = vmatpush1.msra.mxu0 0.0
    %1760 = vmatprep.subr.mxu0 0.0
    %1761 = vmatpush1.msra.mxu0 0.0
    %1762 = vmatprep.subr.mxu0 0.0
    %1763 = vmatpush1.msra.mxu0 %v92
    %1764 = vmatprep.subr.mxu0 0.0
    %1765 = vmatpush1.msra.mxu0 %v91
    %1766 = vmatprep.subr.mxu0 0.0
    %1767 = vmatpush1.msra.mxu0 %v90
    %1768 = vmatprep.subr.mxu0 0.0
    %1769 = vmatpush1.msra.mxu0 %v89
    %1770 = vmatprep.subr.mxu0 0.0
    %1771 = vmatpush2.msra.mxu0 0.0
    %1772 = vmatprep.subr.mxu0 0.0
    %1773 = vmatpush2.msra.mxu0 0.0
    %1774 = vmatprep.subr.mxu0 0.0
    %1775 = vmatpush2.msra.mxu0 0.0
    %1776 = vmatprep.subr.mxu0 0.0
    %1777 = vmatpush2.msra.mxu0 0.0
    %1778 = vmatprep.subr.mxu0 0.0
    %1779 = vmatpush2.msra.mxu0 0.0
    %1780 = vmatprep.subr.mxu0 0.0
    %1781 = vmatpush2.msra.mxu0 0.0
    %1782 = vmatprep.subr.mxu0 0.0
    %1783 = vmatpush2.msra.mxu0 0.0
    %1784 = vmatprep.subr.mxu0 0.0
    %1785 = vmatpush2.msra.mxu0 0.0
    %1786 = vmatprep.subr.mxu0 0.0
    %1787 = vmatpush2.msra.mxu0 0.0
    %1788 = vmatprep.subr.mxu0 0.0
    %1789 = vmatpush2.msra.mxu0 0.0
    %1790 = vmatprep.subr.mxu0 0.0
    %1791 = vmatpush2.msra.mxu0 0.0
    %1792 = vmatprep.subr.mxu0 0.0
    %1793 = vmatpush2.msra.mxu0 0.0
    %1794 = vmatprep.subr.mxu0 0.0
    %1795 = vmatpush2.msra.mxu0 0.0
    %1796 = vmatprep.subr.mxu0 0.0
    %1797 = vmatpush2.msra.mxu0 0.0
    %1798 = vmatprep.subr.mxu0 0.0
    %1799 = vmatpush2.msra.mxu0 0.0
    %1800 = vmatprep.subr.mxu0 0.0
    %1801 = vmatpush2.msra.mxu0 0.0
    %1802 = vmatprep.mubr.f32.mxu0 0.0
    %1803 = vmatmul.mubr.f32.gmra.mxu0 %v215
    %v1804 = vpop.f32.mrf.mxu0
    %v1805 = vadd.f32 %v1371, %v1804
    %v1806 = vpop.f32.mrf.mxu0
    %1807 = vdwg.mxu0
    %1808 = vmatprep.subr.mxu0 0.0
    %1809 = vmatpush1.msra.mxu0 0.0
    %1810 = vmatprep.subr.mxu0 0.0
    %1811 = vmatpush1.msra.mxu0 0.0
    %1812 = vmatprep.subr.mxu0 0.0
    %1813 = vmatpush1.msra.mxu0 0.0
    %1814 = vmatprep.subr.mxu0 0.0
    %1815 = vmatpush1.msra.mxu0 0.0
    %1816 = vmatprep.subr.mxu0 0.0
    %1817 = vmatpush1.msra.mxu0 0.0
    %1818 = vmatprep.subr.mxu0 0.0
    %1819 = vmatpush1.msra.mxu0 0.0
    %1820 = vmatprep.subr.mxu0 0.0
    %1821 = vmatpush1.msra.mxu0 0.0
    %1822 = vmatprep.subr.mxu0 0.0
    %1823 = vmatpush1.msra.mxu0 0.0
    %1824 = vmatprep.subr.mxu0 0.0
    %1825 = vmatpush1.msra.mxu0 0.0
    %1826 = vmatprep.subr.mxu0 0.0
    %1827 = vmatpush1.msra.mxu0 0.0
    %1828 = vmatprep.subr.mxu0 0.0
    %1829 = vmatpush1.msra.mxu0 0.0
    %1830 = vmatprep.subr.mxu0 0.0
    %1831 = vmatpush1.msra.mxu0 0.0
    %1832 = vmatprep.subr.mxu0 0.0
    %1833 = vmatpush1.msra.mxu0 %v96
    %1834 = vmatprep.subr.mxu0 0.0
    %1835 = vmatpush1.msra.mxu0 %v95
    %1836 = vmatprep.subr.mxu0 0.0
    %1837 = vmatpush1.msra.mxu0 %v94
    %1838 = vmatprep.subr.mxu0 0.0
    %1839 = vmatpush1.msra.mxu0 %v93
    %1840 = vmatprep.subr.mxu0 0.0
    %1841 = vmatpush2.msra.mxu0 0.0
    %1842 = vmatprep.subr.mxu0 0.0
    %1843 = vmatpush2.msra.mxu0 0.0
    %1844 = vmatprep.subr.mxu0 0.0
    %1845 = vmatpush2.msra.mxu0 0.0
    %1846 = vmatprep.subr.mxu0 0.0
    %1847 = vmatpush2.msra.mxu0 0.0
    %1848 = vmatprep.subr.mxu0 0.0
    %1849 = vmatpush2.msra.mxu0 0.0
    %1850 = vmatprep.subr.mxu0 0.0
    %1851 = vmatpush2.msra.mxu0 0.0
    %1852 = vmatprep.subr.mxu0 0.0
    %1853 = vmatpush2.msra.mxu0 0.0
    %1854 = vmatprep.subr.mxu0 0.0
    %1855 = vmatpush2.msra.mxu0 0.0
    %1856 = vmatprep.subr.mxu0 0.0
    %1857 = vmatpush2.msra.mxu0 0.0
    %1858 = vmatprep.subr.mxu0 0.0
    %1859 = vmatpush2.msra.mxu0 0.0
    %1860 = vmatprep.subr.mxu0 0.0
    %1861 = vmatpush2.msra.mxu0 0.0
    %1862 = vmatprep.subr.mxu0 0.0
    %1863 = vmatpush2.msra.mxu0 0.0
    %1864 = vmatprep.subr.mxu0 0.0
    %1865 = vmatpush2.msra.mxu0 0.0
    %1866 = vmatprep.subr.mxu0 0.0
    %1867 = vmatpush2.msra.mxu0 0.0
    %1868 = vmatprep.subr.mxu0 0.0
    %1869 = vmatpush2.msra.mxu0 0.0
    %1870 = vmatprep.subr.mxu0 0.0
    %1871 = vmatpush2.msra.mxu0 0.0
    %1872 = vmatprep.mubr.f32.mxu0 0.0
    %1873 = vmatmul.mubr.f32.gmra.mxu0 %v215
    %v1874 = vpop.f32.mrf.mxu0
    %v1875 = vadd.f32 %v1375, %v1874
    %v1876 = vpop.f32.mrf.mxu0
    %1877 = vdwg.mxu0
    %1878 = vmatprep.subr.mxu0 0.0
    %1879 = vmatpush1.msra.mxu0 0.0
    %1880 = vmatprep.subr.mxu0 0.0
    %1881 = vmatpush1.msra.mxu0 0.0
    %1882 = vmatprep.subr.mxu0 0.0
    %1883 = vmatpush1.msra.mxu0 0.0
    %1884 = vmatprep.subr.mxu0 0.0
    %1885 = vmatpush1.msra.mxu0 0.0
    %1886 = vmatprep.subr.mxu0 0.0
    %1887 = vmatpush1.msra.mxu0 0.0
    %1888 = vmatprep.subr.mxu0 0.0
    %1889 = vmatpush1.msra.mxu0 0.0
    %1890 = vmatprep.subr.mxu0 0.0
    %1891 = vmatpush1.msra.mxu0 0.0
    %1892 = vmatprep.subr.mxu0 0.0
    %1893 = vmatpush1.msra.mxu0 0.0
    %1894 = vmatprep.subr.mxu0 0.0
    %1895 = vmatpush1.msra.mxu0 0.0
    %1896 = vmatprep.subr.mxu0 0.0
    %1897 = vmatpush1.msra.mxu0 0.0
    %1898 = vmatprep.subr.mxu0 0.0
    %1899 = vmatpush1.msra.mxu0 0.0
    %1900 = vmatprep.subr.mxu0 0.0
    %1901 = vmatpush1.msra.mxu0 0.0
    %1902 = vmatprep.subr.mxu0 0.0
    %1903 = vmatpush1.msra.mxu0 %v100
    %1904 = vmatprep.subr.mxu0 0.0
    %1905 = vmatpush1.msra.mxu0 %v99
    %1906 = vmatprep.subr.mxu0 0.0
    %1907 = vmatpush1.msra.mxu0 %v98
    %1908 = vmatprep.subr.mxu0 0.0
    %1909 = vmatpush1.msra.mxu0 %v97
    %1910 = vmatprep.subr.mxu0 0.0
    %1911 = vmatpush2.msra.mxu0 0.0
    %1912 = vmatprep.subr.mxu0 0.0
    %1913 = vmatpush2.msra.mxu0 0.0
    %1914 = vmatprep.subr.mxu0 0.0
    %1915 = vmatpush2.msra.mxu0 0.0
    %1916 = vmatprep.subr.mxu0 0.0
    %1917 = vmatpush2.msra.mxu0 0.0
    %1918 = vmatprep.subr.mxu0 0.0
    %1919 = vmatpush2.msra.mxu0 0.0
    %1920 = vmatprep.subr.mxu0 0.0
    %1921 = vmatpush2.msra.mxu0 0.0
    %1922 = vmatprep.subr.mxu0 0.0
    %1923 = vmatpush2.msra.mxu0 0.0
    %1924 = vmatprep.subr.mxu0 0.0
    %1925 = vmatpush2.msra.mxu0 0.0
    %1926 = vmatprep.subr.mxu0 0.0
    %1927 = vmatpush2.msra.mxu0 0.0
    %1928 = vmatprep.subr.mxu0 0.0
    %1929 = vmatpush2.msra.mxu0 0.0
    %1930 = vmatprep.subr.mxu0 0.0
    %1931 = vmatpush2.msra.mxu0 0.0
    %1932 = vmatprep.subr.mxu0 0.0
    %1933 = vmatpush2.msra.mxu0 0.0
    %1934 = vmatprep.subr.mxu0 0.0
    %1935 = vmatpush2.msra.mxu0 0.0
    %1936 = vmatprep.subr.mxu0 0.0
    %1937 = vmatpush2.msra.mxu0 0.0
    %1938 = vmatprep.subr.mxu0 0.0
    %1939 = vmatpush2.msra.mxu0 0.0
    %1940 = vmatprep.subr.mxu0 0.0
    %1941 = vmatpush2.msra.mxu0 0.0
    %1942 = vmatprep.mubr.f32.mxu0 0.0
    %1943 = vmatmul.mubr.f32.gmra.mxu0 %v215
    %v1944 = vpop.f32.mrf.mxu0
    %v1945 = vadd.f32 %v1379, %v1944
    %v1946 = vpop.f32.mrf.mxu0
    %1947 = vdwg.mxu0
    %1948 = vmatprep.subr.mxu0 0.0
    %1949 = vmatpush1.msra.mxu0 0.0
    %1950 = vmatprep.subr.mxu0 0.0
    %1951 = vmatpush1.msra.mxu0 0.0
    %1952 = vmatprep.subr.mxu0 0.0
    %1953 = vmatpush1.msra.mxu0 0.0
    %1954 = vmatprep.subr.mxu0 0.0
    %1955 = vmatpush1.msra.mxu0 0.0
    %1956 = vmatprep.subr.mxu0 0.0
    %1957 = vmatpush1.msra.mxu0 0.0
    %1958 = vmatprep.subr.mxu0 0.0
    %1959 = vmatpush1.msra.mxu0 0.0
    %1960 = vmatprep.subr.mxu0 0.0
    %1961 = vmatpush1.msra.mxu0 0.0
    %1962 = vmatprep.subr.mxu0 0.0
    %1963 = vmatpush1.msra.mxu0 0.0
    %1964 = vmatprep.subr.mxu0 0.0
    %1965 = vmatpush1.msra.mxu0 0.0
    %1966 = vmatprep.subr.mxu0 0.0
    %1967 = vmatpush1.msra.mxu0 0.0
    %1968 = vmatprep.subr.mxu0 0.0
    %1969 = vmatpush1.msra.mxu0 0.0
    %1970 = vmatprep.subr.mxu0 0.0
    %1971 = vmatpush1.msra.mxu0 0.0
    %1972 = vmatprep.subr.mxu0 0.0
    %1973 = vmatpush1.msra.mxu0 %v72
    %1974 = vmatprep.subr.mxu0 0.0
    %1975 = vmatpush1.msra.mxu0 %v71
    %1976 = vmatprep.subr.mxu0 0.0
    %1977 = vmatpush1.msra.mxu0 %v70
    %1978 = vmatprep.subr.mxu0 0.0
    %1979 = vmatpush1.msra.mxu0 %v69
    %1980 = vmatprep.subr.mxu0 0.0
    %1981 = vmatpush2.msra.mxu0 0.0
    %1982 = vmatprep.subr.mxu0 0.0
    %1983 = vmatpush2.msra.mxu0 0.0
    %1984 = vmatprep.subr.mxu0 0.0
    %1985 = vmatpush2.msra.mxu0 0.0
    %1986 = vmatprep.subr.mxu0 0.0
    %1987 = vmatpush2.msra.mxu0 0.0
    %1988 = vmatprep.subr.mxu0 0.0
    %1989 = vmatpush2.msra.mxu0 0.0
    %1990 = vmatprep.subr.mxu0 0.0
    %1991 = vmatpush2.msra.mxu0 0.0
    %1992 = vmatprep.subr.mxu0 0.0
    %1993 = vmatpush2.msra.mxu0 0.0
    %1994 = vmatprep.subr.mxu0 0.0
    %1995 = vmatpush2.msra.mxu0 0.0
    %1996 = vmatprep.subr.mxu0 0.0
    %1997 = vmatpush2.msra.mxu0 0.0
    %1998 = vmatprep.subr.mxu0 0.0
    %1999 = vmatpush2.msra.mxu0 0.0
    %2000 = vmatprep.subr.mxu0 0.0
    %2001 = vmatpush2.msra.mxu0 0.0
    %2002 = vmatprep.subr.mxu0 0.0
    %2003 = vmatpush2.msra.mxu0 0.0
    %2004 = vmatprep.subr.mxu0 0.0
    %2005 = vmatpush2.msra.mxu0 0.0
    %2006 = vmatprep.subr.mxu0 0.0
    %2007 = vmatpush2.msra.mxu0 0.0
    %2008 = vmatprep.subr.mxu0 0.0
    %2009 = vmatpush2.msra.mxu0 0.0
    %2010 = vmatprep.subr.mxu0 0.0
    %2011 = vmatpush2.msra.mxu0 0.0
    %2012 = vmatprep.mubr.f32.mxu0 0.0
    %2013 = vmatmul.mubr.f32.gmra.mxu0 %v778
    %v2014 = vpop.f32.mrf.mxu0
    %v2015 = vadd.f32 %v1351, %v2014
    %v2016 = vpop.f32.mrf.mxu0
    %2017 = vdwg.mxu0
    %2018 = vmatprep.subr.mxu0 0.0
    %2019 = vmatpush1.msra.mxu0 0.0
    %2020 = vmatprep.subr.mxu0 0.0
    %2021 = vmatpush1.msra.mxu0 0.0
    %2022 = vmatprep.subr.mxu0 0.0
    %2023 = vmatpush1.msra.mxu0 0.0
    %2024 = vmatprep.subr.mxu0 0.0
    %2025 = vmatpush1.msra.mxu0 0.0
    %2026 = vmatprep.subr.mxu0 0.0
    %2027 = vmatpush1.msra.mxu0 0.0
    %2028 = vmatprep.subr.mxu0 0.0
    %2029 = vmatpush1.msra.mxu0 0.0
    %2030 = vmatprep.subr.mxu0 0.0
    %2031 = vmatpush1.msra.mxu0 0.0
    %2032 = vmatprep.subr.mxu0 0.0
    %2033 = vmatpush1.msra.mxu0 0.0
    %2034 = vmatprep.subr.mxu0 0.0
    %2035 = vmatpush1.msra.mxu0 0.0
    %2036 = vmatprep.subr.mxu0 0.0
    %2037 = vmatpush1.msra.mxu0 0.0
    %2038 = vmatprep.subr.mxu0 0.0
    %2039 = vmatpush1.msra.mxu0 0.0
    %2040 = vmatprep.subr.mxu0 0.0
    %2041 = vmatpush1.msra.mxu0 0.0
    %2042 = vmatprep.subr.mxu0 0.0
    %2043 = vmatpush1.msra.mxu0 %v76
    %2044 = vmatprep.subr.mxu0 0.0
    %2045 = vmatpush1.msra.mxu0 %v75
    %2046 = vmatprep.subr.mxu0 0.0
    %2047 = vmatpush1.msra.mxu0 %v74
    %2048 = vmatprep.subr.mxu0 0.0
    %2049 = vmatpush1.msra.mxu0 %v73
    %2050 = vmatprep.subr.mxu0 0.0
    %2051 = vmatpush2.msra.mxu0 0.0
    %2052 = vmatprep.subr.mxu0 0.0
    %2053 = vmatpush2.msra.mxu0 0.0
    %2054 = vmatprep.subr.mxu0 0.0
    %2055 = vmatpush2.msra.mxu0 0.0
    %2056 = vmatprep.subr.mxu0 0.0
    %2057 = vmatpush2.msra.mxu0 0.0
    %2058 = vmatprep.subr.mxu0 0.0
    %2059 = vmatpush2.msra.mxu0 0.0
    %2060 = vmatprep.subr.mxu0 0.0
    %2061 = vmatpush2.msra.mxu0 0.0
    %2062 = vmatprep.subr.mxu0 0.0
    %2063 = vmatpush2.msra.mxu0 0.0
    %2064 = vmatprep.subr.mxu0 0.0
    %2065 = vmatpush2.msra.mxu0 0.0
    %2066 = vmatprep.subr.mxu0 0.0
    %2067 = vmatpush2.msra.mxu0 0.0
    %2068 = vmatprep.subr.mxu0 0.0
    %2069 = vmatpush2.msra.mxu0 0.0
    %2070 = vmatprep.subr.mxu0 0.0
    %2071 = vmatpush2.msra.mxu0 0.0
    %2072 = vmatprep.subr.mxu0 0.0
    %2073 = vmatpush2.msra.mxu0 0.0
    %2074 = vmatprep.subr.mxu0 0.0
    %2075 = vmatpush2.msra.mxu0 0.0
    %2076 = vmatprep.subr.mxu0 0.0
    %2077 = vmatpush2.msra.mxu0 0.0
    %2078 = vmatprep.subr.mxu0 0.0
    %2079 = vmatpush2.msra.mxu0 0.0
    %2080 = vmatprep.subr.mxu0 0.0
    %2081 = vmatpush2.msra.mxu0 0.0
    %2082 = vmatprep.mubr.f32.mxu0 0.0
    %2083 = vmatmul.mubr.f32.gmra.mxu0 %v778
    %v2084 = vpop.f32.mrf.mxu0
    %v2085 = vadd.f32 %v1355, %v2084
    %v2086 = vpop.f32.mrf.mxu0
    %2087 = vdwg.mxu0
    %2088 = vmatprep.subr.mxu0 0.0
    %2089 = vmatpush1.msra.mxu0 0.0
    %2090 = vmatprep.subr.mxu0 0.0
    %2091 = vmatpush1.msra.mxu0 0.0
    %2092 = vmatprep.subr.mxu0 0.0
    %2093 = vmatpush1.msra.mxu0 0.0
    %2094 = vmatprep.subr.mxu0 0.0
    %2095 = vmatpush1.msra.mxu0 0.0
    %2096 = vmatprep.subr.mxu0 0.0
    %2097 = vmatpush1.msra.mxu0 0.0
    %2098 = vmatprep.subr.mxu0 0.0
    %2099 = vmatpush1.msra.mxu0 0.0
    %2100 = vmatprep.subr.mxu0 0.0
    %2101 = vmatpush1.msra.mxu0 0.0
    %2102 = vmatprep.subr.mxu0 0.0
    %2103 = vmatpush1.msra.mxu0 0.0
    %2104 = vmatprep.subr.mxu0 0.0
    %2105 = vmatpush1.msra.mxu0 0.0
    %2106 = vmatprep.subr.mxu0 0.0
    %2107 = vmatpush1.msra.mxu0 0.0
    %2108 = vmatprep.subr.mxu0 0.0
    %2109 = vmatpush1.msra.mxu0 0.0
    %2110 = vmatprep.subr.mxu0 0.0
    %2111 = vmatpush1.msra.mxu0 0.0
    %2112 = vmatprep.subr.mxu0 0.0
    %2113 = vmatpush1.msra.mxu0 %v80
    %2114 = vmatprep.subr.mxu0 0.0
    %2115 = vmatpush1.msra.mxu0 %v79
    %2116 = vmatprep.subr.mxu0 0.0
    %2117 = vmatpush1.msra.mxu0 %v78
    %2118 = vmatprep.subr.mxu0 0.0
    %2119 = vmatpush1.msra.mxu0 %v77
    %2120 = vmatprep.subr.mxu0 0.0
    %2121 = vmatpush2.msra.mxu0 0.0
    %2122 = vmatprep.subr.mxu0 0.0
    %2123 = vmatpush2.msra.mxu0 0.0
    %2124 = vmatprep.subr.mxu0 0.0
    %2125 = vmatpush2.msra.mxu0 0.0
    %2126 = vmatprep.subr.mxu0 0.0
    %2127 = vmatpush2.msra.mxu0 0.0
    %2128 = vmatprep.subr.mxu0 0.0
    %2129 = vmatpush2.msra.mxu0 0.0
    %2130 = vmatprep.subr.mxu0 0.0
    %2131 = vmatpush2.msra.mxu0 0.0
    %2132 = vmatprep.subr.mxu0 0.0
    %2133 = vmatpush2.msra.mxu0 0.0
    %2134 = vmatprep.subr.mxu0 0.0
    %2135 = vmatpush2.msra.mxu0 0.0
    %2136 = vmatprep.subr.mxu0 0.0
    %2137 = vmatpush2.msra.mxu0 0.0
    %2138 = vmatprep.subr.mxu0 0.0
    %2139 = vmatpush2.msra.mxu0 0.0
    %2140 = vmatprep.subr.mxu0 0.0
    %2141 = vmatpush2.msra.mxu0 0.0
    %2142 = vmatprep.subr.mxu0 0.0
    %2143 = vmatpush2.msra.mxu0 0.0
    %2144 = vmatprep.subr.mxu0 0.0
    %2145 = vmatpush2.msra.mxu0 0.0
    %2146 = vmatprep.subr.mxu0 0.0
    %2147 = vmatpush2.msra.mxu0 0.0
    %2148 = vmatprep.subr.mxu0 0.0
    %2149 = vmatpush2.msra.mxu0 0.0
    %2150 = vmatprep.subr.mxu0 0.0
    %2151 = vmatpush2.msra.mxu0 0.0
    %2152 = vmatprep.mubr.f32.mxu0 0.0
    %2153 = vmatmul.mubr.f32.gmra.mxu0 %v778
    %v2154 = vpop.f32.mrf.mxu0
    %v2155 = vadd.f32 %v1359, %v2154
    %v2156 = vpop.f32.mrf.mxu0
    %2157 = vdwg.mxu0
    %2158 = vmatprep.subr.mxu0 0.0
    %2159 = vmatpush1.msra.mxu0 0.0
    %2160 = vmatprep.subr.mxu0 0.0
    %2161 = vmatpush1.msra.mxu0 0.0
    %2162 = vmatprep.subr.mxu0 0.0
    %2163 = vmatpush1.msra.mxu0 0.0
    %2164 = vmatprep.subr.mxu0 0.0
    %2165 = vmatpush1.msra.mxu0 0.0
    %2166 = vmatprep.subr.mxu0 0.0
    %2167 = vmatpush1.msra.mxu0 0.0
    %2168 = vmatprep.subr.mxu0 0.0
    %2169 = vmatpush1.msra.mxu0 0.0
    %2170 = vmatprep.subr.mxu0 0.0
    %2171 = vmatpush1.msra.mxu0 0.0
    %2172 = vmatprep.subr.mxu0 0.0
    %2173 = vmatpush1.msra.mxu0 0.0
    %2174 = vmatprep.subr.mxu0 0.0
    %2175 = vmatpush1.msra.mxu0 0.0
    %2176 = vmatprep.subr.mxu0 0.0
    %2177 = vmatpush1.msra.mxu0 0.0
    %2178 = vmatprep.subr.mxu0 0.0
    %2179 = vmatpush1.msra.mxu0 0.0
    %2180 = vmatprep.subr.mxu0 0.0
    %2181 = vmatpush1.msra.mxu0 0.0
    %2182 = vmatprep.subr.mxu0 0.0
    %2183 = vmatpush1.msra.mxu0 %v84
    %2184 = vmatprep.subr.mxu0 0.0
    %2185 = vmatpush1.msra.mxu0 %v83
    %2186 = vmatprep.subr.mxu0 0.0
    %2187 = vmatpush1.msra.mxu0 %v82
    %2188 = vmatprep.subr.mxu0 0.0
    %2189 = vmatpush1.msra.mxu0 %v81
    %2190 = vmatprep.subr.mxu0 0.0
    %2191 = vmatpush2.msra.mxu0 0.0
    %2192 = vmatprep.subr.mxu0 0.0
    %2193 = vmatpush2.msra.mxu0 0.0
    %2194 = vmatprep.subr.mxu0 0.0
    %2195 = vmatpush2.msra.mxu0 0.0
    %2196 = vmatprep.subr.mxu0 0.0
    %2197 = vmatpush2.msra.mxu0 0.0
    %2198 = vmatprep.subr.mxu0 0.0
    %2199 = vmatpush2.msra.mxu0 0.0
    %2200 = vmatprep.subr.mxu0 0.0
    %2201 = vmatpush2.msra.mxu0 0.0
    %2202 = vmatprep.subr.mxu0 0.0
    %2203 = vmatpush2.msra.mxu0 0.0
    %2204 = vmatprep.subr.mxu0 0.0
    %2205 = vmatpush2.msra.mxu0 0.0
    %2206 = vmatprep.subr.mxu0 0.0
    %2207 = vmatpush2.msra.mxu0 0.0
    %2208 = vmatprep.subr.mxu0 0.0
    %2209 = vmatpush2.msra.mxu0 0.0
    %2210 = vmatprep.subr.mxu0 0.0
    %2211 = vmatpush2.msra.mxu0 0.0
    %2212 = vmatprep.subr.mxu0 0.0
    %2213 = vmatpush2.msra.mxu0 0.0
    %2214 = vmatprep.subr.mxu0 0.0
    %2215 = vmatpush2.msra.mxu0 0.0
    %2216 = vmatprep.subr.mxu0 0.0
    %2217 = vmatpush2.msra.mxu0 0.0
    %2218 = vmatprep.subr.mxu0 0.0
    %2219 = vmatpush2.msra.mxu0 0.0
    %2220 = vmatprep.subr.mxu0 0.0
    %2221 = vmatpush2.msra.mxu0 0.0
    %2222 = vmatprep.mubr.f32.mxu0 0.0
    %2223 = vmatmul.mubr.f32.gmra.mxu0 %v778
    %v2224 = vpop.f32.mrf.mxu0
    %v2225 = vadd.f32 %v1363, %v2224
    %v2226 = vpop.f32.mrf.mxu0
    %2227 = vdwg.mxu0
    %2228 = vmatprep.subr.mxu0 0.0
    %2229 = vmatpush1.msra.mxu0 0.0
    %2230 = vmatprep.subr.mxu0 0.0
    %2231 = vmatpush1.msra.mxu0 0.0
    %2232 = vmatprep.subr.mxu0 0.0
    %2233 = vmatpush1.msra.mxu0 0.0
    %2234 = vmatprep.subr.mxu0 0.0
    %2235 = vmatpush1.msra.mxu0 0.0
    %2236 = vmatprep.subr.mxu0 0.0
    %2237 = vmatpush1.msra.mxu0 0.0
    %2238 = vmatprep.subr.mxu0 0.0
    %2239 = vmatpush1.msra.mxu0 0.0
    %2240 = vmatprep.subr.mxu0 0.0
    %2241 = vmatpush1.msra.mxu0 0.0
    %2242 = vmatprep.subr.mxu0 0.0
    %2243 = vmatpush1.msra.mxu0 0.0
    %2244 = vmatprep.subr.mxu0 0.0
    %2245 = vmatpush1.msra.mxu0 0.0
    %2246 = vmatprep.subr.mxu0 0.0
    %2247 = vmatpush1.msra.mxu0 0.0
    %2248 = vmatprep.subr.mxu0 0.0
    %2249 = vmatpush1.msra.mxu0 0.0
    %2250 = vmatprep.subr.mxu0 0.0
    %2251 = vmatpush1.msra.mxu0 0.0
    %2252 = vmatprep.subr.mxu0 0.0
    %2253 = vmatpush1.msra.mxu0 %v88
    %2254 = vmatprep.subr.mxu0 0.0
    %2255 = vmatpush1.msra.mxu0 %v87
    %2256 = vmatprep.subr.mxu0 0.0
    %2257 = vmatpush1.msra.mxu0 %v86
    %2258 = vmatprep.subr.mxu0 0.0
    %2259 = vmatpush1.msra.mxu0 %v85
    %2260 = vmatprep.subr.mxu0 0.0
    %2261 = vmatpush2.msra.mxu0 0.0
    %2262 = vmatprep.subr.mxu0 0.0
    %2263 = vmatpush2.msra.mxu0 0.0
    %2264 = vmatprep.subr.mxu0 0.0
    %2265 = vmatpush2.msra.mxu0 0.0
    %2266 = vmatprep.subr.mxu0 0.0
    %2267 = vmatpush2.msra.mxu0 0.0
    %2268 = vmatprep.subr.mxu0 0.0
    %2269 = vmatpush2.msra.mxu0 0.0
    %2270 = vmatprep.subr.mxu0 0.0
    %2271 = vmatpush2.msra.mxu0 0.0
    %2272 = vmatprep.subr.mxu0 0.0
    %2273 = vmatpush2.msra.mxu0 0.0
    %2274 = vmatprep.subr.mxu0 0.0
    %2275 = vmatpush2.msra.mxu0 0.0
    %2276 = vmatprep.subr.mxu0 0.0
    %2277 = vmatpush2.msra.mxu0 0.0
    %2278 = vmatprep.subr.mxu0 0.0
    %2279 = vmatpush2.msra.mxu0 0.0
    %2280 = vmatprep.subr.mxu0 0.0
    %2281 = vmatpush2.msra.mxu0 0.0
    %2282 = vmatprep.subr.mxu0 0.0
    %2283 = vmatpush2.msra.mxu0 0.0
    %2284 = vmatprep.subr.mxu0 0.0
    %2285 = vmatpush2.msra.mxu0 0.0
    %2286 = vmatprep.subr.mxu0 0.0
    %2287 = vmatpush2.msra.mxu0 0.0
    %2288 = vmatprep.subr.mxu0 0.0
    %2289 = vmatpush2.msra.mxu0 0.0
    %2290 = vmatprep.subr.mxu0 0.0
    %2291 = vmatpush2.msra.mxu0 0.0
    %2292 = vmatprep.mubr.f32.mxu0 0.0
    %2293 = vmatmul.mubr.f32.gmra.mxu0 %v778
    %v2294 = vpop.f32.mrf.mxu0
    %v2295 = vadd.f32 %v1367, %v2294
    %v2296 = vpop.f32.mrf.mxu0
    %2297 = vdwg.mxu0
    %2298 = vmatprep.subr.mxu0 0.0
    %2299 = vmatpush1.msra.mxu0 0.0
    %2300 = vmatprep.subr.mxu0 0.0
    %2301 = vmatpush1.msra.mxu0 0.0
    %2302 = vmatprep.subr.mxu0 0.0
    %2303 = vmatpush1.msra.mxu0 0.0
    %2304 = vmatprep.subr.mxu0 0.0
    %2305 = vmatpush1.msra.mxu0 0.0
    %2306 = vmatprep.subr.mxu0 0.0
    %2307 = vmatpush1.msra.mxu0 0.0
    %2308 = vmatprep.subr.mxu0 0.0
    %2309 = vmatpush1.msra.mxu0 0.0
    %2310 = vmatprep.subr.mxu0 0.0
    %2311 = vmatpush1.msra.mxu0 0.0
    %2312 = vmatprep.subr.mxu0 0.0
    %2313 = vmatpush1.msra.mxu0 0.0
    %2314 = vmatprep.subr.mxu0 0.0
    %2315 = vmatpush1.msra.mxu0 0.0
    %2316 = vmatprep.subr.mxu0 0.0
    %2317 = vmatpush1.msra.mxu0 0.0
    %2318 = vmatprep.subr.mxu0 0.0
    %2319 = vmatpush1.msra.mxu0 0.0
    %2320 = vmatprep.subr.mxu0 0.0
    %2321 = vmatpush1.msra.mxu0 0.0
    %2322 = vmatprep.subr.mxu0 0.0
    %2323 = vmatpush1.msra.mxu0 %v92
    %2324 = vmatprep.subr.mxu0 0.0
    %2325 = vmatpush1.msra.mxu0 %v91
    %2326 = vmatprep.subr.mxu0 0.0
    %2327 = vmatpush1.msra.mxu0 %v90
    %2328 = vmatprep.subr.mxu0 0.0
    %2329 = vmatpush1.msra.mxu0 %v89
    %2330 = vmatprep.subr.mxu0 0.0
    %2331 = vmatpush2.msra.mxu0 0.0
    %2332 = vmatprep.subr.mxu0 0.0
    %2333 = vmatpush2.msra.mxu0 0.0
    %2334 = vmatprep.subr.mxu0 0.0
    %2335 = vmatpush2.msra.mxu0 0.0
    %2336 = vmatprep.subr.mxu0 0.0
    %2337 = vmatpush2.msra.mxu0 0.0
    %2338 = vmatprep.subr.mxu0 0.0
    %2339 = vmatpush2.msra.mxu0 0.0
    %2340 = vmatprep.subr.mxu0 0.0
    %2341 = vmatpush2.msra.mxu0 0.0
    %2342 = vmatprep.subr.mxu0 0.0
    %2343 = vmatpush2.msra.mxu0 0.0
    %2344 = vmatprep.subr.mxu0 0.0
    %2345 = vmatpush2.msra.mxu0 0.0
    %2346 = vmatprep.subr.mxu0 0.0
    %2347 = vmatpush2.msra.mxu0 0.0
    %2348 = vmatprep.subr.mxu0 0.0
    %2349 = vmatpush2.msra.mxu0 0.0
    %2350 = vmatprep.subr.mxu0 0.0
    %2351 = vmatpush2.msra.mxu0 0.0
    %2352 = vmatprep.subr.mxu0 0.0
    %2353 = vmatpush2.msra.mxu0 0.0
    %2354 = vmatprep.subr.mxu0 0.0
    %2355 = vmatpush2.msra.mxu0 0.0
    %2356 = vmatprep.subr.mxu0 0.0
    %2357 = vmatpush2.msra.mxu0 0.0
    %2358 = vmatprep.subr.mxu0 0.0
    %2359 = vmatpush2.msra.mxu0 0.0
    %2360 = vmatprep.subr.mxu0 0.0
    %2361 = vmatpush2.msra.mxu0 0.0
    %2362 = vmatprep.mubr.f32.mxu0 0.0
    %2363 = vmatmul.mubr.f32.gmra.mxu0 %v778
    %v2364 = vpop.f32.mrf.mxu0
    %v2365 = vadd.f32 %v1371, %v2364
    %v2366 = vpop.f32.mrf.mxu0
    %2367 = vdwg.mxu0
    %2368 = vmatprep.subr.mxu0 0.0
    %2369 = vmatpush1.msra.mxu0 0.0
    %2370 = vmatprep.subr.mxu0 0.0
    %2371 = vmatpush1.msra.mxu0 0.0
    %2372 = vmatprep.subr.mxu0 0.0
    %2373 = vmatpush1.msra.mxu0 0.0
    %2374 = vmatprep.subr.mxu0 0.0
    %2375 = vmatpush1.msra.mxu0 0.0
    %2376 = vmatprep.subr.mxu0 0.0
    %2377 = vmatpush1.msra.mxu0 0.0
    %2378 = vmatprep.subr.mxu0 0.0
    %2379 = vmatpush1.msra.mxu0 0.0
    %2380 = vmatprep.subr.mxu0 0.0
    %2381 = vmatpush1.msra.mxu0 0.0
    %2382 = vmatprep.subr.mxu0 0.0
    %2383 = vmatpush1.msra.mxu0 0.0
    %2384 = vmatprep.subr.mxu0 0.0
    %2385 = vmatpush1.msra.mxu0 0.0
    %2386 = vmatprep.subr.mxu0 0.0
    %2387 = vmatpush1.msra.mxu0 0.0
    %2388 = vmatprep.subr.mxu0 0.0
    %2389 = vmatpush1.msra.mxu0 0.0
    %2390 = vmatprep.subr.mxu0 0.0
    %2391 = vmatpush1.msra.mxu0 0.0
    %2392 = vmatprep.subr.mxu0 0.0
    %2393 = vmatpush1.msra.mxu0 %v96
    %2394 = vmatprep.subr.mxu0 0.0
    %2395 = vmatpush1.msra.mxu0 %v95
    %2396 = vmatprep.subr.mxu0 0.0
    %2397 = vmatpush1.msra.mxu0 %v94
    %2398 = vmatprep.subr.mxu0 0.0
    %2399 = vmatpush1.msra.mxu0 %v93
    %2400 = vmatprep.subr.mxu0 0.0
    %2401 = vmatpush2.msra.mxu0 0.0
    %2402 = vmatprep.subr.mxu0 0.0
    %2403 = vmatpush2.msra.mxu0 0.0
    %2404 = vmatprep.subr.mxu0 0.0
    %2405 = vmatpush2.msra.mxu0 0.0
    %2406 = vmatprep.subr.mxu0 0.0
    %2407 = vmatpush2.msra.mxu0 0.0
    %2408 = vmatprep.subr.mxu0 0.0
    %2409 = vmatpush2.msra.mxu0 0.0
    %2410 = vmatprep.subr.mxu0 0.0
    %2411 = vmatpush2.msra.mxu0 0.0
    %2412 = vmatprep.subr.mxu0 0.0
    %2413 = vmatpush2.msra.mxu0 0.0
    %2414 = vmatprep.subr.mxu0 0.0
    %2415 = vmatpush2.msra.mxu0 0.0
    %2416 = vmatprep.subr.mxu0 0.0
    %2417 = vmatpush2.msra.mxu0 0.0
    %2418 = vmatprep.subr.mxu0 0.0
    %2419 = vmatpush2.msra.mxu0 0.0
    %2420 = vmatprep.subr.mxu0 0.0
    %2421 = vmatpush2.msra.mxu0 0.0
    %2422 = vmatprep.subr.mxu0 0.0
    %2423 = vmatpush2.msra.mxu0 0.0
    %2424 = vmatprep.subr.mxu0 0.0
    %2425 = vmatpush2.msra.mxu0 0.0
    %2426 = vmatprep.subr.mxu0 0.0
    %2427 = vmatpush2.msra.mxu0 0.0
    %2428 = vmatprep.subr.mxu0 0.0
    %2429 = vmatpush2.msra.mxu0 0.0
    %2430 = vmatprep.subr.mxu0 0.0
    %2431 = vmatpush2.msra.mxu0 0.0
    %2432 = vmatprep.mubr.f32.mxu0 0.0
    %2433 = vmatmul.mubr.f32.gmra.mxu0 %v778
    %v2434 = vpop.f32.mrf.mxu0
    %v2435 = vadd.f32 %v1375, %v2434
    %v2436 = vpop.f32.mrf.mxu0
    %2437 = vdwg.mxu0
    %2438 = vmatprep.subr.mxu0 0.0
    %2439 = vmatpush1.msra.mxu0 0.0
    %2440 = vmatprep.subr.mxu0 0.0
    %2441 = vmatpush1.msra.mxu0 0.0
    %2442 = vmatprep.subr.mxu0 0.0
    %2443 = vmatpush1.msra.mxu0 0.0
    %2444 = vmatprep.subr.mxu0 0.0
    %2445 = vmatpush1.msra.mxu0 0.0
    %2446 = vmatprep.subr.mxu0 0.0
    %2447 = vmatpush1.msra.mxu0 0.0
    %2448 = vmatprep.subr.mxu0 0.0
    %2449 = vmatpush1.msra.mxu0 0.0
    %2450 = vmatprep.subr.mxu0 0.0
    %2451 = vmatpush1.msra.mxu0 0.0
    %2452 = vmatprep.subr.mxu0 0.0
    %2453 = vmatpush1.msra.mxu0 0.0
    %2454 = vmatprep.subr.mxu0 0.0
    %2455 = vmatpush1.msra.mxu0 0.0
    %2456 = vmatprep.subr.mxu0 0.0
    %2457 = vmatpush1.msra.mxu0 0.0
    %2458 = vmatprep.subr.mxu0 0.0
    %2459 = vmatpush1.msra.mxu0 0.0
    %2460 = vmatprep.subr.mxu0 0.0
    %2461 = vmatpush1.msra.mxu0 0.0
    %2462 = vmatprep.subr.mxu0 0.0
    %2463 = vmatpush1.msra.mxu0 %v100
    %2464 = vmatprep.subr.mxu0 0.0
    %2465 = vmatpush1.msra.mxu0 %v99
    %2466 = vmatprep.subr.mxu0 0.0
    %2467 = vmatpush1.msra.mxu0 %v98
    %2468 = vmatprep.subr.mxu0 0.0
    %2469 = vmatpush1.msra.mxu0 %v97
    %2470 = vmatprep.subr.mxu0 0.0
    %2471 = vmatpush2.msra.mxu0 0.0
    %2472 = vmatprep.subr.mxu0 0.0
    %2473 = vmatpush2.msra.mxu0 0.0
    %2474 = vmatprep.subr.mxu0 0.0
    %2475 = vmatpush2.msra.mxu0 0.0
    %2476 = vmatprep.subr.mxu0 0.0
    %2477 = vmatpush2.msra.mxu0 0.0
    %2478 = vmatprep.subr.mxu0 0.0
    %2479 = vmatpush2.msra.mxu0 0.0
    %2480 = vmatprep.subr.mxu0 0.0
    %2481 = vmatpush2.msra.mxu0 0.0
    %2482 = vmatprep.subr.mxu0 0.0
    %2483 = vmatpush2.msra.mxu0 0.0
    %2484 = vmatprep.subr.mxu0 0.0
    %2485 = vmatpush2.msra.mxu0 0.0
    %2486 = vmatprep.subr.mxu0 0.0
    %2487 = vmatpush2.msra.mxu0 0.0
    %2488 = vmatprep.subr.mxu0 0.0
    %2489 = vmatpush2.msra.mxu0 0.0
    %2490 = vmatprep.subr.mxu0 0.0
    %2491 = vmatpush2.msra.mxu0 0.0
    %2492 = vmatprep.subr.mxu0 0.0
    %2493 = vmatpush2.msra.mxu0 0.0
    %2494 = vmatprep.subr.mxu0 0.0
    %2495 = vmatpush2.msra.mxu0 0.0
    %2496 = vmatprep.subr.mxu0 0.0
    %2497 = vmatpush2.msra.mxu0 0.0
    %2498 = vmatprep.subr.mxu0 0.0
    %2499 = vmatpush2.msra.mxu0 0.0
    %2500 = vmatprep.subr.mxu0 0.0
    %2501 = vmatpush2.msra.mxu0 0.0
    %2502 = vmatprep.mubr.f32.mxu0 0.0
    %2503 = vmatmul.mubr.f32.gmra.mxu0 %v778
    %v2504 = vpop.f32.mrf.mxu0
    %v2505 = vadd.f32 %v1379, %v2504
    %v2506 = vpop.f32.mrf.mxu0
    %2507 = vdwg.mxu0
    %v2516 = vlaneseq
    %v2517 = vshrl.u32 %v2516, 7
    %v2518 = vsub.s32 0, %v2517
    %v2519 = vrot.slane %v149, %v2518
    %v2520 = vlaneseq
    %v2521 = vshrl.u32 %v2520, 7
    %v2522 = vsub.s32 0, %v2521
    %v2523 = vrot.slane %v150, %v2522
    %v2524 = vlaneseq
    %v2525 = vshrl.u32 %v2524, 7
    %v2526 = vsub.s32 0, %v2525
    %v2527 = vrot.slane %v151, %v2526
    %v2528 = vlaneseq
    %v2529 = vshrl.u32 %v2528, 7
    %v2530 = vsub.s32 0, %v2529
    %v2531 = vrot.slane %v152, %v2530
    %v2532 = vlaneseq
    %v2533 = vshrl.u32 %v2532, 7
    %v2534 = vsub.s32 0, %v2533
    %v2535 = vrot.slane %v153, %v2534
    %v2536 = vlaneseq
    %v2537 = vshrl.u32 %v2536, 7
    %v2538 = vsub.s32 0, %v2537
    %v2539 = vrot.slane %v154, %v2538
    %v2540 = vlaneseq
    %v2541 = vshrl.u32 %v2540, 7
    %v2542 = vsub.s32 0, %v2541
    %v2543 = vrot.slane %v155, %v2542
    %v2544 = vlaneseq
    %v2545 = vshrl.u32 %v2544, 7
    %v2546 = vsub.s32 0, %v2545
    %v2547 = vrot.slane %v156, %v2546
    %2556 = vmatprep.subr.mxu0 0.0
    %2557 = vmatpush1.msra.mxu0 0.0
    %2558 = vmatprep.subr.mxu0 0.0
    %2559 = vmatpush1.msra.mxu0 0.0
    %2560 = vmatprep.subr.mxu0 0.0
    %2561 = vmatpush1.msra.mxu0 0.0
    %2562 = vmatprep.subr.mxu0 0.0
    %2563 = vmatpush1.msra.mxu0 0.0
    %2564 = vmatprep.subr.mxu0 0.0
    %2565 = vmatpush1.msra.mxu0 0.0
    %2566 = vmatprep.subr.mxu0 0.0
    %2567 = vmatpush1.msra.mxu0 0.0
    %2568 = vmatprep.subr.mxu0 0.0
    %2569 = vmatpush1.msra.mxu0 0.0
    %2570 = vmatprep.subr.mxu0 0.0
    %2571 = vmatpush1.msra.mxu0 0.0
    %2572 = vmatprep.subr.mxu0 0.0
    %2573 = vmatpush1.msra.mxu0 0.0
    %2574 = vmatprep.subr.mxu0 0.0
    %2575 = vmatpush1.msra.mxu0 0.0
    %2576 = vmatprep.subr.mxu0 0.0
    %2577 = vmatpush1.msra.mxu0 0.0
    %2578 = vmatprep.subr.mxu0 0.0
    %2579 = vmatpush1.msra.mxu0 0.0
    %2580 = vmatprep.subr.mxu0 0.0
    %2581 = vmatpush1.msra.mxu0 %v104
    %2582 = vmatprep.subr.mxu0 0.0
    %2583 = vmatpush1.msra.mxu0 %v103
    %2584 = vmatprep.subr.mxu0 0.0
    %2585 = vmatpush1.msra.mxu0 %v102
    %2586 = vmatprep.subr.mxu0 0.0
    %2587 = vmatpush1.msra.mxu0 %v101
    %2588 = vmatprep.subr.mxu0 0.0
    %2589 = vmatpush2.msra.mxu0 0.0
    %2590 = vmatprep.subr.mxu0 0.0
    %2591 = vmatpush2.msra.mxu0 0.0
    %2592 = vmatprep.subr.mxu0 0.0
    %2593 = vmatpush2.msra.mxu0 0.0
    %2594 = vmatprep.subr.mxu0 0.0
    %2595 = vmatpush2.msra.mxu0 0.0
    %2596 = vmatprep.subr.mxu0 0.0
    %2597 = vmatpush2.msra.mxu0 0.0
    %2598 = vmatprep.subr.mxu0 0.0
    %2599 = vmatpush2.msra.mxu0 0.0
    %2600 = vmatprep.subr.mxu0 0.0
    %2601 = vmatpush2.msra.mxu0 0.0
    %2602 = vmatprep.subr.mxu0 0.0
    %2603 = vmatpush2.msra.mxu0 0.0
    %2604 = vmatprep.subr.mxu0 0.0
    %2605 = vmatpush2.msra.mxu0 0.0
    %2606 = vmatprep.subr.mxu0 0.0
    %2607 = vmatpush2.msra.mxu0 0.0
    %2608 = vmatprep.subr.mxu0 0.0
    %2609 = vmatpush2.msra.mxu0 0.0
    %2610 = vmatprep.subr.mxu0 0.0
    %2611 = vmatpush2.msra.mxu0 0.0
    %2612 = vmatprep.subr.mxu0 0.0
    %2613 = vmatpush2.msra.mxu0 0.0
    %2614 = vmatprep.subr.mxu0 0.0
    %2615 = vmatpush2.msra.mxu0 0.0
    %2616 = vmatprep.subr.mxu0 0.0
    %2617 = vmatpush2.msra.mxu0 0.0
    %2618 = vmatprep.subr.mxu0 0.0
    %2619 = vmatpush2.msra.mxu0 0.0
    %2620 = vmatprep.mubr.f32.mxu0 0.0
    %2621 = vmatmul.mubr.f32.gmra.mxu0 %v215
    %v2622 = vpop.f32.mrf.mxu0
    %v2623 = vadd.f32 %v2519, %v2622
    %v2624 = vpop.f32.mrf.mxu0
    %2625 = vdwg.mxu0
    %2626 = vmatprep.subr.mxu0 0.0
    %2627 = vmatpush1.msra.mxu0 0.0
    %2628 = vmatprep.subr.mxu0 0.0
    %2629 = vmatpush1.msra.mxu0 0.0
    %2630 = vmatprep.subr.mxu0 0.0
    %2631 = vmatpush1.msra.mxu0 0.0
    %2632 = vmatprep.subr.mxu0 0.0
    %2633 = vmatpush1.msra.mxu0 0.0
    %2634 = vmatprep.subr.mxu0 0.0
    %2635 = vmatpush1.msra.mxu0 0.0
    %2636 = vmatprep.subr.mxu0 0.0
    %2637 = vmatpush1.msra.mxu0 0.0
    %2638 = vmatprep.subr.mxu0 0.0
    %2639 = vmatpush1.msra.mxu0 0.0
    %2640 = vmatprep.subr.mxu0 0.0
    %2641 = vmatpush1.msra.mxu0 0.0
    %2642 = vmatprep.subr.mxu0 0.0
    %2643 = vmatpush1.msra.mxu0 0.0
    %2644 = vmatprep.subr.mxu0 0.0
    %2645 = vmatpush1.msra.mxu0 0.0
    %2646 = vmatprep.subr.mxu0 0.0
    %2647 = vmatpush1.msra.mxu0 0.0
    %2648 = vmatprep.subr.mxu0 0.0
    %2649 = vmatpush1.msra.mxu0 0.0
    %2650 = vmatprep.subr.mxu0 0.0
    %2651 = vmatpush1.msra.mxu0 %v108
    %2652 = vmatprep.subr.mxu0 0.0
    %2653 = vmatpush1.msra.mxu0 %v107
    %2654 = vmatprep.subr.mxu0 0.0
    %2655 = vmatpush1.msra.mxu0 %v106
    %2656 = vmatprep.subr.mxu0 0.0
    %2657 = vmatpush1.msra.mxu0 %v105
    %2658 = vmatprep.subr.mxu0 0.0
    %2659 = vmatpush2.msra.mxu0 0.0
    %2660 = vmatprep.subr.mxu0 0.0
    %2661 = vmatpush2.msra.mxu0 0.0
    %2662 = vmatprep.subr.mxu0 0.0
    %2663 = vmatpush2.msra.mxu0 0.0
    %2664 = vmatprep.subr.mxu0 0.0
    %2665 = vmatpush2.msra.mxu0 0.0
    %2666 = vmatprep.subr.mxu0 0.0
    %2667 = vmatpush2.msra.mxu0 0.0
    %2668 = vmatprep.subr.mxu0 0.0
    %2669 = vmatpush2.msra.mxu0 0.0
    %2670 = vmatprep.subr.mxu0 0.0
    %2671 = vmatpush2.msra.mxu0 0.0
    %2672 = vmatprep.subr.mxu0 0.0
    %2673 = vmatpush2.msra.mxu0 0.0
    %2674 = vmatprep.subr.mxu0 0.0
    %2675 = vmatpush2.msra.mxu0 0.0
    %2676 = vmatprep.subr.mxu0 0.0
    %2677 = vmatpush2.msra.mxu0 0.0
    %2678 = vmatprep.subr.mxu0 0.0
    %2679 = vmatpush2.msra.mxu0 0.0
    %2680 = vmatprep.subr.mxu0 0.0
    %2681 = vmatpush2.msra.mxu0 0.0
    %2682 = vmatprep.subr.mxu0 0.0
    %2683 = vmatpush2.msra.mxu0 0.0
    %2684 = vmatprep.subr.mxu0 0.0
    %2685 = vmatpush2.msra.mxu0 0.0
    %2686 = vmatprep.subr.mxu0 0.0
    %2687 = vmatpush2.msra.mxu0 0.0
    %2688 = vmatprep.subr.mxu0 0.0
    %2689 = vmatpush2.msra.mxu0 0.0
    %2690 = vmatprep.mubr.f32.mxu0 0.0
    %2691 = vmatmul.mubr.f32.gmra.mxu0 %v215
    %v2692 = vpop.f32.mrf.mxu0
    %v2693 = vadd.f32 %v2523, %v2692
    %v2694 = vpop.f32.mrf.mxu0
    %2695 = vdwg.mxu0
    %2696 = vmatprep.subr.mxu0 0.0
    %2697 = vmatpush1.msra.mxu0 0.0
    %2698 = vmatprep.subr.mxu0 0.0
    %2699 = vmatpush1.msra.mxu0 0.0
    %2700 = vmatprep.subr.mxu0 0.0
    %2701 = vmatpush1.msra.mxu0 0.0
    %2702 = vmatprep.subr.mxu0 0.0
    %2703 = vmatpush1.msra.mxu0 0.0
    %2704 = vmatprep.subr.mxu0 0.0
    %2705 = vmatpush1.msra.mxu0 0.0
    %2706 = vmatprep.subr.mxu0 0.0
    %2707 = vmatpush1.msra.mxu0 0.0
    %2708 = vmatprep.subr.mxu0 0.0
    %2709 = vmatpush1.msra.mxu0 0.0
    %2710 = vmatprep.subr.mxu0 0.0
    %2711 = vmatpush1.msra.mxu0 0.0
    %2712 = vmatprep.subr.mxu0 0.0
    %2713 = vmatpush1.msra.mxu0 0.0
    %2714 = vmatprep.subr.mxu0 0.0
    %2715 = vmatpush1.msra.mxu0 0.0
    %2716 = vmatprep.subr.mxu0 0.0
    %2717 = vmatpush1.msra.mxu0 0.0
    %2718 = vmatprep.subr.mxu0 0.0
    %2719 = vmatpush1.msra.mxu0 0.0
    %2720 = vmatprep.subr.mxu0 0.0
    %2721 = vmatpush1.msra.mxu0 %v112
    %2722 = vmatprep.subr.mxu0 0.0
    %2723 = vmatpush1.msra.mxu0 %v111
    %2724 = vmatprep.subr.mxu0 0.0
    %2725 = vmatpush1.msra.mxu0 %v110
    %2726 = vmatprep.subr.mxu0 0.0
    %2727 = vmatpush1.msra.mxu0 %v109
    %2728 = vmatprep.subr.mxu0 0.0
    %2729 = vmatpush2.msra.mxu0 0.0
    %2730 = vmatprep.subr.mxu0 0.0
    %2731 = vmatpush2.msra.mxu0 0.0
    %2732 = vmatprep.subr.mxu0 0.0
    %2733 = vmatpush2.msra.mxu0 0.0
    %2734 = vmatprep.subr.mxu0 0.0
    %2735 = vmatpush2.msra.mxu0 0.0
    %2736 = vmatprep.subr.mxu0 0.0
    %2737 = vmatpush2.msra.mxu0 0.0
    %2738 = vmatprep.subr.mxu0 0.0
    %2739 = vmatpush2.msra.mxu0 0.0
    %2740 = vmatprep.subr.mxu0 0.0
    %2741 = vmatpush2.msra.mxu0 0.0
    %2742 = vmatprep.subr.mxu0 0.0
    %2743 = vmatpush2.msra.mxu0 0.0
    %2744 = vmatprep.subr.mxu0 0.0
    %2745 = vmatpush2.msra.mxu0 0.0
    %2746 = vmatprep.subr.mxu0 0.0
    %2747 = vmatpush2.msra.mxu0 0.0
    %2748 = vmatprep.subr.mxu0 0.0
    %2749 = vmatpush2.msra.mxu0 0.0
    %2750 = vmatprep.subr.mxu0 0.0
    %2751 = vmatpush2.msra.mxu0 0.0
    %2752 = vmatprep.subr.mxu0 0.0
    %2753 = vmatpush2.msra.mxu0 0.0
    %2754 = vmatprep.subr.mxu0 0.0
    %2755 = vmatpush2.msra.mxu0 0.0
    %2756 = vmatprep.subr.mxu0 0.0
    %2757 = vmatpush2.msra.mxu0 0.0
    %2758 = vmatprep.subr.mxu0 0.0
    %2759 = vmatpush2.msra.mxu0 0.0
    %2760 = vmatprep.mubr.f32.mxu0 0.0
    %2761 = vmatmul.mubr.f32.gmra.mxu0 %v215
    %v2762 = vpop.f32.mrf.mxu0
    %v2763 = vadd.f32 %v2527, %v2762
    %v2764 = vpop.f32.mrf.mxu0
    %2765 = vdwg.mxu0
    %2766 = vmatprep.subr.mxu0 0.0
    %2767 = vmatpush1.msra.mxu0 0.0
    %2768 = vmatprep.subr.mxu0 0.0
    %2769 = vmatpush1.msra.mxu0 0.0
    %2770 = vmatprep.subr.mxu0 0.0
    %2771 = vmatpush1.msra.mxu0 0.0
    %2772 = vmatprep.subr.mxu0 0.0
    %2773 = vmatpush1.msra.mxu0 0.0
    %2774 = vmatprep.subr.mxu0 0.0
    %2775 = vmatpush1.msra.mxu0 0.0
    %2776 = vmatprep.subr.mxu0 0.0
    %2777 = vmatpush1.msra.mxu0 0.0
    %2778 = vmatprep.subr.mxu0 0.0
    %2779 = vmatpush1.msra.mxu0 0.0
    %2780 = vmatprep.subr.mxu0 0.0
    %2781 = vmatpush1.msra.mxu0 0.0
    %2782 = vmatprep.subr.mxu0 0.0
    %2783 = vmatpush1.msra.mxu0 0.0
    %2784 = vmatprep.subr.mxu0 0.0
    %2785 = vmatpush1.msra.mxu0 0.0
    %2786 = vmatprep.subr.mxu0 0.0
    %2787 = vmatpush1.msra.mxu0 0.0
    %2788 = vmatprep.subr.mxu0 0.0
    %2789 = vmatpush1.msra.mxu0 0.0
    %2790 = vmatprep.subr.mxu0 0.0
    %2791 = vmatpush1.msra.mxu0 %v116
    %2792 = vmatprep.subr.mxu0 0.0
    %2793 = vmatpush1.msra.mxu0 %v115
    %2794 = vmatprep.subr.mxu0 0.0
    %2795 = vmatpush1.msra.mxu0 %v114
    %2796 = vmatprep.subr.mxu0 0.0
    %2797 = vmatpush1.msra.mxu0 %v113
    %2798 = vmatprep.subr.mxu0 0.0
    %2799 = vmatpush2.msra.mxu0 0.0
    %2800 = vmatprep.subr.mxu0 0.0
    %2801 = vmatpush2.msra.mxu0 0.0
    %2802 = vmatprep.subr.mxu0 0.0
    %2803 = vmatpush2.msra.mxu0 0.0
    %2804 = vmatprep.subr.mxu0 0.0
    %2805 = vmatpush2.msra.mxu0 0.0
    %2806 = vmatprep.subr.mxu0 0.0
    %2807 = vmatpush2.msra.mxu0 0.0
    %2808 = vmatprep.subr.mxu0 0.0
    %2809 = vmatpush2.msra.mxu0 0.0
    %2810 = vmatprep.subr.mxu0 0.0
    %2811 = vmatpush2.msra.mxu0 0.0
    %2812 = vmatprep.subr.mxu0 0.0
    %2813 = vmatpush2.msra.mxu0 0.0
    %2814 = vmatprep.subr.mxu0 0.0
    %2815 = vmatpush2.msra.mxu0 0.0
    %2816 = vmatprep.subr.mxu0 0.0
    %2817 = vmatpush2.msra.mxu0 0.0
    %2818 = vmatprep.subr.mxu0 0.0
    %2819 = vmatpush2.msra.mxu0 0.0
    %2820 = vmatprep.subr.mxu0 0.0
    %2821 = vmatpush2.msra.mxu0 0.0
    %2822 = vmatprep.subr.mxu0 0.0
    %2823 = vmatpush2.msra.mxu0 0.0
    %2824 = vmatprep.subr.mxu0 0.0
    %2825 = vmatpush2.msra.mxu0 0.0
    %2826 = vmatprep.subr.mxu0 0.0
    %2827 = vmatpush2.msra.mxu0 0.0
    %2828 = vmatprep.subr.mxu0 0.0
    %2829 = vmatpush2.msra.mxu0 0.0
    %2830 = vmatprep.mubr.f32.mxu0 0.0
    %2831 = vmatmul.mubr.f32.gmra.mxu0 %v215
    %v2832 = vpop.f32.mrf.mxu0
    %v2833 = vadd.f32 %v2531, %v2832
    %v2834 = vpop.f32.mrf.mxu0
    %2835 = vdwg.mxu0
    %2836 = vmatprep.subr.mxu0 0.0
    %2837 = vmatpush1.msra.mxu0 0.0
    %2838 = vmatprep.subr.mxu0 0.0
    %2839 = vmatpush1.msra.mxu0 0.0
    %2840 = vmatprep.subr.mxu0 0.0
    %2841 = vmatpush1.msra.mxu0 0.0
    %2842 = vmatprep.subr.mxu0 0.0
    %2843 = vmatpush1.msra.mxu0 0.0
    %2844 = vmatprep.subr.mxu0 0.0
    %2845 = vmatpush1.msra.mxu0 0.0
    %2846 = vmatprep.subr.mxu0 0.0
    %2847 = vmatpush1.msra.mxu0 0.0
    %2848 = vmatprep.subr.mxu0 0.0
    %2849 = vmatpush1.msra.mxu0 0.0
    %2850 = vmatprep.subr.mxu0 0.0
    %2851 = vmatpush1.msra.mxu0 0.0
    %2852 = vmatprep.subr.mxu0 0.0
    %2853 = vmatpush1.msra.mxu0 0.0
    %2854 = vmatprep.subr.mxu0 0.0
    %2855 = vmatpush1.msra.mxu0 0.0
    %2856 = vmatprep.subr.mxu0 0.0
    %2857 = vmatpush1.msra.mxu0 0.0
    %2858 = vmatprep.subr.mxu0 0.0
    %2859 = vmatpush1.msra.mxu0 0.0
    %2860 = vmatprep.subr.mxu0 0.0
    %2861 = vmatpush1.msra.mxu0 %v120
    %2862 = vmatprep.subr.mxu0 0.0
    %2863 = vmatpush1.msra.mxu0 %v119
    %2864 = vmatprep.subr.mxu0 0.0
    %2865 = vmatpush1.msra.mxu0 %v118
    %2866 = vmatprep.subr.mxu0 0.0
    %2867 = vmatpush1.msra.mxu0 %v117
    %2868 = vmatprep.subr.mxu0 0.0
    %2869 = vmatpush2.msra.mxu0 0.0
    %2870 = vmatprep.subr.mxu0 0.0
    %2871 = vmatpush2.msra.mxu0 0.0
    %2872 = vmatprep.subr.mxu0 0.0
    %2873 = vmatpush2.msra.mxu0 0.0
    %2874 = vmatprep.subr.mxu0 0.0
    %2875 = vmatpush2.msra.mxu0 0.0
    %2876 = vmatprep.subr.mxu0 0.0
    %2877 = vmatpush2.msra.mxu0 0.0
    %2878 = vmatprep.subr.mxu0 0.0
    %2879 = vmatpush2.msra.mxu0 0.0
    %2880 = vmatprep.subr.mxu0 0.0
    %2881 = vmatpush2.msra.mxu0 0.0
    %2882 = vmatprep.subr.mxu0 0.0
    %2883 = vmatpush2.msra.mxu0 0.0
    %2884 = vmatprep.subr.mxu0 0.0
    %2885 = vmatpush2.msra.mxu0 0.0
    %2886 = vmatprep.subr.mxu0 0.0
    %2887 = vmatpush2.msra.mxu0 0.0
    %2888 = vmatprep.subr.mxu0 0.0
    %2889 = vmatpush2.msra.mxu0 0.0
    %2890 = vmatprep.subr.mxu0 0.0
    %2891 = vmatpush2.msra.mxu0 0.0
    %2892 = vmatprep.subr.mxu0 0.0
    %2893 = vmatpush2.msra.mxu0 0.0
    %2894 = vmatprep.subr.mxu0 0.0
    %2895 = vmatpush2.msra.mxu0 0.0
    %2896 = vmatprep.subr.mxu0 0.0
    %2897 = vmatpush2.msra.mxu0 0.0
    %2898 = vmatprep.subr.mxu0 0.0
    %2899 = vmatpush2.msra.mxu0 0.0
    %2900 = vmatprep.mubr.f32.mxu0 0.0
    %2901 = vmatmul.mubr.f32.gmra.mxu0 %v215
    %v2902 = vpop.f32.mrf.mxu0
    %v2903 = vadd.f32 %v2535, %v2902
    %v2904 = vpop.f32.mrf.mxu0
    %2905 = vdwg.mxu0
    %2906 = vmatprep.subr.mxu0 0.0
    %2907 = vmatpush1.msra.mxu0 0.0
    %2908 = vmatprep.subr.mxu0 0.0
    %2909 = vmatpush1.msra.mxu0 0.0
    %2910 = vmatprep.subr.mxu0 0.0
    %2911 = vmatpush1.msra.mxu0 0.0
    %2912 = vmatprep.subr.mxu0 0.0
    %2913 = vmatpush1.msra.mxu0 0.0
    %2914 = vmatprep.subr.mxu0 0.0
    %2915 = vmatpush1.msra.mxu0 0.0
    %2916 = vmatprep.subr.mxu0 0.0
    %2917 = vmatpush1.msra.mxu0 0.0
    %2918 = vmatprep.subr.mxu0 0.0
    %2919 = vmatpush1.msra.mxu0 0.0
    %2920 = vmatprep.subr.mxu0 0.0
    %2921 = vmatpush1.msra.mxu0 0.0
    %2922 = vmatprep.subr.mxu0 0.0
    %2923 = vmatpush1.msra.mxu0 0.0
    %2924 = vmatprep.subr.mxu0 0.0
    %2925 = vmatpush1.msra.mxu0 0.0
    %2926 = vmatprep.subr.mxu0 0.0
    %2927 = vmatpush1.msra.mxu0 0.0
    %2928 = vmatprep.subr.mxu0 0.0
    %2929 = vmatpush1.msra.mxu0 0.0
    %2930 = vmatprep.subr.mxu0 0.0
    %2931 = vmatpush1.msra.mxu0 %v124
    %2932 = vmatprep.subr.mxu0 0.0
    %2933 = vmatpush1.msra.mxu0 %v123
    %2934 = vmatprep.subr.mxu0 0.0
    %2935 = vmatpush1.msra.mxu0 %v122
    %2936 = vmatprep.subr.mxu0 0.0
    %2937 = vmatpush1.msra.mxu0 %v121
    %2938 = vmatprep.subr.mxu0 0.0
    %2939 = vmatpush2.msra.mxu0 0.0
    %2940 = vmatprep.subr.mxu0 0.0
    %2941 = vmatpush2.msra.mxu0 0.0
    %2942 = vmatprep.subr.mxu0 0.0
    %2943 = vmatpush2.msra.mxu0 0.0
    %2944 = vmatprep.subr.mxu0 0.0
    %2945 = vmatpush2.msra.mxu0 0.0
    %2946 = vmatprep.subr.mxu0 0.0
    %2947 = vmatpush2.msra.mxu0 0.0
    %2948 = vmatprep.subr.mxu0 0.0
    %2949 = vmatpush2.msra.mxu0 0.0
    %2950 = vmatprep.subr.mxu0 0.0
    %2951 = vmatpush2.msra.mxu0 0.0
    %2952 = vmatprep.subr.mxu0 0.0
    %2953 = vmatpush2.msra.mxu0 0.0
    %2954 = vmatprep.subr.mxu0 0.0
    %2955 = vmatpush2.msra.mxu0 0.0
    %2956 = vmatprep.subr.mxu0 0.0
    %2957 = vmatpush2.msra.mxu0 0.0
    %2958 = vmatprep.subr.mxu0 0.0
    %2959 = vmatpush2.msra.mxu0 0.0
    %2960 = vmatprep.subr.mxu0 0.0
    %2961 = vmatpush2.msra.mxu0 0.0
    %2962 = vmatprep.subr.mxu0 0.0
    %2963 = vmatpush2.msra.mxu0 0.0
    %2964 = vmatprep.subr.mxu0 0.0
    %2965 = vmatpush2.msra.mxu0 0.0
    %2966 = vmatprep.subr.mxu0 0.0
    %2967 = vmatpush2.msra.mxu0 0.0
    %2968 = vmatprep.subr.mxu0 0.0
    %2969 = vmatpush2.msra.mxu0 0.0
    %2970 = vmatprep.mubr.f32.mxu0 0.0
    %2971 = vmatmul.mubr.f32.gmra.mxu0 %v215
    %v2972 = vpop.f32.mrf.mxu0
    %v2973 = vadd.f32 %v2539, %v2972
    %v2974 = vpop.f32.mrf.mxu0
    %2975 = vdwg.mxu0
    %2976 = vmatprep.subr.mxu0 0.0
    %2977 = vmatpush1.msra.mxu0 0.0
    %2978 = vmatprep.subr.mxu0 0.0
    %2979 = vmatpush1.msra.mxu0 0.0
    %2980 = vmatprep.subr.mxu0 0.0
    %2981 = vmatpush1.msra.mxu0 0.0
    %2982 = vmatprep.subr.mxu0 0.0
    %2983 = vmatpush1.msra.mxu0 0.0
    %2984 = vmatprep.subr.mxu0 0.0
    %2985 = vmatpush1.msra.mxu0 0.0
    %2986 = vmatprep.subr.mxu0 0.0
    %2987 = vmatpush1.msra.mxu0 0.0
    %2988 = vmatprep.subr.mxu0 0.0
    %2989 = vmatpush1.msra.mxu0 0.0
    %2990 = vmatprep.subr.mxu0 0.0
    %2991 = vmatpush1.msra.mxu0 0.0
    %2992 = vmatprep.subr.mxu0 0.0
    %2993 = vmatpush1.msra.mxu0 0.0
    %2994 = vmatprep.subr.mxu0 0.0
    %2995 = vmatpush1.msra.mxu0 0.0
    %2996 = vmatprep.subr.mxu0 0.0
    %2997 = vmatpush1.msra.mxu0 0.0
    %2998 = vmatprep.subr.mxu0 0.0
    %2999 = vmatpush1.msra.mxu0 0.0
    %3000 = vmatprep.subr.mxu0 0.0
    %3001 = vmatpush1.msra.mxu0 %v128
    %3002 = vmatprep.subr.mxu0 0.0
    %3003 = vmatpush1.msra.mxu0 %v127
    %3004 = vmatprep.subr.mxu0 0.0
    %3005 = vmatpush1.msra.mxu0 %v126
    %3006 = vmatprep.subr.mxu0 0.0
    %3007 = vmatpush1.msra.mxu0 %v125
    %3008 = vmatprep.subr.mxu0 0.0
    %3009 = vmatpush2.msra.mxu0 0.0
    %3010 = vmatprep.subr.mxu0 0.0
    %3011 = vmatpush2.msra.mxu0 0.0
    %3012 = vmatprep.subr.mxu0 0.0
    %3013 = vmatpush2.msra.mxu0 0.0
    %3014 = vmatprep.subr.mxu0 0.0
    %3015 = vmatpush2.msra.mxu0 0.0
    %3016 = vmatprep.subr.mxu0 0.0
    %3017 = vmatpush2.msra.mxu0 0.0
    %3018 = vmatprep.subr.mxu0 0.0
    %3019 = vmatpush2.msra.mxu0 0.0
    %3020 = vmatprep.subr.mxu0 0.0
    %3021 = vmatpush2.msra.mxu0 0.0
    %3022 = vmatprep.subr.mxu0 0.0
    %3023 = vmatpush2.msra.mxu0 0.0
    %3024 = vmatprep.subr.mxu0 0.0
    %3025 = vmatpush2.msra.mxu0 0.0
    %3026 = vmatprep.subr.mxu0 0.0
    %3027 = vmatpush2.msra.mxu0 0.0
    %3028 = vmatprep.subr.mxu0 0.0
    %3029 = vmatpush2.msra.mxu0 0.0
    %3030 = vmatprep.subr.mxu0 0.0
    %3031 = vmatpush2.msra.mxu0 0.0
    %3032 = vmatprep.subr.mxu0 0.0
    %3033 = vmatpush2.msra.mxu0 0.0
    %3034 = vmatprep.subr.mxu0 0.0
    %3035 = vmatpush2.msra.mxu0 0.0
    %3036 = vmatprep.subr.mxu0 0.0
    %3037 = vmatpush2.msra.mxu0 0.0
    %3038 = vmatprep.subr.mxu0 0.0
    %3039 = vmatpush2.msra.mxu0 0.0
    %3040 = vmatprep.mubr.f32.mxu0 0.0
    %3041 = vmatmul.mubr.f32.gmra.mxu0 %v215
    %v3042 = vpop.f32.mrf.mxu0
    %v3043 = vadd.f32 %v2543, %v3042
    %v3044 = vpop.f32.mrf.mxu0
    %3045 = vdwg.mxu0
    %3046 = vmatprep.subr.mxu0 0.0
    %3047 = vmatpush1.msra.mxu0 0.0
    %3048 = vmatprep.subr.mxu0 0.0
    %3049 = vmatpush1.msra.mxu0 0.0
    %3050 = vmatprep.subr.mxu0 0.0
    %3051 = vmatpush1.msra.mxu0 0.0
    %3052 = vmatprep.subr.mxu0 0.0
    %3053 = vmatpush1.msra.mxu0 0.0
    %3054 = vmatprep.subr.mxu0 0.0
    %3055 = vmatpush1.msra.mxu0 0.0
    %3056 = vmatprep.subr.mxu0 0.0
    %3057 = vmatpush1.msra.mxu0 0.0
    %3058 = vmatprep.subr.mxu0 0.0
    %3059 = vmatpush1.msra.mxu0 0.0
    %3060 = vmatprep.subr.mxu0 0.0
    %3061 = vmatpush1.msra.mxu0 0.0
    %3062 = vmatprep.subr.mxu0 0.0
    %3063 = vmatpush1.msra.mxu0 0.0
    %3064 = vmatprep.subr.mxu0 0.0
    %3065 = vmatpush1.msra.mxu0 0.0
    %3066 = vmatprep.subr.mxu0 0.0
    %3067 = vmatpush1.msra.mxu0 0.0
    %3068 = vmatprep.subr.mxu0 0.0
    %3069 = vmatpush1.msra.mxu0 0.0
    %3070 = vmatprep.subr.mxu0 0.0
    %3071 = vmatpush1.msra.mxu0 %v132
    %3072 = vmatprep.subr.mxu0 0.0
    %3073 = vmatpush1.msra.mxu0 %v131
    %3074 = vmatprep.subr.mxu0 0.0
    %3075 = vmatpush1.msra.mxu0 %v130
    %3076 = vmatprep.subr.mxu0 0.0
    %3077 = vmatpush1.msra.mxu0 %v129
    %3078 = vmatprep.subr.mxu0 0.0
    %3079 = vmatpush2.msra.mxu0 0.0
    %3080 = vmatprep.subr.mxu0 0.0
    %3081 = vmatpush2.msra.mxu0 0.0
    %3082 = vmatprep.subr.mxu0 0.0
    %3083 = vmatpush2.msra.mxu0 0.0
    %3084 = vmatprep.subr.mxu0 0.0
    %3085 = vmatpush2.msra.mxu0 0.0
    %3086 = vmatprep.subr.mxu0 0.0
    %3087 = vmatpush2.msra.mxu0 0.0
    %3088 = vmatprep.subr.mxu0 0.0
    %3089 = vmatpush2.msra.mxu0 0.0
    %3090 = vmatprep.subr.mxu0 0.0
    %3091 = vmatpush2.msra.mxu0 0.0
    %3092 = vmatprep.subr.mxu0 0.0
    %3093 = vmatpush2.msra.mxu0 0.0
    %3094 = vmatprep.subr.mxu0 0.0
    %3095 = vmatpush2.msra.mxu0 0.0
    %3096 = vmatprep.subr.mxu0 0.0
    %3097 = vmatpush2.msra.mxu0 0.0
    %3098 = vmatprep.subr.mxu0 0.0
    %3099 = vmatpush2.msra.mxu0 0.0
    %3100 = vmatprep.subr.mxu0 0.0
    %3101 = vmatpush2.msra.mxu0 0.0
    %3102 = vmatprep.subr.mxu0 0.0
    %3103 = vmatpush2.msra.mxu0 0.0
    %3104 = vmatprep.subr.mxu0 0.0
    %3105 = vmatpush2.msra.mxu0 0.0
    %3106 = vmatprep.subr.mxu0 0.0
    %3107 = vmatpush2.msra.mxu0 0.0
    %3108 = vmatprep.subr.mxu0 0.0
    %3109 = vmatpush2.msra.mxu0 0.0
    %3110 = vmatprep.mubr.f32.mxu0 0.0
    %3111 = vmatmul.mubr.f32.gmra.mxu0 %v215
    %v3112 = vpop.f32.mrf.mxu0
    %v3113 = vadd.f32 %v2547, %v3112
    %v3114 = vpop.f32.mrf.mxu0
    %3115 = vdwg.mxu0
    %3116 = vmatprep.subr.mxu0 0.0
    %3117 = vmatpush1.msra.mxu0 0.0
    %3118 = vmatprep.subr.mxu0 0.0
    %3119 = vmatpush1.msra.mxu0 0.0
    %3120 = vmatprep.subr.mxu0 0.0
    %3121 = vmatpush1.msra.mxu0 0.0
    %3122 = vmatprep.subr.mxu0 0.0
    %3123 = vmatpush1.msra.mxu0 0.0
    %3124 = vmatprep.subr.mxu0 0.0
    %3125 = vmatpush1.msra.mxu0 0.0
    %3126 = vmatprep.subr.mxu0 0.0
    %3127 = vmatpush1.msra.mxu0 0.0
    %3128 = vmatprep.subr.mxu0 0.0
    %3129 = vmatpush1.msra.mxu0 0.0
    %3130 = vmatprep.subr.mxu0 0.0
    %3131 = vmatpush1.msra.mxu0 0.0
    %3132 = vmatprep.subr.mxu0 0.0
    %3133 = vmatpush1.msra.mxu0 0.0
    %3134 = vmatprep.subr.mxu0 0.0
    %3135 = vmatpush1.msra.mxu0 0.0
    %3136 = vmatprep.subr.mxu0 0.0
    %3137 = vmatpush1.msra.mxu0 0.0
    %3138 = vmatprep.subr.mxu0 0.0
    %3139 = vmatpush1.msra.mxu0 0.0
    %3140 = vmatprep.subr.mxu0 0.0
    %3141 = vmatpush1.msra.mxu0 %v104
    %3142 = vmatprep.subr.mxu0 0.0
    %3143 = vmatpush1.msra.mxu0 %v103
    %3144 = vmatprep.subr.mxu0 0.0
    %3145 = vmatpush1.msra.mxu0 %v102
    %3146 = vmatprep.subr.mxu0 0.0
    %3147 = vmatpush1.msra.mxu0 %v101
    %3148 = vmatprep.subr.mxu0 0.0
    %3149 = vmatpush2.msra.mxu0 0.0
    %3150 = vmatprep.subr.mxu0 0.0
    %3151 = vmatpush2.msra.mxu0 0.0
    %3152 = vmatprep.subr.mxu0 0.0
    %3153 = vmatpush2.msra.mxu0 0.0
    %3154 = vmatprep.subr.mxu0 0.0
    %3155 = vmatpush2.msra.mxu0 0.0
    %3156 = vmatprep.subr.mxu0 0.0
    %3157 = vmatpush2.msra.mxu0 0.0
    %3158 = vmatprep.subr.mxu0 0.0
    %3159 = vmatpush2.msra.mxu0 0.0
    %3160 = vmatprep.subr.mxu0 0.0
    %3161 = vmatpush2.msra.mxu0 0.0
    %3162 = vmatprep.subr.mxu0 0.0
    %3163 = vmatpush2.msra.mxu0 0.0
    %3164 = vmatprep.subr.mxu0 0.0
    %3165 = vmatpush2.msra.mxu0 0.0
    %3166 = vmatprep.subr.mxu0 0.0
    %3167 = vmatpush2.msra.mxu0 0.0
    %3168 = vmatprep.subr.mxu0 0.0
    %3169 = vmatpush2.msra.mxu0 0.0
    %3170 = vmatprep.subr.mxu0 0.0
    %3171 = vmatpush2.msra.mxu0 0.0
    %3172 = vmatprep.subr.mxu0 0.0
    %3173 = vmatpush2.msra.mxu0 0.0
    %3174 = vmatprep.subr.mxu0 0.0
    %3175 = vmatpush2.msra.mxu0 0.0
    %3176 = vmatprep.subr.mxu0 0.0
    %3177 = vmatpush2.msra.mxu0 0.0
    %3178 = vmatprep.subr.mxu0 0.0
    %3179 = vmatpush2.msra.mxu0 0.0
    %3180 = vmatprep.mubr.f32.mxu0 0.0
    %3181 = vmatmul.mubr.f32.gmra.mxu0 %v778
    %v3182 = vpop.f32.mrf.mxu0
    %v3183 = vadd.f32 %v2519, %v3182
    %v3184 = vpop.f32.mrf.mxu0
    %3185 = vdwg.mxu0
    %3186 = vmatprep.subr.mxu0 0.0
    %3187 = vmatpush1.msra.mxu0 0.0
    %3188 = vmatprep.subr.mxu0 0.0
    %3189 = vmatpush1.msra.mxu0 0.0
    %3190 = vmatprep.subr.mxu0 0.0
    %3191 = vmatpush1.msra.mxu0 0.0
    %3192 = vmatprep.subr.mxu0 0.0
    %3193 = vmatpush1.msra.mxu0 0.0
    %3194 = vmatprep.subr.mxu0 0.0
    %3195 = vmatpush1.msra.mxu0 0.0
    %3196 = vmatprep.subr.mxu0 0.0
    %3197 = vmatpush1.msra.mxu0 0.0
    %3198 = vmatprep.subr.mxu0 0.0
    %3199 = vmatpush1.msra.mxu0 0.0
    %3200 = vmatprep.subr.mxu0 0.0
    %3201 = vmatpush1.msra.mxu0 0.0
    %3202 = vmatprep.subr.mxu0 0.0
    %3203 = vmatpush1.msra.mxu0 0.0
    %3204 = vmatprep.subr.mxu0 0.0
    %3205 = vmatpush1.msra.mxu0 0.0
    %3206 = vmatprep.subr.mxu0 0.0
    %3207 = vmatpush1.msra.mxu0 0.0
    %3208 = vmatprep.subr.mxu0 0.0
    %3209 = vmatpush1.msra.mxu0 0.0
    %3210 = vmatprep.subr.mxu0 0.0
    %3211 = vmatpush1.msra.mxu0 %v108
    %3212 = vmatprep.subr.mxu0 0.0
    %3213 = vmatpush1.msra.mxu0 %v107
    %3214 = vmatprep.subr.mxu0 0.0
    %3215 = vmatpush1.msra.mxu0 %v106
    %3216 = vmatprep.subr.mxu0 0.0
    %3217 = vmatpush1.msra.mxu0 %v105
    %3218 = vmatprep.subr.mxu0 0.0
    %3219 = vmatpush2.msra.mxu0 0.0
    %3220 = vmatprep.subr.mxu0 0.0
    %3221 = vmatpush2.msra.mxu0 0.0
    %3222 = vmatprep.subr.mxu0 0.0
    %3223 = vmatpush2.msra.mxu0 0.0
    %3224 = vmatprep.subr.mxu0 0.0
    %3225 = vmatpush2.msra.mxu0 0.0
    %3226 = vmatprep.subr.mxu0 0.0
    %3227 = vmatpush2.msra.mxu0 0.0
    %3228 = vmatprep.subr.mxu0 0.0
    %3229 = vmatpush2.msra.mxu0 0.0
    %3230 = vmatprep.subr.mxu0 0.0
    %3231 = vmatpush2.msra.mxu0 0.0
    %3232 = vmatprep.subr.mxu0 0.0
    %3233 = vmatpush2.msra.mxu0 0.0
    %3234 = vmatprep.subr.mxu0 0.0
    %3235 = vmatpush2.msra.mxu0 0.0
    %3236 = vmatprep.subr.mxu0 0.0
    %3237 = vmatpush2.msra.mxu0 0.0
    %3238 = vmatprep.subr.mxu0 0.0
    %3239 = vmatpush2.msra.mxu0 0.0
    %3240 = vmatprep.subr.mxu0 0.0
    %3241 = vmatpush2.msra.mxu0 0.0
    %3242 = vmatprep.subr.mxu0 0.0
    %3243 = vmatpush2.msra.mxu0 0.0
    %3244 = vmatprep.subr.mxu0 0.0
    %3245 = vmatpush2.msra.mxu0 0.0
    %3246 = vmatprep.subr.mxu0 0.0
    %3247 = vmatpush2.msra.mxu0 0.0
    %3248 = vmatprep.subr.mxu0 0.0
    %3249 = vmatpush2.msra.mxu0 0.0
    %3250 = vmatprep.mubr.f32.mxu0 0.0
    %3251 = vmatmul.mubr.f32.gmra.mxu0 %v778
    %v3252 = vpop.f32.mrf.mxu0
    %v3253 = vadd.f32 %v2523, %v3252
    %v3254 = vpop.f32.mrf.mxu0
    %3255 = vdwg.mxu0
    %3256 = vmatprep.subr.mxu0 0.0
    %3257 = vmatpush1.msra.mxu0 0.0
    %3258 = vmatprep.subr.mxu0 0.0
    %3259 = vmatpush1.msra.mxu0 0.0
    %3260 = vmatprep.subr.mxu0 0.0
    %3261 = vmatpush1.msra.mxu0 0.0
    %3262 = vmatprep.subr.mxu0 0.0
    %3263 = vmatpush1.msra.mxu0 0.0
    %3264 = vmatprep.subr.mxu0 0.0
    %3265 = vmatpush1.msra.mxu0 0.0
    %3266 = vmatprep.subr.mxu0 0.0
    %3267 = vmatpush1.msra.mxu0 0.0
    %3268 = vmatprep.subr.mxu0 0.0
    %3269 = vmatpush1.msra.mxu0 0.0
    %3270 = vmatprep.subr.mxu0 0.0
    %3271 = vmatpush1.msra.mxu0 0.0
    %3272 = vmatprep.subr.mxu0 0.0
    %3273 = vmatpush1.msra.mxu0 0.0
    %3274 = vmatprep.subr.mxu0 0.0
    %3275 = vmatpush1.msra.mxu0 0.0
    %3276 = vmatprep.subr.mxu0 0.0
    %3277 = vmatpush1.msra.mxu0 0.0
    %3278 = vmatprep.subr.mxu0 0.0
    %3279 = vmatpush1.msra.mxu0 0.0
    %3280 = vmatprep.subr.mxu0 0.0
    %3281 = vmatpush1.msra.mxu0 %v112
    %3282 = vmatprep.subr.mxu0 0.0
    %3283 = vmatpush1.msra.mxu0 %v111
    %3284 = vmatprep.subr.mxu0 0.0
    %3285 = vmatpush1.msra.mxu0 %v110
    %3286 = vmatprep.subr.mxu0 0.0
    %3287 = vmatpush1.msra.mxu0 %v109
    %3288 = vmatprep.subr.mxu0 0.0
    %3289 = vmatpush2.msra.mxu0 0.0
    %3290 = vmatprep.subr.mxu0 0.0
    %3291 = vmatpush2.msra.mxu0 0.0
    %3292 = vmatprep.subr.mxu0 0.0
    %3293 = vmatpush2.msra.mxu0 0.0
    %3294 = vmatprep.subr.mxu0 0.0
    %3295 = vmatpush2.msra.mxu0 0.0
    %3296 = vmatprep.subr.mxu0 0.0
    %3297 = vmatpush2.msra.mxu0 0.0
    %3298 = vmatprep.subr.mxu0 0.0
    %3299 = vmatpush2.msra.mxu0 0.0
    %3300 = vmatprep.subr.mxu0 0.0
    %3301 = vmatpush2.msra.mxu0 0.0
    %3302 = vmatprep.subr.mxu0 0.0
    %3303 = vmatpush2.msra.mxu0 0.0
    %3304 = vmatprep.subr.mxu0 0.0
    %3305 = vmatpush2.msra.mxu0 0.0
    %3306 = vmatprep.subr.mxu0 0.0
    %3307 = vmatpush2.msra.mxu0 0.0
    %3308 = vmatprep.subr.mxu0 0.0
    %3309 = vmatpush2.msra.mxu0 0.0
    %3310 = vmatprep.subr.mxu0 0.0
    %3311 = vmatpush2.msra.mxu0 0.0
    %3312 = vmatprep.subr.mxu0 0.0
    %3313 = vmatpush2.msra.mxu0 0.0
    %3314 = vmatprep.subr.mxu0 0.0
    %3315 = vmatpush2.msra.mxu0 0.0
    %3316 = vmatprep.subr.mxu0 0.0
    %3317 = vmatpush2.msra.mxu0 0.0
    %3318 = vmatprep.subr.mxu0 0.0
    %3319 = vmatpush2.msra.mxu0 0.0
    %3320 = vmatprep.mubr.f32.mxu0 0.0
    %3321 = vmatmul.mubr.f32.gmra.mxu0 %v778
    %v3322 = vpop.f32.mrf.mxu0
    %v3323 = vadd.f32 %v2527, %v3322
    %v3324 = vpop.f32.mrf.mxu0
    %3325 = vdwg.mxu0
    %3326 = vmatprep.subr.mxu0 0.0
    %3327 = vmatpush1.msra.mxu0 0.0
    %3328 = vmatprep.subr.mxu0 0.0
    %3329 = vmatpush1.msra.mxu0 0.0
    %3330 = vmatprep.subr.mxu0 0.0
    %3331 = vmatpush1.msra.mxu0 0.0
    %3332 = vmatprep.subr.mxu0 0.0
    %3333 = vmatpush1.msra.mxu0 0.0
    %3334 = vmatprep.subr.mxu0 0.0
    %3335 = vmatpush1.msra.mxu0 0.0
    %3336 = vmatprep.subr.mxu0 0.0
    %3337 = vmatpush1.msra.mxu0 0.0
    %3338 = vmatprep.subr.mxu0 0.0
    %3339 = vmatpush1.msra.mxu0 0.0
    %3340 = vmatprep.subr.mxu0 0.0
    %3341 = vmatpush1.msra.mxu0 0.0
    %3342 = vmatprep.subr.mxu0 0.0
    %3343 = vmatpush1.msra.mxu0 0.0
    %3344 = vmatprep.subr.mxu0 0.0
    %3345 = vmatpush1.msra.mxu0 0.0
    %3346 = vmatprep.subr.mxu0 0.0
    %3347 = vmatpush1.msra.mxu0 0.0
    %3348 = vmatprep.subr.mxu0 0.0
    %3349 = vmatpush1.msra.mxu0 0.0
    %3350 = vmatprep.subr.mxu0 0.0
    %3351 = vmatpush1.msra.mxu0 %v116
    %3352 = vmatprep.subr.mxu0 0.0
    %3353 = vmatpush1.msra.mxu0 %v115
    %3354 = vmatprep.subr.mxu0 0.0
    %3355 = vmatpush1.msra.mxu0 %v114
    %3356 = vmatprep.subr.mxu0 0.0
    %3357 = vmatpush1.msra.mxu0 %v113
    %3358 = vmatprep.subr.mxu0 0.0
    %3359 = vmatpush2.msra.mxu0 0.0
    %3360 = vmatprep.subr.mxu0 0.0
    %3361 = vmatpush2.msra.mxu0 0.0
    %3362 = vmatprep.subr.mxu0 0.0
    %3363 = vmatpush2.msra.mxu0 0.0
    %3364 = vmatprep.subr.mxu0 0.0
    %3365 = vmatpush2.msra.mxu0 0.0
    %3366 = vmatprep.subr.mxu0 0.0
    %3367 = vmatpush2.msra.mxu0 0.0
    %3368 = vmatprep.subr.mxu0 0.0
    %3369 = vmatpush2.msra.mxu0 0.0
    %3370 = vmatprep.subr.mxu0 0.0
    %3371 = vmatpush2.msra.mxu0 0.0
    %3372 = vmatprep.subr.mxu0 0.0
    %3373 = vmatpush2.msra.mxu0 0.0
    %3374 = vmatprep.subr.mxu0 0.0
    %3375 = vmatpush2.msra.mxu0 0.0
    %3376 = vmatprep.subr.mxu0 0.0
    %3377 = vmatpush2.msra.mxu0 0.0
    %3378 = vmatprep.subr.mxu0 0.0
    %3379 = vmatpush2.msra.mxu0 0.0
    %3380 = vmatprep.subr.mxu0 0.0
    %3381 = vmatpush2.msra.mxu0 0.0
    %3382 = vmatprep.subr.mxu0 0.0
    %3383 = vmatpush2.msra.mxu0 0.0
    %3384 = vmatprep.subr.mxu0 0.0
    %3385 = vmatpush2.msra.mxu0 0.0
    %3386 = vmatprep.subr.mxu0 0.0
    %3387 = vmatpush2.msra.mxu0 0.0
    %3388 = vmatprep.subr.mxu0 0.0
    %3389 = vmatpush2.msra.mxu0 0.0
    %3390 = vmatprep.mubr.f32.mxu0 0.0
    %3391 = vmatmul.mubr.f32.gmra.mxu0 %v778
    %v3392 = vpop.f32.mrf.mxu0
    %v3393 = vadd.f32 %v2531, %v3392
    %v3394 = vpop.f32.mrf.mxu0
    %3395 = vdwg.mxu0
    %3396 = vmatprep.subr.mxu0 0.0
    %3397 = vmatpush1.msra.mxu0 0.0
    %3398 = vmatprep.subr.mxu0 0.0
    %3399 = vmatpush1.msra.mxu0 0.0
    %3400 = vmatprep.subr.mxu0 0.0
    %3401 = vmatpush1.msra.mxu0 0.0
    %3402 = vmatprep.subr.mxu0 0.0
    %3403 = vmatpush1.msra.mxu0 0.0
    %3404 = vmatprep.subr.mxu0 0.0
    %3405 = vmatpush1.msra.mxu0 0.0
    %3406 = vmatprep.subr.mxu0 0.0
    %3407 = vmatpush1.msra.mxu0 0.0
    %3408 = vmatprep.subr.mxu0 0.0
    %3409 = vmatpush1.msra.mxu0 0.0
    %3410 = vmatprep.subr.mxu0 0.0
    %3411 = vmatpush1.msra.mxu0 0.0
    %3412 = vmatprep.subr.mxu0 0.0
    %3413 = vmatpush1.msra.mxu0 0.0
    %3414 = vmatprep.subr.mxu0 0.0
    %3415 = vmatpush1.msra.mxu0 0.0
    %3416 = vmatprep.subr.mxu0 0.0
    %3417 = vmatpush1.msra.mxu0 0.0
    %3418 = vmatprep.subr.mxu0 0.0
    %3419 = vmatpush1.msra.mxu0 0.0
    %3420 = vmatprep.subr.mxu0 0.0
    %3421 = vmatpush1.msra.mxu0 %v120
    %3422 = vmatprep.subr.mxu0 0.0
    %3423 = vmatpush1.msra.mxu0 %v119
    %3424 = vmatprep.subr.mxu0 0.0
    %3425 = vmatpush1.msra.mxu0 %v118
    %3426 = vmatprep.subr.mxu0 0.0
    %3427 = vmatpush1.msra.mxu0 %v117
    %3428 = vmatprep.subr.mxu0 0.0
    %3429 = vmatpush2.msra.mxu0 0.0
    %3430 = vmatprep.subr.mxu0 0.0
    %3431 = vmatpush2.msra.mxu0 0.0
    %3432 = vmatprep.subr.mxu0 0.0
    %3433 = vmatpush2.msra.mxu0 0.0
    %3434 = vmatprep.subr.mxu0 0.0
    %3435 = vmatpush2.msra.mxu0 0.0
    %3436 = vmatprep.subr.mxu0 0.0
    %3437 = vmatpush2.msra.mxu0 0.0
    %3438 = vmatprep.subr.mxu0 0.0
    %3439 = vmatpush2.msra.mxu0 0.0
    %3440 = vmatprep.subr.mxu0 0.0
    %3441 = vmatpush2.msra.mxu0 0.0
    %3442 = vmatprep.subr.mxu0 0.0
    %3443 = vmatpush2.msra.mxu0 0.0
    %3444 = vmatprep.subr.mxu0 0.0
    %3445 = vmatpush2.msra.mxu0 0.0
    %3446 = vmatprep.subr.mxu0 0.0
    %3447 = vmatpush2.msra.mxu0 0.0
    %3448 = vmatprep.subr.mxu0 0.0
    %3449 = vmatpush2.msra.mxu0 0.0
    %3450 = vmatprep.subr.mxu0 0.0
    %3451 = vmatpush2.msra.mxu0 0.0
    %3452 = vmatprep.subr.mxu0 0.0
    %3453 = vmatpush2.msra.mxu0 0.0
    %3454 = vmatprep.subr.mxu0 0.0
    %3455 = vmatpush2.msra.mxu0 0.0
    %3456 = vmatprep.subr.mxu0 0.0
    %3457 = vmatpush2.msra.mxu0 0.0
    %3458 = vmatprep.subr.mxu0 0.0
    %3459 = vmatpush2.msra.mxu0 0.0
    %3460 = vmatprep.mubr.f32.mxu0 0.0
    %3461 = vmatmul.mubr.f32.gmra.mxu0 %v778
    %v3462 = vpop.f32.mrf.mxu0
    %v3463 = vadd.f32 %v2535, %v3462
    %v3464 = vpop.f32.mrf.mxu0
    %3465 = vdwg.mxu0
    %3466 = vmatprep.subr.mxu0 0.0
    %3467 = vmatpush1.msra.mxu0 0.0
    %3468 = vmatprep.subr.mxu0 0.0
    %3469 = vmatpush1.msra.mxu0 0.0
    %3470 = vmatprep.subr.mxu0 0.0
    %3471 = vmatpush1.msra.mxu0 0.0
    %3472 = vmatprep.subr.mxu0 0.0
    %3473 = vmatpush1.msra.mxu0 0.0
    %3474 = vmatprep.subr.mxu0 0.0
    %3475 = vmatpush1.msra.mxu0 0.0
    %3476 = vmatprep.subr.mxu0 0.0
    %3477 = vmatpush1.msra.mxu0 0.0
    %3478 = vmatprep.subr.mxu0 0.0
    %3479 = vmatpush1.msra.mxu0 0.0
    %3480 = vmatprep.subr.mxu0 0.0
    %3481 = vmatpush1.msra.mxu0 0.0
    %3482 = vmatprep.subr.mxu0 0.0
    %3483 = vmatpush1.msra.mxu0 0.0
    %3484 = vmatprep.subr.mxu0 0.0
    %3485 = vmatpush1.msra.mxu0 0.0
    %3486 = vmatprep.subr.mxu0 0.0
    %3487 = vmatpush1.msra.mxu0 0.0
    %3488 = vmatprep.subr.mxu0 0.0
    %3489 = vmatpush1.msra.mxu0 0.0
    %3490 = vmatprep.subr.mxu0 0.0
    %3491 = vmatpush1.msra.mxu0 %v124
    %3492 = vmatprep.subr.mxu0 0.0
    %3493 = vmatpush1.msra.mxu0 %v123
    %3494 = vmatprep.subr.mxu0 0.0
    %3495 = vmatpush1.msra.mxu0 %v122
    %3496 = vmatprep.subr.mxu0 0.0
    %3497 = vmatpush1.msra.mxu0 %v121
    %3498 = vmatprep.subr.mxu0 0.0
    %3499 = vmatpush2.msra.mxu0 0.0
    %3500 = vmatprep.subr.mxu0 0.0
    %3501 = vmatpush2.msra.mxu0 0.0
    %3502 = vmatprep.subr.mxu0 0.0
    %3503 = vmatpush2.msra.mxu0 0.0
    %3504 = vmatprep.subr.mxu0 0.0
    %3505 = vmatpush2.msra.mxu0 0.0
    %3506 = vmatprep.subr.mxu0 0.0
    %3507 = vmatpush2.msra.mxu0 0.0
    %3508 = vmatprep.subr.mxu0 0.0
    %3509 = vmatpush2.msra.mxu0 0.0
    %3510 = vmatprep.subr.mxu0 0.0
    %3511 = vmatpush2.msra.mxu0 0.0
    %3512 = vmatprep.subr.mxu0 0.0
    %3513 = vmatpush2.msra.mxu0 0.0
    %3514 = vmatprep.subr.mxu0 0.0
    %3515 = vmatpush2.msra.mxu0 0.0
    %3516 = vmatprep.subr.mxu0 0.0
    %3517 = vmatpush2.msra.mxu0 0.0
    %3518 = vmatprep.subr.mxu0 0.0
    %3519 = vmatpush2.msra.mxu0 0.0
    %3520 = vmatprep.subr.mxu0 0.0
    %3521 = vmatpush2.msra.mxu0 0.0
    %3522 = vmatprep.subr.mxu0 0.0
    %3523 = vmatpush2.msra.mxu0 0.0
    %3524 = vmatprep.subr.mxu0 0.0
    %3525 = vmatpush2.msra.mxu0 0.0
    %3526 = vmatprep.subr.mxu0 0.0
    %3527 = vmatpush2.msra.mxu0 0.0
    %3528 = vmatprep.subr.mxu0 0.0
    %3529 = vmatpush2.msra.mxu0 0.0
    %3530 = vmatprep.mubr.f32.mxu0 0.0
    %3531 = vmatmul.mubr.f32.gmra.mxu0 %v778
    %v3532 = vpop.f32.mrf.mxu0
    %v3533 = vadd.f32 %v2539, %v3532
    %v3534 = vpop.f32.mrf.mxu0
    %3535 = vdwg.mxu0
    %3536 = vmatprep.subr.mxu0 0.0
    %3537 = vmatpush1.msra.mxu0 0.0
    %3538 = vmatprep.subr.mxu0 0.0
    %3539 = vmatpush1.msra.mxu0 0.0
    %3540 = vmatprep.subr.mxu0 0.0
    %3541 = vmatpush1.msra.mxu0 0.0
    %3542 = vmatprep.subr.mxu0 0.0
    %3543 = vmatpush1.msra.mxu0 0.0
    %3544 = vmatprep.subr.mxu0 0.0
    %3545 = vmatpush1.msra.mxu0 0.0
    %3546 = vmatprep.subr.mxu0 0.0
    %3547 = vmatpush1.msra.mxu0 0.0
    %3548 = vmatprep.subr.mxu0 0.0
    %3549 = vmatpush1.msra.mxu0 0.0
    %3550 = vmatprep.subr.mxu0 0.0
    %3551 = vmatpush1.msra.mxu0 0.0
    %3552 = vmatprep.subr.mxu0 0.0
    %3553 = vmatpush1.msra.mxu0 0.0
    %3554 = vmatprep.subr.mxu0 0.0
    %3555 = vmatpush1.msra.mxu0 0.0
    %3556 = vmatprep.subr.mxu0 0.0
    %3557 = vmatpush1.msra.mxu0 0.0
    %3558 = vmatprep.subr.mxu0 0.0
    %3559 = vmatpush1.msra.mxu0 0.0
    %3560 = vmatprep.subr.mxu0 0.0
    %3561 = vmatpush1.msra.mxu0 %v128
    %3562 = vmatprep.subr.mxu0 0.0
    %3563 = vmatpush1.msra.mxu0 %v127
    %3564 = vmatprep.subr.mxu0 0.0
    %3565 = vmatpush1.msra.mxu0 %v126
    %3566 = vmatprep.subr.mxu0 0.0
    %3567 = vmatpush1.msra.mxu0 %v125
    %3568 = vmatprep.subr.mxu0 0.0
    %3569 = vmatpush2.msra.mxu0 0.0
    %3570 = vmatprep.subr.mxu0 0.0
    %3571 = vmatpush2.msra.mxu0 0.0
    %3572 = vmatprep.subr.mxu0 0.0
    %3573 = vmatpush2.msra.mxu0 0.0
    %3574 = vmatprep.subr.mxu0 0.0
    %3575 = vmatpush2.msra.mxu0 0.0
    %3576 = vmatprep.subr.mxu0 0.0
    %3577 = vmatpush2.msra.mxu0 0.0
    %3578 = vmatprep.subr.mxu0 0.0
    %3579 = vmatpush2.msra.mxu0 0.0
    %3580 = vmatprep.subr.mxu0 0.0
    %3581 = vmatpush2.msra.mxu0 0.0
    %3582 = vmatprep.subr.mxu0 0.0
    %3583 = vmatpush2.msra.mxu0 0.0
    %3584 = vmatprep.subr.mxu0 0.0
    %3585 = vmatpush2.msra.mxu0 0.0
    %3586 = vmatprep.subr.mxu0 0.0
    %3587 = vmatpush2.msra.mxu0 0.0
    %3588 = vmatprep.subr.mxu0 0.0
    %3589 = vmatpush2.msra.mxu0 0.0
    %3590 = vmatprep.subr.mxu0 0.0
    %3591 = vmatpush2.msra.mxu0 0.0
    %3592 = vmatprep.subr.mxu0 0.0
    %3593 = vmatpush2.msra.mxu0 0.0
    %3594 = vmatprep.subr.mxu0 0.0
    %3595 = vmatpush2.msra.mxu0 0.0
    %3596 = vmatprep.subr.mxu0 0.0
    %3597 = vmatpush2.msra.mxu0 0.0
    %3598 = vmatprep.subr.mxu0 0.0
    %3599 = vmatpush2.msra.mxu0 0.0
    %3600 = vmatprep.mubr.f32.mxu0 0.0
    %3601 = vmatmul.mubr.f32.gmra.mxu0 %v778
    %v3602 = vpop.f32.mrf.mxu0
    %v3603 = vadd.f32 %v2543, %v3602
    %v3604 = vpop.f32.mrf.mxu0
    %3605 = vdwg.mxu0
    %3606 = vmatprep.subr.mxu0 0.0
    %3607 = vmatpush1.msra.mxu0 0.0
    %3608 = vmatprep.subr.mxu0 0.0
    %3609 = vmatpush1.msra.mxu0 0.0
    %3610 = vmatprep.subr.mxu0 0.0
    %3611 = vmatpush1.msra.mxu0 0.0
    %3612 = vmatprep.subr.mxu0 0.0
    %3613 = vmatpush1.msra.mxu0 0.0
    %3614 = vmatprep.subr.mxu0 0.0
    %3615 = vmatpush1.msra.mxu0 0.0
    %3616 = vmatprep.subr.mxu0 0.0
    %3617 = vmatpush1.msra.mxu0 0.0
    %3618 = vmatprep.subr.mxu0 0.0
    %3619 = vmatpush1.msra.mxu0 0.0
    %3620 = vmatprep.subr.mxu0 0.0
    %3621 = vmatpush1.msra.mxu0 0.0
    %3622 = vmatprep.subr.mxu0 0.0
    %3623 = vmatpush1.msra.mxu0 0.0
    %3624 = vmatprep.subr.mxu0 0.0
    %3625 = vmatpush1.msra.mxu0 0.0
    %3626 = vmatprep.subr.mxu0 0.0
    %3627 = vmatpush1.msra.mxu0 0.0
    %3628 = vmatprep.subr.mxu0 0.0
    %3629 = vmatpush1.msra.mxu0 0.0
    %3630 = vmatprep.subr.mxu0 0.0
    %3631 = vmatpush1.msra.mxu0 %v132
    %3632 = vmatprep.subr.mxu0 0.0
    %3633 = vmatpush1.msra.mxu0 %v131
    %3634 = vmatprep.subr.mxu0 0.0
    %3635 = vmatpush1.msra.mxu0 %v130
    %3636 = vmatprep.subr.mxu0 0.0
    %3637 = vmatpush1.msra.mxu0 %v129
    %3638 = vmatprep.subr.mxu0 0.0
    %3639 = vmatpush2.msra.mxu0 0.0
    %3640 = vmatprep.subr.mxu0 0.0
    %3641 = vmatpush2.msra.mxu0 0.0
    %3642 = vmatprep.subr.mxu0 0.0
    %3643 = vmatpush2.msra.mxu0 0.0
    %3644 = vmatprep.subr.mxu0 0.0
    %3645 = vmatpush2.msra.mxu0 0.0
    %3646 = vmatprep.subr.mxu0 0.0
    %3647 = vmatpush2.msra.mxu0 0.0
    %3648 = vmatprep.subr.mxu0 0.0
    %3649 = vmatpush2.msra.mxu0 0.0
    %3650 = vmatprep.subr.mxu0 0.0
    %3651 = vmatpush2.msra.mxu0 0.0
    %3652 = vmatprep.subr.mxu0 0.0
    %3653 = vmatpush2.msra.mxu0 0.0
    %3654 = vmatprep.subr.mxu0 0.0
    %3655 = vmatpush2.msra.mxu0 0.0
    %3656 = vmatprep.subr.mxu0 0.0
    %3657 = vmatpush2.msra.mxu0 0.0
    %3658 = vmatprep.subr.mxu0 0.0
    %3659 = vmatpush2.msra.mxu0 0.0
    %3660 = vmatprep.subr.mxu0 0.0
    %3661 = vmatpush2.msra.mxu0 0.0
    %3662 = vmatprep.subr.mxu0 0.0
    %3663 = vmatpush2.msra.mxu0 0.0
    %3664 = vmatprep.subr.mxu0 0.0
    %3665 = vmatpush2.msra.mxu0 0.0
    %3666 = vmatprep.subr.mxu0 0.0
    %3667 = vmatpush2.msra.mxu0 0.0
    %3668 = vmatprep.subr.mxu0 0.0
    %3669 = vmatpush2.msra.mxu0 0.0
    %3670 = vmatprep.mubr.f32.mxu0 0.0
    %3671 = vmatmul.mubr.f32.gmra.mxu0 %v778
    %v3672 = vpop.f32.mrf.mxu0
    %v3673 = vadd.f32 %v2547, %v3672
    %v3674 = vpop.f32.mrf.mxu0
    %3675 = vdwg.mxu0
    %vm3676 = vcmask 31744
    %v3678 = vsel %vm3676, %v284, 0
    %v3681 = vsel %vm3676, %v1455, 0
    %3683 = vmatprep.subr.mxu0 0.0
    %3684 = vmatpush1.xpose.msra.mxu0 0.0
    %3685 = vmatprep.subr.mxu0 0.0
    %3686 = vmatpush1.xpose.msra.mxu0 0.0
    %3687 = vmatprep.subr.mxu0 0.0
    %3688 = vmatpush1.xpose.msra.mxu0 0.0
    %3689 = vmatprep.subr.mxu0 0.0
    %3690 = vmatpush1.xpose.msra.mxu0 0.0
    %3691 = vmatprep.subr.mxu0 0.0
    %3692 = vmatpush1.xpose.msra.mxu0 0.0
    %3693 = vmatprep.subr.mxu0 0.0
    %3694 = vmatpush1.xpose.msra.mxu0 0.0
    %3695 = vmatprep.subr.mxu0 0.0
    %3696 = vmatpush1.xpose.msra.mxu0 0.0
    %3697 = vmatprep.subr.mxu0 0.0
    %3698 = vmatpush1.xpose.msra.mxu0 0.0
    %3699 = vmatprep.subr.mxu0 0.0
    %3700 = vmatpush1.xpose.msra.mxu0 0.0
    %3701 = vmatprep.subr.mxu0 0.0
    %3702 = vmatpush1.xpose.msra.mxu0 0.0
    %3703 = vmatprep.subr.mxu0 0.0
    %3704 = vmatpush1.xpose.msra.mxu0 0.0
    %3705 = vmatprep.subr.mxu0 0.0
    %3706 = vmatpush1.xpose.msra.mxu0 0.0
    %3707 = vmatprep.subr.mxu0 0.0
    %3708 = vmatpush1.xpose.msra.mxu0 0.0
    %3709 = vmatprep.subr.mxu0 0.0
    %3710 = vmatpush1.xpose.msra.mxu0 0.0
    %3711 = vmatprep.subr.mxu0 0.0
    %3712 = vmatpush1.xpose.msra.mxu0 0.0
    %3713 = vmatprep.subr.mxu0 0.0
    %3714 = vmatpush1.xpose.msra.mxu0 %v3681
    %3715 = vmatprep.subr.mxu0 0.0
    %3716 = vmatpush2.xpose.msra.mxu0 0.0
    %3717 = vmatprep.subr.mxu0 0.0
    %3718 = vmatpush2.xpose.msra.mxu0 0.0
    %3719 = vmatprep.subr.mxu0 0.0
    %3720 = vmatpush2.xpose.msra.mxu0 0.0
    %3721 = vmatprep.subr.mxu0 0.0
    %3722 = vmatpush2.xpose.msra.mxu0 0.0
    %3723 = vmatprep.subr.mxu0 0.0
    %3724 = vmatpush2.xpose.msra.mxu0 0.0
    %3725 = vmatprep.subr.mxu0 0.0
    %3726 = vmatpush2.xpose.msra.mxu0 0.0
    %3727 = vmatprep.subr.mxu0 0.0
    %3728 = vmatpush2.xpose.msra.mxu0 0.0
    %3729 = vmatprep.subr.mxu0 0.0
    %3730 = vmatpush2.xpose.msra.mxu0 0.0
    %3731 = vmatprep.subr.mxu0 0.0
    %3732 = vmatpush2.xpose.msra.mxu0 0.0
    %3733 = vmatprep.subr.mxu0 0.0
    %3734 = vmatpush2.xpose.msra.mxu0 0.0
    %3735 = vmatprep.subr.mxu0 0.0
    %3736 = vmatpush2.xpose.msra.mxu0 0.0
    %3737 = vmatprep.subr.mxu0 0.0
    %3738 = vmatpush2.xpose.msra.mxu0 0.0
    %3739 = vmatprep.subr.mxu0 0.0
    %3740 = vmatpush2.xpose.msra.mxu0 0.0
    %3741 = vmatprep.subr.mxu0 0.0
    %3742 = vmatpush2.xpose.msra.mxu0 0.0
    %3743 = vmatprep.subr.mxu0 0.0
    %3744 = vmatpush2.xpose.msra.mxu0 0.0
    %3745 = vmatprep.subr.mxu0 0.0
    %3746 = vmatpush2.xpose.msra.mxu0 0.0
    %3747 = vmatprep.mubr.f32.mxu0 0.0
    %3748 = vmatmul.mubr.f32.gmra.mxu0 %v3678
    %v3749 = vpop.f32.mrf.mxu0
    %v3750 = vadd.f32 0.0, %v3749
    %v3751 = vpop.f32.mrf.mxu0
    %3752 = vdwg.mxu0
    %v3754 = vsel %vm3676, %v354, 0
    %v3757 = vsel %vm3676, %v1525, 0
    %3759 = vmatprep.subr.mxu0 0.0
    %3760 = vmatpush1.xpose.msra.mxu0 0.0
    %3761 = vmatprep.subr.mxu0 0.0
    %3762 = vmatpush1.xpose.msra.mxu0 0.0
    %3763 = vmatprep.subr.mxu0 0.0
    %3764 = vmatpush1.xpose.msra.mxu0 0.0
    %3765 = vmatprep.subr.mxu0 0.0
    %3766 = vmatpush1.xpose.msra.mxu0 0.0
    %3767 = vmatprep.subr.mxu0 0.0
    %3768 = vmatpush1.xpose.msra.mxu0 0.0
    %3769 = vmatprep.subr.mxu0 0.0
    %3770 = vmatpush1.xpose.msra.mxu0 0.0
    %3771 = vmatprep.subr.mxu0 0.0
    %3772 = vmatpush1.xpose.msra.mxu0 0.0
    %3773 = vmatprep.subr.mxu0 0.0
    %3774 = vmatpush1.xpose.msra.mxu0 0.0
    %3775 = vmatprep.subr.mxu0 0.0
    %3776 = vmatpush1.xpose.msra.mxu0 0.0
    %3777 = vmatprep.subr.mxu0 0.0
    %3778 = vmatpush1.xpose.msra.mxu0 0.0
    %3779 = vmatprep.subr.mxu0 0.0
    %3780 = vmatpush1.xpose.msra.mxu0 0.0
    %3781 = vmatprep.subr.mxu0 0.0
    %3782 = vmatpush1.xpose.msra.mxu0 0.0
    %3783 = vmatprep.subr.mxu0 0.0
    %3784 = vmatpush1.xpose.msra.mxu0 0.0
    %3785 = vmatprep.subr.mxu0 0.0
    %3786 = vmatpush1.xpose.msra.mxu0 0.0
    %3787 = vmatprep.subr.mxu0 0.0
    %3788 = vmatpush1.xpose.msra.mxu0 0.0
    %3789 = vmatprep.subr.mxu0 0.0
    %3790 = vmatpush1.xpose.msra.mxu0 %v3757
    %3791 = vmatprep.subr.mxu0 0.0
    %3792 = vmatpush2.xpose.msra.mxu0 0.0
    %3793 = vmatprep.subr.mxu0 0.0
    %3794 = vmatpush2.xpose.msra.mxu0 0.0
    %3795 = vmatprep.subr.mxu0 0.0
    %3796 = vmatpush2.xpose.msra.mxu0 0.0
    %3797 = vmatprep.subr.mxu0 0.0
    %3798 = vmatpush2.xpose.msra.mxu0 0.0
    %3799 = vmatprep.subr.mxu0 0.0
    %3800 = vmatpush2.xpose.msra.mxu0 0.0
    %3801 = vmatprep.subr.mxu0 0.0
    %3802 = vmatpush2.xpose.msra.mxu0 0.0
    %3803 = vmatprep.subr.mxu0 0.0
    %3804 = vmatpush2.xpose.msra.mxu0 0.0
    %3805 = vmatprep.subr.mxu0 0.0
    %3806 = vmatpush2.xpose.msra.mxu0 0.0
    %3807 = vmatprep.subr.mxu0 0.0
    %3808 = vmatpush2.xpose.msra.mxu0 0.0
    %3809 = vmatprep.subr.mxu0 0.0
    %3810 = vmatpush2.xpose.msra.mxu0 0.0
    %3811 = vmatprep.subr.mxu0 0.0
    %3812 = vmatpush2.xpose.msra.mxu0 0.0
    %3813 = vmatprep.subr.mxu0 0.0
    %3814 = vmatpush2.xpose.msra.mxu0 0.0
    %3815 = vmatprep.subr.mxu0 0.0
    %3816 = vmatpush2.xpose.msra.mxu0 0.0
    %3817 = vmatprep.subr.mxu0 0.0
    %3818 = vmatpush2.xpose.msra.mxu0 0.0
    %3819 = vmatprep.subr.mxu0 0.0
    %3820 = vmatpush2.xpose.msra.mxu0 0.0
    %3821 = vmatprep.subr.mxu0 0.0
    %3822 = vmatpush2.xpose.msra.mxu0 0.0
    %3823 = vmatprep.mubr.f32.mxu0 0.0
    %3824 = vmatmul.mubr.f32.gmra.mxu0 %v3754
    %v3825 = vpop.f32.mrf.mxu0
    %v3826 = vadd.f32 0.0, %v3825
    %v3827 = vpop.f32.mrf.mxu0
    %3828 = vdwg.mxu0
    %v3830 = vsel %vm3676, %v424, 0
    %v3833 = vsel %vm3676, %v1595, 0
    %3835 = vmatprep.subr.mxu0 0.0
    %3836 = vmatpush1.xpose.msra.mxu0 0.0
    %3837 = vmatprep.subr.mxu0 0.0
    %3838 = vmatpush1.xpose.msra.mxu0 0.0
    %3839 = vmatprep.subr.mxu0 0.0
    %3840 = vmatpush1.xpose.msra.mxu0 0.0
    %3841 = vmatprep.subr.mxu0 0.0
    %3842 = vmatpush1.xpose.msra.mxu0 0.0
    %3843 = vmatprep.subr.mxu0 0.0
    %3844 = vmatpush1.xpose.msra.mxu0 0.0
    %3845 = vmatprep.subr.mxu0 0.0
    %3846 = vmatpush1.xpose.msra.mxu0 0.0
    %3847 = vmatprep.subr.mxu0 0.0
    %3848 = vmatpush1.xpose.msra.mxu0 0.0
    %3849 = vmatprep.subr.mxu0 0.0
    %3850 = vmatpush1.xpose.msra.mxu0 0.0
    %3851 = vmatprep.subr.mxu0 0.0
    %3852 = vmatpush1.xpose.msra.mxu0 0.0
    %3853 = vmatprep.subr.mxu0 0.0
    %3854 = vmatpush1.xpose.msra.mxu0 0.0
    %3855 = vmatprep.subr.mxu0 0.0
    %3856 = vmatpush1.xpose.msra.mxu0 0.0
    %3857 = vmatprep.subr.mxu0 0.0
    %3858 = vmatpush1.xpose.msra.mxu0 0.0
    %3859 = vmatprep.subr.mxu0 0.0
    %3860 = vmatpush1.xpose.msra.mxu0 0.0
    %3861 = vmatprep.subr.mxu0 0.0
    %3862 = vmatpush1.xpose.msra.mxu0 0.0
    %3863 = vmatprep.subr.mxu0 0.0
    %3864 = vmatpush1.xpose.msra.mxu0 0.0
    %3865 = vmatprep.subr.mxu0 0.0
    %3866 = vmatpush1.xpose.msra.mxu0 %v3833
    %3867 = vmatprep.subr.mxu0 0.0
    %3868 = vmatpush2.xpose.msra.mxu0 0.0
    %3869 = vmatprep.subr.mxu0 0.0
    %3870 = vmatpush2.xpose.msra.mxu0 0.0
    %3871 = vmatprep.subr.mxu0 0.0
    %3872 = vmatpush2.xpose.msra.mxu0 0.0
    %3873 = vmatprep.subr.mxu0 0.0
    %3874 = vmatpush2.xpose.msra.mxu0 0.0
    %3875 = vmatprep.subr.mxu0 0.0
    %3876 = vmatpush2.xpose.msra.mxu0 0.0
    %3877 = vmatprep.subr.mxu0 0.0
    %3878 = vmatpush2.xpose.msra.mxu0 0.0
    %3879 = vmatprep.subr.mxu0 0.0
    %3880 = vmatpush2.xpose.msra.mxu0 0.0
    %3881 = vmatprep.subr.mxu0 0.0
    %3882 = vmatpush2.xpose.msra.mxu0 0.0
    %3883 = vmatprep.subr.mxu0 0.0
    %3884 = vmatpush2.xpose.msra.mxu0 0.0
    %3885 = vmatprep.subr.mxu0 0.0
    %3886 = vmatpush2.xpose.msra.mxu0 0.0
    %3887 = vmatprep.subr.mxu0 0.0
    %3888 = vmatpush2.xpose.msra.mxu0 0.0
    %3889 = vmatprep.subr.mxu0 0.0
    %3890 = vmatpush2.xpose.msra.mxu0 0.0
    %3891 = vmatprep.subr.mxu0 0.0
    %3892 = vmatpush2.xpose.msra.mxu0 0.0
    %3893 = vmatprep.subr.mxu0 0.0
    %3894 = vmatpush2.xpose.msra.mxu0 0.0
    %3895 = vmatprep.subr.mxu0 0.0
    %3896 = vmatpush2.xpose.msra.mxu0 0.0
    %3897 = vmatprep.subr.mxu0 0.0
    %3898 = vmatpush2.xpose.msra.mxu0 0.0
    %3899 = vmatprep.mubr.f32.mxu0 0.0
    %3900 = vmatmul.mubr.f32.gmra.mxu0 %v3830
    %v3901 = vpop.f32.mrf.mxu0
    %v3902 = vadd.f32 0.0, %v3901
    %v3903 = vpop.f32.mrf.mxu0
    %3904 = vdwg.mxu0
    %v3906 = vsel %vm3676, %v494, 0
    %v3909 = vsel %vm3676, %v1665, 0
    %3911 = vmatprep.subr.mxu0 0.0
    %3912 = vmatpush1.xpose.msra.mxu0 0.0
    %3913 = vmatprep.subr.mxu0 0.0
    %3914 = vmatpush1.xpose.msra.mxu0 0.0
    %3915 = vmatprep.subr.mxu0 0.0
    %3916 = vmatpush1.xpose.msra.mxu0 0.0
    %3917 = vmatprep.subr.mxu0 0.0
    %3918 = vmatpush1.xpose.msra.mxu0 0.0
    %3919 = vmatprep.subr.mxu0 0.0
    %3920 = vmatpush1.xpose.msra.mxu0 0.0
    %3921 = vmatprep.subr.mxu0 0.0
    %3922 = vmatpush1.xpose.msra.mxu0 0.0
    %3923 = vmatprep.subr.mxu0 0.0
    %3924 = vmatpush1.xpose.msra.mxu0 0.0
    %3925 = vmatprep.subr.mxu0 0.0
    %3926 = vmatpush1.xpose.msra.mxu0 0.0
    %3927 = vmatprep.subr.mxu0 0.0
    %3928 = vmatpush1.xpose.msra.mxu0 0.0
    %3929 = vmatprep.subr.mxu0 0.0
    %3930 = vmatpush1.xpose.msra.mxu0 0.0
    %3931 = vmatprep.subr.mxu0 0.0
    %3932 = vmatpush1.xpose.msra.mxu0 0.0
    %3933 = vmatprep.subr.mxu0 0.0
    %3934 = vmatpush1.xpose.msra.mxu0 0.0
    %3935 = vmatprep.subr.mxu0 0.0
    %3936 = vmatpush1.xpose.msra.mxu0 0.0
    %3937 = vmatprep.subr.mxu0 0.0
    %3938 = vmatpush1.xpose.msra.mxu0 0.0
    %3939 = vmatprep.subr.mxu0 0.0
    %3940 = vmatpush1.xpose.msra.mxu0 0.0
    %3941 = vmatprep.subr.mxu0 0.0
    %3942 = vmatpush1.xpose.msra.mxu0 %v3909
    %3943 = vmatprep.subr.mxu0 0.0
    %3944 = vmatpush2.xpose.msra.mxu0 0.0
    %3945 = vmatprep.subr.mxu0 0.0
    %3946 = vmatpush2.xpose.msra.mxu0 0.0
    %3947 = vmatprep.subr.mxu0 0.0
    %3948 = vmatpush2.xpose.msra.mxu0 0.0
    %3949 = vmatprep.subr.mxu0 0.0
    %3950 = vmatpush2.xpose.msra.mxu0 0.0
    %3951 = vmatprep.subr.mxu0 0.0
    %3952 = vmatpush2.xpose.msra.mxu0 0.0
    %3953 = vmatprep.subr.mxu0 0.0
    %3954 = vmatpush2.xpose.msra.mxu0 0.0
    %3955 = vmatprep.subr.mxu0 0.0
    %3956 = vmatpush2.xpose.msra.mxu0 0.0
    %3957 = vmatprep.subr.mxu0 0.0
    %3958 = vmatpush2.xpose.msra.mxu0 0.0
    %3959 = vmatprep.subr.mxu0 0.0
    %3960 = vmatpush2.xpose.msra.mxu0 0.0
    %3961 = vmatprep.subr.mxu0 0.0
    %3962 = vmatpush2.xpose.msra.mxu0 0.0
    %3963 = vmatprep.subr.mxu0 0.0
    %3964 = vmatpush2.xpose.msra.mxu0 0.0
    %3965 = vmatprep.subr.mxu0 0.0
    %3966 = vmatpush2.xpose.msra.mxu0 0.0
    %3967 = vmatprep.subr.mxu0 0.0
    %3968 = vmatpush2.xpose.msra.mxu0 0.0
    %3969 = vmatprep.subr.mxu0 0.0
    %3970 = vmatpush2.xpose.msra.mxu0 0.0
    %3971 = vmatprep.subr.mxu0 0.0
    %3972 = vmatpush2.xpose.msra.mxu0 0.0
    %3973 = vmatprep.subr.mxu0 0.0
    %3974 = vmatpush2.xpose.msra.mxu0 0.0
    %3975 = vmatprep.mubr.f32.mxu0 0.0
    %3976 = vmatmul.mubr.f32.gmra.mxu0 %v3906
    %v3977 = vpop.f32.mrf.mxu0
    %v3978 = vadd.f32 0.0, %v3977
    %v3979 = vpop.f32.mrf.mxu0
    %3980 = vdwg.mxu0
    %v3982 = vsel %vm3676, %v564, 0
    %v3985 = vsel %vm3676, %v1735, 0
    %3987 = vmatprep.subr.mxu0 0.0
    %3988 = vmatpush1.xpose.msra.mxu0 0.0
    %3989 = vmatprep.subr.mxu0 0.0
    %3990 = vmatpush1.xpose.msra.mxu0 0.0
    %3991 = vmatprep.subr.mxu0 0.0
    %3992 = vmatpush1.xpose.msra.mxu0 0.0
    %3993 = vmatprep.subr.mxu0 0.0
    %3994 = vmatpush1.xpose.msra.mxu0 0.0
    %3995 = vmatprep.subr.mxu0 0.0
    %3996 = vmatpush1.xpose.msra.mxu0 0.0
    %3997 = vmatprep.subr.mxu0 0.0
    %3998 = vmatpush1.xpose.msra.mxu0 0.0
    %3999 = vmatprep.subr.mxu0 0.0
    %4000 = vmatpush1.xpose.msra.mxu0 0.0
    %4001 = vmatprep.subr.mxu0 0.0
    %4002 = vmatpush1.xpose.msra.mxu0 0.0
    %4003 = vmatprep.subr.mxu0 0.0
    %4004 = vmatpush1.xpose.msra.mxu0 0.0
    %4005 = vmatprep.subr.mxu0 0.0
    %4006 = vmatpush1.xpose.msra.mxu0 0.0
    %4007 = vmatprep.subr.mxu0 0.0
    %4008 = vmatpush1.xpose.msra.mxu0 0.0
    %4009 = vmatprep.subr.mxu0 0.0
    %4010 = vmatpush1.xpose.msra.mxu0 0.0
    %4011 = vmatprep.subr.mxu0 0.0
    %4012 = vmatpush1.xpose.msra.mxu0 0.0
    %4013 = vmatprep.subr.mxu0 0.0
    %4014 = vmatpush1.xpose.msra.mxu0 0.0
    %4015 = vmatprep.subr.mxu0 0.0
    %4016 = vmatpush1.xpose.msra.mxu0 0.0
    %4017 = vmatprep.subr.mxu0 0.0
    %4018 = vmatpush1.xpose.msra.mxu0 %v3985
    %4019 = vmatprep.subr.mxu0 0.0
    %4020 = vmatpush2.xpose.msra.mxu0 0.0
    %4021 = vmatprep.subr.mxu0 0.0
    %4022 = vmatpush2.xpose.msra.mxu0 0.0
    %4023 = vmatprep.subr.mxu0 0.0
    %4024 = vmatpush2.xpose.msra.mxu0 0.0
    %4025 = vmatprep.subr.mxu0 0.0
    %4026 = vmatpush2.xpose.msra.mxu0 0.0
    %4027 = vmatprep.subr.mxu0 0.0
    %4028 = vmatpush2.xpose.msra.mxu0 0.0
    %4029 = vmatprep.subr.mxu0 0.0
    %4030 = vmatpush2.xpose.msra.mxu0 0.0
    %4031 = vmatprep.subr.mxu0 0.0
    %4032 = vmatpush2.xpose.msra.mxu0 0.0
    %4033 = vmatprep.subr.mxu0 0.0
    %4034 = vmatpush2.xpose.msra.mxu0 0.0
    %4035 = vmatprep.subr.mxu0 0.0
    %4036 = vmatpush2.xpose.msra.mxu0 0.0
    %4037 = vmatprep.subr.mxu0 0.0
    %4038 = vmatpush2.xpose.msra.mxu0 0.0
    %4039 = vmatprep.subr.mxu0 0.0
    %4040 = vmatpush2.xpose.msra.mxu0 0.0
    %4041 = vmatprep.subr.mxu0 0.0
    %4042 = vmatpush2.xpose.msra.mxu0 0.0
    %4043 = vmatprep.subr.mxu0 0.0
    %4044 = vmatpush2.xpose.msra.mxu0 0.0
    %4045 = vmatprep.subr.mxu0 0.0
    %4046 = vmatpush2.xpose.msra.mxu0 0.0
    %4047 = vmatprep.subr.mxu0 0.0
    %4048 = vmatpush2.xpose.msra.mxu0 0.0
    %4049 = vmatprep.subr.mxu0 0.0
    %4050 = vmatpush2.xpose.msra.mxu0 0.0
    %4051 = vmatprep.mubr.f32.mxu0 0.0
    %4052 = vmatmul.mubr.f32.gmra.mxu0 %v3982
    %v4053 = vpop.f32.mrf.mxu0
    %v4054 = vadd.f32 0.0, %v4053
    %v4055 = vpop.f32.mrf.mxu0
    %4056 = vdwg.mxu0
    %v4058 = vsel %vm3676, %v634, 0
    %v4061 = vsel %vm3676, %v1805, 0
    %4063 = vmatprep.subr.mxu0 0.0
    %4064 = vmatpush1.xpose.msra.mxu0 0.0
    %4065 = vmatprep.subr.mxu0 0.0
    %4066 = vmatpush1.xpose.msra.mxu0 0.0
    %4067 = vmatprep.subr.mxu0 0.0
    %4068 = vmatpush1.xpose.msra.mxu0 0.0
    %4069 = vmatprep.subr.mxu0 0.0
    %4070 = vmatpush1.xpose.msra.mxu0 0.0
    %4071 = vmatprep.subr.mxu0 0.0
    %4072 = vmatpush1.xpose.msra.mxu0 0.0
    %4073 = vmatprep.subr.mxu0 0.0
    %4074 = vmatpush1.xpose.msra.mxu0 0.0
    %4075 = vmatprep.subr.mxu0 0.0
    %4076 = vmatpush1.xpose.msra.mxu0 0.0
    %4077 = vmatprep.subr.mxu0 0.0
    %4078 = vmatpush1.xpose.msra.mxu0 0.0
    %4079 = vmatprep.subr.mxu0 0.0
    %4080 = vmatpush1.xpose.msra.mxu0 0.0
    %4081 = vmatprep.subr.mxu0 0.0
    %4082 = vmatpush1.xpose.msra.mxu0 0.0
    %4083 = vmatprep.subr.mxu0 0.0
    %4084 = vmatpush1.xpose.msra.mxu0 0.0
    %4085 = vmatprep.subr.mxu0 0.0
    %4086 = vmatpush1.xpose.msra.mxu0 0.0
    %4087 = vmatprep.subr.mxu0 0.0
    %4088 = vmatpush1.xpose.msra.mxu0 0.0
    %4089 = vmatprep.subr.mxu0 0.0
    %4090 = vmatpush1.xpose.msra.mxu0 0.0
    %4091 = vmatprep.subr.mxu0 0.0
    %4092 = vmatpush1.xpose.msra.mxu0 0.0
    %4093 = vmatprep.subr.mxu0 0.0
    %4094 = vmatpush1.xpose.msra.mxu0 %v4061
    %4095 = vmatprep.subr.mxu0 0.0
    %4096 = vmatpush2.xpose.msra.mxu0 0.0
    %4097 = vmatprep.subr.mxu0 0.0
    %4098 = vmatpush2.xpose.msra.mxu0 0.0
    %4099 = vmatprep.subr.mxu0 0.0
    %4100 = vmatpush2.xpose.msra.mxu0 0.0
    %4101 = vmatprep.subr.mxu0 0.0
    %4102 = vmatpush2.xpose.msra.mxu0 0.0
    %4103 = vmatprep.subr.mxu0 0.0
    %4104 = vmatpush2.xpose.msra.mxu0 0.0
    %4105 = vmatprep.subr.mxu0 0.0
    %4106 = vmatpush2.xpose.msra.mxu0 0.0
    %4107 = vmatprep.subr.mxu0 0.0
    %4108 = vmatpush2.xpose.msra.mxu0 0.0
    %4109 = vmatprep.subr.mxu0 0.0
    %4110 = vmatpush2.xpose.msra.mxu0 0.0
    %4111 = vmatprep.subr.mxu0 0.0
    %4112 = vmatpush2.xpose.msra.mxu0 0.0
    %4113 = vmatprep.subr.mxu0 0.0
    %4114 = vmatpush2.xpose.msra.mxu0 0.0
    %4115 = vmatprep.subr.mxu0 0.0
    %4116 = vmatpush2.xpose.msra.mxu0 0.0
    %4117 = vmatprep.subr.mxu0 0.0
    %4118 = vmatpush2.xpose.msra.mxu0 0.0
    %4119 = vmatprep.subr.mxu0 0.0
    %4120 = vmatpush2.xpose.msra.mxu0 0.0
    %4121 = vmatprep.subr.mxu0 0.0
    %4122 = vmatpush2.xpose.msra.mxu0 0.0
    %4123 = vmatprep.subr.mxu0 0.0
    %4124 = vmatpush2.xpose.msra.mxu0 0.0
    %4125 = vmatprep.subr.mxu0 0.0
    %4126 = vmatpush2.xpose.msra.mxu0 0.0
    %4127 = vmatprep.mubr.f32.mxu0 0.0
    %4128 = vmatmul.mubr.f32.gmra.mxu0 %v4058
    %v4129 = vpop.f32.mrf.mxu0
    %v4130 = vadd.f32 0.0, %v4129
    %v4131 = vpop.f32.mrf.mxu0
    %4132 = vdwg.mxu0
    %v4134 = vsel %vm3676, %v704, 0
    %v4137 = vsel %vm3676, %v1875, 0
    %4139 = vmatprep.subr.mxu0 0.0
    %4140 = vmatpush1.xpose.msra.mxu0 0.0
    %4141 = vmatprep.subr.mxu0 0.0
    %4142 = vmatpush1.xpose.msra.mxu0 0.0
    %4143 = vmatprep.subr.mxu0 0.0
    %4144 = vmatpush1.xpose.msra.mxu0 0.0
    %4145 = vmatprep.subr.mxu0 0.0
    %4146 = vmatpush1.xpose.msra.mxu0 0.0
    %4147 = vmatprep.subr.mxu0 0.0
    %4148 = vmatpush1.xpose.msra.mxu0 0.0
    %4149 = vmatprep.subr.mxu0 0.0
    %4150 = vmatpush1.xpose.msra.mxu0 0.0
    %4151 = vmatprep.subr.mxu0 0.0
    %4152 = vmatpush1.xpose.msra.mxu0 0.0
    %4153 = vmatprep.subr.mxu0 0.0
    %4154 = vmatpush1.xpose.msra.mxu0 0.0
    %4155 = vmatprep.subr.mxu0 0.0
    %4156 = vmatpush1.xpose.msra.mxu0 0.0
    %4157 = vmatprep.subr.mxu0 0.0
    %4158 = vmatpush1.xpose.msra.mxu0 0.0
    %4159 = vmatprep.subr.mxu0 0.0
    %4160 = vmatpush1.xpose.msra.mxu0 0.0
    %4161 = vmatprep.subr.mxu0 0.0
    %4162 = vmatpush1.xpose.msra.mxu0 0.0
    %4163 = vmatprep.subr.mxu0 0.0
    %4164 = vmatpush1.xpose.msra.mxu0 0.0
    %4165 = vmatprep.subr.mxu0 0.0
    %4166 = vmatpush1.xpose.msra.mxu0 0.0
    %4167 = vmatprep.subr.mxu0 0.0
    %4168 = vmatpush1.xpose.msra.mxu0 0.0
    %4169 = vmatprep.subr.mxu0 0.0
    %4170 = vmatpush1.xpose.msra.mxu0 %v4137
    %4171 = vmatprep.subr.mxu0 0.0
    %4172 = vmatpush2.xpose.msra.mxu0 0.0
    %4173 = vmatprep.subr.mxu0 0.0
    %4174 = vmatpush2.xpose.msra.mxu0 0.0
    %4175 = vmatprep.subr.mxu0 0.0
    %4176 = vmatpush2.xpose.msra.mxu0 0.0
    %4177 = vmatprep.subr.mxu0 0.0
    %4178 = vmatpush2.xpose.msra.mxu0 0.0
    %4179 = vmatprep.subr.mxu0 0.0
    %4180 = vmatpush2.xpose.msra.mxu0 0.0
    %4181 = vmatprep.subr.mxu0 0.0
    %4182 = vmatpush2.xpose.msra.mxu0 0.0
    %4183 = vmatprep.subr.mxu0 0.0
    %4184 = vmatpush2.xpose.msra.mxu0 0.0
    %4185 = vmatprep.subr.mxu0 0.0
    %4186 = vmatpush2.xpose.msra.mxu0 0.0
    %4187 = vmatprep.subr.mxu0 0.0
    %4188 = vmatpush2.xpose.msra.mxu0 0.0
    %4189 = vmatprep.subr.mxu0 0.0
    %4190 = vmatpush2.xpose.msra.mxu0 0.0
    %4191 = vmatprep.subr.mxu0 0.0
    %4192 = vmatpush2.xpose.msra.mxu0 0.0
    %4193 = vmatprep.subr.mxu0 0.0
    %4194 = vmatpush2.xpose.msra.mxu0 0.0
    %4195 = vmatprep.subr.mxu0 0.0
    %4196 = vmatpush2.xpose.msra.mxu0 0.0
    %4197 = vmatprep.subr.mxu0 0.0
    %4198 = vmatpush2.xpose.msra.mxu0 0.0
    %4199 = vmatprep.subr.mxu0 0.0
    %4200 = vmatpush2.xpose.msra.mxu0 0.0
    %4201 = vmatprep.subr.mxu0 0.0
    %4202 = vmatpush2.xpose.msra.mxu0 0.0
    %4203 = vmatprep.mubr.f32.mxu0 0.0
    %4204 = vmatmul.mubr.f32.gmra.mxu0 %v4134
    %v4205 = vpop.f32.mrf.mxu0
    %v4206 = vadd.f32 0.0, %v4205
    %v4207 = vpop.f32.mrf.mxu0
    %4208 = vdwg.mxu0
    %v4210 = vsel %vm3676, %v774, 0
    %v4213 = vsel %vm3676, %v1945, 0
    %4215 = vmatprep.subr.mxu0 0.0
    %4216 = vmatpush1.xpose.msra.mxu0 0.0
    %4217 = vmatprep.subr.mxu0 0.0
    %4218 = vmatpush1.xpose.msra.mxu0 0.0
    %4219 = vmatprep.subr.mxu0 0.0
    %4220 = vmatpush1.xpose.msra.mxu0 0.0
    %4221 = vmatprep.subr.mxu0 0.0
    %4222 = vmatpush1.xpose.msra.mxu0 0.0
    %4223 = vmatprep.subr.mxu0 0.0
    %4224 = vmatpush1.xpose.msra.mxu0 0.0
    %4225 = vmatprep.subr.mxu0 0.0
    %4226 = vmatpush1.xpose.msra.mxu0 0.0
    %4227 = vmatprep.subr.mxu0 0.0
    %4228 = vmatpush1.xpose.msra.mxu0 0.0
    %4229 = vmatprep.subr.mxu0 0.0
    %4230 = vmatpush1.xpose.msra.mxu0 0.0
    %4231 = vmatprep.subr.mxu0 0.0
    %4232 = vmatpush1.xpose.msra.mxu0 0.0
    %4233 = vmatprep.subr.mxu0 0.0
    %4234 = vmatpush1.xpose.msra.mxu0 0.0
    %4235 = vmatprep.subr.mxu0 0.0
    %4236 = vmatpush1.xpose.msra.mxu0 0.0
    %4237 = vmatprep.subr.mxu0 0.0
    %4238 = vmatpush1.xpose.msra.mxu0 0.0
    %4239 = vmatprep.subr.mxu0 0.0
    %4240 = vmatpush1.xpose.msra.mxu0 0.0
    %4241 = vmatprep.subr.mxu0 0.0
    %4242 = vmatpush1.xpose.msra.mxu0 0.0
    %4243 = vmatprep.subr.mxu0 0.0
    %4244 = vmatpush1.xpose.msra.mxu0 0.0
    %4245 = vmatprep.subr.mxu0 0.0
    %4246 = vmatpush1.xpose.msra.mxu0 %v4213
    %4247 = vmatprep.subr.mxu0 0.0
    %4248 = vmatpush2.xpose.msra.mxu0 0.0
    %4249 = vmatprep.subr.mxu0 0.0
    %4250 = vmatpush2.xpose.msra.mxu0 0.0
    %4251 = vmatprep.subr.mxu0 0.0
    %4252 = vmatpush2.xpose.msra.mxu0 0.0
    %4253 = vmatprep.subr.mxu0 0.0
    %4254 = vmatpush2.xpose.msra.mxu0 0.0
    %4255 = vmatprep.subr.mxu0 0.0
    %4256 = vmatpush2.xpose.msra.mxu0 0.0
    %4257 = vmatprep.subr.mxu0 0.0
    %4258 = vmatpush2.xpose.msra.mxu0 0.0
    %4259 = vmatprep.subr.mxu0 0.0
    %4260 = vmatpush2.xpose.msra.mxu0 0.0
    %4261 = vmatprep.subr.mxu0 0.0
    %4262 = vmatpush2.xpose.msra.mxu0 0.0
    %4263 = vmatprep.subr.mxu0 0.0
    %4264 = vmatpush2.xpose.msra.mxu0 0.0
    %4265 = vmatprep.subr.mxu0 0.0
    %4266 = vmatpush2.xpose.msra.mxu0 0.0
    %4267 = vmatprep.subr.mxu0 0.0
    %4268 = vmatpush2.xpose.msra.mxu0 0.0
    %4269 = vmatprep.subr.mxu0 0.0
    %4270 = vmatpush2.xpose.msra.mxu0 0.0
    %4271 = vmatprep.subr.mxu0 0.0
    %4272 = vmatpush2.xpose.msra.mxu0 0.0
    %4273 = vmatprep.subr.mxu0 0.0
    %4274 = vmatpush2.xpose.msra.mxu0 0.0
    %4275 = vmatprep.subr.mxu0 0.0
    %4276 = vmatpush2.xpose.msra.mxu0 0.0
    %4277 = vmatprep.subr.mxu0 0.0
    %4278 = vmatpush2.xpose.msra.mxu0 0.0
    %4279 = vmatprep.mubr.f32.mxu0 0.0
    %4280 = vmatmul.mubr.f32.gmra.mxu0 %v4210
    %v4281 = vpop.f32.mrf.mxu0
    %v4282 = vadd.f32 0.0, %v4281
    %v4283 = vpop.f32.mrf.mxu0
    %4284 = vdwg.mxu0
    %v4286 = vsel %vm3676, %v847, 0
    %v4289 = vsel %vm3676, %v2015, 0
    %4291 = vmatprep.subr.mxu0 0.0
    %4292 = vmatpush1.xpose.msra.mxu0 0.0
    %4293 = vmatprep.subr.mxu0 0.0
    %4294 = vmatpush1.xpose.msra.mxu0 0.0
    %4295 = vmatprep.subr.mxu0 0.0
    %4296 = vmatpush1.xpose.msra.mxu0 0.0
    %4297 = vmatprep.subr.mxu0 0.0
    %4298 = vmatpush1.xpose.msra.mxu0 0.0
    %4299 = vmatprep.subr.mxu0 0.0
    %4300 = vmatpush1.xpose.msra.mxu0 0.0
    %4301 = vmatprep.subr.mxu0 0.0
    %4302 = vmatpush1.xpose.msra.mxu0 0.0
    %4303 = vmatprep.subr.mxu0 0.0
    %4304 = vmatpush1.xpose.msra.mxu0 0.0
    %4305 = vmatprep.subr.mxu0 0.0
    %4306 = vmatpush1.xpose.msra.mxu0 0.0
    %4307 = vmatprep.subr.mxu0 0.0
    %4308 = vmatpush1.xpose.msra.mxu0 0.0
    %4309 = vmatprep.subr.mxu0 0.0
    %4310 = vmatpush1.xpose.msra.mxu0 0.0
    %4311 = vmatprep.subr.mxu0 0.0
    %4312 = vmatpush1.xpose.msra.mxu0 0.0
    %4313 = vmatprep.subr.mxu0 0.0
    %4314 = vmatpush1.xpose.msra.mxu0 0.0
    %4315 = vmatprep.subr.mxu0 0.0
    %4316 = vmatpush1.xpose.msra.mxu0 0.0
    %4317 = vmatprep.subr.mxu0 0.0
    %4318 = vmatpush1.xpose.msra.mxu0 0.0
    %4319 = vmatprep.subr.mxu0 0.0
    %4320 = vmatpush1.xpose.msra.mxu0 0.0
    %4321 = vmatprep.subr.mxu0 0.0
    %4322 = vmatpush1.xpose.msra.mxu0 %v4289
    %4323 = vmatprep.subr.mxu0 0.0
    %4324 = vmatpush2.xpose.msra.mxu0 0.0
    %4325 = vmatprep.subr.mxu0 0.0
    %4326 = vmatpush2.xpose.msra.mxu0 0.0
    %4327 = vmatprep.subr.mxu0 0.0
    %4328 = vmatpush2.xpose.msra.mxu0 0.0
    %4329 = vmatprep.subr.mxu0 0.0
    %4330 = vmatpush2.xpose.msra.mxu0 0.0
    %4331 = vmatprep.subr.mxu0 0.0
    %4332 = vmatpush2.xpose.msra.mxu0 0.0
    %4333 = vmatprep.subr.mxu0 0.0
    %4334 = vmatpush2.xpose.msra.mxu0 0.0
    %4335 = vmatprep.subr.mxu0 0.0
    %4336 = vmatpush2.xpose.msra.mxu0 0.0
    %4337 = vmatprep.subr.mxu0 0.0
    %4338 = vmatpush2.xpose.msra.mxu0 0.0
    %4339 = vmatprep.subr.mxu0 0.0
    %4340 = vmatpush2.xpose.msra.mxu0 0.0
    %4341 = vmatprep.subr.mxu0 0.0
    %4342 = vmatpush2.xpose.msra.mxu0 0.0
    %4343 = vmatprep.subr.mxu0 0.0
    %4344 = vmatpush2.xpose.msra.mxu0 0.0
    %4345 = vmatprep.subr.mxu0 0.0
    %4346 = vmatpush2.xpose.msra.mxu0 0.0
    %4347 = vmatprep.subr.mxu0 0.0
    %4348 = vmatpush2.xpose.msra.mxu0 0.0
    %4349 = vmatprep.subr.mxu0 0.0
    %4350 = vmatpush2.xpose.msra.mxu0 0.0
    %4351 = vmatprep.subr.mxu0 0.0
    %4352 = vmatpush2.xpose.msra.mxu0 0.0
    %4353 = vmatprep.subr.mxu0 0.0
    %4354 = vmatpush2.xpose.msra.mxu0 0.0
    %4355 = vmatprep.mubr.f32.mxu0 0.0
    %4356 = vmatmul.mubr.f32.gmra.mxu0 %v4286
    %v4357 = vpop.f32.mrf.mxu0
    %v4358 = vadd.f32 0.0, %v4357
    %v4359 = vpop.f32.mrf.mxu0
    %4360 = vdwg.mxu0
    %v4362 = vsel %vm3676, %v917, 0
    %v4365 = vsel %vm3676, %v2085, 0
    %4367 = vmatprep.subr.mxu0 0.0
    %4368 = vmatpush1.xpose.msra.mxu0 0.0
    %4369 = vmatprep.subr.mxu0 0.0
    %4370 = vmatpush1.xpose.msra.mxu0 0.0
    %4371 = vmatprep.subr.mxu0 0.0
    %4372 = vmatpush1.xpose.msra.mxu0 0.0
    %4373 = vmatprep.subr.mxu0 0.0
    %4374 = vmatpush1.xpose.msra.mxu0 0.0
    %4375 = vmatprep.subr.mxu0 0.0
    %4376 = vmatpush1.xpose.msra.mxu0 0.0
    %4377 = vmatprep.subr.mxu0 0.0
    %4378 = vmatpush1.xpose.msra.mxu0 0.0
    %4379 = vmatprep.subr.mxu0 0.0
    %4380 = vmatpush1.xpose.msra.mxu0 0.0
    %4381 = vmatprep.subr.mxu0 0.0
    %4382 = vmatpush1.xpose.msra.mxu0 0.0
    %4383 = vmatprep.subr.mxu0 0.0
    %4384 = vmatpush1.xpose.msra.mxu0 0.0
    %4385 = vmatprep.subr.mxu0 0.0
    %4386 = vmatpush1.xpose.msra.mxu0 0.0
    %4387 = vmatprep.subr.mxu0 0.0
    %4388 = vmatpush1.xpose.msra.mxu0 0.0
    %4389 = vmatprep.subr.mxu0 0.0
    %4390 = vmatpush1.xpose.msra.mxu0 0.0
    %4391 = vmatprep.subr.mxu0 0.0
    %4392 = vmatpush1.xpose.msra.mxu0 0.0
    %4393 = vmatprep.subr.mxu0 0.0
    %4394 = vmatpush1.xpose.msra.mxu0 0.0
    %4395 = vmatprep.subr.mxu0 0.0
    %4396 = vmatpush1.xpose.msra.mxu0 0.0
    %4397 = vmatprep.subr.mxu0 0.0
    %4398 = vmatpush1.xpose.msra.mxu0 %v4365
    %4399 = vmatprep.subr.mxu0 0.0
    %4400 = vmatpush2.xpose.msra.mxu0 0.0
    %4401 = vmatprep.subr.mxu0 0.0
    %4402 = vmatpush2.xpose.msra.mxu0 0.0
    %4403 = vmatprep.subr.mxu0 0.0
    %4404 = vmatpush2.xpose.msra.mxu0 0.0
    %4405 = vmatprep.subr.mxu0 0.0
    %4406 = vmatpush2.xpose.msra.mxu0 0.0
    %4407 = vmatprep.subr.mxu0 0.0
    %4408 = vmatpush2.xpose.msra.mxu0 0.0
    %4409 = vmatprep.subr.mxu0 0.0
    %4410 = vmatpush2.xpose.msra.mxu0 0.0
    %4411 = vmatprep.subr.mxu0 0.0
    %4412 = vmatpush2.xpose.msra.mxu0 0.0
    %4413 = vmatprep.subr.mxu0 0.0
    %4414 = vmatpush2.xpose.msra.mxu0 0.0
    %4415 = vmatprep.subr.mxu0 0.0
    %4416 = vmatpush2.xpose.msra.mxu0 0.0
    %4417 = vmatprep.subr.mxu0 0.0
    %4418 = vmatpush2.xpose.msra.mxu0 0.0
    %4419 = vmatprep.subr.mxu0 0.0
    %4420 = vmatpush2.xpose.msra.mxu0 0.0
    %4421 = vmatprep.subr.mxu0 0.0
    %4422 = vmatpush2.xpose.msra.mxu0 0.0
    %4423 = vmatprep.subr.mxu0 0.0
    %4424 = vmatpush2.xpose.msra.mxu0 0.0
    %4425 = vmatprep.subr.mxu0 0.0
    %4426 = vmatpush2.xpose.msra.mxu0 0.0
    %4427 = vmatprep.subr.mxu0 0.0
    %4428 = vmatpush2.xpose.msra.mxu0 0.0
    %4429 = vmatprep.subr.mxu0 0.0
    %4430 = vmatpush2.xpose.msra.mxu0 0.0
    %4431 = vmatprep.mubr.f32.mxu0 0.0
    %4432 = vmatmul.mubr.f32.gmra.mxu0 %v4362
    %v4433 = vpop.f32.mrf.mxu0
    %v4434 = vadd.f32 0.0, %v4433
    %v4435 = vpop.f32.mrf.mxu0
    %4436 = vdwg.mxu0
    %v4438 = vsel %vm3676, %v987, 0
    %v4441 = vsel %vm3676, %v2155, 0
    %4443 = vmatprep.subr.mxu0 0.0
    %4444 = vmatpush1.xpose.msra.mxu0 0.0
    %4445 = vmatprep.subr.mxu0 0.0
    %4446 = vmatpush1.xpose.msra.mxu0 0.0
    %4447 = vmatprep.subr.mxu0 0.0
    %4448 = vmatpush1.xpose.msra.mxu0 0.0
    %4449 = vmatprep.subr.mxu0 0.0
    %4450 = vmatpush1.xpose.msra.mxu0 0.0
    %4451 = vmatprep.subr.mxu0 0.0
    %4452 = vmatpush1.xpose.msra.mxu0 0.0
    %4453 = vmatprep.subr.mxu0 0.0
    %4454 = vmatpush1.xpose.msra.mxu0 0.0
    %4455 = vmatprep.subr.mxu0 0.0
    %4456 = vmatpush1.xpose.msra.mxu0 0.0
    %4457 = vmatprep.subr.mxu0 0.0
    %4458 = vmatpush1.xpose.msra.mxu0 0.0
    %4459 = vmatprep.subr.mxu0 0.0
    %4460 = vmatpush1.xpose.msra.mxu0 0.0
    %4461 = vmatprep.subr.mxu0 0.0
    %4462 = vmatpush1.xpose.msra.mxu0 0.0
    %4463 = vmatprep.subr.mxu0 0.0
    %4464 = vmatpush1.xpose.msra.mxu0 0.0
    %4465 = vmatprep.subr.mxu0 0.0
    %4466 = vmatpush1.xpose.msra.mxu0 0.0
    %4467 = vmatprep.subr.mxu0 0.0
    %4468 = vmatpush1.xpose.msra.mxu0 0.0
    %4469 = vmatprep.subr.mxu0 0.0
    %4470 = vmatpush1.xpose.msra.mxu0 0.0
    %4471 = vmatprep.subr.mxu0 0.0
    %4472 = vmatpush1.xpose.msra.mxu0 0.0
    %4473 = vmatprep.subr.mxu0 0.0
    %4474 = vmatpush1.xpose.msra.mxu0 %v4441
    %4475 = vmatprep.subr.mxu0 0.0
    %4476 = vmatpush2.xpose.msra.mxu0 0.0
    %4477 = vmatprep.subr.mxu0 0.0
    %4478 = vmatpush2.xpose.msra.mxu0 0.0
    %4479 = vmatprep.subr.mxu0 0.0
    %4480 = vmatpush2.xpose.msra.mxu0 0.0
    %4481 = vmatprep.subr.mxu0 0.0
    %4482 = vmatpush2.xpose.msra.mxu0 0.0
    %4483 = vmatprep.subr.mxu0 0.0
    %4484 = vmatpush2.xpose.msra.mxu0 0.0
    %4485 = vmatprep.subr.mxu0 0.0
    %4486 = vmatpush2.xpose.msra.mxu0 0.0
    %4487 = vmatprep.subr.mxu0 0.0
    %4488 = vmatpush2.xpose.msra.mxu0 0.0
    %4489 = vmatprep.subr.mxu0 0.0
    %4490 = vmatpush2.xpose.msra.mxu0 0.0
    %4491 = vmatprep.subr.mxu0 0.0
    %4492 = vmatpush2.xpose.msra.mxu0 0.0
    %4493 = vmatprep.subr.mxu0 0.0
    %4494 = vmatpush2.xpose.msra.mxu0 0.0
    %4495 = vmatprep.subr.mxu0 0.0
    %4496 = vmatpush2.xpose.msra.mxu0 0.0
    %4497 = vmatprep.subr.mxu0 0.0
    %4498 = vmatpush2.xpose.msra.mxu0 0.0
    %4499 = vmatprep.subr.mxu0 0.0
    %4500 = vmatpush2.xpose.msra.mxu0 0.0
    %4501 = vmatprep.subr.mxu0 0.0
    %4502 = vmatpush2.xpose.msra.mxu0 0.0
    %4503 = vmatprep.subr.mxu0 0.0
    %4504 = vmatpush2.xpose.msra.mxu0 0.0
    %4505 = vmatprep.subr.mxu0 0.0
    %4506 = vmatpush2.xpose.msra.mxu0 0.0
    %4507 = vmatprep.mubr.f32.mxu0 0.0
    %4508 = vmatmul.mubr.f32.gmra.mxu0 %v4438
    %v4509 = vpop.f32.mrf.mxu0
    %v4510 = vadd.f32 0.0, %v4509
    %v4511 = vpop.f32.mrf.mxu0
    %4512 = vdwg.mxu0
    %v4514 = vsel %vm3676, %v1057, 0
    %v4517 = vsel %vm3676, %v2225, 0
    %4519 = vmatprep.subr.mxu0 0.0
    %4520 = vmatpush1.xpose.msra.mxu0 0.0
    %4521 = vmatprep.subr.mxu0 0.0
    %4522 = vmatpush1.xpose.msra.mxu0 0.0
    %4523 = vmatprep.subr.mxu0 0.0
    %4524 = vmatpush1.xpose.msra.mxu0 0.0
    %4525 = vmatprep.subr.mxu0 0.0
    %4526 = vmatpush1.xpose.msra.mxu0 0.0
    %4527 = vmatprep.subr.mxu0 0.0
    %4528 = vmatpush1.xpose.msra.mxu0 0.0
    %4529 = vmatprep.subr.mxu0 0.0
    %4530 = vmatpush1.xpose.msra.mxu0 0.0
    %4531 = vmatprep.subr.mxu0 0.0
    %4532 = vmatpush1.xpose.msra.mxu0 0.0
    %4533 = vmatprep.subr.mxu0 0.0
    %4534 = vmatpush1.xpose.msra.mxu0 0.0
    %4535 = vmatprep.subr.mxu0 0.0
    %4536 = vmatpush1.xpose.msra.mxu0 0.0
    %4537 = vmatprep.subr.mxu0 0.0
    %4538 = vmatpush1.xpose.msra.mxu0 0.0
    %4539 = vmatprep.subr.mxu0 0.0
    %4540 = vmatpush1.xpose.msra.mxu0 0.0
    %4541 = vmatprep.subr.mxu0 0.0
    %4542 = vmatpush1.xpose.msra.mxu0 0.0
    %4543 = vmatprep.subr.mxu0 0.0
    %4544 = vmatpush1.xpose.msra.mxu0 0.0
    %4545 = vmatprep.subr.mxu0 0.0
    %4546 = vmatpush1.xpose.msra.mxu0 0.0
    %4547 = vmatprep.subr.mxu0 0.0
    %4548 = vmatpush1.xpose.msra.mxu0 0.0
    %4549 = vmatprep.subr.mxu0 0.0
    %4550 = vmatpush1.xpose.msra.mxu0 %v4517
    %4551 = vmatprep.subr.mxu0 0.0
    %4552 = vmatpush2.xpose.msra.mxu0 0.0
    %4553 = vmatprep.subr.mxu0 0.0
    %4554 = vmatpush2.xpose.msra.mxu0 0.0
    %4555 = vmatprep.subr.mxu0 0.0
    %4556 = vmatpush2.xpose.msra.mxu0 0.0
    %4557 = vmatprep.subr.mxu0 0.0
    %4558 = vmatpush2.xpose.msra.mxu0 0.0
    %4559 = vmatprep.subr.mxu0 0.0
    %4560 = vmatpush2.xpose.msra.mxu0 0.0
    %4561 = vmatprep.subr.mxu0 0.0
    %4562 = vmatpush2.xpose.msra.mxu0 0.0
    %4563 = vmatprep.subr.mxu0 0.0
    %4564 = vmatpush2.xpose.msra.mxu0 0.0
    %4565 = vmatprep.subr.mxu0 0.0
    %4566 = vmatpush2.xpose.msra.mxu0 0.0
    %4567 = vmatprep.subr.mxu0 0.0
    %4568 = vmatpush2.xpose.msra.mxu0 0.0
    %4569 = vmatprep.subr.mxu0 0.0
    %4570 = vmatpush2.xpose.msra.mxu0 0.0
    %4571 = vmatprep.subr.mxu0 0.0
    %4572 = vmatpush2.xpose.msra.mxu0 0.0
    %4573 = vmatprep.subr.mxu0 0.0
    %4574 = vmatpush2.xpose.msra.mxu0 0.0
    %4575 = vmatprep.subr.mxu0 0.0
    %4576 = vmatpush2.xpose.msra.mxu0 0.0
    %4577 = vmatprep.subr.mxu0 0.0
    %4578 = vmatpush2.xpose.msra.mxu0 0.0
    %4579 = vmatprep.subr.mxu0 0.0
    %4580 = vmatpush2.xpose.msra.mxu0 0.0
    %4581 = vmatprep.subr.mxu0 0.0
    %4582 = vmatpush2.xpose.msra.mxu0 0.0
    %4583 = vmatprep.mubr.f32.mxu0 0.0
    %4584 = vmatmul.mubr.f32.gmra.mxu0 %v4514
    %v4585 = vpop.f32.mrf.mxu0
    %v4586 = vadd.f32 0.0, %v4585
    %v4587 = vpop.f32.mrf.mxu0
    %4588 = vdwg.mxu0
    %v4590 = vsel %vm3676, %v1127, 0
    %v4593 = vsel %vm3676, %v2295, 0
    %4595 = vmatprep.subr.mxu0 0.0
    %4596 = vmatpush1.xpose.msra.mxu0 0.0
    %4597 = vmatprep.subr.mxu0 0.0
    %4598 = vmatpush1.xpose.msra.mxu0 0.0
    %4599 = vmatprep.subr.mxu0 0.0
    %4600 = vmatpush1.xpose.msra.mxu0 0.0
    %4601 = vmatprep.subr.mxu0 0.0
    %4602 = vmatpush1.xpose.msra.mxu0 0.0
    %4603 = vmatprep.subr.mxu0 0.0
    %4604 = vmatpush1.xpose.msra.mxu0 0.0
    %4605 = vmatprep.subr.mxu0 0.0
    %4606 = vmatpush1.xpose.msra.mxu0 0.0
    %4607 = vmatprep.subr.mxu0 0.0
    %4608 = vmatpush1.xpose.msra.mxu0 0.0
    %4609 = vmatprep.subr.mxu0 0.0
    %4610 = vmatpush1.xpose.msra.mxu0 0.0
    %4611 = vmatprep.subr.mxu0 0.0
    %4612 = vmatpush1.xpose.msra.mxu0 0.0
    %4613 = vmatprep.subr.mxu0 0.0
    %4614 = vmatpush1.xpose.msra.mxu0 0.0
    %4615 = vmatprep.subr.mxu0 0.0
    %4616 = vmatpush1.xpose.msra.mxu0 0.0
    %4617 = vmatprep.subr.mxu0 0.0
    %4618 = vmatpush1.xpose.msra.mxu0 0.0
    %4619 = vmatprep.subr.mxu0 0.0
    %4620 = vmatpush1.xpose.msra.mxu0 0.0
    %4621 = vmatprep.subr.mxu0 0.0
    %4622 = vmatpush1.xpose.msra.mxu0 0.0
    %4623 = vmatprep.subr.mxu0 0.0
    %4624 = vmatpush1.xpose.msra.mxu0 0.0
    %4625 = vmatprep.subr.mxu0 0.0
    %4626 = vmatpush1.xpose.msra.mxu0 %v4593
    %4627 = vmatprep.subr.mxu0 0.0
    %4628 = vmatpush2.xpose.msra.mxu0 0.0
    %4629 = vmatprep.subr.mxu0 0.0
    %4630 = vmatpush2.xpose.msra.mxu0 0.0
    %4631 = vmatprep.subr.mxu0 0.0
    %4632 = vmatpush2.xpose.msra.mxu0 0.0
    %4633 = vmatprep.subr.mxu0 0.0
    %4634 = vmatpush2.xpose.msra.mxu0 0.0
    %4635 = vmatprep.subr.mxu0 0.0
    %4636 = vmatpush2.xpose.msra.mxu0 0.0
    %4637 = vmatprep.subr.mxu0 0.0
    %4638 = vmatpush2.xpose.msra.mxu0 0.0
    %4639 = vmatprep.subr.mxu0 0.0
    %4640 = vmatpush2.xpose.msra.mxu0 0.0
    %4641 = vmatprep.subr.mxu0 0.0
    %4642 = vmatpush2.xpose.msra.mxu0 0.0
    %4643 = vmatprep.subr.mxu0 0.0
    %4644 = vmatpush2.xpose.msra.mxu0 0.0
    %4645 = vmatprep.subr.mxu0 0.0
    %4646 = vmatpush2.xpose.msra.mxu0 0.0
    %4647 = vmatprep.subr.mxu0 0.0
    %4648 = vmatpush2.xpose.msra.mxu0 0.0
    %4649 = vmatprep.subr.mxu0 0.0
    %4650 = vmatpush2.xpose.msra.mxu0 0.0
    %4651 = vmatprep.subr.mxu0 0.0
    %4652 = vmatpush2.xpose.msra.mxu0 0.0
    %4653 = vmatprep.subr.mxu0 0.0
    %4654 = vmatpush2.xpose.msra.mxu0 0.0
    %4655 = vmatprep.subr.mxu0 0.0
    %4656 = vmatpush2.xpose.msra.mxu0 0.0
    %4657 = vmatprep.subr.mxu0 0.0
    %4658 = vmatpush2.xpose.msra.mxu0 0.0
    %4659 = vmatprep.mubr.f32.mxu0 0.0
    %4660 = vmatmul.mubr.f32.gmra.mxu0 %v4590
    %v4661 = vpop.f32.mrf.mxu0
    %v4662 = vadd.f32 0.0, %v4661
    %v4663 = vpop.f32.mrf.mxu0
    %4664 = vdwg.mxu0
    %v4666 = vsel %vm3676, %v1197, 0
    %v4669 = vsel %vm3676, %v2365, 0
    %4671 = vmatprep.subr.mxu0 0.0
    %4672 = vmatpush1.xpose.msra.mxu0 0.0
    %4673 = vmatprep.subr.mxu0 0.0
    %4674 = vmatpush1.xpose.msra.mxu0 0.0
    %4675 = vmatprep.subr.mxu0 0.0
    %4676 = vmatpush1.xpose.msra.mxu0 0.0
    %4677 = vmatprep.subr.mxu0 0.0
    %4678 = vmatpush1.xpose.msra.mxu0 0.0
    %4679 = vmatprep.subr.mxu0 0.0
    %4680 = vmatpush1.xpose.msra.mxu0 0.0
    %4681 = vmatprep.subr.mxu0 0.0
    %4682 = vmatpush1.xpose.msra.mxu0 0.0
    %4683 = vmatprep.subr.mxu0 0.0
    %4684 = vmatpush1.xpose.msra.mxu0 0.0
    %4685 = vmatprep.subr.mxu0 0.0
    %4686 = vmatpush1.xpose.msra.mxu0 0.0
    %4687 = vmatprep.subr.mxu0 0.0
    %4688 = vmatpush1.xpose.msra.mxu0 0.0
    %4689 = vmatprep.subr.mxu0 0.0
    %4690 = vmatpush1.xpose.msra.mxu0 0.0
    %4691 = vmatprep.subr.mxu0 0.0
    %4692 = vmatpush1.xpose.msra.mxu0 0.0
    %4693 = vmatprep.subr.mxu0 0.0
    %4694 = vmatpush1.xpose.msra.mxu0 0.0
    %4695 = vmatprep.subr.mxu0 0.0
    %4696 = vmatpush1.xpose.msra.mxu0 0.0
    %4697 = vmatprep.subr.mxu0 0.0
    %4698 = vmatpush1.xpose.msra.mxu0 0.0
    %4699 = vmatprep.subr.mxu0 0.0
    %4700 = vmatpush1.xpose.msra.mxu0 0.0
    %4701 = vmatprep.subr.mxu0 0.0
    %4702 = vmatpush1.xpose.msra.mxu0 %v4669
    %4703 = vmatprep.subr.mxu0 0.0
    %4704 = vmatpush2.xpose.msra.mxu0 0.0
    %4705 = vmatprep.subr.mxu0 0.0
    %4706 = vmatpush2.xpose.msra.mxu0 0.0
    %4707 = vmatprep.subr.mxu0 0.0
    %4708 = vmatpush2.xpose.msra.mxu0 0.0
    %4709 = vmatprep.subr.mxu0 0.0
    %4710 = vmatpush2.xpose.msra.mxu0 0.0
    %4711 = vmatprep.subr.mxu0 0.0
    %4712 = vmatpush2.xpose.msra.mxu0 0.0
    %4713 = vmatprep.subr.mxu0 0.0
    %4714 = vmatpush2.xpose.msra.mxu0 0.0
    %4715 = vmatprep.subr.mxu0 0.0
    %4716 = vmatpush2.xpose.msra.mxu0 0.0
    %4717 = vmatprep.subr.mxu0 0.0
    %4718 = vmatpush2.xpose.msra.mxu0 0.0
    %4719 = vmatprep.subr.mxu0 0.0
    %4720 = vmatpush2.xpose.msra.mxu0 0.0
    %4721 = vmatprep.subr.mxu0 0.0
    %4722 = vmatpush2.xpose.msra.mxu0 0.0
    %4723 = vmatprep.subr.mxu0 0.0
    %4724 = vmatpush2.xpose.msra.mxu0 0.0
    %4725 = vmatprep.subr.mxu0 0.0
    %4726 = vmatpush2.xpose.msra.mxu0 0.0
    %4727 = vmatprep.subr.mxu0 0.0
    %4728 = vmatpush2.xpose.msra.mxu0 0.0
    %4729 = vmatprep.subr.mxu0 0.0
    %4730 = vmatpush2.xpose.msra.mxu0 0.0
    %4731 = vmatprep.subr.mxu0 0.0
    %4732 = vmatpush2.xpose.msra.mxu0 0.0
    %4733 = vmatprep.subr.mxu0 0.0
    %4734 = vmatpush2.xpose.msra.mxu0 0.0
    %4735 = vmatprep.mubr.f32.mxu0 0.0
    %4736 = vmatmul.mubr.f32.gmra.mxu0 %v4666
    %v4737 = vpop.f32.mrf.mxu0
    %v4738 = vadd.f32 0.0, %v4737
    %v4739 = vpop.f32.mrf.mxu0
    %4740 = vdwg.mxu0
    %v4742 = vsel %vm3676, %v1267, 0
    %v4745 = vsel %vm3676, %v2435, 0
    %4747 = vmatprep.subr.mxu0 0.0
    %4748 = vmatpush1.xpose.msra.mxu0 0.0
    %4749 = vmatprep.subr.mxu0 0.0
    %4750 = vmatpush1.xpose.msra.mxu0 0.0
    %4751 = vmatprep.subr.mxu0 0.0
    %4752 = vmatpush1.xpose.msra.mxu0 0.0
    %4753 = vmatprep.subr.mxu0 0.0
    %4754 = vmatpush1.xpose.msra.mxu0 0.0
    %4755 = vmatprep.subr.mxu0 0.0
    %4756 = vmatpush1.xpose.msra.mxu0 0.0
    %4757 = vmatprep.subr.mxu0 0.0
    %4758 = vmatpush1.xpose.msra.mxu0 0.0
    %4759 = vmatprep.subr.mxu0 0.0
    %4760 = vmatpush1.xpose.msra.mxu0 0.0
    %4761 = vmatprep.subr.mxu0 0.0
    %4762 = vmatpush1.xpose.msra.mxu0 0.0
    %4763 = vmatprep.subr.mxu0 0.0
    %4764 = vmatpush1.xpose.msra.mxu0 0.0
    %4765 = vmatprep.subr.mxu0 0.0
    %4766 = vmatpush1.xpose.msra.mxu0 0.0
    %4767 = vmatprep.subr.mxu0 0.0
    %4768 = vmatpush1.xpose.msra.mxu0 0.0
    %4769 = vmatprep.subr.mxu0 0.0
    %4770 = vmatpush1.xpose.msra.mxu0 0.0
    %4771 = vmatprep.subr.mxu0 0.0
    %4772 = vmatpush1.xpose.msra.mxu0 0.0
    %4773 = vmatprep.subr.mxu0 0.0
    %4774 = vmatpush1.xpose.msra.mxu0 0.0
    %4775 = vmatprep.subr.mxu0 0.0
    %4776 = vmatpush1.xpose.msra.mxu0 0.0
    %4777 = vmatprep.subr.mxu0 0.0
    %4778 = vmatpush1.xpose.msra.mxu0 %v4745
    %4779 = vmatprep.subr.mxu0 0.0
    %4780 = vmatpush2.xpose.msra.mxu0 0.0
    %4781 = vmatprep.subr.mxu0 0.0
    %4782 = vmatpush2.xpose.msra.mxu0 0.0
    %4783 = vmatprep.subr.mxu0 0.0
    %4784 = vmatpush2.xpose.msra.mxu0 0.0
    %4785 = vmatprep.subr.mxu0 0.0
    %4786 = vmatpush2.xpose.msra.mxu0 0.0
    %4787 = vmatprep.subr.mxu0 0.0
    %4788 = vmatpush2.xpose.msra.mxu0 0.0
    %4789 = vmatprep.subr.mxu0 0.0
    %4790 = vmatpush2.xpose.msra.mxu0 0.0
    %4791 = vmatprep.subr.mxu0 0.0
    %4792 = vmatpush2.xpose.msra.mxu0 0.0
    %4793 = vmatprep.subr.mxu0 0.0
    %4794 = vmatpush2.xpose.msra.mxu0 0.0
    %4795 = vmatprep.subr.mxu0 0.0
    %4796 = vmatpush2.xpose.msra.mxu0 0.0
    %4797 = vmatprep.subr.mxu0 0.0
    %4798 = vmatpush2.xpose.msra.mxu0 0.0
    %4799 = vmatprep.subr.mxu0 0.0
    %4800 = vmatpush2.xpose.msra.mxu0 0.0
    %4801 = vmatprep.subr.mxu0 0.0
    %4802 = vmatpush2.xpose.msra.mxu0 0.0
    %4803 = vmatprep.subr.mxu0 0.0
    %4804 = vmatpush2.xpose.msra.mxu0 0.0
    %4805 = vmatprep.subr.mxu0 0.0
    %4806 = vmatpush2.xpose.msra.mxu0 0.0
    %4807 = vmatprep.subr.mxu0 0.0
    %4808 = vmatpush2.xpose.msra.mxu0 0.0
    %4809 = vmatprep.subr.mxu0 0.0
    %4810 = vmatpush2.xpose.msra.mxu0 0.0
    %4811 = vmatprep.mubr.f32.mxu0 0.0
    %4812 = vmatmul.mubr.f32.gmra.mxu0 %v4742
    %v4813 = vpop.f32.mrf.mxu0
    %v4814 = vadd.f32 0.0, %v4813
    %v4815 = vpop.f32.mrf.mxu0
    %4816 = vdwg.mxu0
    %v4818 = vsel %vm3676, %v1337, 0
    %v4821 = vsel %vm3676, %v2505, 0
    %4823 = vmatprep.subr.mxu0 0.0
    %4824 = vmatpush1.xpose.msra.mxu0 0.0
    %4825 = vmatprep.subr.mxu0 0.0
    %4826 = vmatpush1.xpose.msra.mxu0 0.0
    %4827 = vmatprep.subr.mxu0 0.0
    %4828 = vmatpush1.xpose.msra.mxu0 0.0
    %4829 = vmatprep.subr.mxu0 0.0
    %4830 = vmatpush1.xpose.msra.mxu0 0.0
    %4831 = vmatprep.subr.mxu0 0.0
    %4832 = vmatpush1.xpose.msra.mxu0 0.0
    %4833 = vmatprep.subr.mxu0 0.0
    %4834 = vmatpush1.xpose.msra.mxu0 0.0
    %4835 = vmatprep.subr.mxu0 0.0
    %4836 = vmatpush1.xpose.msra.mxu0 0.0
    %4837 = vmatprep.subr.mxu0 0.0
    %4838 = vmatpush1.xpose.msra.mxu0 0.0
    %4839 = vmatprep.subr.mxu0 0.0
    %4840 = vmatpush1.xpose.msra.mxu0 0.0
    %4841 = vmatprep.subr.mxu0 0.0
    %4842 = vmatpush1.xpose.msra.mxu0 0.0
    %4843 = vmatprep.subr.mxu0 0.0
    %4844 = vmatpush1.xpose.msra.mxu0 0.0
    %4845 = vmatprep.subr.mxu0 0.0
    %4846 = vmatpush1.xpose.msra.mxu0 0.0
    %4847 = vmatprep.subr.mxu0 0.0
    %4848 = vmatpush1.xpose.msra.mxu0 0.0
    %4849 = vmatprep.subr.mxu0 0.0
    %4850 = vmatpush1.xpose.msra.mxu0 0.0
    %4851 = vmatprep.subr.mxu0 0.0
    %4852 = vmatpush1.xpose.msra.mxu0 0.0
    %4853 = vmatprep.subr.mxu0 0.0
    %4854 = vmatpush1.xpose.msra.mxu0 %v4821
    %4855 = vmatprep.subr.mxu0 0.0
    %4856 = vmatpush2.xpose.msra.mxu0 0.0
    %4857 = vmatprep.subr.mxu0 0.0
    %4858 = vmatpush2.xpose.msra.mxu0 0.0
    %4859 = vmatprep.subr.mxu0 0.0
    %4860 = vmatpush2.xpose.msra.mxu0 0.0
    %4861 = vmatprep.subr.mxu0 0.0
    %4862 = vmatpush2.xpose.msra.mxu0 0.0
    %4863 = vmatprep.subr.mxu0 0.0
    %4864 = vmatpush2.xpose.msra.mxu0 0.0
    %4865 = vmatprep.subr.mxu0 0.0
    %4866 = vmatpush2.xpose.msra.mxu0 0.0
    %4867 = vmatprep.subr.mxu0 0.0
    %4868 = vmatpush2.xpose.msra.mxu0 0.0
    %4869 = vmatprep.subr.mxu0 0.0
    %4870 = vmatpush2.xpose.msra.mxu0 0.0
    %4871 = vmatprep.subr.mxu0 0.0
    %4872 = vmatpush2.xpose.msra.mxu0 0.0
    %4873 = vmatprep.subr.mxu0 0.0
    %4874 = vmatpush2.xpose.msra.mxu0 0.0
    %4875 = vmatprep.subr.mxu0 0.0
    %4876 = vmatpush2.xpose.msra.mxu0 0.0
    %4877 = vmatprep.subr.mxu0 0.0
    %4878 = vmatpush2.xpose.msra.mxu0 0.0
    %4879 = vmatprep.subr.mxu0 0.0
    %4880 = vmatpush2.xpose.msra.mxu0 0.0
    %4881 = vmatprep.subr.mxu0 0.0
    %4882 = vmatpush2.xpose.msra.mxu0 0.0
    %4883 = vmatprep.subr.mxu0 0.0
    %4884 = vmatpush2.xpose.msra.mxu0 0.0
    %4885 = vmatprep.subr.mxu0 0.0
    %4886 = vmatpush2.xpose.msra.mxu0 0.0
    %4887 = vmatprep.mubr.f32.mxu0 0.0
    %4888 = vmatmul.mubr.f32.gmra.mxu0 %v4818
    %v4889 = vpop.f32.mrf.mxu0
    %v4890 = vadd.f32 0.0, %v4889
    %v4891 = vpop.f32.mrf.mxu0
    %4892 = vdwg.mxu0
    %vm4893 = vcmask 64512
    %v4894 = vsel %vm4893, %v3750, -inf
    %4895 = vmax.xlane.f32.xlu0 %v4894
    %v4896 = vpop.xlane.xlu0 %4895
    %v4897 = vsel %vm4893, %v3826, -inf
    %4898 = vmax.xlane.f32.xlu0 %v4897
    %v4899 = vpop.xlane.xlu0 %4898
    %v4900 = vsel %vm4893, %v3902, -inf
    %4901 = vmax.xlane.f32.xlu0 %v4900
    %v4902 = vpop.xlane.xlu0 %4901
    %v4903 = vsel %vm4893, %v3978, -inf
    %4904 = vmax.xlane.f32.xlu0 %v4903
    %v4905 = vpop.xlane.xlu0 %4904
    %v4906 = vsel %vm4893, %v4054, -inf
    %4907 = vmax.xlane.f32.xlu0 %v4906
    %v4908 = vpop.xlane.xlu0 %4907
    %v4909 = vsel %vm4893, %v4130, -inf
    %4910 = vmax.xlane.f32.xlu0 %v4909
    %v4911 = vpop.xlane.xlu0 %4910
    %v4912 = vsel %vm4893, %v4206, -inf
    %4913 = vmax.xlane.f32.xlu0 %v4912
    %v4914 = vpop.xlane.xlu0 %4913
    %v4915 = vsel %vm4893, %v4282, -inf
    %4916 = vmax.xlane.f32.xlu0 %v4915
    %v4917 = vpop.xlane.xlu0 %4916
    %v4918 = vsel %vm4893, %v4358, -inf
    %4919 = vmax.xlane.f32.xlu0 %v4918
    %v4920 = vpop.xlane.xlu0 %4919
    %v4921 = vsel %vm4893, %v4434, -inf
    %4922 = vmax.xlane.f32.xlu0 %v4921
    %v4923 = vpop.xlane.xlu0 %4922
    %v4924 = vsel %vm4893, %v4510, -inf
    %4925 = vmax.xlane.f32.xlu0 %v4924
    %v4926 = vpop.xlane.xlu0 %4925
    %v4927 = vsel %vm4893, %v4586, -inf
    %4928 = vmax.xlane.f32.xlu0 %v4927
    %v4929 = vpop.xlane.xlu0 %4928
    %v4930 = vsel %vm4893, %v4662, -inf
    %4931 = vmax.xlane.f32.xlu0 %v4930
    %v4932 = vpop.xlane.xlu0 %4931
    %v4933 = vsel %vm4893, %v4738, -inf
    %4934 = vmax.xlane.f32.xlu0 %v4933
    %v4935 = vpop.xlane.xlu0 %4934
    %v4936 = vsel %vm4893, %v4814, -inf
    %4937 = vmax.xlane.f32.xlu0 %v4936
    %v4938 = vpop.xlane.xlu0 %4937
    %v4939 = vsel %vm4893, %v4890, -inf
    %4940 = vmax.xlane.f32.xlu0 %v4939
    %v4941 = vpop.xlane.xlu0 %4940
    %v4942 = vsub.f32 %v3750, %v4896
    %v4943 = vsub.f32 %v3826, %v4899
    %v4944 = vsub.f32 %v3902, %v4902
    %v4945 = vsub.f32 %v3978, %v4905
    %v4946 = vsub.f32 %v4054, %v4908
    %v4947 = vsub.f32 %v4130, %v4911
    %v4948 = vsub.f32 %v4206, %v4914
    %v4949 = vsub.f32 %v4282, %v4917
    %v4950 = vsub.f32 %v4358, %v4920
    %v4951 = vsub.f32 %v4434, %v4923
    %v4952 = vsub.f32 %v4510, %v4926
    %v4953 = vsub.f32 %v4586, %v4929
    %v4954 = vsub.f32 %v4662, %v4932
    %v4955 = vsub.f32 %v4738, %v4935
    %v4956 = vsub.f32 %v4814, %v4938
    %v4957 = vsub.f32 %v4890, %v4941
    %v4958 = vmul.f32 %v4942, 1.442695
    %v4959 = vpow.pop %v4958
    %v4960 = vmul.f32 %v4943, 1.442695
    %v4961 = vpow.pop %v4960
    %v4962 = vmul.f32 %v4944, 1.442695
    %v4963 = vpow.pop %v4962
    %v4964 = vmul.f32 %v4945, 1.442695
    %v4965 = vpow.pop %v4964
    %v4966 = vmul.f32 %v4946, 1.442695
    %v4967 = vpow.pop %v4966
    %v4968 = vmul.f32 %v4947, 1.442695
    %v4969 = vpow.pop %v4968
    %v4970 = vmul.f32 %v4948, 1.442695
    %v4971 = vpow.pop %v4970
    %v4972 = vmul.f32 %v4949, 1.442695
    %v4973 = vpow.pop %v4972
    %v4974 = vmul.f32 %v4950, 1.442695
    %v4975 = vpow.pop %v4974
    %v4976 = vmul.f32 %v4951, 1.442695
    %v4977 = vpow.pop %v4976
    %v4978 = vmul.f32 %v4952, 1.442695
    %v4979 = vpow.pop %v4978
    %v4980 = vmul.f32 %v4953, 1.442695
    %v4981 = vpow.pop %v4980
    %v4982 = vmul.f32 %v4954, 1.442695
    %v4983 = vpow.pop %v4982
    %v4984 = vmul.f32 %v4955, 1.442695
    %v4985 = vpow.pop %v4984
    %v4986 = vmul.f32 %v4956, 1.442695
    %v4987 = vpow.pop %v4986
    %v4988 = vmul.f32 %v4957, 1.442695
    %v4989 = vpow.pop %v4988
    %v4990 = vsel %vm4893, %v4959, 0.0
    %4991 = vadd.xlane.f32.xlu0 %v4990
    %v4992 = vpop.xlane.xlu0 %4991
    %v4993 = vsel %vm4893, %v4961, 0.0
    %4994 = vadd.xlane.f32.xlu0 %v4993
    %v4995 = vpop.xlane.xlu0 %4994
    %v4996 = vsel %vm4893, %v4963, 0.0
    %4997 = vadd.xlane.f32.xlu0 %v4996
    %v4998 = vpop.xlane.xlu0 %4997
    %v4999 = vsel %vm4893, %v4965, 0.0
    %5000 = vadd.xlane.f32.xlu0 %v4999
    %v5001 = vpop.xlane.xlu0 %5000
    %v5002 = vsel %vm4893, %v4967, 0.0
    %5003 = vadd.xlane.f32.xlu0 %v5002
    %v5004 = vpop.xlane.xlu0 %5003
    %v5005 = vsel %vm4893, %v4969, 0.0
    %5006 = vadd.xlane.f32.xlu0 %v5005
    %v5007 = vpop.xlane.xlu0 %5006
    %v5008 = vsel %vm4893, %v4971, 0.0
    %5009 = vadd.xlane.f32.xlu0 %v5008
    %v5010 = vpop.xlane.xlu0 %5009
    %v5011 = vsel %vm4893, %v4973, 0.0
    %5012 = vadd.xlane.f32.xlu0 %v5011
    %v5013 = vpop.xlane.xlu0 %5012
    %v5014 = vsel %vm4893, %v4975, 0.0
    %5015 = vadd.xlane.f32.xlu0 %v5014
    %v5016 = vpop.xlane.xlu0 %5015
    %v5017 = vsel %vm4893, %v4977, 0.0
    %5018 = vadd.xlane.f32.xlu0 %v5017
    %v5019 = vpop.xlane.xlu0 %5018
    %v5020 = vsel %vm4893, %v4979, 0.0
    %5021 = vadd.xlane.f32.xlu0 %v5020
    %v5022 = vpop.xlane.xlu0 %5021
    %v5023 = vsel %vm4893, %v4981, 0.0
    %5024 = vadd.xlane.f32.xlu0 %v5023
    %v5025 = vpop.xlane.xlu0 %5024
    %v5026 = vsel %vm4893, %v4983, 0.0
    %5027 = vadd.xlane.f32.xlu0 %v5026
    %v5028 = vpop.xlane.xlu0 %5027
    %v5029 = vsel %vm4893, %v4985, 0.0
    %5030 = vadd.xlane.f32.xlu0 %v5029
    %v5031 = vpop.xlane.xlu0 %5030
    %v5032 = vsel %vm4893, %v4987, 0.0
    %5033 = vadd.xlane.f32.xlu0 %v5032
    %v5034 = vpop.xlane.xlu0 %5033
    %v5035 = vsel %vm4893, %v4989, 0.0
    %5036 = vadd.xlane.f32.xlu0 %v5035
    %v5037 = vpop.xlane.xlu0 %5036
    %v5038 = vrcp.pop %v4992
    %v5039 = vrcp.pop %v4995
    %v5040 = vrcp.pop %v4998
    %v5041 = vrcp.pop %v5001
    %v5042 = vrcp.pop %v5004
    %v5043 = vrcp.pop %v5007
    %v5044 = vrcp.pop %v5010
    %v5045 = vrcp.pop %v5013
    %v5046 = vrcp.pop %v5016
    %v5047 = vrcp.pop %v5019
    %v5048 = vrcp.pop %v5022
    %v5049 = vrcp.pop %v5025
    %v5050 = vrcp.pop %v5028
    %v5051 = vrcp.pop %v5031
    %v5052 = vrcp.pop %v5034
    %v5053 = vrcp.pop %v5037
    %v5054 = vmul.f32 %v4959, %v5038
    %v5055 = vmul.f32 %v4961, %v5039
    %v5056 = vmul.f32 %v4963, %v5040
    %v5057 = vmul.f32 %v4965, %v5041
    %v5058 = vmul.f32 %v4967, %v5042
    %v5059 = vmul.f32 %v4969, %v5043
    %v5060 = vmul.f32 %v4971, %v5044
    %v5061 = vmul.f32 %v4973, %v5045
    %v5062 = vmul.f32 %v4975, %v5046
    %v5063 = vmul.f32 %v4977, %v5047
    %v5064 = vmul.f32 %v4979, %v5048
    %v5065 = vmul.f32 %v4981, %v5049
    %v5066 = vmul.f32 %v4983, %v5050
    %v5067 = vmul.f32 %v4985, %v5051
    %v5068 = vmul.f32 %v4987, %v5052
    %v5069 = vmul.f32 %v4989, %v5053
    %v5071 = vsel %vm4893, %v5054, 0
    %5073 = vmatprep.subr.mxu0 0.0
    %5074 = vmatpush1.msra.mxu0 0.0
    %5075 = vmatprep.subr.mxu0 0.0
    %5076 = vmatpush1.msra.mxu0 0.0
    %5077 = vmatprep.subr.mxu0 0.0
    %5078 = vmatpush1.msra.mxu0 0.0
    %5079 = vmatprep.subr.mxu0 0.0
    %5080 = vmatpush1.msra.mxu0 0.0
    %5081 = vmatprep.subr.mxu0 0.0
    %5082 = vmatpush1.msra.mxu0 0.0
    %5083 = vmatprep.subr.mxu0 0.0
    %5084 = vmatpush1.msra.mxu0 0.0
    %5085 = vmatprep.subr.mxu0 0.0
    %5086 = vmatpush1.msra.mxu0 0.0
    %5087 = vmatprep.subr.mxu0 0.0
    %5088 = vmatpush1.msra.mxu0 0.0
    %5089 = vmatprep.subr.mxu0 0.0
    %5090 = vmatpush1.msra.mxu0 0.0
    %5091 = vmatprep.subr.mxu0 0.0
    %5092 = vmatpush1.msra.mxu0 0.0
    %5093 = vmatprep.subr.mxu0 0.0
    %5094 = vmatpush1.msra.mxu0 0.0
    %5095 = vmatprep.subr.mxu0 0.0
    %5096 = vmatpush1.msra.mxu0 0.0
    %5097 = vmatprep.subr.mxu0 0.0
    %5098 = vmatpush1.msra.mxu0 0.0
    %5099 = vmatprep.subr.mxu0 0.0
    %5100 = vmatpush1.msra.mxu0 0.0
    %5101 = vmatprep.subr.mxu0 0.0
    %5102 = vmatpush1.msra.mxu0 0.0
    %5103 = vmatprep.subr.mxu0 0.0
    %5104 = vmatpush1.msra.mxu0 %v2623
    %5105 = vmatprep.subr.mxu0 0.0
    %5106 = vmatpush2.msra.mxu0 0.0
    %5107 = vmatprep.subr.mxu0 0.0
    %5108 = vmatpush2.msra.mxu0 0.0
    %5109 = vmatprep.subr.mxu0 0.0
    %5110 = vmatpush2.msra.mxu0 0.0
    %5111 = vmatprep.subr.mxu0 0.0
    %5112 = vmatpush2.msra.mxu0 0.0
    %5113 = vmatprep.subr.mxu0 0.0
    %5114 = vmatpush2.msra.mxu0 0.0
    %5115 = vmatprep.subr.mxu0 0.0
    %5116 = vmatpush2.msra.mxu0 0.0
    %5117 = vmatprep.subr.mxu0 0.0
    %5118 = vmatpush2.msra.mxu0 0.0
    %5119 = vmatprep.subr.mxu0 0.0
    %5120 = vmatpush2.msra.mxu0 0.0
    %5121 = vmatprep.subr.mxu0 0.0
    %5122 = vmatpush2.msra.mxu0 0.0
    %5123 = vmatprep.subr.mxu0 0.0
    %5124 = vmatpush2.msra.mxu0 0.0
    %5125 = vmatprep.subr.mxu0 0.0
    %5126 = vmatpush2.msra.mxu0 0.0
    %5127 = vmatprep.subr.mxu0 0.0
    %5128 = vmatpush2.msra.mxu0 0.0
    %5129 = vmatprep.subr.mxu0 0.0
    %5130 = vmatpush2.msra.mxu0 0.0
    %5131 = vmatprep.subr.mxu0 0.0
    %5132 = vmatpush2.msra.mxu0 0.0
    %5133 = vmatprep.subr.mxu0 0.0
    %5134 = vmatpush2.msra.mxu0 0.0
    %5135 = vmatprep.subr.mxu0 0.0
    %5136 = vmatpush2.msra.mxu0 0.0
    %5137 = vmatprep.mubr.f32.mxu0 0.0
    %5138 = vmatmul.mubr.f32.gmra.mxu0 %v5071
    %v5139 = vpop.f32.mrf.mxu0
    %v5140 = vadd.f32 0.0, %v5139
    %v5141 = vpop.f32.mrf.mxu0
    %5142 = vdwg.mxu0
    %v5144 = vsel %vm4893, %v5055, 0
    %5146 = vmatprep.subr.mxu0 0.0
    %5147 = vmatpush1.msra.mxu0 0.0
    %5148 = vmatprep.subr.mxu0 0.0
    %5149 = vmatpush1.msra.mxu0 0.0
    %5150 = vmatprep.subr.mxu0 0.0
    %5151 = vmatpush1.msra.mxu0 0.0
    %5152 = vmatprep.subr.mxu0 0.0
    %5153 = vmatpush1.msra.mxu0 0.0
    %5154 = vmatprep.subr.mxu0 0.0
    %5155 = vmatpush1.msra.mxu0 0.0
    %5156 = vmatprep.subr.mxu0 0.0
    %5157 = vmatpush1.msra.mxu0 0.0
    %5158 = vmatprep.subr.mxu0 0.0
    %5159 = vmatpush1.msra.mxu0 0.0
    %5160 = vmatprep.subr.mxu0 0.0
    %5161 = vmatpush1.msra.mxu0 0.0
    %5162 = vmatprep.subr.mxu0 0.0
    %5163 = vmatpush1.msra.mxu0 0.0
    %5164 = vmatprep.subr.mxu0 0.0
    %5165 = vmatpush1.msra.mxu0 0.0
    %5166 = vmatprep.subr.mxu0 0.0
    %5167 = vmatpush1.msra.mxu0 0.0
    %5168 = vmatprep.subr.mxu0 0.0
    %5169 = vmatpush1.msra.mxu0 0.0
    %5170 = vmatprep.subr.mxu0 0.0
    %5171 = vmatpush1.msra.mxu0 0.0
    %5172 = vmatprep.subr.mxu0 0.0
    %5173 = vmatpush1.msra.mxu0 0.0
    %5174 = vmatprep.subr.mxu0 0.0
    %5175 = vmatpush1.msra.mxu0 0.0
    %5176 = vmatprep.subr.mxu0 0.0
    %5177 = vmatpush1.msra.mxu0 %v2693
    %5178 = vmatprep.subr.mxu0 0.0
    %5179 = vmatpush2.msra.mxu0 0.0
    %5180 = vmatprep.subr.mxu0 0.0
    %5181 = vmatpush2.msra.mxu0 0.0
    %5182 = vmatprep.subr.mxu0 0.0
    %5183 = vmatpush2.msra.mxu0 0.0
    %5184 = vmatprep.subr.mxu0 0.0
    %5185 = vmatpush2.msra.mxu0 0.0
    %5186 = vmatprep.subr.mxu0 0.0
    %5187 = vmatpush2.msra.mxu0 0.0
    %5188 = vmatprep.subr.mxu0 0.0
    %5189 = vmatpush2.msra.mxu0 0.0
    %5190 = vmatprep.subr.mxu0 0.0
    %5191 = vmatpush2.msra.mxu0 0.0
    %5192 = vmatprep.subr.mxu0 0.0
    %5193 = vmatpush2.msra.mxu0 0.0
    %5194 = vmatprep.subr.mxu0 0.0
    %5195 = vmatpush2.msra.mxu0 0.0
    %5196 = vmatprep.subr.mxu0 0.0
    %5197 = vmatpush2.msra.mxu0 0.0
    %5198 = vmatprep.subr.mxu0 0.0
    %5199 = vmatpush2.msra.mxu0 0.0
    %5200 = vmatprep.subr.mxu0 0.0
    %5201 = vmatpush2.msra.mxu0 0.0
    %5202 = vmatprep.subr.mxu0 0.0
    %5203 = vmatpush2.msra.mxu0 0.0
    %5204 = vmatprep.subr.mxu0 0.0
    %5205 = vmatpush2.msra.mxu0 0.0
    %5206 = vmatprep.subr.mxu0 0.0
    %5207 = vmatpush2.msra.mxu0 0.0
    %5208 = vmatprep.subr.mxu0 0.0
    %5209 = vmatpush2.msra.mxu0 0.0
    %5210 = vmatprep.mubr.f32.mxu0 0.0
    %5211 = vmatmul.mubr.f32.gmra.mxu0 %v5144
    %v5212 = vpop.f32.mrf.mxu0
    %v5213 = vadd.f32 0.0, %v5212
    %v5214 = vpop.f32.mrf.mxu0
    %5215 = vdwg.mxu0
    %v5217 = vsel %vm4893, %v5056, 0
    %5219 = vmatprep.subr.mxu0 0.0
    %5220 = vmatpush1.msra.mxu0 0.0
    %5221 = vmatprep.subr.mxu0 0.0
    %5222 = vmatpush1.msra.mxu0 0.0
    %5223 = vmatprep.subr.mxu0 0.0
    %5224 = vmatpush1.msra.mxu0 0.0
    %5225 = vmatprep.subr.mxu0 0.0
    %5226 = vmatpush1.msra.mxu0 0.0
    %5227 = vmatprep.subr.mxu0 0.0
    %5228 = vmatpush1.msra.mxu0 0.0
    %5229 = vmatprep.subr.mxu0 0.0
    %5230 = vmatpush1.msra.mxu0 0.0
    %5231 = vmatprep.subr.mxu0 0.0
    %5232 = vmatpush1.msra.mxu0 0.0
    %5233 = vmatprep.subr.mxu0 0.0
    %5234 = vmatpush1.msra.mxu0 0.0
    %5235 = vmatprep.subr.mxu0 0.0
    %5236 = vmatpush1.msra.mxu0 0.0
    %5237 = vmatprep.subr.mxu0 0.0
    %5238 = vmatpush1.msra.mxu0 0.0
    %5239 = vmatprep.subr.mxu0 0.0
    %5240 = vmatpush1.msra.mxu0 0.0
    %5241 = vmatprep.subr.mxu0 0.0
    %5242 = vmatpush1.msra.mxu0 0.0
    %5243 = vmatprep.subr.mxu0 0.0
    %5244 = vmatpush1.msra.mxu0 0.0
    %5245 = vmatprep.subr.mxu0 0.0
    %5246 = vmatpush1.msra.mxu0 0.0
    %5247 = vmatprep.subr.mxu0 0.0
    %5248 = vmatpush1.msra.mxu0 0.0
    %5249 = vmatprep.subr.mxu0 0.0
    %5250 = vmatpush1.msra.mxu0 %v2763
    %5251 = vmatprep.subr.mxu0 0.0
    %5252 = vmatpush2.msra.mxu0 0.0
    %5253 = vmatprep.subr.mxu0 0.0
    %5254 = vmatpush2.msra.mxu0 0.0
    %5255 = vmatprep.subr.mxu0 0.0
    %5256 = vmatpush2.msra.mxu0 0.0
    %5257 = vmatprep.subr.mxu0 0.0
    %5258 = vmatpush2.msra.mxu0 0.0
    %5259 = vmatprep.subr.mxu0 0.0
    %5260 = vmatpush2.msra.mxu0 0.0
    %5261 = vmatprep.subr.mxu0 0.0
    %5262 = vmatpush2.msra.mxu0 0.0
    %5263 = vmatprep.subr.mxu0 0.0
    %5264 = vmatpush2.msra.mxu0 0.0
    %5265 = vmatprep.subr.mxu0 0.0
    %5266 = vmatpush2.msra.mxu0 0.0
    %5267 = vmatprep.subr.mxu0 0.0
    %5268 = vmatpush2.msra.mxu0 0.0
    %5269 = vmatprep.subr.mxu0 0.0
    %5270 = vmatpush2.msra.mxu0 0.0
    %5271 = vmatprep.subr.mxu0 0.0
    %5272 = vmatpush2.msra.mxu0 0.0
    %5273 = vmatprep.subr.mxu0 0.0
    %5274 = vmatpush2.msra.mxu0 0.0
    %5275 = vmatprep.subr.mxu0 0.0
    %5276 = vmatpush2.msra.mxu0 0.0
    %5277 = vmatprep.subr.mxu0 0.0
    %5278 = vmatpush2.msra.mxu0 0.0
    %5279 = vmatprep.subr.mxu0 0.0
    %5280 = vmatpush2.msra.mxu0 0.0
    %5281 = vmatprep.subr.mxu0 0.0
    %5282 = vmatpush2.msra.mxu0 0.0
    %5283 = vmatprep.mubr.f32.mxu0 0.0
    %5284 = vmatmul.mubr.f32.gmra.mxu0 %v5217
    %v5285 = vpop.f32.mrf.mxu0
    %v5286 = vadd.f32 0.0, %v5285
    %v5287 = vpop.f32.mrf.mxu0
    %5288 = vdwg.mxu0
    %v5290 = vsel %vm4893, %v5057, 0
    %5292 = vmatprep.subr.mxu0 0.0
    %5293 = vmatpush1.msra.mxu0 0.0
    %5294 = vmatprep.subr.mxu0 0.0
    %5295 = vmatpush1.msra.mxu0 0.0
    %5296 = vmatprep.subr.mxu0 0.0
    %5297 = vmatpush1.msra.mxu0 0.0
    %5298 = vmatprep.subr.mxu0 0.0
    %5299 = vmatpush1.msra.mxu0 0.0
    %5300 = vmatprep.subr.mxu0 0.0
    %5301 = vmatpush1.msra.mxu0 0.0
    %5302 = vmatprep.subr.mxu0 0.0
    %5303 = vmatpush1.msra.mxu0 0.0
    %5304 = vmatprep.subr.mxu0 0.0
    %5305 = vmatpush1.msra.mxu0 0.0
    %5306 = vmatprep.subr.mxu0 0.0
    %5307 = vmatpush1.msra.mxu0 0.0
    %5308 = vmatprep.subr.mxu0 0.0
    %5309 = vmatpush1.msra.mxu0 0.0
    %5310 = vmatprep.subr.mxu0 0.0
    %5311 = vmatpush1.msra.mxu0 0.0
    %5312 = vmatprep.subr.mxu0 0.0
    %5313 = vmatpush1.msra.mxu0 0.0
    %5314 = vmatprep.subr.mxu0 0.0
    %5315 = vmatpush1.msra.mxu0 0.0
    %5316 = vmatprep.subr.mxu0 0.0
    %5317 = vmatpush1.msra.mxu0 0.0
    %5318 = vmatprep.subr.mxu0 0.0
    %5319 = vmatpush1.msra.mxu0 0.0
    %5320 = vmatprep.subr.mxu0 0.0
    %5321 = vmatpush1.msra.mxu0 0.0
    %5322 = vmatprep.subr.mxu0 0.0
    %5323 = vmatpush1.msra.mxu0 %v2833
    %5324 = vmatprep.subr.mxu0 0.0
    %5325 = vmatpush2.msra.mxu0 0.0
    %5326 = vmatprep.subr.mxu0 0.0
    %5327 = vmatpush2.msra.mxu0 0.0
    %5328 = vmatprep.subr.mxu0 0.0
    %5329 = vmatpush2.msra.mxu0 0.0
    %5330 = vmatprep.subr.mxu0 0.0
    %5331 = vmatpush2.msra.mxu0 0.0
    %5332 = vmatprep.subr.mxu0 0.0
    %5333 = vmatpush2.msra.mxu0 0.0
    %5334 = vmatprep.subr.mxu0 0.0
    %5335 = vmatpush2.msra.mxu0 0.0
    %5336 = vmatprep.subr.mxu0 0.0
    %5337 = vmatpush2.msra.mxu0 0.0
    %5338 = vmatprep.subr.mxu0 0.0
    %5339 = vmatpush2.msra.mxu0 0.0
    %5340 = vmatprep.subr.mxu0 0.0
    %5341 = vmatpush2.msra.mxu0 0.0
    %5342 = vmatprep.subr.mxu0 0.0
    %5343 = vmatpush2.msra.mxu0 0.0
    %5344 = vmatprep.subr.mxu0 0.0
    %5345 = vmatpush2.msra.mxu0 0.0
    %5346 = vmatprep.subr.mxu0 0.0
    %5347 = vmatpush2.msra.mxu0 0.0
    %5348 = vmatprep.subr.mxu0 0.0
    %5349 = vmatpush2.msra.mxu0 0.0
    %5350 = vmatprep.subr.mxu0 0.0
    %5351 = vmatpush2.msra.mxu0 0.0
    %5352 = vmatprep.subr.mxu0 0.0
    %5353 = vmatpush2.msra.mxu0 0.0
    %5354 = vmatprep.subr.mxu0 0.0
    %5355 = vmatpush2.msra.mxu0 0.0
    %5356 = vmatprep.mubr.f32.mxu0 0.0
    %5357 = vmatmul.mubr.f32.gmra.mxu0 %v5290
    %v5358 = vpop.f32.mrf.mxu0
    %v5359 = vadd.f32 0.0, %v5358
    %v5360 = vpop.f32.mrf.mxu0
    %5361 = vdwg.mxu0
    %v5363 = vsel %vm4893, %v5058, 0
    %5365 = vmatprep.subr.mxu0 0.0
    %5366 = vmatpush1.msra.mxu0 0.0
    %5367 = vmatprep.subr.mxu0 0.0
    %5368 = vmatpush1.msra.mxu0 0.0
    %5369 = vmatprep.subr.mxu0 0.0
    %5370 = vmatpush1.msra.mxu0 0.0
    %5371 = vmatprep.subr.mxu0 0.0
    %5372 = vmatpush1.msra.mxu0 0.0
    %5373 = vmatprep.subr.mxu0 0.0
    %5374 = vmatpush1.msra.mxu0 0.0
    %5375 = vmatprep.subr.mxu0 0.0
    %5376 = vmatpush1.msra.mxu0 0.0
    %5377 = vmatprep.subr.mxu0 0.0
    %5378 = vmatpush1.msra.mxu0 0.0
    %5379 = vmatprep.subr.mxu0 0.0
    %5380 = vmatpush1.msra.mxu0 0.0
    %5381 = vmatprep.subr.mxu0 0.0
    %5382 = vmatpush1.msra.mxu0 0.0
    %5383 = vmatprep.subr.mxu0 0.0
    %5384 = vmatpush1.msra.mxu0 0.0
    %5385 = vmatprep.subr.mxu0 0.0
    %5386 = vmatpush1.msra.mxu0 0.0
    %5387 = vmatprep.subr.mxu0 0.0
    %5388 = vmatpush1.msra.mxu0 0.0
    %5389 = vmatprep.subr.mxu0 0.0
    %5390 = vmatpush1.msra.mxu0 0.0
    %5391 = vmatprep.subr.mxu0 0.0
    %5392 = vmatpush1.msra.mxu0 0.0
    %5393 = vmatprep.subr.mxu0 0.0
    %5394 = vmatpush1.msra.mxu0 0.0
    %5395 = vmatprep.subr.mxu0 0.0
    %5396 = vmatpush1.msra.mxu0 %v2903
    %5397 = vmatprep.subr.mxu0 0.0
    %5398 = vmatpush2.msra.mxu0 0.0
    %5399 = vmatprep.subr.mxu0 0.0
    %5400 = vmatpush2.msra.mxu0 0.0
    %5401 = vmatprep.subr.mxu0 0.0
    %5402 = vmatpush2.msra.mxu0 0.0
    %5403 = vmatprep.subr.mxu0 0.0
    %5404 = vmatpush2.msra.mxu0 0.0
    %5405 = vmatprep.subr.mxu0 0.0
    %5406 = vmatpush2.msra.mxu0 0.0
    %5407 = vmatprep.subr.mxu0 0.0
    %5408 = vmatpush2.msra.mxu0 0.0
    %5409 = vmatprep.subr.mxu0 0.0
    %5410 = vmatpush2.msra.mxu0 0.0
    %5411 = vmatprep.subr.mxu0 0.0
    %5412 = vmatpush2.msra.mxu0 0.0
    %5413 = vmatprep.subr.mxu0 0.0
    %5414 = vmatpush2.msra.mxu0 0.0
    %5415 = vmatprep.subr.mxu0 0.0
    %5416 = vmatpush2.msra.mxu0 0.0
    %5417 = vmatprep.subr.mxu0 0.0
    %5418 = vmatpush2.msra.mxu0 0.0
    %5419 = vmatprep.subr.mxu0 0.0
    %5420 = vmatpush2.msra.mxu0 0.0
    %5421 = vmatprep.subr.mxu0 0.0
    %5422 = vmatpush2.msra.mxu0 0.0
    %5423 = vmatprep.subr.mxu0 0.0
    %5424 = vmatpush2.msra.mxu0 0.0
    %5425 = vmatprep.subr.mxu0 0.0
    %5426 = vmatpush2.msra.mxu0 0.0
    %5427 = vmatprep.subr.mxu0 0.0
    %5428 = vmatpush2.msra.mxu0 0.0
    %5429 = vmatprep.mubr.f32.mxu0 0.0
    %5430 = vmatmul.mubr.f32.gmra.mxu0 %v5363
    %v5431 = vpop.f32.mrf.mxu0
    %v5432 = vadd.f32 0.0, %v5431
    %v5433 = vpop.f32.mrf.mxu0
    %5434 = vdwg.mxu0
    %v5436 = vsel %vm4893, %v5059, 0
    %5438 = vmatprep.subr.mxu0 0.0
    %5439 = vmatpush1.msra.mxu0 0.0
    %5440 = vmatprep.subr.mxu0 0.0
    %5441 = vmatpush1.msra.mxu0 0.0
    %5442 = vmatprep.subr.mxu0 0.0
    %5443 = vmatpush1.msra.mxu0 0.0
    %5444 = vmatprep.subr.mxu0 0.0
    %5445 = vmatpush1.msra.mxu0 0.0
    %5446 = vmatprep.subr.mxu0 0.0
    %5447 = vmatpush1.msra.mxu0 0.0
    %5448 = vmatprep.subr.mxu0 0.0
    %5449 = vmatpush1.msra.mxu0 0.0
    %5450 = vmatprep.subr.mxu0 0.0
    %5451 = vmatpush1.msra.mxu0 0.0
    %5452 = vmatprep.subr.mxu0 0.0
    %5453 = vmatpush1.msra.mxu0 0.0
    %5454 = vmatprep.subr.mxu0 0.0
    %5455 = vmatpush1.msra.mxu0 0.0
    %5456 = vmatprep.subr.mxu0 0.0
    %5457 = vmatpush1.msra.mxu0 0.0
    %5458 = vmatprep.subr.mxu0 0.0
    %5459 = vmatpush1.msra.mxu0 0.0
    %5460 = vmatprep.subr.mxu0 0.0
    %5461 = vmatpush1.msra.mxu0 0.0
    %5462 = vmatprep.subr.mxu0 0.0
    %5463 = vmatpush1.msra.mxu0 0.0
    %5464 = vmatprep.subr.mxu0 0.0
    %5465 = vmatpush1.msra.mxu0 0.0
    %5466 = vmatprep.subr.mxu0 0.0
    %5467 = vmatpush1.msra.mxu0 0.0
    %5468 = vmatprep.subr.mxu0 0.0
    %5469 = vmatpush1.msra.mxu0 %v2973
    %5470 = vmatprep.subr.mxu0 0.0
    %5471 = vmatpush2.msra.mxu0 0.0
    %5472 = vmatprep.subr.mxu0 0.0
    %5473 = vmatpush2.msra.mxu0 0.0
    %5474 = vmatprep.subr.mxu0 0.0
    %5475 = vmatpush2.msra.mxu0 0.0
    %5476 = vmatprep.subr.mxu0 0.0
    %5477 = vmatpush2.msra.mxu0 0.0
    %5478 = vmatprep.subr.mxu0 0.0
    %5479 = vmatpush2.msra.mxu0 0.0
    %5480 = vmatprep.subr.mxu0 0.0
    %5481 = vmatpush2.msra.mxu0 0.0
    %5482 = vmatprep.subr.mxu0 0.0
    %5483 = vmatpush2.msra.mxu0 0.0
    %5484 = vmatprep.subr.mxu0 0.0
    %5485 = vmatpush2.msra.mxu0 0.0
    %5486 = vmatprep.subr.mxu0 0.0
    %5487 = vmatpush2.msra.mxu0 0.0
    %5488 = vmatprep.subr.mxu0 0.0
    %5489 = vmatpush2.msra.mxu0 0.0
    %5490 = vmatprep.subr.mxu0 0.0
    %5491 = vmatpush2.msra.mxu0 0.0
    %5492 = vmatprep.subr.mxu0 0.0
    %5493 = vmatpush2.msra.mxu0 0.0
    %5494 = vmatprep.subr.mxu0 0.0
    %5495 = vmatpush2.msra.mxu0 0.0
    %5496 = vmatprep.subr.mxu0 0.0
    %5497 = vmatpush2.msra.mxu0 0.0
    %5498 = vmatprep.subr.mxu0 0.0
    %5499 = vmatpush2.msra.mxu0 0.0
    %5500 = vmatprep.subr.mxu0 0.0
    %5501 = vmatpush2.msra.mxu0 0.0
    %5502 = vmatprep.mubr.f32.mxu0 0.0
    %5503 = vmatmul.mubr.f32.gmra.mxu0 %v5436
    %v5504 = vpop.f32.mrf.mxu0
    %v5505 = vadd.f32 0.0, %v5504
    %v5506 = vpop.f32.mrf.mxu0
    %5507 = vdwg.mxu0
    %v5509 = vsel %vm4893, %v5060, 0
    %5511 = vmatprep.subr.mxu0 0.0
    %5512 = vmatpush1.msra.mxu0 0.0
    %5513 = vmatprep.subr.mxu0 0.0
    %5514 = vmatpush1.msra.mxu0 0.0
    %5515 = vmatprep.subr.mxu0 0.0
    %5516 = vmatpush1.msra.mxu0 0.0
    %5517 = vmatprep.subr.mxu0 0.0
    %5518 = vmatpush1.msra.mxu0 0.0
    %5519 = vmatprep.subr.mxu0 0.0
    %5520 = vmatpush1.msra.mxu0 0.0
    %5521 = vmatprep.subr.mxu0 0.0
    %5522 = vmatpush1.msra.mxu0 0.0
    %5523 = vmatprep.subr.mxu0 0.0
    %5524 = vmatpush1.msra.mxu0 0.0
    %5525 = vmatprep.subr.mxu0 0.0
    %5526 = vmatpush1.msra.mxu0 0.0
    %5527 = vmatprep.subr.mxu0 0.0
    %5528 = vmatpush1.msra.mxu0 0.0
    %5529 = vmatprep.subr.mxu0 0.0
    %5530 = vmatpush1.msra.mxu0 0.0
    %5531 = vmatprep.subr.mxu0 0.0
    %5532 = vmatpush1.msra.mxu0 0.0
    %5533 = vmatprep.subr.mxu0 0.0
    %5534 = vmatpush1.msra.mxu0 0.0
    %5535 = vmatprep.subr.mxu0 0.0
    %5536 = vmatpush1.msra.mxu0 0.0
    %5537 = vmatprep.subr.mxu0 0.0
    %5538 = vmatpush1.msra.mxu0 0.0
    %5539 = vmatprep.subr.mxu0 0.0
    %5540 = vmatpush1.msra.mxu0 0.0
    %5541 = vmatprep.subr.mxu0 0.0
    %5542 = vmatpush1.msra.mxu0 %v3043
    %5543 = vmatprep.subr.mxu0 0.0
    %5544 = vmatpush2.msra.mxu0 0.0
    %5545 = vmatprep.subr.mxu0 0.0
    %5546 = vmatpush2.msra.mxu0 0.0
    %5547 = vmatprep.subr.mxu0 0.0
    %5548 = vmatpush2.msra.mxu0 0.0
    %5549 = vmatprep.subr.mxu0 0.0
    %5550 = vmatpush2.msra.mxu0 0.0
    %5551 = vmatprep.subr.mxu0 0.0
    %5552 = vmatpush2.msra.mxu0 0.0
    %5553 = vmatprep.subr.mxu0 0.0
    %5554 = vmatpush2.msra.mxu0 0.0
    %5555 = vmatprep.subr.mxu0 0.0
    %5556 = vmatpush2.msra.mxu0 0.0
    %5557 = vmatprep.subr.mxu0 0.0
    %5558 = vmatpush2.msra.mxu0 0.0
    %5559 = vmatprep.subr.mxu0 0.0
    %5560 = vmatpush2.msra.mxu0 0.0
    %5561 = vmatprep.subr.mxu0 0.0
    %5562 = vmatpush2.msra.mxu0 0.0
    %5563 = vmatprep.subr.mxu0 0.0
    %5564 = vmatpush2.msra.mxu0 0.0
    %5565 = vmatprep.subr.mxu0 0.0
    %5566 = vmatpush2.msra.mxu0 0.0
    %5567 = vmatprep.subr.mxu0 0.0
    %5568 = vmatpush2.msra.mxu0 0.0
    %5569 = vmatprep.subr.mxu0 0.0
    %5570 = vmatpush2.msra.mxu0 0.0
    %5571 = vmatprep.subr.mxu0 0.0
    %5572 = vmatpush2.msra.mxu0 0.0
    %5573 = vmatprep.subr.mxu0 0.0
    %5574 = vmatpush2.msra.mxu0 0.0
    %5575 = vmatprep.mubr.f32.mxu0 0.0
    %5576 = vmatmul.mubr.f32.gmra.mxu0 %v5509
    %v5577 = vpop.f32.mrf.mxu0
    %v5578 = vadd.f32 0.0, %v5577
    %v5579 = vpop.f32.mrf.mxu0
    %5580 = vdwg.mxu0
    %v5582 = vsel %vm4893, %v5061, 0
    %5584 = vmatprep.subr.mxu0 0.0
    %5585 = vmatpush1.msra.mxu0 0.0
    %5586 = vmatprep.subr.mxu0 0.0
    %5587 = vmatpush1.msra.mxu0 0.0
    %5588 = vmatprep.subr.mxu0 0.0
    %5589 = vmatpush1.msra.mxu0 0.0
    %5590 = vmatprep.subr.mxu0 0.0
    %5591 = vmatpush1.msra.mxu0 0.0
    %5592 = vmatprep.subr.mxu0 0.0
    %5593 = vmatpush1.msra.mxu0 0.0
    %5594 = vmatprep.subr.mxu0 0.0
    %5595 = vmatpush1.msra.mxu0 0.0
    %5596 = vmatprep.subr.mxu0 0.0
    %5597 = vmatpush1.msra.mxu0 0.0
    %5598 = vmatprep.subr.mxu0 0.0
    %5599 = vmatpush1.msra.mxu0 0.0
    %5600 = vmatprep.subr.mxu0 0.0
    %5601 = vmatpush1.msra.mxu0 0.0
    %5602 = vmatprep.subr.mxu0 0.0
    %5603 = vmatpush1.msra.mxu0 0.0
    %5604 = vmatprep.subr.mxu0 0.0
    %5605 = vmatpush1.msra.mxu0 0.0
    %5606 = vmatprep.subr.mxu0 0.0
    %5607 = vmatpush1.msra.mxu0 0.0
    %5608 = vmatprep.subr.mxu0 0.0
    %5609 = vmatpush1.msra.mxu0 0.0
    %5610 = vmatprep.subr.mxu0 0.0
    %5611 = vmatpush1.msra.mxu0 0.0
    %5612 = vmatprep.subr.mxu0 0.0
    %5613 = vmatpush1.msra.mxu0 0.0
    %5614 = vmatprep.subr.mxu0 0.0
    %5615 = vmatpush1.msra.mxu0 %v3113
    %5616 = vmatprep.subr.mxu0 0.0
    %5617 = vmatpush2.msra.mxu0 0.0
    %5618 = vmatprep.subr.mxu0 0.0
    %5619 = vmatpush2.msra.mxu0 0.0
    %5620 = vmatprep.subr.mxu0 0.0
    %5621 = vmatpush2.msra.mxu0 0.0
    %5622 = vmatprep.subr.mxu0 0.0
    %5623 = vmatpush2.msra.mxu0 0.0
    %5624 = vmatprep.subr.mxu0 0.0
    %5625 = vmatpush2.msra.mxu0 0.0
    %5626 = vmatprep.subr.mxu0 0.0
    %5627 = vmatpush2.msra.mxu0 0.0
    %5628 = vmatprep.subr.mxu0 0.0
    %5629 = vmatpush2.msra.mxu0 0.0
    %5630 = vmatprep.subr.mxu0 0.0
    %5631 = vmatpush2.msra.mxu0 0.0
    %5632 = vmatprep.subr.mxu0 0.0
    %5633 = vmatpush2.msra.mxu0 0.0
    %5634 = vmatprep.subr.mxu0 0.0
    %5635 = vmatpush2.msra.mxu0 0.0
    %5636 = vmatprep.subr.mxu0 0.0
    %5637 = vmatpush2.msra.mxu0 0.0
    %5638 = vmatprep.subr.mxu0 0.0
    %5639 = vmatpush2.msra.mxu0 0.0
    %5640 = vmatprep.subr.mxu0 0.0
    %5641 = vmatpush2.msra.mxu0 0.0
    %5642 = vmatprep.subr.mxu0 0.0
    %5643 = vmatpush2.msra.mxu0 0.0
    %5644 = vmatprep.subr.mxu0 0.0
    %5645 = vmatpush2.msra.mxu0 0.0
    %5646 = vmatprep.subr.mxu0 0.0
    %5647 = vmatpush2.msra.mxu0 0.0
    %5648 = vmatprep.mubr.f32.mxu0 0.0
    %5649 = vmatmul.mubr.f32.gmra.mxu0 %v5582
    %v5650 = vpop.f32.mrf.mxu0
    %v5651 = vadd.f32 0.0, %v5650
    %v5652 = vpop.f32.mrf.mxu0
    %5653 = vdwg.mxu0
    %v5655 = vsel %vm4893, %v5062, 0
    %5657 = vmatprep.subr.mxu0 0.0
    %5658 = vmatpush1.msra.mxu0 0.0
    %5659 = vmatprep.subr.mxu0 0.0
    %5660 = vmatpush1.msra.mxu0 0.0
    %5661 = vmatprep.subr.mxu0 0.0
    %5662 = vmatpush1.msra.mxu0 0.0
    %5663 = vmatprep.subr.mxu0 0.0
    %5664 = vmatpush1.msra.mxu0 0.0
    %5665 = vmatprep.subr.mxu0 0.0
    %5666 = vmatpush1.msra.mxu0 0.0
    %5667 = vmatprep.subr.mxu0 0.0
    %5668 = vmatpush1.msra.mxu0 0.0
    %5669 = vmatprep.subr.mxu0 0.0
    %5670 = vmatpush1.msra.mxu0 0.0
    %5671 = vmatprep.subr.mxu0 0.0
    %5672 = vmatpush1.msra.mxu0 0.0
    %5673 = vmatprep.subr.mxu0 0.0
    %5674 = vmatpush1.msra.mxu0 0.0
    %5675 = vmatprep.subr.mxu0 0.0
    %5676 = vmatpush1.msra.mxu0 0.0
    %5677 = vmatprep.subr.mxu0 0.0
    %5678 = vmatpush1.msra.mxu0 0.0
    %5679 = vmatprep.subr.mxu0 0.0
    %5680 = vmatpush1.msra.mxu0 0.0
    %5681 = vmatprep.subr.mxu0 0.0
    %5682 = vmatpush1.msra.mxu0 0.0
    %5683 = vmatprep.subr.mxu0 0.0
    %5684 = vmatpush1.msra.mxu0 0.0
    %5685 = vmatprep.subr.mxu0 0.0
    %5686 = vmatpush1.msra.mxu0 0.0
    %5687 = vmatprep.subr.mxu0 0.0
    %5688 = vmatpush1.msra.mxu0 %v3183
    %5689 = vmatprep.subr.mxu0 0.0
    %5690 = vmatpush2.msra.mxu0 0.0
    %5691 = vmatprep.subr.mxu0 0.0
    %5692 = vmatpush2.msra.mxu0 0.0
    %5693 = vmatprep.subr.mxu0 0.0
    %5694 = vmatpush2.msra.mxu0 0.0
    %5695 = vmatprep.subr.mxu0 0.0
    %5696 = vmatpush2.msra.mxu0 0.0
    %5697 = vmatprep.subr.mxu0 0.0
    %5698 = vmatpush2.msra.mxu0 0.0
    %5699 = vmatprep.subr.mxu0 0.0
    %5700 = vmatpush2.msra.mxu0 0.0
    %5701 = vmatprep.subr.mxu0 0.0
    %5702 = vmatpush2.msra.mxu0 0.0
    %5703 = vmatprep.subr.mxu0 0.0
    %5704 = vmatpush2.msra.mxu0 0.0
    %5705 = vmatprep.subr.mxu0 0.0
    %5706 = vmatpush2.msra.mxu0 0.0
    %5707 = vmatprep.subr.mxu0 0.0
    %5708 = vmatpush2.msra.mxu0 0.0
    %5709 = vmatprep.subr.mxu0 0.0
    %5710 = vmatpush2.msra.mxu0 0.0
    %5711 = vmatprep.subr.mxu0 0.0
    %5712 = vmatpush2.msra.mxu0 0.0
    %5713 = vmatprep.subr.mxu0 0.0
    %5714 = vmatpush2.msra.mxu0 0.0
    %5715 = vmatprep.subr.mxu0 0.0
    %5716 = vmatpush2.msra.mxu0 0.0
    %5717 = vmatprep.subr.mxu0 0.0
    %5718 = vmatpush2.msra.mxu0 0.0
    %5719 = vmatprep.subr.mxu0 0.0
    %5720 = vmatpush2.msra.mxu0 0.0
    %5721 = vmatprep.mubr.f32.mxu0 0.0
    %5722 = vmatmul.mubr.f32.gmra.mxu0 %v5655
    %v5723 = vpop.f32.mrf.mxu0
    %v5724 = vadd.f32 0.0, %v5723
    %v5725 = vpop.f32.mrf.mxu0
    %5726 = vdwg.mxu0
    %v5728 = vsel %vm4893, %v5063, 0
    %5730 = vmatprep.subr.mxu0 0.0
    %5731 = vmatpush1.msra.mxu0 0.0
    %5732 = vmatprep.subr.mxu0 0.0
    %5733 = vmatpush1.msra.mxu0 0.0
    %5734 = vmatprep.subr.mxu0 0.0
    %5735 = vmatpush1.msra.mxu0 0.0
    %5736 = vmatprep.subr.mxu0 0.0
    %5737 = vmatpush1.msra.mxu0 0.0
    %5738 = vmatprep.subr.mxu0 0.0
    %5739 = vmatpush1.msra.mxu0 0.0
    %5740 = vmatprep.subr.mxu0 0.0
    %5741 = vmatpush1.msra.mxu0 0.0
    %5742 = vmatprep.subr.mxu0 0.0
    %5743 = vmatpush1.msra.mxu0 0.0
    %5744 = vmatprep.subr.mxu0 0.0
    %5745 = vmatpush1.msra.mxu0 0.0
    %5746 = vmatprep.subr.mxu0 0.0
    %5747 = vmatpush1.msra.mxu0 0.0
    %5748 = vmatprep.subr.mxu0 0.0
    %5749 = vmatpush1.msra.mxu0 0.0
    %5750 = vmatprep.subr.mxu0 0.0
    %5751 = vmatpush1.msra.mxu0 0.0
    %5752 = vmatprep.subr.mxu0 0.0
    %5753 = vmatpush1.msra.mxu0 0.0
    %5754 = vmatprep.subr.mxu0 0.0
    %5755 = vmatpush1.msra.mxu0 0.0
    %5756 = vmatprep.subr.mxu0 0.0
    %5757 = vmatpush1.msra.mxu0 0.0
    %5758 = vmatprep.subr.mxu0 0.0
    %5759 = vmatpush1.msra.mxu0 0.0
    %5760 = vmatprep.subr.mxu0 0.0
    %5761 = vmatpush1.msra.mxu0 %v3253
    %5762 = vmatprep.subr.mxu0 0.0
    %5763 = vmatpush2.msra.mxu0 0.0
    %5764 = vmatprep.subr.mxu0 0.0
    %5765 = vmatpush2.msra.mxu0 0.0
    %5766 = vmatprep.subr.mxu0 0.0
    %5767 = vmatpush2.msra.mxu0 0.0
    %5768 = vmatprep.subr.mxu0 0.0
    %5769 = vmatpush2.msra.mxu0 0.0
    %5770 = vmatprep.subr.mxu0 0.0
    %5771 = vmatpush2.msra.mxu0 0.0
    %5772 = vmatprep.subr.mxu0 0.0
    %5773 = vmatpush2.msra.mxu0 0.0
    %5774 = vmatprep.subr.mxu0 0.0
    %5775 = vmatpush2.msra.mxu0 0.0
    %5776 = vmatprep.subr.mxu0 0.0
    %5777 = vmatpush2.msra.mxu0 0.0
    %5778 = vmatprep.subr.mxu0 0.0
    %5779 = vmatpush2.msra.mxu0 0.0
    %5780 = vmatprep.subr.mxu0 0.0
    %5781 = vmatpush2.msra.mxu0 0.0
    %5782 = vmatprep.subr.mxu0 0.0
    %5783 = vmatpush2.msra.mxu0 0.0
    %5784 = vmatprep.subr.mxu0 0.0
    %5785 = vmatpush2.msra.mxu0 0.0
    %5786 = vmatprep.subr.mxu0 0.0
    %5787 = vmatpush2.msra.mxu0 0.0
    %5788 = vmatprep.subr.mxu0 0.0
    %5789 = vmatpush2.msra.mxu0 0.0
    %5790 = vmatprep.subr.mxu0 0.0
    %5791 = vmatpush2.msra.mxu0 0.0
    %5792 = vmatprep.subr.mxu0 0.0
    %5793 = vmatpush2.msra.mxu0 0.0
    %5794 = vmatprep.mubr.f32.mxu0 0.0
    %5795 = vmatmul.mubr.f32.gmra.mxu0 %v5728
    %v5796 = vpop.f32.mrf.mxu0
    %v5797 = vadd.f32 0.0, %v5796
    %v5798 = vpop.f32.mrf.mxu0
    %5799 = vdwg.mxu0
    %v5801 = vsel %vm4893, %v5064, 0
    %5803 = vmatprep.subr.mxu0 0.0
    %5804 = vmatpush1.msra.mxu0 0.0
    %5805 = vmatprep.subr.mxu0 0.0
    %5806 = vmatpush1.msra.mxu0 0.0
    %5807 = vmatprep.subr.mxu0 0.0
    %5808 = vmatpush1.msra.mxu0 0.0
    %5809 = vmatprep.subr.mxu0 0.0
    %5810 = vmatpush1.msra.mxu0 0.0
    %5811 = vmatprep.subr.mxu0 0.0
    %5812 = vmatpush1.msra.mxu0 0.0
    %5813 = vmatprep.subr.mxu0 0.0
    %5814 = vmatpush1.msra.mxu0 0.0
    %5815 = vmatprep.subr.mxu0 0.0
    %5816 = vmatpush1.msra.mxu0 0.0
    %5817 = vmatprep.subr.mxu0 0.0
    %5818 = vmatpush1.msra.mxu0 0.0
    %5819 = vmatprep.subr.mxu0 0.0
    %5820 = vmatpush1.msra.mxu0 0.0
    %5821 = vmatprep.subr.mxu0 0.0
    %5822 = vmatpush1.msra.mxu0 0.0
    %5823 = vmatprep.subr.mxu0 0.0
    %5824 = vmatpush1.msra.mxu0 0.0
    %5825 = vmatprep.subr.mxu0 0.0
    %5826 = vmatpush1.msra.mxu0 0.0
    %5827 = vmatprep.subr.mxu0 0.0
    %5828 = vmatpush1.msra.mxu0 0.0
    %5829 = vmatprep.subr.mxu0 0.0
    %5830 = vmatpush1.msra.mxu0 0.0
    %5831 = vmatprep.subr.mxu0 0.0
    %5832 = vmatpush1.msra.mxu0 0.0
    %5833 = vmatprep.subr.mxu0 0.0
    %5834 = vmatpush1.msra.mxu0 %v3323
    %5835 = vmatprep.subr.mxu0 0.0
    %5836 = vmatpush2.msra.mxu0 0.0
    %5837 = vmatprep.subr.mxu0 0.0
    %5838 = vmatpush2.msra.mxu0 0.0
    %5839 = vmatprep.subr.mxu0 0.0
    %5840 = vmatpush2.msra.mxu0 0.0
    %5841 = vmatprep.subr.mxu0 0.0
    %5842 = vmatpush2.msra.mxu0 0.0
    %5843 = vmatprep.subr.mxu0 0.0
    %5844 = vmatpush2.msra.mxu0 0.0
    %5845 = vmatprep.subr.mxu0 0.0
    %5846 = vmatpush2.msra.mxu0 0.0
    %5847 = vmatprep.subr.mxu0 0.0
    %5848 = vmatpush2.msra.mxu0 0.0
    %5849 = vmatprep.subr.mxu0 0.0
    %5850 = vmatpush2.msra.mxu0 0.0
    %5851 = vmatprep.subr.mxu0 0.0
    %5852 = vmatpush2.msra.mxu0 0.0
    %5853 = vmatprep.subr.mxu0 0.0
    %5854 = vmatpush2.msra.mxu0 0.0
    %5855 = vmatprep.subr.mxu0 0.0
    %5856 = vmatpush2.msra.mxu0 0.0
    %5857 = vmatprep.subr.mxu0 0.0
    %5858 = vmatpush2.msra.mxu0 0.0
    %5859 = vmatprep.subr.mxu0 0.0
    %5860 = vmatpush2.msra.mxu0 0.0
    %5861 = vmatprep.subr.mxu0 0.0
    %5862 = vmatpush2.msra.mxu0 0.0
    %5863 = vmatprep.subr.mxu0 0.0
    %5864 = vmatpush2.msra.mxu0 0.0
    %5865 = vmatprep.subr.mxu0 0.0
    %5866 = vmatpush2.msra.mxu0 0.0
    %5867 = vmatprep.mubr.f32.mxu0 0.0
    %5868 = vmatmul.mubr.f32.gmra.mxu0 %v5801
    %v5869 = vpop.f32.mrf.mxu0
    %v5870 = vadd.f32 0.0, %v5869
    %v5871 = vpop.f32.mrf.mxu0
    %5872 = vdwg.mxu0
    %v5874 = vsel %vm4893, %v5065, 0
    %5876 = vmatprep.subr.mxu0 0.0
    %5877 = vmatpush1.msra.mxu0 0.0
    %5878 = vmatprep.subr.mxu0 0.0
    %5879 = vmatpush1.msra.mxu0 0.0
    %5880 = vmatprep.subr.mxu0 0.0
    %5881 = vmatpush1.msra.mxu0 0.0
    %5882 = vmatprep.subr.mxu0 0.0
    %5883 = vmatpush1.msra.mxu0 0.0
    %5884 = vmatprep.subr.mxu0 0.0
    %5885 = vmatpush1.msra.mxu0 0.0
    %5886 = vmatprep.subr.mxu0 0.0
    %5887 = vmatpush1.msra.mxu0 0.0
    %5888 = vmatprep.subr.mxu0 0.0
    %5889 = vmatpush1.msra.mxu0 0.0
    %5890 = vmatprep.subr.mxu0 0.0
    %5891 = vmatpush1.msra.mxu0 0.0
    %5892 = vmatprep.subr.mxu0 0.0
    %5893 = vmatpush1.msra.mxu0 0.0
    %5894 = vmatprep.subr.mxu0 0.0
    %5895 = vmatpush1.msra.mxu0 0.0
    %5896 = vmatprep.subr.mxu0 0.0
    %5897 = vmatpush1.msra.mxu0 0.0
    %5898 = vmatprep.subr.mxu0 0.0
    %5899 = vmatpush1.msra.mxu0 0.0
    %5900 = vmatprep.subr.mxu0 0.0
    %5901 = vmatpush1.msra.mxu0 0.0
    %5902 = vmatprep.subr.mxu0 0.0
    %5903 = vmatpush1.msra.mxu0 0.0
    %5904 = vmatprep.subr.mxu0 0.0
    %5905 = vmatpush1.msra.mxu0 0.0
    %5906 = vmatprep.subr.mxu0 0.0
    %5907 = vmatpush1.msra.mxu0 %v3393
    %5908 = vmatprep.subr.mxu0 0.0
    %5909 = vmatpush2.msra.mxu0 0.0
    %5910 = vmatprep.subr.mxu0 0.0
    %5911 = vmatpush2.msra.mxu0 0.0
    %5912 = vmatprep.subr.mxu0 0.0
    %5913 = vmatpush2.msra.mxu0 0.0
    %5914 = vmatprep.subr.mxu0 0.0
    %5915 = vmatpush2.msra.mxu0 0.0
    %5916 = vmatprep.subr.mxu0 0.0
    %5917 = vmatpush2.msra.mxu0 0.0
    %5918 = vmatprep.subr.mxu0 0.0
    %5919 = vmatpush2.msra.mxu0 0.0
    %5920 = vmatprep.subr.mxu0 0.0
    %5921 = vmatpush2.msra.mxu0 0.0
    %5922 = vmatprep.subr.mxu0 0.0
    %5923 = vmatpush2.msra.mxu0 0.0
    %5924 = vmatprep.subr.mxu0 0.0
    %5925 = vmatpush2.msra.mxu0 0.0
    %5926 = vmatprep.subr.mxu0 0.0
    %5927 = vmatpush2.msra.mxu0 0.0
    %5928 = vmatprep.subr.mxu0 0.0
    %5929 = vmatpush2.msra.mxu0 0.0
    %5930 = vmatprep.subr.mxu0 0.0
    %5931 = vmatpush2.msra.mxu0 0.0
    %5932 = vmatprep.subr.mxu0 0.0
    %5933 = vmatpush2.msra.mxu0 0.0
    %5934 = vmatprep.subr.mxu0 0.0
    %5935 = vmatpush2.msra.mxu0 0.0
    %5936 = vmatprep.subr.mxu0 0.0
    %5937 = vmatpush2.msra.mxu0 0.0
    %5938 = vmatprep.subr.mxu0 0.0
    %5939 = vmatpush2.msra.mxu0 0.0
    %5940 = vmatprep.mubr.f32.mxu0 0.0
    %5941 = vmatmul.mubr.f32.gmra.mxu0 %v5874
    %v5942 = vpop.f32.mrf.mxu0
    %v5943 = vadd.f32 0.0, %v5942
    %v5944 = vpop.f32.mrf.mxu0
    %5945 = vdwg.mxu0
    %v5947 = vsel %vm4893, %v5066, 0
    %5949 = vmatprep.subr.mxu0 0.0
    %5950 = vmatpush1.msra.mxu0 0.0
    %5951 = vmatprep.subr.mxu0 0.0
    %5952 = vmatpush1.msra.mxu0 0.0
    %5953 = vmatprep.subr.mxu0 0.0
    %5954 = vmatpush1.msra.mxu0 0.0
    %5955 = vmatprep.subr.mxu0 0.0
    %5956 = vmatpush1.msra.mxu0 0.0
    %5957 = vmatprep.subr.mxu0 0.0
    %5958 = vmatpush1.msra.mxu0 0.0
    %5959 = vmatprep.subr.mxu0 0.0
    %5960 = vmatpush1.msra.mxu0 0.0
    %5961 = vmatprep.subr.mxu0 0.0
    %5962 = vmatpush1.msra.mxu0 0.0
    %5963 = vmatprep.subr.mxu0 0.0
    %5964 = vmatpush1.msra.mxu0 0.0
    %5965 = vmatprep.subr.mxu0 0.0
    %5966 = vmatpush1.msra.mxu0 0.0
    %5967 = vmatprep.subr.mxu0 0.0
    %5968 = vmatpush1.msra.mxu0 0.0
    %5969 = vmatprep.subr.mxu0 0.0
    %5970 = vmatpush1.msra.mxu0 0.0
    %5971 = vmatprep.subr.mxu0 0.0
    %5972 = vmatpush1.msra.mxu0 0.0
    %5973 = vmatprep.subr.mxu0 0.0
    %5974 = vmatpush1.msra.mxu0 0.0
    %5975 = vmatprep.subr.mxu0 0.0
    %5976 = vmatpush1.msra.mxu0 0.0
    %5977 = vmatprep.subr.mxu0 0.0
    %5978 = vmatpush1.msra.mxu0 0.0
    %5979 = vmatprep.subr.mxu0 0.0
    %5980 = vmatpush1.msra.mxu0 %v3463
    %5981 = vmatprep.subr.mxu0 0.0
    %5982 = vmatpush2.msra.mxu0 0.0
    %5983 = vmatprep.subr.mxu0 0.0
    %5984 = vmatpush2.msra.mxu0 0.0
    %5985 = vmatprep.subr.mxu0 0.0
    %5986 = vmatpush2.msra.mxu0 0.0
    %5987 = vmatprep.subr.mxu0 0.0
    %5988 = vmatpush2.msra.mxu0 0.0
    %5989 = vmatprep.subr.mxu0 0.0
    %5990 = vmatpush2.msra.mxu0 0.0
    %5991 = vmatprep.subr.mxu0 0.0
    %5992 = vmatpush2.msra.mxu0 0.0
    %5993 = vmatprep.subr.mxu0 0.0
    %5994 = vmatpush2.msra.mxu0 0.0
    %5995 = vmatprep.subr.mxu0 0.0
    %5996 = vmatpush2.msra.mxu0 0.0
    %5997 = vmatprep.subr.mxu0 0.0
    %5998 = vmatpush2.msra.mxu0 0.0
    %5999 = vmatprep.subr.mxu0 0.0
    %6000 = vmatpush2.msra.mxu0 0.0
    %6001 = vmatprep.subr.mxu0 0.0
    %6002 = vmatpush2.msra.mxu0 0.0
    %6003 = vmatprep.subr.mxu0 0.0
    %6004 = vmatpush2.msra.mxu0 0.0
    %6005 = vmatprep.subr.mxu0 0.0
    %6006 = vmatpush2.msra.mxu0 0.0
    %6007 = vmatprep.subr.mxu0 0.0
    %6008 = vmatpush2.msra.mxu0 0.0
    %6009 = vmatprep.subr.mxu0 0.0
    %6010 = vmatpush2.msra.mxu0 0.0
    %6011 = vmatprep.subr.mxu0 0.0
    %6012 = vmatpush2.msra.mxu0 0.0
    %6013 = vmatprep.mubr.f32.mxu0 0.0
    %6014 = vmatmul.mubr.f32.gmra.mxu0 %v5947
    %v6015 = vpop.f32.mrf.mxu0
    %v6016 = vadd.f32 0.0, %v6015
    %v6017 = vpop.f32.mrf.mxu0
    %6018 = vdwg.mxu0
    %v6020 = vsel %vm4893, %v5067, 0
    %6022 = vmatprep.subr.mxu0 0.0
    %6023 = vmatpush1.msra.mxu0 0.0
    %6024 = vmatprep.subr.mxu0 0.0
    %6025 = vmatpush1.msra.mxu0 0.0
    %6026 = vmatprep.subr.mxu0 0.0
    %6027 = vmatpush1.msra.mxu0 0.0
    %6028 = vmatprep.subr.mxu0 0.0
    %6029 = vmatpush1.msra.mxu0 0.0
    %6030 = vmatprep.subr.mxu0 0.0
    %6031 = vmatpush1.msra.mxu0 0.0
    %6032 = vmatprep.subr.mxu0 0.0
    %6033 = vmatpush1.msra.mxu0 0.0
    %6034 = vmatprep.subr.mxu0 0.0
    %6035 = vmatpush1.msra.mxu0 0.0
    %6036 = vmatprep.subr.mxu0 0.0
    %6037 = vmatpush1.msra.mxu0 0.0
    %6038 = vmatprep.subr.mxu0 0.0
    %6039 = vmatpush1.msra.mxu0 0.0
    %6040 = vmatprep.subr.mxu0 0.0
    %6041 = vmatpush1.msra.mxu0 0.0
    %6042 = vmatprep.subr.mxu0 0.0
    %6043 = vmatpush1.msra.mxu0 0.0
    %6044 = vmatprep.subr.mxu0 0.0
    %6045 = vmatpush1.msra.mxu0 0.0
    %6046 = vmatprep.subr.mxu0 0.0
    %6047 = vmatpush1.msra.mxu0 0.0
    %6048 = vmatprep.subr.mxu0 0.0
    %6049 = vmatpush1.msra.mxu0 0.0
    %6050 = vmatprep.subr.mxu0 0.0
    %6051 = vmatpush1.msra.mxu0 0.0
    %6052 = vmatprep.subr.mxu0 0.0
    %6053 = vmatpush1.msra.mxu0 %v3533
    %6054 = vmatprep.subr.mxu0 0.0
    %6055 = vmatpush2.msra.mxu0 0.0
    %6056 = vmatprep.subr.mxu0 0.0
    %6057 = vmatpush2.msra.mxu0 0.0
    %6058 = vmatprep.subr.mxu0 0.0
    %6059 = vmatpush2.msra.mxu0 0.0
    %6060 = vmatprep.subr.mxu0 0.0
    %6061 = vmatpush2.msra.mxu0 0.0
    %6062 = vmatprep.subr.mxu0 0.0
    %6063 = vmatpush2.msra.mxu0 0.0
    %6064 = vmatprep.subr.mxu0 0.0
    %6065 = vmatpush2.msra.mxu0 0.0
    %6066 = vmatprep.subr.mxu0 0.0
    %6067 = vmatpush2.msra.mxu0 0.0
    %6068 = vmatprep.subr.mxu0 0.0
    %6069 = vmatpush2.msra.mxu0 0.0
    %6070 = vmatprep.subr.mxu0 0.0
    %6071 = vmatpush2.msra.mxu0 0.0
    %6072 = vmatprep.subr.mxu0 0.0
    %6073 = vmatpush2.msra.mxu0 0.0
    %6074 = vmatprep.subr.mxu0 0.0
    %6075 = vmatpush2.msra.mxu0 0.0
    %6076 = vmatprep.subr.mxu0 0.0
    %6077 = vmatpush2.msra.mxu0 0.0
    %6078 = vmatprep.subr.mxu0 0.0
    %6079 = vmatpush2.msra.mxu0 0.0
    %6080 = vmatprep.subr.mxu0 0.0
    %6081 = vmatpush2.msra.mxu0 0.0
    %6082 = vmatprep.subr.mxu0 0.0
    %6083 = vmatpush2.msra.mxu0 0.0
    %6084 = vmatprep.subr.mxu0 0.0
    %6085 = vmatpush2.msra.mxu0 0.0
    %6086 = vmatprep.mubr.f32.mxu0 0.0
    %6087 = vmatmul.mubr.f32.gmra.mxu0 %v6020
    %v6088 = vpop.f32.mrf.mxu0
    %v6089 = vadd.f32 0.0, %v6088
    %v6090 = vpop.f32.mrf.mxu0
    %6091 = vdwg.mxu0
    %v6093 = vsel %vm4893, %v5068, 0
    %6095 = vmatprep.subr.mxu0 0.0
    %6096 = vmatpush1.msra.mxu0 0.0
    %6097 = vmatprep.subr.mxu0 0.0
    %6098 = vmatpush1.msra.mxu0 0.0
    %6099 = vmatprep.subr.mxu0 0.0
    %6100 = vmatpush1.msra.mxu0 0.0
    %6101 = vmatprep.subr.mxu0 0.0
    %6102 = vmatpush1.msra.mxu0 0.0
    %6103 = vmatprep.subr.mxu0 0.0
    %6104 = vmatpush1.msra.mxu0 0.0
    %6105 = vmatprep.subr.mxu0 0.0
    %6106 = vmatpush1.msra.mxu0 0.0
    %6107 = vmatprep.subr.mxu0 0.0
    %6108 = vmatpush1.msra.mxu0 0.0
    %6109 = vmatprep.subr.mxu0 0.0
    %6110 = vmatpush1.msra.mxu0 0.0
    %6111 = vmatprep.subr.mxu0 0.0
    %6112 = vmatpush1.msra.mxu0 0.0
    %6113 = vmatprep.subr.mxu0 0.0
    %6114 = vmatpush1.msra.mxu0 0.0
    %6115 = vmatprep.subr.mxu0 0.0
    %6116 = vmatpush1.msra.mxu0 0.0
    %6117 = vmatprep.subr.mxu0 0.0
    %6118 = vmatpush1.msra.mxu0 0.0
    %6119 = vmatprep.subr.mxu0 0.0
    %6120 = vmatpush1.msra.mxu0 0.0
    %6121 = vmatprep.subr.mxu0 0.0
    %6122 = vmatpush1.msra.mxu0 0.0
    %6123 = vmatprep.subr.mxu0 0.0
    %6124 = vmatpush1.msra.mxu0 0.0
    %6125 = vmatprep.subr.mxu0 0.0
    %6126 = vmatpush1.msra.mxu0 %v3603
    %6127 = vmatprep.subr.mxu0 0.0
    %6128 = vmatpush2.msra.mxu0 0.0
    %6129 = vmatprep.subr.mxu0 0.0
    %6130 = vmatpush2.msra.mxu0 0.0
    %6131 = vmatprep.subr.mxu0 0.0
    %6132 = vmatpush2.msra.mxu0 0.0
    %6133 = vmatprep.subr.mxu0 0.0
    %6134 = vmatpush2.msra.mxu0 0.0
    %6135 = vmatprep.subr.mxu0 0.0
    %6136 = vmatpush2.msra.mxu0 0.0
    %6137 = vmatprep.subr.mxu0 0.0
    %6138 = vmatpush2.msra.mxu0 0.0
    %6139 = vmatprep.subr.mxu0 0.0
    %6140 = vmatpush2.msra.mxu0 0.0
    %6141 = vmatprep.subr.mxu0 0.0
    %6142 = vmatpush2.msra.mxu0 0.0
    %6143 = vmatprep.subr.mxu0 0.0
    %6144 = vmatpush2.msra.mxu0 0.0
    %6145 = vmatprep.subr.mxu0 0.0
    %6146 = vmatpush2.msra.mxu0 0.0
    %6147 = vmatprep.subr.mxu0 0.0
    %6148 = vmatpush2.msra.mxu0 0.0
    %6149 = vmatprep.subr.mxu0 0.0
    %6150 = vmatpush2.msra.mxu0 0.0
    %6151 = vmatprep.subr.mxu0 0.0
    %6152 = vmatpush2.msra.mxu0 0.0
    %6153 = vmatprep.subr.mxu0 0.0
    %6154 = vmatpush2.msra.mxu0 0.0
    %6155 = vmatprep.subr.mxu0 0.0
    %6156 = vmatpush2.msra.mxu0 0.0
    %6157 = vmatprep.subr.mxu0 0.0
    %6158 = vmatpush2.msra.mxu0 0.0
    %6159 = vmatprep.mubr.f32.mxu0 0.0
    %6160 = vmatmul.mubr.f32.gmra.mxu0 %v6093
    %v6161 = vpop.f32.mrf.mxu0
    %v6162 = vadd.f32 0.0, %v6161
    %v6163 = vpop.f32.mrf.mxu0
    %6164 = vdwg.mxu0
    %v6166 = vsel %vm4893, %v5069, 0
    %6168 = vmatprep.subr.mxu0 0.0
    %6169 = vmatpush1.msra.mxu0 0.0
    %6170 = vmatprep.subr.mxu0 0.0
    %6171 = vmatpush1.msra.mxu0 0.0
    %6172 = vmatprep.subr.mxu0 0.0
    %6173 = vmatpush1.msra.mxu0 0.0
    %6174 = vmatprep.subr.mxu0 0.0
    %6175 = vmatpush1.msra.mxu0 0.0
    %6176 = vmatprep.subr.mxu0 0.0
    %6177 = vmatpush1.msra.mxu0 0.0
    %6178 = vmatprep.subr.mxu0 0.0
    %6179 = vmatpush1.msra.mxu0 0.0
    %6180 = vmatprep.subr.mxu0 0.0
    %6181 = vmatpush1.msra.mxu0 0.0
    %6182 = vmatprep.subr.mxu0 0.0
    %6183 = vmatpush1.msra.mxu0 0.0
    %6184 = vmatprep.subr.mxu0 0.0
    %6185 = vmatpush1.msra.mxu0 0.0
    %6186 = vmatprep.subr.mxu0 0.0
    %6187 = vmatpush1.msra.mxu0 0.0
    %6188 = vmatprep.subr.mxu0 0.0
    %6189 = vmatpush1.msra.mxu0 0.0
    %6190 = vmatprep.subr.mxu0 0.0
    %6191 = vmatpush1.msra.mxu0 0.0
    %6192 = vmatprep.subr.mxu0 0.0
    %6193 = vmatpush1.msra.mxu0 0.0
    %6194 = vmatprep.subr.mxu0 0.0
    %6195 = vmatpush1.msra.mxu0 0.0
    %6196 = vmatprep.subr.mxu0 0.0
    %6197 = vmatpush1.msra.mxu0 0.0
    %6198 = vmatprep.subr.mxu0 0.0
    %6199 = vmatpush1.msra.mxu0 %v3673
    %6200 = vmatprep.subr.mxu0 0.0
    %6201 = vmatpush2.msra.mxu0 0.0
    %6202 = vmatprep.subr.mxu0 0.0
    %6203 = vmatpush2.msra.mxu0 0.0
    %6204 = vmatprep.subr.mxu0 0.0
    %6205 = vmatpush2.msra.mxu0 0.0
    %6206 = vmatprep.subr.mxu0 0.0
    %6207 = vmatpush2.msra.mxu0 0.0
    %6208 = vmatprep.subr.mxu0 0.0
    %6209 = vmatpush2.msra.mxu0 0.0
    %6210 = vmatprep.subr.mxu0 0.0
    %6211 = vmatpush2.msra.mxu0 0.0
    %6212 = vmatprep.subr.mxu0 0.0
    %6213 = vmatpush2.msra.mxu0 0.0
    %6214 = vmatprep.subr.mxu0 0.0
    %6215 = vmatpush2.msra.mxu0 0.0
    %6216 = vmatprep.subr.mxu0 0.0
    %6217 = vmatpush2.msra.mxu0 0.0
    %6218 = vmatprep.subr.mxu0 0.0
    %6219 = vmatpush2.msra.mxu0 0.0
    %6220 = vmatprep.subr.mxu0 0.0
    %6221 = vmatpush2.msra.mxu0 0.0
    %6222 = vmatprep.subr.mxu0 0.0
    %6223 = vmatpush2.msra.mxu0 0.0
    %6224 = vmatprep.subr.mxu0 0.0
    %6225 = vmatpush2.msra.mxu0 0.0
    %6226 = vmatprep.subr.mxu0 0.0
    %6227 = vmatpush2.msra.mxu0 0.0
    %6228 = vmatprep.subr.mxu0 0.0
    %6229 = vmatpush2.msra.mxu0 0.0
    %6230 = vmatprep.subr.mxu0 0.0
    %6231 = vmatpush2.msra.mxu0 0.0
    %6232 = vmatprep.mubr.f32.mxu0 0.0
    %6233 = vmatmul.mubr.f32.gmra.mxu0 %v6166
    %v6234 = vpop.f32.mrf.mxu0
    %v6235 = vadd.f32 0.0, %v6234
    %v6236 = vpop.f32.mrf.mxu0
    %6237 = vdwg.mxu0
    %v6239 = vsel %vm3676, %v157, 0
    %v6242 = vsel %vm3676, %v5140, 0
    %6244 = vmatprep.subr.mxu0 0.0
    %6245 = vmatpush1.xpose.msra.mxu0 0.0
    %6246 = vmatprep.subr.mxu0 0.0
    %6247 = vmatpush1.xpose.msra.mxu0 0.0
    %6248 = vmatprep.subr.mxu0 0.0
    %6249 = vmatpush1.xpose.msra.mxu0 0.0
    %6250 = vmatprep.subr.mxu0 0.0
    %6251 = vmatpush1.xpose.msra.mxu0 0.0
    %6252 = vmatprep.subr.mxu0 0.0
    %6253 = vmatpush1.xpose.msra.mxu0 0.0
    %6254 = vmatprep.subr.mxu0 0.0
    %6255 = vmatpush1.xpose.msra.mxu0 0.0
    %6256 = vmatprep.subr.mxu0 0.0
    %6257 = vmatpush1.xpose.msra.mxu0 0.0
    %6258 = vmatprep.subr.mxu0 0.0
    %6259 = vmatpush1.xpose.msra.mxu0 0.0
    %6260 = vmatprep.subr.mxu0 0.0
    %6261 = vmatpush1.xpose.msra.mxu0 0.0
    %6262 = vmatprep.subr.mxu0 0.0
    %6263 = vmatpush1.xpose.msra.mxu0 0.0
    %6264 = vmatprep.subr.mxu0 0.0
    %6265 = vmatpush1.xpose.msra.mxu0 0.0
    %6266 = vmatprep.subr.mxu0 0.0
    %6267 = vmatpush1.xpose.msra.mxu0 0.0
    %6268 = vmatprep.subr.mxu0 0.0
    %6269 = vmatpush1.xpose.msra.mxu0 0.0
    %6270 = vmatprep.subr.mxu0 0.0
    %6271 = vmatpush1.xpose.msra.mxu0 0.0
    %6272 = vmatprep.subr.mxu0 0.0
    %6273 = vmatpush1.xpose.msra.mxu0 0.0
    %6274 = vmatprep.subr.mxu0 0.0
    %6275 = vmatpush1.xpose.msra.mxu0 %v6242
    %6276 = vmatprep.subr.mxu0 0.0
    %6277 = vmatpush2.xpose.msra.mxu0 0.0
    %6278 = vmatprep.subr.mxu0 0.0
    %6279 = vmatpush2.xpose.msra.mxu0 0.0
    %6280 = vmatprep.subr.mxu0 0.0
    %6281 = vmatpush2.xpose.msra.mxu0 0.0
    %6282 = vmatprep.subr.mxu0 0.0
    %6283 = vmatpush2.xpose.msra.mxu0 0.0
    %6284 = vmatprep.subr.mxu0 0.0
    %6285 = vmatpush2.xpose.msra.mxu0 0.0
    %6286 = vmatprep.subr.mxu0 0.0
    %6287 = vmatpush2.xpose.msra.mxu0 0.0
    %6288 = vmatprep.subr.mxu0 0.0
    %6289 = vmatpush2.xpose.msra.mxu0 0.0
    %6290 = vmatprep.subr.mxu0 0.0
    %6291 = vmatpush2.xpose.msra.mxu0 0.0
    %6292 = vmatprep.subr.mxu0 0.0
    %6293 = vmatpush2.xpose.msra.mxu0 0.0
    %6294 = vmatprep.subr.mxu0 0.0
    %6295 = vmatpush2.xpose.msra.mxu0 0.0
    %6296 = vmatprep.subr.mxu0 0.0
    %6297 = vmatpush2.xpose.msra.mxu0 0.0
    %6298 = vmatprep.subr.mxu0 0.0
    %6299 = vmatpush2.xpose.msra.mxu0 0.0
    %6300 = vmatprep.subr.mxu0 0.0
    %6301 = vmatpush2.xpose.msra.mxu0 0.0
    %6302 = vmatprep.subr.mxu0 0.0
    %6303 = vmatpush2.xpose.msra.mxu0 0.0
    %6304 = vmatprep.subr.mxu0 0.0
    %6305 = vmatpush2.xpose.msra.mxu0 0.0
    %6306 = vmatprep.subr.mxu0 0.0
    %6307 = vmatpush2.xpose.msra.mxu0 0.0
    %6308 = vmatprep.mubr.f32.mxu0 0.0
    %6309 = vmatmul.mubr.f32.gmra.mxu0 %v6239
    %v6310 = vpop.f32.mrf.mxu0
    %v6311 = vadd.f32 0.0, %v6310
    %v6312 = vpop.f32.mrf.mxu0
    %6313 = vdwg.mxu0
    %v6315 = vsel %vm3676, %v158, 0
    %v6318 = vsel %vm3676, %v5213, 0
    %6320 = vmatprep.subr.mxu0 0.0
    %6321 = vmatpush1.xpose.msra.mxu0 0.0
    %6322 = vmatprep.subr.mxu0 0.0
    %6323 = vmatpush1.xpose.msra.mxu0 0.0
    %6324 = vmatprep.subr.mxu0 0.0
    %6325 = vmatpush1.xpose.msra.mxu0 0.0
    %6326 = vmatprep.subr.mxu0 0.0
    %6327 = vmatpush1.xpose.msra.mxu0 0.0
    %6328 = vmatprep.subr.mxu0 0.0
    %6329 = vmatpush1.xpose.msra.mxu0 0.0
    %6330 = vmatprep.subr.mxu0 0.0
    %6331 = vmatpush1.xpose.msra.mxu0 0.0
    %6332 = vmatprep.subr.mxu0 0.0
    %6333 = vmatpush1.xpose.msra.mxu0 0.0
    %6334 = vmatprep.subr.mxu0 0.0
    %6335 = vmatpush1.xpose.msra.mxu0 0.0
    %6336 = vmatprep.subr.mxu0 0.0
    %6337 = vmatpush1.xpose.msra.mxu0 0.0
    %6338 = vmatprep.subr.mxu0 0.0
    %6339 = vmatpush1.xpose.msra.mxu0 0.0
    %6340 = vmatprep.subr.mxu0 0.0
    %6341 = vmatpush1.xpose.msra.mxu0 0.0
    %6342 = vmatprep.subr.mxu0 0.0
    %6343 = vmatpush1.xpose.msra.mxu0 0.0
    %6344 = vmatprep.subr.mxu0 0.0
    %6345 = vmatpush1.xpose.msra.mxu0 0.0
    %6346 = vmatprep.subr.mxu0 0.0
    %6347 = vmatpush1.xpose.msra.mxu0 0.0
    %6348 = vmatprep.subr.mxu0 0.0
    %6349 = vmatpush1.xpose.msra.mxu0 0.0
    %6350 = vmatprep.subr.mxu0 0.0
    %6351 = vmatpush1.xpose.msra.mxu0 %v6318
    %6352 = vmatprep.subr.mxu0 0.0
    %6353 = vmatpush2.xpose.msra.mxu0 0.0
    %6354 = vmatprep.subr.mxu0 0.0
    %6355 = vmatpush2.xpose.msra.mxu0 0.0
    %6356 = vmatprep.subr.mxu0 0.0
    %6357 = vmatpush2.xpose.msra.mxu0 0.0
    %6358 = vmatprep.subr.mxu0 0.0
    %6359 = vmatpush2.xpose.msra.mxu0 0.0
    %6360 = vmatprep.subr.mxu0 0.0
    %6361 = vmatpush2.xpose.msra.mxu0 0.0
    %6362 = vmatprep.subr.mxu0 0.0
    %6363 = vmatpush2.xpose.msra.mxu0 0.0
    %6364 = vmatprep.subr.mxu0 0.0
    %6365 = vmatpush2.xpose.msra.mxu0 0.0
    %6366 = vmatprep.subr.mxu0 0.0
    %6367 = vmatpush2.xpose.msra.mxu0 0.0
    %6368 = vmatprep.subr.mxu0 0.0
    %6369 = vmatpush2.xpose.msra.mxu0 0.0
    %6370 = vmatprep.subr.mxu0 0.0
    %6371 = vmatpush2.xpose.msra.mxu0 0.0
    %6372 = vmatprep.subr.mxu0 0.0
    %6373 = vmatpush2.xpose.msra.mxu0 0.0
    %6374 = vmatprep.subr.mxu0 0.0
    %6375 = vmatpush2.xpose.msra.mxu0 0.0
    %6376 = vmatprep.subr.mxu0 0.0
    %6377 = vmatpush2.xpose.msra.mxu0 0.0
    %6378 = vmatprep.subr.mxu0 0.0
    %6379 = vmatpush2.xpose.msra.mxu0 0.0
    %6380 = vmatprep.subr.mxu0 0.0
    %6381 = vmatpush2.xpose.msra.mxu0 0.0
    %6382 = vmatprep.subr.mxu0 0.0
    %6383 = vmatpush2.xpose.msra.mxu0 0.0
    %6384 = vmatprep.mubr.f32.mxu0 0.0
    %6385 = vmatmul.mubr.f32.gmra.mxu0 %v6315
    %v6386 = vpop.f32.mrf.mxu0
    %v6387 = vadd.f32 0.0, %v6386
    %v6388 = vpop.f32.mrf.mxu0
    %6389 = vdwg.mxu0
    %v6391 = vsel %vm3676, %v159, 0
    %v6394 = vsel %vm3676, %v5286, 0
    %6396 = vmatprep.subr.mxu0 0.0
    %6397 = vmatpush1.xpose.msra.mxu0 0.0
    %6398 = vmatprep.subr.mxu0 0.0
    %6399 = vmatpush1.xpose.msra.mxu0 0.0
    %6400 = vmatprep.subr.mxu0 0.0
    %6401 = vmatpush1.xpose.msra.mxu0 0.0
    %6402 = vmatprep.subr.mxu0 0.0
    %6403 = vmatpush1.xpose.msra.mxu0 0.0
    %6404 = vmatprep.subr.mxu0 0.0
    %6405 = vmatpush1.xpose.msra.mxu0 0.0
    %6406 = vmatprep.subr.mxu0 0.0
    %6407 = vmatpush1.xpose.msra.mxu0 0.0
    %6408 = vmatprep.subr.mxu0 0.0
    %6409 = vmatpush1.xpose.msra.mxu0 0.0
    %6410 = vmatprep.subr.mxu0 0.0
    %6411 = vmatpush1.xpose.msra.mxu0 0.0
    %6412 = vmatprep.subr.mxu0 0.0
    %6413 = vmatpush1.xpose.msra.mxu0 0.0
    %6414 = vmatprep.subr.mxu0 0.0
    %6415 = vmatpush1.xpose.msra.mxu0 0.0
    %6416 = vmatprep.subr.mxu0 0.0
    %6417 = vmatpush1.xpose.msra.mxu0 0.0
    %6418 = vmatprep.subr.mxu0 0.0
    %6419 = vmatpush1.xpose.msra.mxu0 0.0
    %6420 = vmatprep.subr.mxu0 0.0
    %6421 = vmatpush1.xpose.msra.mxu0 0.0
    %6422 = vmatprep.subr.mxu0 0.0
    %6423 = vmatpush1.xpose.msra.mxu0 0.0
    %6424 = vmatprep.subr.mxu0 0.0
    %6425 = vmatpush1.xpose.msra.mxu0 0.0
    %6426 = vmatprep.subr.mxu0 0.0
    %6427 = vmatpush1.xpose.msra.mxu0 %v6394
    %6428 = vmatprep.subr.mxu0 0.0
    %6429 = vmatpush2.xpose.msra.mxu0 0.0
    %6430 = vmatprep.subr.mxu0 0.0
    %6431 = vmatpush2.xpose.msra.mxu0 0.0
    %6432 = vmatprep.subr.mxu0 0.0
    %6433 = vmatpush2.xpose.msra.mxu0 0.0
    %6434 = vmatprep.subr.mxu0 0.0
    %6435 = vmatpush2.xpose.msra.mxu0 0.0
    %6436 = vmatprep.subr.mxu0 0.0
    %6437 = vmatpush2.xpose.msra.mxu0 0.0
    %6438 = vmatprep.subr.mxu0 0.0
    %6439 = vmatpush2.xpose.msra.mxu0 0.0
    %6440 = vmatprep.subr.mxu0 0.0
    %6441 = vmatpush2.xpose.msra.mxu0 0.0
    %6442 = vmatprep.subr.mxu0 0.0
    %6443 = vmatpush2.xpose.msra.mxu0 0.0
    %6444 = vmatprep.subr.mxu0 0.0
    %6445 = vmatpush2.xpose.msra.mxu0 0.0
    %6446 = vmatprep.subr.mxu0 0.0
    %6447 = vmatpush2.xpose.msra.mxu0 0.0
    %6448 = vmatprep.subr.mxu0 0.0
    %6449 = vmatpush2.xpose.msra.mxu0 0.0
    %6450 = vmatprep.subr.mxu0 0.0
    %6451 = vmatpush2.xpose.msra.mxu0 0.0
    %6452 = vmatprep.subr.mxu0 0.0
    %6453 = vmatpush2.xpose.msra.mxu0 0.0
    %6454 = vmatprep.subr.mxu0 0.0
    %6455 = vmatpush2.xpose.msra.mxu0 0.0
    %6456 = vmatprep.subr.mxu0 0.0
    %6457 = vmatpush2.xpose.msra.mxu0 0.0
    %6458 = vmatprep.subr.mxu0 0.0
    %6459 = vmatpush2.xpose.msra.mxu0 0.0
    %6460 = vmatprep.mubr.f32.mxu0 0.0
    %6461 = vmatmul.mubr.f32.gmra.mxu0 %v6391
    %v6462 = vpop.f32.mrf.mxu0
    %v6463 = vadd.f32 0.0, %v6462
    %v6464 = vpop.f32.mrf.mxu0
    %6465 = vdwg.mxu0
    %v6467 = vsel %vm3676, %v160, 0
    %v6470 = vsel %vm3676, %v5359, 0
    %6472 = vmatprep.subr.mxu0 0.0
    %6473 = vmatpush1.xpose.msra.mxu0 0.0
    %6474 = vmatprep.subr.mxu0 0.0
    %6475 = vmatpush1.xpose.msra.mxu0 0.0
    %6476 = vmatprep.subr.mxu0 0.0
    %6477 = vmatpush1.xpose.msra.mxu0 0.0
    %6478 = vmatprep.subr.mxu0 0.0
    %6479 = vmatpush1.xpose.msra.mxu0 0.0
    %6480 = vmatprep.subr.mxu0 0.0
    %6481 = vmatpush1.xpose.msra.mxu0 0.0
    %6482 = vmatprep.subr.mxu0 0.0
    %6483 = vmatpush1.xpose.msra.mxu0 0.0
    %6484 = vmatprep.subr.mxu0 0.0
    %6485 = vmatpush1.xpose.msra.mxu0 0.0
    %6486 = vmatprep.subr.mxu0 0.0
    %6487 = vmatpush1.xpose.msra.mxu0 0.0
    %6488 = vmatprep.subr.mxu0 0.0
    %6489 = vmatpush1.xpose.msra.mxu0 0.0
    %6490 = vmatprep.subr.mxu0 0.0
    %6491 = vmatpush1.xpose.msra.mxu0 0.0
    %6492 = vmatprep.subr.mxu0 0.0
    %6493 = vmatpush1.xpose.msra.mxu0 0.0
    %6494 = vmatprep.subr.mxu0 0.0
    %6495 = vmatpush1.xpose.msra.mxu0 0.0
    %6496 = vmatprep.subr.mxu0 0.0
    %6497 = vmatpush1.xpose.msra.mxu0 0.0
    %6498 = vmatprep.subr.mxu0 0.0
    %6499 = vmatpush1.xpose.msra.mxu0 0.0
    %6500 = vmatprep.subr.mxu0 0.0
    %6501 = vmatpush1.xpose.msra.mxu0 0.0
    %6502 = vmatprep.subr.mxu0 0.0
    %6503 = vmatpush1.xpose.msra.mxu0 %v6470
    %6504 = vmatprep.subr.mxu0 0.0
    %6505 = vmatpush2.xpose.msra.mxu0 0.0
    %6506 = vmatprep.subr.mxu0 0.0
    %6507 = vmatpush2.xpose.msra.mxu0 0.0
    %6508 = vmatprep.subr.mxu0 0.0
    %6509 = vmatpush2.xpose.msra.mxu0 0.0
    %6510 = vmatprep.subr.mxu0 0.0
    %6511 = vmatpush2.xpose.msra.mxu0 0.0
    %6512 = vmatprep.subr.mxu0 0.0
    %6513 = vmatpush2.xpose.msra.mxu0 0.0
    %6514 = vmatprep.subr.mxu0 0.0
    %6515 = vmatpush2.xpose.msra.mxu0 0.0
    %6516 = vmatprep.subr.mxu0 0.0
    %6517 = vmatpush2.xpose.msra.mxu0 0.0
    %6518 = vmatprep.subr.mxu0 0.0
    %6519 = vmatpush2.xpose.msra.mxu0 0.0
    %6520 = vmatprep.subr.mxu0 0.0
    %6521 = vmatpush2.xpose.msra.mxu0 0.0
    %6522 = vmatprep.subr.mxu0 0.0
    %6523 = vmatpush2.xpose.msra.mxu0 0.0
    %6524 = vmatprep.subr.mxu0 0.0
    %6525 = vmatpush2.xpose.msra.mxu0 0.0
    %6526 = vmatprep.subr.mxu0 0.0
    %6527 = vmatpush2.xpose.msra.mxu0 0.0
    %6528 = vmatprep.subr.mxu0 0.0
    %6529 = vmatpush2.xpose.msra.mxu0 0.0
    %6530 = vmatprep.subr.mxu0 0.0
    %6531 = vmatpush2.xpose.msra.mxu0 0.0
    %6532 = vmatprep.subr.mxu0 0.0
    %6533 = vmatpush2.xpose.msra.mxu0 0.0
    %6534 = vmatprep.subr.mxu0 0.0
    %6535 = vmatpush2.xpose.msra.mxu0 0.0
    %6536 = vmatprep.mubr.f32.mxu0 0.0
    %6537 = vmatmul.mubr.f32.gmra.mxu0 %v6467
    %v6538 = vpop.f32.mrf.mxu0
    %v6539 = vadd.f32 0.0, %v6538
    %v6540 = vpop.f32.mrf.mxu0
    %6541 = vdwg.mxu0
    %v6543 = vsel %vm3676, %v161, 0
    %v6546 = vsel %vm3676, %v5432, 0
    %6548 = vmatprep.subr.mxu0 0.0
    %6549 = vmatpush1.xpose.msra.mxu0 0.0
    %6550 = vmatprep.subr.mxu0 0.0
    %6551 = vmatpush1.xpose.msra.mxu0 0.0
    %6552 = vmatprep.subr.mxu0 0.0
    %6553 = vmatpush1.xpose.msra.mxu0 0.0
    %6554 = vmatprep.subr.mxu0 0.0
    %6555 = vmatpush1.xpose.msra.mxu0 0.0
    %6556 = vmatprep.subr.mxu0 0.0
    %6557 = vmatpush1.xpose.msra.mxu0 0.0
    %6558 = vmatprep.subr.mxu0 0.0
    %6559 = vmatpush1.xpose.msra.mxu0 0.0
    %6560 = vmatprep.subr.mxu0 0.0
    %6561 = vmatpush1.xpose.msra.mxu0 0.0
    %6562 = vmatprep.subr.mxu0 0.0
    %6563 = vmatpush1.xpose.msra.mxu0 0.0
    %6564 = vmatprep.subr.mxu0 0.0
    %6565 = vmatpush1.xpose.msra.mxu0 0.0
    %6566 = vmatprep.subr.mxu0 0.0
    %6567 = vmatpush1.xpose.msra.mxu0 0.0
    %6568 = vmatprep.subr.mxu0 0.0
    %6569 = vmatpush1.xpose.msra.mxu0 0.0
    %6570 = vmatprep.subr.mxu0 0.0
    %6571 = vmatpush1.xpose.msra.mxu0 0.0
    %6572 = vmatprep.subr.mxu0 0.0
    %6573 = vmatpush1.xpose.msra.mxu0 0.0
    %6574 = vmatprep.subr.mxu0 0.0
    %6575 = vmatpush1.xpose.msra.mxu0 0.0
    %6576 = vmatprep.subr.mxu0 0.0
    %6577 = vmatpush1.xpose.msra.mxu0 0.0
    %6578 = vmatprep.subr.mxu0 0.0
    %6579 = vmatpush1.xpose.msra.mxu0 %v6546
    %6580 = vmatprep.subr.mxu0 0.0
    %6581 = vmatpush2.xpose.msra.mxu0 0.0
    %6582 = vmatprep.subr.mxu0 0.0
    %6583 = vmatpush2.xpose.msra.mxu0 0.0
    %6584 = vmatprep.subr.mxu0 0.0
    %6585 = vmatpush2.xpose.msra.mxu0 0.0
    %6586 = vmatprep.subr.mxu0 0.0
    %6587 = vmatpush2.xpose.msra.mxu0 0.0
    %6588 = vmatprep.subr.mxu0 0.0
    %6589 = vmatpush2.xpose.msra.mxu0 0.0
    %6590 = vmatprep.subr.mxu0 0.0
    %6591 = vmatpush2.xpose.msra.mxu0 0.0
    %6592 = vmatprep.subr.mxu0 0.0
    %6593 = vmatpush2.xpose.msra.mxu0 0.0
    %6594 = vmatprep.subr.mxu0 0.0
    %6595 = vmatpush2.xpose.msra.mxu0 0.0
    %6596 = vmatprep.subr.mxu0 0.0
    %6597 = vmatpush2.xpose.msra.mxu0 0.0
    %6598 = vmatprep.subr.mxu0 0.0
    %6599 = vmatpush2.xpose.msra.mxu0 0.0
    %6600 = vmatprep.subr.mxu0 0.0
    %6601 = vmatpush2.xpose.msra.mxu0 0.0
    %6602 = vmatprep.subr.mxu0 0.0
    %6603 = vmatpush2.xpose.msra.mxu0 0.0
    %6604 = vmatprep.subr.mxu0 0.0
    %6605 = vmatpush2.xpose.msra.mxu0 0.0
    %6606 = vmatprep.subr.mxu0 0.0
    %6607 = vmatpush2.xpose.msra.mxu0 0.0
    %6608 = vmatprep.subr.mxu0 0.0
    %6609 = vmatpush2.xpose.msra.mxu0 0.0
    %6610 = vmatprep.subr.mxu0 0.0
    %6611 = vmatpush2.xpose.msra.mxu0 0.0
    %6612 = vmatprep.mubr.f32.mxu0 0.0
    %6613 = vmatmul.mubr.f32.gmra.mxu0 %v6543
    %v6614 = vpop.f32.mrf.mxu0
    %v6615 = vadd.f32 0.0, %v6614
    %v6616 = vpop.f32.mrf.mxu0
    %6617 = vdwg.mxu0
    %v6619 = vsel %vm3676, %v162, 0
    %v6622 = vsel %vm3676, %v5505, 0
    %6624 = vmatprep.subr.mxu0 0.0
    %6625 = vmatpush1.xpose.msra.mxu0 0.0
    %6626 = vmatprep.subr.mxu0 0.0
    %6627 = vmatpush1.xpose.msra.mxu0 0.0
    %6628 = vmatprep.subr.mxu0 0.0
    %6629 = vmatpush1.xpose.msra.mxu0 0.0
    %6630 = vmatprep.subr.mxu0 0.0
    %6631 = vmatpush1.xpose.msra.mxu0 0.0
    %6632 = vmatprep.subr.mxu0 0.0
    %6633 = vmatpush1.xpose.msra.mxu0 0.0
    %6634 = vmatprep.subr.mxu0 0.0
    %6635 = vmatpush1.xpose.msra.mxu0 0.0
    %6636 = vmatprep.subr.mxu0 0.0
    %6637 = vmatpush1.xpose.msra.mxu0 0.0
    %6638 = vmatprep.subr.mxu0 0.0
    %6639 = vmatpush1.xpose.msra.mxu0 0.0
    %6640 = vmatprep.subr.mxu0 0.0
    %6641 = vmatpush1.xpose.msra.mxu0 0.0
    %6642 = vmatprep.subr.mxu0 0.0
    %6643 = vmatpush1.xpose.msra.mxu0 0.0
    %6644 = vmatprep.subr.mxu0 0.0
    %6645 = vmatpush1.xpose.msra.mxu0 0.0
    %6646 = vmatprep.subr.mxu0 0.0
    %6647 = vmatpush1.xpose.msra.mxu0 0.0
    %6648 = vmatprep.subr.mxu0 0.0
    %6649 = vmatpush1.xpose.msra.mxu0 0.0
    %6650 = vmatprep.subr.mxu0 0.0
    %6651 = vmatpush1.xpose.msra.mxu0 0.0
    %6652 = vmatprep.subr.mxu0 0.0
    %6653 = vmatpush1.xpose.msra.mxu0 0.0
    %6654 = vmatprep.subr.mxu0 0.0
    %6655 = vmatpush1.xpose.msra.mxu0 %v6622
    %6656 = vmatprep.subr.mxu0 0.0
    %6657 = vmatpush2.xpose.msra.mxu0 0.0
    %6658 = vmatprep.subr.mxu0 0.0
    %6659 = vmatpush2.xpose.msra.mxu0 0.0
    %6660 = vmatprep.subr.mxu0 0.0
    %6661 = vmatpush2.xpose.msra.mxu0 0.0
    %6662 = vmatprep.subr.mxu0 0.0
    %6663 = vmatpush2.xpose.msra.mxu0 0.0
    %6664 = vmatprep.subr.mxu0 0.0
    %6665 = vmatpush2.xpose.msra.mxu0 0.0
    %6666 = vmatprep.subr.mxu0 0.0
    %6667 = vmatpush2.xpose.msra.mxu0 0.0
    %6668 = vmatprep.subr.mxu0 0.0
    %6669 = vmatpush2.xpose.msra.mxu0 0.0
    %6670 = vmatprep.subr.mxu0 0.0
    %6671 = vmatpush2.xpose.msra.mxu0 0.0
    %6672 = vmatprep.subr.mxu0 0.0
    %6673 = vmatpush2.xpose.msra.mxu0 0.0
    %6674 = vmatprep.subr.mxu0 0.0
    %6675 = vmatpush2.xpose.msra.mxu0 0.0
    %6676 = vmatprep.subr.mxu0 0.0
    %6677 = vmatpush2.xpose.msra.mxu0 0.0
    %6678 = vmatprep.subr.mxu0 0.0
    %6679 = vmatpush2.xpose.msra.mxu0 0.0
    %6680 = vmatprep.subr.mxu0 0.0
    %6681 = vmatpush2.xpose.msra.mxu0 0.0
    %6682 = vmatprep.subr.mxu0 0.0
    %6683 = vmatpush2.xpose.msra.mxu0 0.0
    %6684 = vmatprep.subr.mxu0 0.0
    %6685 = vmatpush2.xpose.msra.mxu0 0.0
    %6686 = vmatprep.subr.mxu0 0.0
    %6687 = vmatpush2.xpose.msra.mxu0 0.0
    %6688 = vmatprep.mubr.f32.mxu0 0.0
    %6689 = vmatmul.mubr.f32.gmra.mxu0 %v6619
    %v6690 = vpop.f32.mrf.mxu0
    %v6691 = vadd.f32 0.0, %v6690
    %v6692 = vpop.f32.mrf.mxu0
    %6693 = vdwg.mxu0
    %v6695 = vsel %vm3676, %v163, 0
    %v6698 = vsel %vm3676, %v5578, 0
    %6700 = vmatprep.subr.mxu0 0.0
    %6701 = vmatpush1.xpose.msra.mxu0 0.0
    %6702 = vmatprep.subr.mxu0 0.0
    %6703 = vmatpush1.xpose.msra.mxu0 0.0
    %6704 = vmatprep.subr.mxu0 0.0
    %6705 = vmatpush1.xpose.msra.mxu0 0.0
    %6706 = vmatprep.subr.mxu0 0.0
    %6707 = vmatpush1.xpose.msra.mxu0 0.0
    %6708 = vmatprep.subr.mxu0 0.0
    %6709 = vmatpush1.xpose.msra.mxu0 0.0
    %6710 = vmatprep.subr.mxu0 0.0
    %6711 = vmatpush1.xpose.msra.mxu0 0.0
    %6712 = vmatprep.subr.mxu0 0.0
    %6713 = vmatpush1.xpose.msra.mxu0 0.0
    %6714 = vmatprep.subr.mxu0 0.0
    %6715 = vmatpush1.xpose.msra.mxu0 0.0
    %6716 = vmatprep.subr.mxu0 0.0
    %6717 = vmatpush1.xpose.msra.mxu0 0.0
    %6718 = vmatprep.subr.mxu0 0.0
    %6719 = vmatpush1.xpose.msra.mxu0 0.0
    %6720 = vmatprep.subr.mxu0 0.0
    %6721 = vmatpush1.xpose.msra.mxu0 0.0
    %6722 = vmatprep.subr.mxu0 0.0
    %6723 = vmatpush1.xpose.msra.mxu0 0.0
    %6724 = vmatprep.subr.mxu0 0.0
    %6725 = vmatpush1.xpose.msra.mxu0 0.0
    %6726 = vmatprep.subr.mxu0 0.0
    %6727 = vmatpush1.xpose.msra.mxu0 0.0
    %6728 = vmatprep.subr.mxu0 0.0
    %6729 = vmatpush1.xpose.msra.mxu0 0.0
    %6730 = vmatprep.subr.mxu0 0.0
    %6731 = vmatpush1.xpose.msra.mxu0 %v6698
    %6732 = vmatprep.subr.mxu0 0.0
    %6733 = vmatpush2.xpose.msra.mxu0 0.0
    %6734 = vmatprep.subr.mxu0 0.0
    %6735 = vmatpush2.xpose.msra.mxu0 0.0
    %6736 = vmatprep.subr.mxu0 0.0
    %6737 = vmatpush2.xpose.msra.mxu0 0.0
    %6738 = vmatprep.subr.mxu0 0.0
    %6739 = vmatpush2.xpose.msra.mxu0 0.0
    %6740 = vmatprep.subr.mxu0 0.0
    %6741 = vmatpush2.xpose.msra.mxu0 0.0
    %6742 = vmatprep.subr.mxu0 0.0
    %6743 = vmatpush2.xpose.msra.mxu0 0.0
    %6744 = vmatprep.subr.mxu0 0.0
    %6745 = vmatpush2.xpose.msra.mxu0 0.0
    %6746 = vmatprep.subr.mxu0 0.0
    %6747 = vmatpush2.xpose.msra.mxu0 0.0
    %6748 = vmatprep.subr.mxu0 0.0
    %6749 = vmatpush2.xpose.msra.mxu0 0.0
    %6750 = vmatprep.subr.mxu0 0.0
    %6751 = vmatpush2.xpose.msra.mxu0 0.0
    %6752 = vmatprep.subr.mxu0 0.0
    %6753 = vmatpush2.xpose.msra.mxu0 0.0
    %6754 = vmatprep.subr.mxu0 0.0
    %6755 = vmatpush2.xpose.msra.mxu0 0.0
    %6756 = vmatprep.subr.mxu0 0.0
    %6757 = vmatpush2.xpose.msra.mxu0 0.0
    %6758 = vmatprep.subr.mxu0 0.0
    %6759 = vmatpush2.xpose.msra.mxu0 0.0
    %6760 = vmatprep.subr.mxu0 0.0
    %6761 = vmatpush2.xpose.msra.mxu0 0.0
    %6762 = vmatprep.subr.mxu0 0.0
    %6763 = vmatpush2.xpose.msra.mxu0 0.0
    %6764 = vmatprep.mubr.f32.mxu0 0.0
    %6765 = vmatmul.mubr.f32.gmra.mxu0 %v6695
    %v6766 = vpop.f32.mrf.mxu0
    %v6767 = vadd.f32 0.0, %v6766
    %v6768 = vpop.f32.mrf.mxu0
    %6769 = vdwg.mxu0
    %v6771 = vsel %vm3676, %v164, 0
    %v6774 = vsel %vm3676, %v5651, 0
    %6776 = vmatprep.subr.mxu0 0.0
    %6777 = vmatpush1.xpose.msra.mxu0 0.0
    %6778 = vmatprep.subr.mxu0 0.0
    %6779 = vmatpush1.xpose.msra.mxu0 0.0
    %6780 = vmatprep.subr.mxu0 0.0
    %6781 = vmatpush1.xpose.msra.mxu0 0.0
    %6782 = vmatprep.subr.mxu0 0.0
    %6783 = vmatpush1.xpose.msra.mxu0 0.0
    %6784 = vmatprep.subr.mxu0 0.0
    %6785 = vmatpush1.xpose.msra.mxu0 0.0
    %6786 = vmatprep.subr.mxu0 0.0
    %6787 = vmatpush1.xpose.msra.mxu0 0.0
    %6788 = vmatprep.subr.mxu0 0.0
    %6789 = vmatpush1.xpose.msra.mxu0 0.0
    %6790 = vmatprep.subr.mxu0 0.0
    %6791 = vmatpush1.xpose.msra.mxu0 0.0
    %6792 = vmatprep.subr.mxu0 0.0
    %6793 = vmatpush1.xpose.msra.mxu0 0.0
    %6794 = vmatprep.subr.mxu0 0.0
    %6795 = vmatpush1.xpose.msra.mxu0 0.0
    %6796 = vmatprep.subr.mxu0 0.0
    %6797 = vmatpush1.xpose.msra.mxu0 0.0
    %6798 = vmatprep.subr.mxu0 0.0
    %6799 = vmatpush1.xpose.msra.mxu0 0.0
    %6800 = vmatprep.subr.mxu0 0.0
    %6801 = vmatpush1.xpose.msra.mxu0 0.0
    %6802 = vmatprep.subr.mxu0 0.0
    %6803 = vmatpush1.xpose.msra.mxu0 0.0
    %6804 = vmatprep.subr.mxu0 0.0
    %6805 = vmatpush1.xpose.msra.mxu0 0.0
    %6806 = vmatprep.subr.mxu0 0.0
    %6807 = vmatpush1.xpose.msra.mxu0 %v6774
    %6808 = vmatprep.subr.mxu0 0.0
    %6809 = vmatpush2.xpose.msra.mxu0 0.0
    %6810 = vmatprep.subr.mxu0 0.0
    %6811 = vmatpush2.xpose.msra.mxu0 0.0
    %6812 = vmatprep.subr.mxu0 0.0
    %6813 = vmatpush2.xpose.msra.mxu0 0.0
    %6814 = vmatprep.subr.mxu0 0.0
    %6815 = vmatpush2.xpose.msra.mxu0 0.0
    %6816 = vmatprep.subr.mxu0 0.0
    %6817 = vmatpush2.xpose.msra.mxu0 0.0
    %6818 = vmatprep.subr.mxu0 0.0
    %6819 = vmatpush2.xpose.msra.mxu0 0.0
    %6820 = vmatprep.subr.mxu0 0.0
    %6821 = vmatpush2.xpose.msra.mxu0 0.0
    %6822 = vmatprep.subr.mxu0 0.0
    %6823 = vmatpush2.xpose.msra.mxu0 0.0
    %6824 = vmatprep.subr.mxu0 0.0
    %6825 = vmatpush2.xpose.msra.mxu0 0.0
    %6826 = vmatprep.subr.mxu0 0.0
    %6827 = vmatpush2.xpose.msra.mxu0 0.0
    %6828 = vmatprep.subr.mxu0 0.0
    %6829 = vmatpush2.xpose.msra.mxu0 0.0
    %6830 = vmatprep.subr.mxu0 0.0
    %6831 = vmatpush2.xpose.msra.mxu0 0.0
    %6832 = vmatprep.subr.mxu0 0.0
    %6833 = vmatpush2.xpose.msra.mxu0 0.0
    %6834 = vmatprep.subr.mxu0 0.0
    %6835 = vmatpush2.xpose.msra.mxu0 0.0
    %6836 = vmatprep.subr.mxu0 0.0
    %6837 = vmatpush2.xpose.msra.mxu0 0.0
    %6838 = vmatprep.subr.mxu0 0.0
    %6839 = vmatpush2.xpose.msra.mxu0 0.0
    %6840 = vmatprep.mubr.f32.mxu0 0.0
    %6841 = vmatmul.mubr.f32.gmra.mxu0 %v6771
    %v6842 = vpop.f32.mrf.mxu0
    %v6843 = vadd.f32 0.0, %v6842
    %v6844 = vpop.f32.mrf.mxu0
    %6845 = vdwg.mxu0
    %v6847 = vsel %vm3676, %v5724, 0
    %6849 = vmatprep.subr.mxu0 0.0
    %6850 = vmatpush1.xpose.msra.mxu0 0.0
    %6851 = vmatprep.subr.mxu0 0.0
    %6852 = vmatpush1.xpose.msra.mxu0 0.0
    %6853 = vmatprep.subr.mxu0 0.0
    %6854 = vmatpush1.xpose.msra.mxu0 0.0
    %6855 = vmatprep.subr.mxu0 0.0
    %6856 = vmatpush1.xpose.msra.mxu0 0.0
    %6857 = vmatprep.subr.mxu0 0.0
    %6858 = vmatpush1.xpose.msra.mxu0 0.0
    %6859 = vmatprep.subr.mxu0 0.0
    %6860 = vmatpush1.xpose.msra.mxu0 0.0
    %6861 = vmatprep.subr.mxu0 0.0
    %6862 = vmatpush1.xpose.msra.mxu0 0.0
    %6863 = vmatprep.subr.mxu0 0.0
    %6864 = vmatpush1.xpose.msra.mxu0 0.0
    %6865 = vmatprep.subr.mxu0 0.0
    %6866 = vmatpush1.xpose.msra.mxu0 0.0
    %6867 = vmatprep.subr.mxu0 0.0
    %6868 = vmatpush1.xpose.msra.mxu0 0.0
    %6869 = vmatprep.subr.mxu0 0.0
    %6870 = vmatpush1.xpose.msra.mxu0 0.0
    %6871 = vmatprep.subr.mxu0 0.0
    %6872 = vmatpush1.xpose.msra.mxu0 0.0
    %6873 = vmatprep.subr.mxu0 0.0
    %6874 = vmatpush1.xpose.msra.mxu0 0.0
    %6875 = vmatprep.subr.mxu0 0.0
    %6876 = vmatpush1.xpose.msra.mxu0 0.0
    %6877 = vmatprep.subr.mxu0 0.0
    %6878 = vmatpush1.xpose.msra.mxu0 0.0
    %6879 = vmatprep.subr.mxu0 0.0
    %6880 = vmatpush1.xpose.msra.mxu0 %v6847
    %6881 = vmatprep.subr.mxu0 0.0
    %6882 = vmatpush2.xpose.msra.mxu0 0.0
    %6883 = vmatprep.subr.mxu0 0.0
    %6884 = vmatpush2.xpose.msra.mxu0 0.0
    %6885 = vmatprep.subr.mxu0 0.0
    %6886 = vmatpush2.xpose.msra.mxu0 0.0
    %6887 = vmatprep.subr.mxu0 0.0
    %6888 = vmatpush2.xpose.msra.mxu0 0.0
    %6889 = vmatprep.subr.mxu0 0.0
    %6890 = vmatpush2.xpose.msra.mxu0 0.0
    %6891 = vmatprep.subr.mxu0 0.0
    %6892 = vmatpush2.xpose.msra.mxu0 0.0
    %6893 = vmatprep.subr.mxu0 0.0
    %6894 = vmatpush2.xpose.msra.mxu0 0.0
    %6895 = vmatprep.subr.mxu0 0.0
    %6896 = vmatpush2.xpose.msra.mxu0 0.0
    %6897 = vmatprep.subr.mxu0 0.0
    %6898 = vmatpush2.xpose.msra.mxu0 0.0
    %6899 = vmatprep.subr.mxu0 0.0
    %6900 = vmatpush2.xpose.msra.mxu0 0.0
    %6901 = vmatprep.subr.mxu0 0.0
    %6902 = vmatpush2.xpose.msra.mxu0 0.0
    %6903 = vmatprep.subr.mxu0 0.0
    %6904 = vmatpush2.xpose.msra.mxu0 0.0
    %6905 = vmatprep.subr.mxu0 0.0
    %6906 = vmatpush2.xpose.msra.mxu0 0.0
    %6907 = vmatprep.subr.mxu0 0.0
    %6908 = vmatpush2.xpose.msra.mxu0 0.0
    %6909 = vmatprep.subr.mxu0 0.0
    %6910 = vmatpush2.xpose.msra.mxu0 0.0
    %6911 = vmatprep.subr.mxu0 0.0
    %6912 = vmatpush2.xpose.msra.mxu0 0.0
    %6913 = vmatprep.mubr.f32.mxu0 0.0
    %6914 = vmatmul.mubr.f32.gmra.mxu0 %v6239
    %v6915 = vpop.f32.mrf.mxu0
    %v6916 = vadd.f32 0.0, %v6915
    %v6917 = vpop.f32.mrf.mxu0
    %6918 = vdwg.mxu0
    %v6920 = vsel %vm3676, %v5797, 0
    %6922 = vmatprep.subr.mxu0 0.0
    %6923 = vmatpush1.xpose.msra.mxu0 0.0
    %6924 = vmatprep.subr.mxu0 0.0
    %6925 = vmatpush1.xpose.msra.mxu0 0.0
    %6926 = vmatprep.subr.mxu0 0.0
    %6927 = vmatpush1.xpose.msra.mxu0 0.0
    %6928 = vmatprep.subr.mxu0 0.0
    %6929 = vmatpush1.xpose.msra.mxu0 0.0
    %6930 = vmatprep.subr.mxu0 0.0
    %6931 = vmatpush1.xpose.msra.mxu0 0.0
    %6932 = vmatprep.subr.mxu0 0.0
    %6933 = vmatpush1.xpose.msra.mxu0 0.0
    %6934 = vmatprep.subr.mxu0 0.0
    %6935 = vmatpush1.xpose.msra.mxu0 0.0
    %6936 = vmatprep.subr.mxu0 0.0
    %6937 = vmatpush1.xpose.msra.mxu0 0.0
    %6938 = vmatprep.subr.mxu0 0.0
    %6939 = vmatpush1.xpose.msra.mxu0 0.0
    %6940 = vmatprep.subr.mxu0 0.0
    %6941 = vmatpush1.xpose.msra.mxu0 0.0
    %6942 = vmatprep.subr.mxu0 0.0
    %6943 = vmatpush1.xpose.msra.mxu0 0.0
    %6944 = vmatprep.subr.mxu0 0.0
    %6945 = vmatpush1.xpose.msra.mxu0 0.0
    %6946 = vmatprep.subr.mxu0 0.0
    %6947 = vmatpush1.xpose.msra.mxu0 0.0
    %6948 = vmatprep.subr.mxu0 0.0
    %6949 = vmatpush1.xpose.msra.mxu0 0.0
    %6950 = vmatprep.subr.mxu0 0.0
    %6951 = vmatpush1.xpose.msra.mxu0 0.0
    %6952 = vmatprep.subr.mxu0 0.0
    %6953 = vmatpush1.xpose.msra.mxu0 %v6920
    %6954 = vmatprep.subr.mxu0 0.0
    %6955 = vmatpush2.xpose.msra.mxu0 0.0
    %6956 = vmatprep.subr.mxu0 0.0
    %6957 = vmatpush2.xpose.msra.mxu0 0.0
    %6958 = vmatprep.subr.mxu0 0.0
    %6959 = vmatpush2.xpose.msra.mxu0 0.0
    %6960 = vmatprep.subr.mxu0 0.0
    %6961 = vmatpush2.xpose.msra.mxu0 0.0
    %6962 = vmatprep.subr.mxu0 0.0
    %6963 = vmatpush2.xpose.msra.mxu0 0.0
    %6964 = vmatprep.subr.mxu0 0.0
    %6965 = vmatpush2.xpose.msra.mxu0 0.0
    %6966 = vmatprep.subr.mxu0 0.0
    %6967 = vmatpush2.xpose.msra.mxu0 0.0
    %6968 = vmatprep.subr.mxu0 0.0
    %6969 = vmatpush2.xpose.msra.mxu0 0.0
    %6970 = vmatprep.subr.mxu0 0.0
    %6971 = vmatpush2.xpose.msra.mxu0 0.0
    %6972 = vmatprep.subr.mxu0 0.0
    %6973 = vmatpush2.xpose.msra.mxu0 0.0
    %6974 = vmatprep.subr.mxu0 0.0
    %6975 = vmatpush2.xpose.msra.mxu0 0.0
    %6976 = vmatprep.subr.mxu0 0.0
    %6977 = vmatpush2.xpose.msra.mxu0 0.0
    %6978 = vmatprep.subr.mxu0 0.0
    %6979 = vmatpush2.xpose.msra.mxu0 0.0
    %6980 = vmatprep.subr.mxu0 0.0
    %6981 = vmatpush2.xpose.msra.mxu0 0.0
    %6982 = vmatprep.subr.mxu0 0.0
    %6983 = vmatpush2.xpose.msra.mxu0 0.0
    %6984 = vmatprep.subr.mxu0 0.0
    %6985 = vmatpush2.xpose.msra.mxu0 0.0
    %6986 = vmatprep.mubr.f32.mxu0 0.0
    %6987 = vmatmul.mubr.f32.gmra.mxu0 %v6315
    %v6988 = vpop.f32.mrf.mxu0
    %v6989 = vadd.f32 0.0, %v6988
    %v6990 = vpop.f32.mrf.mxu0
    %6991 = vdwg.mxu0
    %v6993 = vsel %vm3676, %v5870, 0
    %6995 = vmatprep.subr.mxu0 0.0
    %6996 = vmatpush1.xpose.msra.mxu0 0.0
    %6997 = vmatprep.subr.mxu0 0.0
    %6998 = vmatpush1.xpose.msra.mxu0 0.0
    %6999 = vmatprep.subr.mxu0 0.0
    %7000 = vmatpush1.xpose.msra.mxu0 0.0
    %7001 = vmatprep.subr.mxu0 0.0
    %7002 = vmatpush1.xpose.msra.mxu0 0.0
    %7003 = vmatprep.subr.mxu0 0.0
    %7004 = vmatpush1.xpose.msra.mxu0 0.0
    %7005 = vmatprep.subr.mxu0 0.0
    %7006 = vmatpush1.xpose.msra.mxu0 0.0
    %7007 = vmatprep.subr.mxu0 0.0
    %7008 = vmatpush1.xpose.msra.mxu0 0.0
    %7009 = vmatprep.subr.mxu0 0.0
    %7010 = vmatpush1.xpose.msra.mxu0 0.0
    %7011 = vmatprep.subr.mxu0 0.0
    %7012 = vmatpush1.xpose.msra.mxu0 0.0
    %7013 = vmatprep.subr.mxu0 0.0
    %7014 = vmatpush1.xpose.msra.mxu0 0.0
    %7015 = vmatprep.subr.mxu0 0.0
    %7016 = vmatpush1.xpose.msra.mxu0 0.0
    %7017 = vmatprep.subr.mxu0 0.0
    %7018 = vmatpush1.xpose.msra.mxu0 0.0
    %7019 = vmatprep.subr.mxu0 0.0
    %7020 = vmatpush1.xpose.msra.mxu0 0.0
    %7021 = vmatprep.subr.mxu0 0.0
    %7022 = vmatpush1.xpose.msra.mxu0 0.0
    %7023 = vmatprep.subr.mxu0 0.0
    %7024 = vmatpush1.xpose.msra.mxu0 0.0
    %7025 = vmatprep.subr.mxu0 0.0
    %7026 = vmatpush1.xpose.msra.mxu0 %v6993
    %7027 = vmatprep.subr.mxu0 0.0
    %7028 = vmatpush2.xpose.msra.mxu0 0.0
    %7029 = vmatprep.subr.mxu0 0.0
    %7030 = vmatpush2.xpose.msra.mxu0 0.0
    %7031 = vmatprep.subr.mxu0 0.0
    %7032 = vmatpush2.xpose.msra.mxu0 0.0
    %7033 = vmatprep.subr.mxu0 0.0
    %7034 = vmatpush2.xpose.msra.mxu0 0.0
    %7035 = vmatprep.subr.mxu0 0.0
    %7036 = vmatpush2.xpose.msra.mxu0 0.0
    %7037 = vmatprep.subr.mxu0 0.0
    %7038 = vmatpush2.xpose.msra.mxu0 0.0
    %7039 = vmatprep.subr.mxu0 0.0
    %7040 = vmatpush2.xpose.msra.mxu0 0.0
    %7041 = vmatprep.subr.mxu0 0.0
    %7042 = vmatpush2.xpose.msra.mxu0 0.0
    %7043 = vmatprep.subr.mxu0 0.0
    %7044 = vmatpush2.xpose.msra.mxu0 0.0
    %7045 = vmatprep.subr.mxu0 0.0
    %7046 = vmatpush2.xpose.msra.mxu0 0.0
    %7047 = vmatprep.subr.mxu0 0.0
    %7048 = vmatpush2.xpose.msra.mxu0 0.0
    %7049 = vmatprep.subr.mxu0 0.0
    %7050 = vmatpush2.xpose.msra.mxu0 0.0
    %7051 = vmatprep.subr.mxu0 0.0
    %7052 = vmatpush2.xpose.msra.mxu0 0.0
    %7053 = vmatprep.subr.mxu0 0.0
    %7054 = vmatpush2.xpose.msra.mxu0 0.0
    %7055 = vmatprep.subr.mxu0 0.0
    %7056 = vmatpush2.xpose.msra.mxu0 0.0
    %7057 = vmatprep.subr.mxu0 0.0
    %7058 = vmatpush2.xpose.msra.mxu0 0.0
    %7059 = vmatprep.mubr.f32.mxu0 0.0
    %7060 = vmatmul.mubr.f32.gmra.mxu0 %v6391
    %v7061 = vpop.f32.mrf.mxu0
    %v7062 = vadd.f32 0.0, %v7061
    %v7063 = vpop.f32.mrf.mxu0
    %7064 = vdwg.mxu0
    %v7066 = vsel %vm3676, %v5943, 0
    %7068 = vmatprep.subr.mxu0 0.0
    %7069 = vmatpush1.xpose.msra.mxu0 0.0
    %7070 = vmatprep.subr.mxu0 0.0
    %7071 = vmatpush1.xpose.msra.mxu0 0.0
    %7072 = vmatprep.subr.mxu0 0.0
    %7073 = vmatpush1.xpose.msra.mxu0 0.0
    %7074 = vmatprep.subr.mxu0 0.0
    %7075 = vmatpush1.xpose.msra.mxu0 0.0
    %7076 = vmatprep.subr.mxu0 0.0
    %7077 = vmatpush1.xpose.msra.mxu0 0.0
    %7078 = vmatprep.subr.mxu0 0.0
    %7079 = vmatpush1.xpose.msra.mxu0 0.0
    %7080 = vmatprep.subr.mxu0 0.0
    %7081 = vmatpush1.xpose.msra.mxu0 0.0
    %7082 = vmatprep.subr.mxu0 0.0
    %7083 = vmatpush1.xpose.msra.mxu0 0.0
    %7084 = vmatprep.subr.mxu0 0.0
    %7085 = vmatpush1.xpose.msra.mxu0 0.0
    %7086 = vmatprep.subr.mxu0 0.0
    %7087 = vmatpush1.xpose.msra.mxu0 0.0
    %7088 = vmatprep.subr.mxu0 0.0
    %7089 = vmatpush1.xpose.msra.mxu0 0.0
    %7090 = vmatprep.subr.mxu0 0.0
    %7091 = vmatpush1.xpose.msra.mxu0 0.0
    %7092 = vmatprep.subr.mxu0 0.0
    %7093 = vmatpush1.xpose.msra.mxu0 0.0
    %7094 = vmatprep.subr.mxu0 0.0
    %7095 = vmatpush1.xpose.msra.mxu0 0.0
    %7096 = vmatprep.subr.mxu0 0.0
    %7097 = vmatpush1.xpose.msra.mxu0 0.0
    %7098 = vmatprep.subr.mxu0 0.0
    %7099 = vmatpush1.xpose.msra.mxu0 %v7066
    %7100 = vmatprep.subr.mxu0 0.0
    %7101 = vmatpush2.xpose.msra.mxu0 0.0
    %7102 = vmatprep.subr.mxu0 0.0
    %7103 = vmatpush2.xpose.msra.mxu0 0.0
    %7104 = vmatprep.subr.mxu0 0.0
    %7105 = vmatpush2.xpose.msra.mxu0 0.0
    %7106 = vmatprep.subr.mxu0 0.0
    %7107 = vmatpush2.xpose.msra.mxu0 0.0
    %7108 = vmatprep.subr.mxu0 0.0
    %7109 = vmatpush2.xpose.msra.mxu0 0.0
    %7110 = vmatprep.subr.mxu0 0.0
    %7111 = vmatpush2.xpose.msra.mxu0 0.0
    %7112 = vmatprep.subr.mxu0 0.0
    %7113 = vmatpush2.xpose.msra.mxu0 0.0
    %7114 = vmatprep.subr.mxu0 0.0
    %7115 = vmatpush2.xpose.msra.mxu0 0.0
    %7116 = vmatprep.subr.mxu0 0.0
    %7117 = vmatpush2.xpose.msra.mxu0 0.0
    %7118 = vmatprep.subr.mxu0 0.0
    %7119 = vmatpush2.xpose.msra.mxu0 0.0
    %7120 = vmatprep.subr.mxu0 0.0
    %7121 = vmatpush2.xpose.msra.mxu0 0.0
    %7122 = vmatprep.subr.mxu0 0.0
    %7123 = vmatpush2.xpose.msra.mxu0 0.0
    %7124 = vmatprep.subr.mxu0 0.0
    %7125 = vmatpush2.xpose.msra.mxu0 0.0
    %7126 = vmatprep.subr.mxu0 0.0
    %7127 = vmatpush2.xpose.msra.mxu0 0.0
    %7128 = vmatprep.subr.mxu0 0.0
    %7129 = vmatpush2.xpose.msra.mxu0 0.0
    %7130 = vmatprep.subr.mxu0 0.0
    %7131 = vmatpush2.xpose.msra.mxu0 0.0
    %7132 = vmatprep.mubr.f32.mxu0 0.0
    %7133 = vmatmul.mubr.f32.gmra.mxu0 %v6467
    %v7134 = vpop.f32.mrf.mxu0
    %v7135 = vadd.f32 0.0, %v7134
    %v7136 = vpop.f32.mrf.mxu0
    %7137 = vdwg.mxu0
    %v7139 = vsel %vm3676, %v6016, 0
    %7141 = vmatprep.subr.mxu0 0.0
    %7142 = vmatpush1.xpose.msra.mxu0 0.0
    %7143 = vmatprep.subr.mxu0 0.0
    %7144 = vmatpush1.xpose.msra.mxu0 0.0
    %7145 = vmatprep.subr.mxu0 0.0
    %7146 = vmatpush1.xpose.msra.mxu0 0.0
    %7147 = vmatprep.subr.mxu0 0.0
    %7148 = vmatpush1.xpose.msra.mxu0 0.0
    %7149 = vmatprep.subr.mxu0 0.0
    %7150 = vmatpush1.xpose.msra.mxu0 0.0
    %7151 = vmatprep.subr.mxu0 0.0
    %7152 = vmatpush1.xpose.msra.mxu0 0.0
    %7153 = vmatprep.subr.mxu0 0.0
    %7154 = vmatpush1.xpose.msra.mxu0 0.0
    %7155 = vmatprep.subr.mxu0 0.0
    %7156 = vmatpush1.xpose.msra.mxu0 0.0
    %7157 = vmatprep.subr.mxu0 0.0
    %7158 = vmatpush1.xpose.msra.mxu0 0.0
    %7159 = vmatprep.subr.mxu0 0.0
    %7160 = vmatpush1.xpose.msra.mxu0 0.0
    %7161 = vmatprep.subr.mxu0 0.0
    %7162 = vmatpush1.xpose.msra.mxu0 0.0
    %7163 = vmatprep.subr.mxu0 0.0
    %7164 = vmatpush1.xpose.msra.mxu0 0.0
    %7165 = vmatprep.subr.mxu0 0.0
    %7166 = vmatpush1.xpose.msra.mxu0 0.0
    %7167 = vmatprep.subr.mxu0 0.0
    %7168 = vmatpush1.xpose.msra.mxu0 0.0
    %7169 = vmatprep.subr.mxu0 0.0
    %7170 = vmatpush1.xpose.msra.mxu0 0.0
    %7171 = vmatprep.subr.mxu0 0.0
    %7172 = vmatpush1.xpose.msra.mxu0 %v7139
    %7173 = vmatprep.subr.mxu0 0.0
    %7174 = vmatpush2.xpose.msra.mxu0 0.0
    %7175 = vmatprep.subr.mxu0 0.0
    %7176 = vmatpush2.xpose.msra.mxu0 0.0
    %7177 = vmatprep.subr.mxu0 0.0
    %7178 = vmatpush2.xpose.msra.mxu0 0.0
    %7179 = vmatprep.subr.mxu0 0.0
    %7180 = vmatpush2.xpose.msra.mxu0 0.0
    %7181 = vmatprep.subr.mxu0 0.0
    %7182 = vmatpush2.xpose.msra.mxu0 0.0
    %7183 = vmatprep.subr.mxu0 0.0
    %7184 = vmatpush2.xpose.msra.mxu0 0.0
    %7185 = vmatprep.subr.mxu0 0.0
    %7186 = vmatpush2.xpose.msra.mxu0 0.0
    %7187 = vmatprep.subr.mxu0 0.0
    %7188 = vmatpush2.xpose.msra.mxu0 0.0
    %7189 = vmatprep.subr.mxu0 0.0
    %7190 = vmatpush2.xpose.msra.mxu0 0.0
    %7191 = vmatprep.subr.mxu0 0.0
    %7192 = vmatpush2.xpose.msra.mxu0 0.0
    %7193 = vmatprep.subr.mxu0 0.0
    %7194 = vmatpush2.xpose.msra.mxu0 0.0
    %7195 = vmatprep.subr.mxu0 0.0
    %7196 = vmatpush2.xpose.msra.mxu0 0.0
    %7197 = vmatprep.subr.mxu0 0.0
    %7198 = vmatpush2.xpose.msra.mxu0 0.0
    %7199 = vmatprep.subr.mxu0 0.0
    %7200 = vmatpush2.xpose.msra.mxu0 0.0
    %7201 = vmatprep.subr.mxu0 0.0
    %7202 = vmatpush2.xpose.msra.mxu0 0.0
    %7203 = vmatprep.subr.mxu0 0.0
    %7204 = vmatpush2.xpose.msra.mxu0 0.0
    %7205 = vmatprep.mubr.f32.mxu0 0.0
    %7206 = vmatmul.mubr.f32.gmra.mxu0 %v6543
    %v7207 = vpop.f32.mrf.mxu0
    %v7208 = vadd.f32 0.0, %v7207
    %v7209 = vpop.f32.mrf.mxu0
    %7210 = vdwg.mxu0
    %v7212 = vsel %vm3676, %v6089, 0
    %7214 = vmatprep.subr.mxu0 0.0
    %7215 = vmatpush1.xpose.msra.mxu0 0.0
    %7216 = vmatprep.subr.mxu0 0.0
    %7217 = vmatpush1.xpose.msra.mxu0 0.0
    %7218 = vmatprep.subr.mxu0 0.0
    %7219 = vmatpush1.xpose.msra.mxu0 0.0
    %7220 = vmatprep.subr.mxu0 0.0
    %7221 = vmatpush1.xpose.msra.mxu0 0.0
    %7222 = vmatprep.subr.mxu0 0.0
    %7223 = vmatpush1.xpose.msra.mxu0 0.0
    %7224 = vmatprep.subr.mxu0 0.0
    %7225 = vmatpush1.xpose.msra.mxu0 0.0
    %7226 = vmatprep.subr.mxu0 0.0
    %7227 = vmatpush1.xpose.msra.mxu0 0.0
    %7228 = vmatprep.subr.mxu0 0.0
    %7229 = vmatpush1.xpose.msra.mxu0 0.0
    %7230 = vmatprep.subr.mxu0 0.0
    %7231 = vmatpush1.xpose.msra.mxu0 0.0
    %7232 = vmatprep.subr.mxu0 0.0
    %7233 = vmatpush1.xpose.msra.mxu0 0.0
    %7234 = vmatprep.subr.mxu0 0.0
    %7235 = vmatpush1.xpose.msra.mxu0 0.0
    %7236 = vmatprep.subr.mxu0 0.0
    %7237 = vmatpush1.xpose.msra.mxu0 0.0
    %7238 = vmatprep.subr.mxu0 0.0
    %7239 = vmatpush1.xpose.msra.mxu0 0.0
    %7240 = vmatprep.subr.mxu0 0.0
    %7241 = vmatpush1.xpose.msra.mxu0 0.0
    %7242 = vmatprep.subr.mxu0 0.0
    %7243 = vmatpush1.xpose.msra.mxu0 0.0
    %7244 = vmatprep.subr.mxu0 0.0
    %7245 = vmatpush1.xpose.msra.mxu0 %v7212
    %7246 = vmatprep.subr.mxu0 0.0
    %7247 = vmatpush2.xpose.msra.mxu0 0.0
    %7248 = vmatprep.subr.mxu0 0.0
    %7249 = vmatpush2.xpose.msra.mxu0 0.0
    %7250 = vmatprep.subr.mxu0 0.0
    %7251 = vmatpush2.xpose.msra.mxu0 0.0
    %7252 = vmatprep.subr.mxu0 0.0
    %7253 = vmatpush2.xpose.msra.mxu0 0.0
    %7254 = vmatprep.subr.mxu0 0.0
    %7255 = vmatpush2.xpose.msra.mxu0 0.0
    %7256 = vmatprep.subr.mxu0 0.0
    %7257 = vmatpush2.xpose.msra.mxu0 0.0
    %7258 = vmatprep.subr.mxu0 0.0
    %7259 = vmatpush2.xpose.msra.mxu0 0.0
    %7260 = vmatprep.subr.mxu0 0.0
    %7261 = vmatpush2.xpose.msra.mxu0 0.0
    %7262 = vmatprep.subr.mxu0 0.0
    %7263 = vmatpush2.xpose.msra.mxu0 0.0
    %7264 = vmatprep.subr.mxu0 0.0
    %7265 = vmatpush2.xpose.msra.mxu0 0.0
    %7266 = vmatprep.subr.mxu0 0.0
    %7267 = vmatpush2.xpose.msra.mxu0 0.0
    %7268 = vmatprep.subr.mxu0 0.0
    %7269 = vmatpush2.xpose.msra.mxu0 0.0
    %7270 = vmatprep.subr.mxu0 0.0
    %7271 = vmatpush2.xpose.msra.mxu0 0.0
    %7272 = vmatprep.subr.mxu0 0.0
    %7273 = vmatpush2.xpose.msra.mxu0 0.0
    %7274 = vmatprep.subr.mxu0 0.0
    %7275 = vmatpush2.xpose.msra.mxu0 0.0
    %7276 = vmatprep.subr.mxu0 0.0
    %7277 = vmatpush2.xpose.msra.mxu0 0.0
    %7278 = vmatprep.mubr.f32.mxu0 0.0
    %7279 = vmatmul.mubr.f32.gmra.mxu0 %v6619
    %v7280 = vpop.f32.mrf.mxu0
    %v7281 = vadd.f32 0.0, %v7280
    %v7282 = vpop.f32.mrf.mxu0
    %7283 = vdwg.mxu0
    %v7285 = vsel %vm3676, %v6162, 0
    %7287 = vmatprep.subr.mxu0 0.0
    %7288 = vmatpush1.xpose.msra.mxu0 0.0
    %7289 = vmatprep.subr.mxu0 0.0
    %7290 = vmatpush1.xpose.msra.mxu0 0.0
    %7291 = vmatprep.subr.mxu0 0.0
    %7292 = vmatpush1.xpose.msra.mxu0 0.0
    %7293 = vmatprep.subr.mxu0 0.0
    %7294 = vmatpush1.xpose.msra.mxu0 0.0
    %7295 = vmatprep.subr.mxu0 0.0
    %7296 = vmatpush1.xpose.msra.mxu0 0.0
    %7297 = vmatprep.subr.mxu0 0.0
    %7298 = vmatpush1.xpose.msra.mxu0 0.0
    %7299 = vmatprep.subr.mxu0 0.0
    %7300 = vmatpush1.xpose.msra.mxu0 0.0
    %7301 = vmatprep.subr.mxu0 0.0
    %7302 = vmatpush1.xpose.msra.mxu0 0.0
    %7303 = vmatprep.subr.mxu0 0.0
    %7304 = vmatpush1.xpose.msra.mxu0 0.0
    %7305 = vmatprep.subr.mxu0 0.0
    %7306 = vmatpush1.xpose.msra.mxu0 0.0
    %7307 = vmatprep.subr.mxu0 0.0
    %7308 = vmatpush1.xpose.msra.mxu0 0.0
    %7309 = vmatprep.subr.mxu0 0.0
    %7310 = vmatpush1.xpose.msra.mxu0 0.0
    %7311 = vmatprep.subr.mxu0 0.0
    %7312 = vmatpush1.xpose.msra.mxu0 0.0
    %7313 = vmatprep.subr.mxu0 0.0
    %7314 = vmatpush1.xpose.msra.mxu0 0.0
    %7315 = vmatprep.subr.mxu0 0.0
    %7316 = vmatpush1.xpose.msra.mxu0 0.0
    %7317 = vmatprep.subr.mxu0 0.0
    %7318 = vmatpush1.xpose.msra.mxu0 %v7285
    %7319 = vmatprep.subr.mxu0 0.0
    %7320 = vmatpush2.xpose.msra.mxu0 0.0
    %7321 = vmatprep.subr.mxu0 0.0
    %7322 = vmatpush2.xpose.msra.mxu0 0.0
    %7323 = vmatprep.subr.mxu0 0.0
    %7324 = vmatpush2.xpose.msra.mxu0 0.0
    %7325 = vmatprep.subr.mxu0 0.0
    %7326 = vmatpush2.xpose.msra.mxu0 0.0
    %7327 = vmatprep.subr.mxu0 0.0
    %7328 = vmatpush2.xpose.msra.mxu0 0.0
    %7329 = vmatprep.subr.mxu0 0.0
    %7330 = vmatpush2.xpose.msra.mxu0 0.0
    %7331 = vmatprep.subr.mxu0 0.0
    %7332 = vmatpush2.xpose.msra.mxu0 0.0
    %7333 = vmatprep.subr.mxu0 0.0
    %7334 = vmatpush2.xpose.msra.mxu0 0.0
    %7335 = vmatprep.subr.mxu0 0.0
    %7336 = vmatpush2.xpose.msra.mxu0 0.0
    %7337 = vmatprep.subr.mxu0 0.0
    %7338 = vmatpush2.xpose.msra.mxu0 0.0
    %7339 = vmatprep.subr.mxu0 0.0
    %7340 = vmatpush2.xpose.msra.mxu0 0.0
    %7341 = vmatprep.subr.mxu0 0.0
    %7342 = vmatpush2.xpose.msra.mxu0 0.0
    %7343 = vmatprep.subr.mxu0 0.0
    %7344 = vmatpush2.xpose.msra.mxu0 0.0
    %7345 = vmatprep.subr.mxu0 0.0
    %7346 = vmatpush2.xpose.msra.mxu0 0.0
    %7347 = vmatprep.subr.mxu0 0.0
    %7348 = vmatpush2.xpose.msra.mxu0 0.0
    %7349 = vmatprep.subr.mxu0 0.0
    %7350 = vmatpush2.xpose.msra.mxu0 0.0
    %7351 = vmatprep.mubr.f32.mxu0 0.0
    %7352 = vmatmul.mubr.f32.gmra.mxu0 %v6695
    %v7353 = vpop.f32.mrf.mxu0
    %v7354 = vadd.f32 0.0, %v7353
    %v7355 = vpop.f32.mrf.mxu0
    %7356 = vdwg.mxu0
    %v7358 = vsel %vm3676, %v6235, 0
    %7360 = vmatprep.subr.mxu0 0.0
    %7361 = vmatpush1.xpose.msra.mxu0 0.0
    %7362 = vmatprep.subr.mxu0 0.0
    %7363 = vmatpush1.xpose.msra.mxu0 0.0
    %7364 = vmatprep.subr.mxu0 0.0
    %7365 = vmatpush1.xpose.msra.mxu0 0.0
    %7366 = vmatprep.subr.mxu0 0.0
    %7367 = vmatpush1.xpose.msra.mxu0 0.0
    %7368 = vmatprep.subr.mxu0 0.0
    %7369 = vmatpush1.xpose.msra.mxu0 0.0
    %7370 = vmatprep.subr.mxu0 0.0
    %7371 = vmatpush1.xpose.msra.mxu0 0.0
    %7372 = vmatprep.subr.mxu0 0.0
    %7373 = vmatpush1.xpose.msra.mxu0 0.0
    %7374 = vmatprep.subr.mxu0 0.0
    %7375 = vmatpush1.xpose.msra.mxu0 0.0
    %7376 = vmatprep.subr.mxu0 0.0
    %7377 = vmatpush1.xpose.msra.mxu0 0.0
    %7378 = vmatprep.subr.mxu0 0.0
    %7379 = vmatpush1.xpose.msra.mxu0 0.0
    %7380 = vmatprep.subr.mxu0 0.0
    %7381 = vmatpush1.xpose.msra.mxu0 0.0
    %7382 = vmatprep.subr.mxu0 0.0
    %7383 = vmatpush1.xpose.msra.mxu0 0.0
    %7384 = vmatprep.subr.mxu0 0.0
    %7385 = vmatpush1.xpose.msra.mxu0 0.0
    %7386 = vmatprep.subr.mxu0 0.0
    %7387 = vmatpush1.xpose.msra.mxu0 0.0
    %7388 = vmatprep.subr.mxu0 0.0
    %7389 = vmatpush1.xpose.msra.mxu0 0.0
    %7390 = vmatprep.subr.mxu0 0.0
    %7391 = vmatpush1.xpose.msra.mxu0 %v7358
    %7392 = vmatprep.subr.mxu0 0.0
    %7393 = vmatpush2.xpose.msra.mxu0 0.0
    %7394 = vmatprep.subr.mxu0 0.0
    %7395 = vmatpush2.xpose.msra.mxu0 0.0
    %7396 = vmatprep.subr.mxu0 0.0
    %7397 = vmatpush2.xpose.msra.mxu0 0.0
    %7398 = vmatprep.subr.mxu0 0.0
    %7399 = vmatpush2.xpose.msra.mxu0 0.0
    %7400 = vmatprep.subr.mxu0 0.0
    %7401 = vmatpush2.xpose.msra.mxu0 0.0
    %7402 = vmatprep.subr.mxu0 0.0
    %7403 = vmatpush2.xpose.msra.mxu0 0.0
    %7404 = vmatprep.subr.mxu0 0.0
    %7405 = vmatpush2.xpose.msra.mxu0 0.0
    %7406 = vmatprep.subr.mxu0 0.0
    %7407 = vmatpush2.xpose.msra.mxu0 0.0
    %7408 = vmatprep.subr.mxu0 0.0
    %7409 = vmatpush2.xpose.msra.mxu0 0.0
    %7410 = vmatprep.subr.mxu0 0.0
    %7411 = vmatpush2.xpose.msra.mxu0 0.0
    %7412 = vmatprep.subr.mxu0 0.0
    %7413 = vmatpush2.xpose.msra.mxu0 0.0
    %7414 = vmatprep.subr.mxu0 0.0
    %7415 = vmatpush2.xpose.msra.mxu0 0.0
    %7416 = vmatprep.subr.mxu0 0.0
    %7417 = vmatpush2.xpose.msra.mxu0 0.0
    %7418 = vmatprep.subr.mxu0 0.0
    %7419 = vmatpush2.xpose.msra.mxu0 0.0
    %7420 = vmatprep.subr.mxu0 0.0
    %7421 = vmatpush2.xpose.msra.mxu0 0.0
    %7422 = vmatprep.subr.mxu0 0.0
    %7423 = vmatpush2.xpose.msra.mxu0 0.0
    %7424 = vmatprep.mubr.f32.mxu0 0.0
    %7425 = vmatmul.mubr.f32.gmra.mxu0 %v6771
    %v7426 = vpop.f32.mrf.mxu0
    %v7427 = vadd.f32 0.0, %v7426
    %v7428 = vpop.f32.mrf.mxu0
    %7429 = vdwg.mxu0
    %vm7430 = vcmask 57344
    %v7431 = vsel %vm7430, %v6311, 0.0
    %v7432 = vsel %vm7430, %v6387, 0.0
    %v7433 = vadd.f32 %v7431, %v7432
    %v7434 = vsel %vm7430, %v6463, 0.0
    %v7435 = vadd.f32 %v7433, %v7434
    %v7436 = vsel %vm7430, %v6539, 0.0
    %v7437 = vadd.f32 %v7435, %v7436
    %v7438 = vsel %vm7430, %v6615, 0.0
    %v7439 = vadd.f32 %v7437, %v7438
    %v7440 = vsel %vm7430, %v6691, 0.0
    %v7441 = vadd.f32 %v7439, %v7440
    %v7442 = vsel %vm7430, %v6767, 0.0
    %v7443 = vadd.f32 %v7441, %v7442
    %v7444 = vsel %vm7430, %v6843, 0.0
    %v7445 = vadd.f32 %v7443, %v7444
    %v7446 = vsel %vm7430, %v6916, 0.0
    %v7447 = vsel %vm7430, %v6989, 0.0
    %v7448 = vadd.f32 %v7446, %v7447
    %v7449 = vsel %vm7430, %v7062, 0.0
    %v7450 = vadd.f32 %v7448, %v7449
    %v7451 = vsel %vm7430, %v7135, 0.0
    %v7452 = vadd.f32 %v7450, %v7451
    %v7453 = vsel %vm7430, %v7208, 0.0
    %v7454 = vadd.f32 %v7452, %v7453
    %v7455 = vsel %vm7430, %v7281, 0.0
    %v7456 = vadd.f32 %v7454, %v7455
    %v7457 = vsel %vm7430, %v7354, 0.0
    %v7458 = vadd.f32 %v7456, %v7457
    %v7459 = vsel %vm7430, %v7427, 0.0
    %v7460 = vadd.f32 %v7458, %v7459
    %v7461 = vld [vmem:[#allocation2] sm:$0x1]
    %7463 = vset.pattern.permute.xlu0 0
    %7464 = vperm.xlu0 %7463, %v7461
    %v7465 = vpop.permute.xlu0 %7464
    %v7467 = vlaneseq
    %v7468 = vshrl.u32 %v7467, 7
    %v7469 = vsub.s32 0, %v7468
    %v7470 = vrot.slane %v7465, %v7469
    %v7471 = vadd.f32 %v7445, %v7470
    %v7472 = vadd.f32 %v7460, %v7470
    %7473 = vst.msk [vmem:[#allocation3] sm:$0x1] %vm7430, %v7471
    %7474 = vst.msk [vmem:[#allocation3 + $0x1] sm:$0x1] %vm7430, %v7472
    // Predicated region
    $region38: #{tpu_custom_call.1} parent=1 // pred_check
      _
    $region39: #{tpu_custom_call.1} parent=1 // pred_check_branch
      %7476 = sbr.rel (0) target = $region41
    $region40: #{tpu_custom_call.1} parent=1 // pred_region
      %s7478 = ssub.s32 32, 32
      %7479 = vsyncadd [#allocation4], %s7478
      %s7480 = sshll.u32 [#allocation3], 4
      %s7481 = int_to_ptr.vmem [resolvable:$true] %s7480
      %7486 = dma.vmem_to_hbm [thread:$0]  %s7481, 32, %s9, [#allocation4], 16, 16, 1
    $region41: #{tpu_custom_call.1} parent=1 // pred_fallthru
      _
    // Predicated region
    $region42: #{tpu_custom_call.1} parent=1 // pred_check
      _
    $region43: #{tpu_custom_call.1} parent=1 // pred_check_branch
      %7488 = sbr.rel (0) target = $region45
    $region44: #{tpu_custom_call.1} parent=1 // pred_region
      %7489 = dma.done [#allocation4], 32
    $region45: #{tpu_custom_call.1} parent=1 // pred_fallthru
      _
    %7490 = vsyncpa [#allocation4], 1

</llo_original>
